<compile_context>
chip_gen: v5e
topology: v5e:2x2
jax: 0.10.0
libtpu: 0.0.40
codegen_flags: <defaults>
</compile_context>

<pallas_src>
import functools

import jax
import jax.numpy as jnp
from jax.experimental import pallas as pl
from jax.experimental.pallas import tpu as pltpu


# ---------------------------------------------------------------------------
# helpers
# ---------------------------------------------------------------------------
def _pick_tile(dim, cap, align):
    """Largest tile <= cap that evenly divides `dim` honoring `align`;
    falls back to the full dim (always a legal block extent)."""
    if dim <= cap:
        return dim
    t = (cap // align) * align
    while t >= align:
        if dim % t == 0:
            return t
        t -= align
    return dim


# ---------------------------------------------------------------------------
# Kernel 1: tiled matmul + folded-BN affine + ReLU   (all 1x1 convolutions)
# ---------------------------------------------------------------------------
def _matmul_bn_relu_kernel(a_ref, w_ref, scale_ref, shift_ref, o_ref, acc_ref):
    k = pl.program_id(2)

    @pl.when(k == 0)
    def _():
        acc_ref[...] = jnp.zeros_like(acc_ref)

    acc_ref[...] += jnp.dot(
        a_ref[...].astype(jnp.bfloat16),
        w_ref[...].astype(jnp.bfloat16),
        preferred_element_type=jnp.float32,
    )

    @pl.when(k == pl.num_programs(2) - 1)
    def _():
        y = acc_ref[...] * scale_ref[...] + shift_ref[...]
        o_ref[...] = jnp.maximum(y, 0.0).astype(o_ref.dtype)


def matmul_bn_relu(a, w, scale, shift, *, tm_cap=256, tn_cap=256, tk_cap=512):
    M, K = a.shape
    Kw, N = w.shape
    assert K == Kw
    # Tile sizes sized for the 32 MiB scoped-VMEM default (safe on v7x's
    # 64 MiB physical VMEM as well); (8,128) alignment or full-extent.
    tm = _pick_tile(M, tm_cap, 8)
    tn = _pick_tile(N, tn_cap, 128)
    tk = _pick_tile(K, tk_cap, 128)
    grid = (M // tm, N // tn, K // tk)
    return pl.pallas_call(
        _matmul_bn_relu_kernel,
        out_shape=jax.ShapeDtypeStruct((M, N), a.dtype),
        grid_spec=pltpu.PrefetchScalarGridSpec(
            num_scalar_prefetch=0,
            grid=grid,
            in_specs=[
                pl.BlockSpec((tm, tk), lambda i, j, k: (i, k)),
                pl.BlockSpec((tk, tn), lambda i, j, k: (k, j)),
                pl.BlockSpec((1, tn), lambda i, j, k: (0, j)),
                pl.BlockSpec((1, tn), lambda i, j, k: (0, j)),
            ],
            out_specs=pl.BlockSpec((tm, tn), lambda i, j, k: (i, j)),
            scratch_shapes=[pltpu.VMEM((tm, tn), jnp.float32)],
        ),
        compiler_params=pltpu.CompilerParams(
            dimension_semantics=("parallel", "parallel", "arbitrary")),
    )(a, w,
      scale.reshape(1, N).astype(jnp.float32),
      shift.reshape(1, N).astype(jnp.float32))


# ---------------------------------------------------------------------------
# Kernel 2: direct KxK conv (+BN+ReLU) via in-kernel tap loop (no im2col)
# ---------------------------------------------------------------------------
def _conv_tap_bn_relu_kernel(xp_ref, w_ref, scale_ref, shift_ref, o_ref, *,
                             kh, kw):
    # xp: (1, Hp, Wp, Cin) zero-padded; w: (kh*kw, Cin, Cout); o: (1,H,W,Cout)
    _, _, _, cin = xp_ref.shape
    _, h, w, cout = o_ref.shape
    acc = jnp.zeros((h * w, cout), jnp.float32)
    for t in range(kh * kw):                       # static unrolled tap loop
        dy, dx = t // kw, t % kw
        win = xp_ref[0, dy:dy + h, dx:dx + w, :]   # static shifted view
        acc += jnp.dot(
            win.reshape(h * w, cin).astype(jnp.bfloat16),
            w_ref[t].astype(jnp.bfloat16),
            preferred_element_type=jnp.float32,
        )
    y = acc * scale_ref[...] + shift_ref[...]
    o_ref[0] = jnp.maximum(y, 0.0).reshape(h, w, cout).astype(o_ref.dtype)


def conv_bn_relu(x_nhwc, w_hwio, scale, shift):
    n, h, w, cin = x_nhwc.shape
    kh, kw, _, cout = w_hwio.shape
    if kh == 1 and kw == 1:
        y = matmul_bn_relu(x_nhwc.reshape(n * h * w, cin),
                           w_hwio.reshape(cin, cout), scale, shift)
        return y.reshape(n, h, w, cout)

    ph, pw = kh // 2, kw // 2
    xp = jnp.pad(x_nhwc, ((0, 0), (ph, ph), (pw, pw), (0, 0)))
    hp, wp = h + 2 * ph, w + 2 * pw
    wt = w_hwio.reshape(kh * kw, cin, cout)
    kern = functools.partial(_conv_tap_bn_relu_kernel, kh=kh, kw=kw)
    # TODO(synk): spatial row-tiling with halos (manual DMA, memory_space=pl.ANY)
    # for resolutions where a single padded image exceeds VMEM.
    return pl.pallas_call(
        kern,
        out_shape=jax.ShapeDtypeStruct((n, h, w, cout), x_nhwc.dtype),
        grid_spec=pltpu.PrefetchScalarGridSpec(
            num_scalar_prefetch=0,
            grid=(n,),
            in_specs=[
                pl.BlockSpec((1, hp, wp, cin), lambda b: (b, 0, 0, 0)),
                pl.BlockSpec((kh * kw, cin, cout), lambda b: (0, 0, 0)),
                pl.BlockSpec((1, cout), lambda b: (0, 0)),
                pl.BlockSpec((1, cout), lambda b: (0, 0)),
            ],
            out_specs=pl.BlockSpec((1, h, w, cout), lambda b: (b, 0, 0, 0)),
        ),
        compiler_params=pltpu.CompilerParams(
            dimension_semantics=("parallel",)),
    )(xp, wt,
      scale.reshape(1, cout).astype(jnp.float32),
      shift.reshape(1, cout).astype(jnp.float32))


# ---------------------------------------------------------------------------
# Kernel 3: fused 3x3 max-pool + 1x1 conv + BN + ReLU (pool never hits HBM)
# ---------------------------------------------------------------------------
def _maxpool_conv_bn_relu_kernel(xp_ref, w_ref, scale_ref, shift_ref, o_ref):
    _, _, _, cin = xp_ref.shape
    _, h, w, cout = o_ref.shape
    pooled = xp_ref[0, 0:h, 0:w, :]
    for dy in range(3):
        for dx in range(3):
            if dy == 0 and dx == 0:
                continue
            pooled = jnp.maximum(pooled, xp_ref[0, dy:dy + h, dx:dx + w, :])
    y = jnp.dot(pooled.reshape(h * w, cin).astype(jnp.bfloat16),
                w_ref[...].astype(jnp.bfloat16),
                preferred_element_type=jnp.float32)
    y = y * scale_ref[...] + shift_ref[...]
    o_ref[0] = jnp.maximum(y, 0.0).reshape(h, w, cout).astype(o_ref.dtype)


def maxpool_conv_bn_relu(x_nhwc, w_hwio, scale, shift):
    n, h, w, cin = x_nhwc.shape
    cout = w_hwio.shape[-1]
    # -inf padding is safe: every 3x3 window contains its real center element.
    xp = jnp.pad(x_nhwc, ((0, 0), (1, 1), (1, 1), (0, 0)),
                 constant_values=-jnp.inf)
    hp, wp = h + 2, w + 2
    return pl.pallas_call(
        _maxpool_conv_bn_relu_kernel,
        out_shape=jax.ShapeDtypeStruct((n, h, w, cout), x_nhwc.dtype),
        grid_spec=pltpu.PrefetchScalarGridSpec(
            num_scalar_prefetch=0,
            grid=(n,),
            in_specs=[
                pl.BlockSpec((1, hp, wp, cin), lambda b: (b, 0, 0, 0)),
                pl.BlockSpec((cin, cout), lambda b: (0, 0)),
                pl.BlockSpec((1, cout), lambda b: (0, 0)),
                pl.BlockSpec((1, cout), lambda b: (0, 0)),
            ],
            out_specs=pl.BlockSpec((1, h, w, cout), lambda b: (b, 0, 0, 0)),
        ),
        compiler_params=pltpu.CompilerParams(
            dimension_semantics=("parallel",)),
    )(xp, w_hwio.reshape(cin, cout),
      scale.reshape(1, cout).astype(jnp.float32),
      shift.reshape(1, cout).astype(jnp.float32))


# ---------------------------------------------------------------------------
# Parameter construction (deterministic, synthetic; BN eval-mode folded)
# ---------------------------------------------------------------------------
def make_conv_bn(key, kh, kw, cin, cout):
    k1, k2, k3, k4, k5, k6 = jax.random.split(key, 6)
    fan_in = kh * kw * cin
    w = jax.random.normal(k1, (kh, kw, cin, cout), jnp.float32) / jnp.sqrt(fan_in)
    b = 0.1 * jax.random.normal(k2, (cout,), jnp.float32)
    gamma = 1.0 + 0.1 * jax.random.normal(k3, (cout,), jnp.float32)
    beta = 0.1 * jax.random.normal(k4, (cout,), jnp.float32)
    r_mean = 0.1 * jax.random.normal(k5, (cout,), jnp.float32)
    r_var = 0.5 + jax.random.uniform(k6, (cout,), jnp.float32)
    eps = 1e-5
    scale = gamma / jnp.sqrt(r_var + eps)
    shift = beta + (b - r_mean) * scale
    return {"w_hwio": w, "scale": scale, "shift": shift}


def init_inception_params(key, c_in, c_red, c_out):
    keys = jax.random.split(key, 6)
    return {
        "1x1":     make_conv_bn(keys[0], 1, 1, c_in,          c_out["1x1"]),
        "3x3_red": make_conv_bn(keys[1], 1, 1, c_in,          c_red["3x3"]),
        "3x3":     make_conv_bn(keys[2], 3, 3, c_red["3x3"],  c_out["3x3"]),
        "5x5_red": make_conv_bn(keys[3], 1, 1, c_in,          c_red["5x5"]),
        "5x5":     make_conv_bn(keys[4], 5, 5, c_red["5x5"],  c_out["5x5"]),
        "max":     make_conv_bn(keys[5], 1, 1, c_in,          c_out["max"]),
    }


# ---------------------------------------------------------------------------
# InceptionBlock forward (NCHW in / NCHW out, matching PyTorch)
# ---------------------------------------------------------------------------
def inception_block(x_nchw, p):
    x = jnp.transpose(x_nchw, (0, 2, 3, 1))        # boundary NCHW -> NHWC
    n, h, w, cin = x.shape

    # Fuse the three 1x1 convs reading x: [1x1 branch | 3x3 reduce | 5x5 reduce]
    c1 = p["1x1"]["w_hwio"].shape[-1]
    c3r = p["3x3_red"]["w_hwio"].shape[-1]
    c5r = p["5x5_red"]["w_hwio"].shape[-1]
    w_cat = jnp.concatenate([p["1x1"]["w_hwio"].reshape(cin, c1),
                             p["3x3_red"]["w_hwio"].reshape(cin, c3r),
                             p["5x5_red"]["w_hwio"].reshape(cin, c5r)], axis=1)
    s_cat = jnp.concatenate([p["1x1"]["scale"], p["3x3_red"]["scale"],
                             p["5x5_red"]["scale"]])
    t_cat = jnp.concatenate([p["1x1"]["shift"], p["3x3_red"]["shift"],
                             p["5x5_red"]["shift"]])
    fused = matmul_bn_relu(x.reshape(n * h * w, cin), w_cat, s_cat, t_cat)
    fused = fused.reshape(n, h, w, c1 + c3r + c5r)

    b1 = fused[..., :c1]
    b3 = conv_bn_relu(fused[..., c1:c1 + c3r], **p["3x3"])
    b5 = conv_bn_relu(fused[..., c1 + c3r:], **p["5x5"])
    bm = maxpool_conv_bn_relu(x, **p["max"])

    y = jnp.concatenate([b1, b3, b5, bm], axis=-1)  # channel concat (NHWC)
    return jnp.transpose(y, (0, 3, 1, 2))           # boundary NHWC -> NCHW


if __name__ == "__main__":
    key = jax.random.PRNGKey(0)
    k_x, k_p = jax.random.split(key)

    N, C_IN, H, W = 2, 4, 16, 16
    c_red = {"3x3": 4, "5x5": 2}
    c_out = {"1x1": 4, "3x3": 8, "5x5": 4, "max": 4}

    x = jax.random.normal(k_x, (N, C_IN, H, W), dtype=jnp.float32)
    params = init_inception_params(k_p, C_IN, c_red, c_out)

    fwd = jax.jit(inception_block)
    y = jax.block_until_ready(fwd(x, params))

    total_c = c_out["1x1"] + c_out["3x3"] + c_out["5x5"] + c_out["max"]
    assert y.shape == (N, total_c, H, W), y.shape
    assert bool(jnp.all(jnp.isfinite(y)))
    assert bool(jnp.all(y >= 0.0))  # ReLU output
    print("KERNEL_OK")
</pallas_src>

<mosaic_0001>
module attributes {stable_mosaic.version = 11 : i64} {
  func.func @_matmul_bn_relu_kernel(%arg0: i32, %arg1: i32, %arg2: i32, %arg3: memref<256x4xf32, #tpu.memory_space<vmem>>, %arg4: memref<4x10xf32, #tpu.memory_space<vmem>>, %arg5: memref<1x10xf32, #tpu.memory_space<vmem>>, %arg6: memref<1x10xf32, #tpu.memory_space<vmem>>, %arg7: memref<256x10xf32, #tpu.memory_space<vmem>>, %arg8: memref<256x10xf32, #tpu.memory_space<vmem>>) attributes {dimension_semantics = [#tpu.dimension_semantics<parallel>, #tpu.dimension_semantics<parallel>, #tpu.dimension_semantics<arbitrary>], iteration_bounds = array<i64: 2, 1, 1>, scalar_prefetch = 0 : i64, scratch_operands = 1 : i64, tpu.core_type = #tpu.core_type<tc>, window_params = [{transform_indices = @transform_0, window_bounds = array<i64: 256, 4>}, {transform_indices = @transform_1, window_bounds = array<i64: 4, 10>}, {transform_indices = @transform_2, window_bounds = array<i64: 1, 10>}, {transform_indices = @transform_3, window_bounds = array<i64: 1, 10>}, {transform_indices = @transform_4, window_bounds = array<i64: 256, 10>}]} {
    %c0_i32 = arith.constant 0 : i32
    %0 = arith.cmpi eq, %arg2, %c0_i32 : i32
    %1 = arith.extui %0 : i1 to i32
    %c0_i32_0 = arith.constant 0 : i32
    %2 = arith.cmpi ne, %1, %c0_i32_0 : i32
    scf.if %2 {
      %cst_10 = arith.constant 0.000000e+00 : f32
      %14 = vector.broadcast %cst_10 : f32 to vector<256x10xf32>
      %c0_11 = arith.constant 0 : index
      %c0_12 = arith.constant 0 : index
      %15 = vector.load %arg8[%c0_11, %c0_12] : memref<256x10xf32, #tpu.memory_space<vmem>>, vector<256x10xf32>
      tpu.vector_store %arg8[%c0_11, %c0_12], %14 {strides = array<i32>} : memref<256x10xf32, #tpu.memory_space<vmem>>, vector<256x10xf32>,
    } else {
    }
    %c0 = arith.constant 0 : index
    %c0_1 = arith.constant 0 : index
    %3 = vector.load %arg8[%c0, %c0_1] : memref<256x10xf32, #tpu.memory_space<vmem>>, vector<256x10xf32>
    %c0_2 = arith.constant 0 : index
    %c0_3 = arith.constant 0 : index
    %4 = vector.load %arg3[%c0_2, %c0_3] : memref<256x4xf32, #tpu.memory_space<vmem>>, vector<256x4xf32>
    %5 = arith.truncf %4 : vector<256x4xf32> to vector<256x4xbf16>
    %c0_4 = arith.constant 0 : index
    %c0_5 = arith.constant 0 : index
    %6 = vector.load %arg4[%c0_4, %c0_5] : memref<4x10xf32, #tpu.memory_space<vmem>>, vector<4x10xf32>
    %7 = arith.truncf %6 : vector<4x10xf32> to vector<4x10xbf16>
    %cst = arith.constant dense<0.000000e+00> : vector<256x10xf32>
    %8 = tpu.matmul %5, %7, %cst {dimension_numbers = #tpu.dot_dimension_numbers<[1], [0], [0], [1], [0, 0, 1, 1], [], []>} : vector<256x4xbf16>, vector<4x10xbf16>, vector<256x10xf32> -> vector<256x10xf32>
    %9 = arith.addf %3, %8 : vector<256x10xf32>
    %c0_6 = arith.constant 0 : index
    %c0_7 = arith.constant 0 : index
    %10 = vector.load %arg8[%c0_6, %c0_7] : memref<256x10xf32, #tpu.memory_space<vmem>>, vector<256x10xf32>
    tpu.vector_store %arg8[%c0_6, %c0_7], %9 {strides = array<i32>} : memref<256x10xf32, #tpu.memory_space<vmem>>, vector<256x10xf32>,
    %c0_i32_8 = arith.constant 0 : i32
    %11 = arith.cmpi eq, %arg2, %c0_i32_8 : i32
    %12 = arith.extui %11 : i1 to i32
    %c0_i32_9 = arith.constant 0 : i32
    %13 = arith.cmpi ne, %12, %c0_i32_9 : i32
    scf.if %13 {
      %c0_10 = arith.constant 0 : index
      %c0_11 = arith.constant 0 : index
      %14 = vector.load %arg8[%c0_10, %c0_11] : memref<256x10xf32, #tpu.memory_space<vmem>>, vector<256x10xf32>
      %c0_12 = arith.constant 0 : index
      %c0_13 = arith.constant 0 : index
      %15 = vector.load %arg5[%c0_12, %c0_13] : memref<1x10xf32, #tpu.memory_space<vmem>>, vector<1x10xf32>
      %16 = vector.broadcast %15 : vector<1x10xf32> to vector<256x10xf32>
      %17 = arith.mulf %14, %16 : vector<256x10xf32>
      %c0_14 = arith.constant 0 : index
      %c0_15 = arith.constant 0 : index
      %18 = vector.load %arg6[%c0_14, %c0_15] : memref<1x10xf32, #tpu.memory_space<vmem>>, vector<1x10xf32>
      %19 = vector.broadcast %18 : vector<1x10xf32> to vector<256x10xf32>
      %20 = arith.addf %17, %19 : vector<256x10xf32>
      %cst_16 = arith.constant 0.000000e+00 : f32
      %21 = vector.broadcast %cst_16 : f32 to vector<256x10xf32>
      %22 = arith.maximumf %20, %21 : vector<256x10xf32>
      %c0_17 = arith.constant 0 : index
      %c0_18 = arith.constant 0 : index
      %23 = vector.load %arg7[%c0_17, %c0_18] : memref<256x10xf32, #tpu.memory_space<vmem>>, vector<256x10xf32>
      tpu.vector_store %arg7[%c0_17, %c0_18], %22 {strides = array<i32>} : memref<256x10xf32, #tpu.memory_space<vmem>>, vector<256x10xf32>,
    } else {
    }
    return
  }
  func.func @transform_0(%arg0: i32, %arg1: i32, %arg2: i32) -> (i32, i32) {
    %c0_i32 = arith.constant 0 : i32
    return %arg0, %arg2 : i32, i32
  }
  func.func @transform_1(%arg0: i32, %arg1: i32, %arg2: i32) -> (i32, i32) {
    %c0_i32 = arith.constant 0 : i32
    return %arg2, %arg1 : i32, i32
  }
  func.func @transform_2(%arg0: i32, %arg1: i32, %arg2: i32) -> (i32, i32) {
    %c0_i32 = arith.constant 0 : i32
    %c0_i32_0 = arith.constant 0 : i32
    return %c0_i32, %arg1 : i32, i32
  }
  func.func @transform_3(%arg0: i32, %arg1: i32, %arg2: i32) -> (i32, i32) {
    %c0_i32 = arith.constant 0 : i32
    %c0_i32_0 = arith.constant 0 : i32
    return %c0_i32, %arg1 : i32, i32
  }
  func.func @transform_4(%arg0: i32, %arg1: i32, %arg2: i32) -> (i32, i32) {
    %c0_i32 = arith.constant 0 : i32
    return %arg0, %arg1 : i32, i32
  }
}

module attributes {stable_mosaic.version = 11 : i64} {
  func.func @_conv_tap_bn_relu_kernel(%arg0: i32, %arg1: memref<1x20x20x2xf32, #tpu.memory_space<vmem>>, %arg2: memref<25x2x4xf32, #tpu.memory_space<vmem>>, %arg3: memref<1x4xf32, #tpu.memory_space<vmem>>, %arg4: memref<1x4xf32, #tpu.memory_space<vmem>>, %arg5: memref<1x16x16x4xf32, #tpu.memory_space<vmem>>) attributes {dimension_semantics = [#tpu.dimension_semantics<parallel>], iteration_bounds = array<i64: 2>, scalar_prefetch = 0 : i64, scratch_operands = 0 : i64, tpu.core_type = #tpu.core_type<tc>, window_params = [{transform_indices = @transform_0, window_bounds = array<i64: 1, 20, 20, 2>}, {pipeline_mode = #tpu.pipeline_mode<synchronous>, transform_indices = @transform_1, window_bounds = array<i64: 25, 2, 4>}, {pipeline_mode = #tpu.pipeline_mode<synchronous>, transform_indices = @transform_2, window_bounds = array<i64: 1, 4>}, {pipeline_mode = #tpu.pipeline_mode<synchronous>, transform_indices = @transform_3, window_bounds = array<i64: 1, 4>}, {transform_indices = @transform_4, window_bounds = array<i64: 1, 16, 16, 4>}]} {
    %cst = arith.constant 0.000000e+00 : f32
    %0 = vector.broadcast %cst : f32 to vector<256x4xf32>
    %c0 = arith.constant 0 : index
    %c0_0 = arith.constant 0 : index
    %c0_1 = arith.constant 0 : index
    %c0_2 = arith.constant 0 : index
    %1 = vector.load %arg1[%c0, %c0_0, %c0_1, %c0_2] : memref<1x20x20x2xf32, #tpu.memory_space<vmem>>, vector<1x16x16x2xf32>
    %2 = vector.shape_cast %1 : vector<1x16x16x2xf32> to vector<16x16x2xf32>
    %3 = vector.shape_cast %2 : vector<16x16x2xf32> to vector<256x2xf32>
    %4 = arith.truncf %3 : vector<256x2xf32> to vector<256x2xbf16>
    %c0_3 = arith.constant 0 : index
    %c0_4 = arith.constant 0 : index
    %c0_5 = arith.constant 0 : index
    %5 = vector.load %arg2[%c0_3, %c0_4, %c0_5] : memref<25x2x4xf32, #tpu.memory_space<vmem>>, vector<1x2x4xf32>
    %6 = vector.shape_cast %5 : vector<1x2x4xf32> to vector<2x4xf32>
    %7 = arith.truncf %6 : vector<2x4xf32> to vector<2x4xbf16>
    %cst_6 = arith.constant dense<0.000000e+00> : vector<256x4xf32>
    %8 = tpu.matmul %4, %7, %cst_6 {dimension_numbers = #tpu.dot_dimension_numbers<[1], [0], [0], [1], [0, 0, 1, 1], [], []>} : vector<256x2xbf16>, vector<2x4xbf16>, vector<256x4xf32> -> vector<256x4xf32>
    %9 = arith.addf %0, %8 : vector<256x4xf32>
    %c0_7 = arith.constant 0 : index
    %c0_8 = arith.constant 0 : index
    %c1 = arith.constant 1 : index
    %c0_9 = arith.constant 0 : index
    %10 = vector.load %arg1[%c0_7, %c0_8, %c1, %c0_9] : memref<1x20x20x2xf32, #tpu.memory_space<vmem>>, vector<1x16x16x2xf32>
    %11 = vector.shape_cast %10 : vector<1x16x16x2xf32> to vector<16x16x2xf32>
    %12 = vector.shape_cast %11 : vector<16x16x2xf32> to vector<256x2xf32>
    %13 = arith.truncf %12 : vector<256x2xf32> to vector<256x2xbf16>
    %c1_10 = arith.constant 1 : index
    %c0_11 = arith.constant 0 : index
    %c0_12 = arith.constant 0 : index
    %14 = vector.load %arg2[%c1_10, %c0_11, %c0_12] : memref<25x2x4xf32, #tpu.memory_space<vmem>>, vector<1x2x4xf32>
    %15 = vector.shape_cast %14 : vector<1x2x4xf32> to vector<2x4xf32>
    %16 = arith.truncf %15 : vector<2x4xf32> to vector<2x4xbf16>
    %cst_13 = arith.constant dense<0.000000e+00> : vector<256x4xf32>
    %17 = tpu.matmul %13, %16, %cst_13 {dimension_numbers = #tpu.dot_dimension_numbers<[1], [0], [0], [1], [0, 0, 1, 1], [], []>} : vector<256x2xbf16>, vector<2x4xbf16>, vector<256x4xf32> -> vector<256x4xf32>
    %18 = arith.addf %9, %17 : vector<256x4xf32>
    %c0_14 = arith.constant 0 : index
    %c0_15 = arith.constant 0 : index
    %c2 = arith.constant 2 : index
    %c0_16 = arith.constant 0 : index
    %19 = vector.load %arg1[%c0_14, %c0_15, %c2, %c0_16] : memref<1x20x20x2xf32, #tpu.memory_space<vmem>>, vector<1x16x16x2xf32>
    %20 = vector.shape_cast %19 : vector<1x16x16x2xf32> to vector<16x16x2xf32>
    %21 = vector.shape_cast %20 : vector<16x16x2xf32> to vector<256x2xf32>
    %22 = arith.truncf %21 : vector<256x2xf32> to vector<256x2xbf16>
    %c2_17 = arith.constant 2 : index
    %c0_18 = arith.constant 0 : index
    %c0_19 = arith.constant 0 : index
    %23 = vector.load %arg2[%c2_17, %c0_18, %c0_19] : memref<25x2x4xf32, #tpu.memory_space<vmem>>, vector<1x2x4xf32>
    %24 = vector.shape_cast %23 : vector<1x2x4xf32> to vector<2x4xf32>
    %25 = arith.truncf %24 : vector<2x4xf32> to vector<2x4xbf16>
    %cst_20 = arith.constant dense<0.000000e+00> : vector<256x4xf32>
    %26 = tpu.matmul %22, %25, %cst_20 {dimension_numbers = #tpu.dot_dimension_numbers<[1], [0], [0], [1], [0, 0, 1, 1], [], []>} : vector<256x2xbf16>, vector<2x4xbf16>, vector<256x4xf32> -> vector<256x4xf32>
    %27 = arith.addf %18, %26 : vector<256x4xf32>
    %c0_21 = arith.constant 0 : index
    %c0_22 = arith.constant 0 : index
    %c3 = arith.constant 3 : index
    %c0_23 = arith.constant 0 : index
    %28 = vector.load %arg1[%c0_21, %c0_22, %c3, %c0_23] : memref<1x20x20x2xf32, #tpu.memory_space<vmem>>, vector<1x16x16x2xf32>
    %29 = vector.shape_cast %28 : vector<1x16x16x2xf32> to vector<16x16x2xf32>
    %30 = vector.shape_cast %29 : vector<16x16x2xf32> to vector<256x2xf32>
    %31 = arith.truncf %30 : vector<256x2xf32> to vector<256x2xbf16>
    %c3_24 = arith.constant 3 : index
    %c0_25 = arith.constant 0 : index
    %c0_26 = arith.constant 0 : index
    %32 = vector.load %arg2[%c3_24, %c0_25, %c0_26] : memref<25x2x4xf32, #tpu.memory_space<vmem>>, vector<1x2x4xf32>
    %33 = vector.shape_cast %32 : vector<1x2x4xf32> to vector<2x4xf32>
    %34 = arith.truncf %33 : vector<2x4xf32> to vector<2x4xbf16>
    %cst_27 = arith.constant dense<0.000000e+00> : vector<256x4xf32>
    %35 = tpu.matmul %31, %34, %cst_27 {dimension_numbers = #tpu.dot_dimension_numbers<[1], [0], [0], [1], [0, 0, 1, 1], [], []>} : vector<256x2xbf16>, vector<2x4xbf16>, vector<256x4xf32> -> vector<256x4xf32>
    %36 = arith.addf %27, %35 : vector<256x4xf32>
    %c0_28 = arith.constant 0 : index
    %c0_29 = arith.constant 0 : index
    %c4 = arith.constant 4 : index
    %c0_30 = arith.constant 0 : index
    %37 = vector.load %arg1[%c0_28, %c0_29, %c4, %c0_30] : memref<1x20x20x2xf32, #tpu.memory_space<vmem>>, vector<1x16x16x2xf32>
    %38 = vector.shape_cast %37 : vector<1x16x16x2xf32> to vector<16x16x2xf32>
    %39 = vector.shape_cast %38 : vector<16x16x2xf32> to vector<256x2xf32>
    %40 = arith.truncf %39 : vector<256x2xf32> to vector<256x2xbf16>
    %c4_31 = arith.constant 4 : index
    %c0_32 = arith.constant 0 : index
    %c0_33 = arith.constant 0 : index
    %41 = vector.load %arg2[%c4_31, %c0_32, %c0_33] : memref<25x2x4xf32, #tpu.memory_space<vmem>>, vector<1x2x4xf32>
    %42 = vector.shape_cast %41 : vector<1x2x4xf32> to vector<2x4xf32>
    %43 = arith.truncf %42 : vector<2x4xf32> to vector<2x4xbf16>
    %cst_34 = arith.constant dense<0.000000e+00> : vector<256x4xf32>
    %44 = tpu.matmul %40, %43, %cst_34 {dimension_numbers = #tpu.dot_dimension_numbers<[1], [0], [0], [1], [0, 0, 1, 1], [], []>} : vector<256x2xbf16>, vector<2x4xbf16>, vector<256x4xf32> -> vector<256x4xf32>
    %45 = arith.addf %36, %44 : vector<256x4xf32>
    %c0_35 = arith.constant 0 : index
    %c1_36 = arith.constant 1 : index
    %c0_37 = arith.constant 0 : index
    %c0_38 = arith.constant 0 : index
    %46 = vector.load %arg1[%c0_35, %c1_36, %c0_37, %c0_38] : memref<1x20x20x2xf32, #tpu.memory_space<vmem>>, vector<1x16x16x2xf32>
    %47 = vector.shape_cast %46 : vector<1x16x16x2xf32> to vector<16x16x2xf32>
    %48 = vector.shape_cast %47 : vector<16x16x2xf32> to vector<256x2xf32>
    %49 = arith.truncf %48 : vector<256x2xf32> to vector<256x2xbf16>
    %c5 = arith.constant 5 : index
    %c0_39 = arith.constant 0 : index
    %c0_40 = arith.constant 0 : index
    %50 = vector.load %arg2[%c5, %c0_39, %c0_40] : memref<25x2x4xf32, #tpu.memory_space<vmem>>, vector<1x2x4xf32>
    %51 = vector.shape_cast %50 : vector<1x2x4xf32> to vector<2x4xf32>
    %52 = arith.truncf %51 : vector<2x4xf32> to vector<2x4xbf16>
    %cst_41 = arith.constant dense<0.000000e+00> : vector<256x4xf32>
    %53 = tpu.matmul %49, %52, %cst_41 {dimension_numbers = #tpu.dot_dimension_numbers<[1], [0], [0], [1], [0, 0, 1, 1], [], []>} : vector<256x2xbf16>, vector<2x4xbf16>, vector<256x4xf32> -> vector<256x4xf32>
    %54 = arith.addf %45, %53 : vector<256x4xf32>
    %c0_42 = arith.constant 0 : index
    %c1_43 = arith.constant 1 : index
    %c1_44 = arith.constant 1 : index
    %c0_45 = arith.constant 0 : index
    %55 = vector.load %arg1[%c0_42, %c1_43, %c1_44, %c0_45] : memref<1x20x20x2xf32, #tpu.memory_space<vmem>>, vector<1x16x16x2xf32>
    %56 = vector.shape_cast %55 : vector<1x16x16x2xf32> to vector<16x16x2xf32>
    %57 = vector.shape_cast %56 : vector<16x16x2xf32> to vector<256x2xf32>
    %58 = arith.truncf %57 : vector<256x2xf32> to vector<256x2xbf16>
    %c6 = arith.constant 6 : index
    %c0_46 = arith.constant 0 : index
    %c0_47 = arith.constant 0 : index
    %59 = vector.load %arg2[%c6, %c0_46, %c0_47] : memref<25x2x4xf32, #tpu.memory_space<vmem>>, vector<1x2x4xf32>
    %60 = vector.shape_cast %59 : vector<1x2x4xf32> to vector<2x4xf32>
    %61 = arith.truncf %60 : vector<2x4xf32> to vector<2x4xbf16>
    %cst_48 = arith.constant dense<0.000000e+00> : vector<256x4xf32>
    %62 = tpu.matmul %58, %61, %cst_48 {dimension_numbers = #tpu.dot_dimension_numbers<[1], [0], [0], [1], [0, 0, 1, 1], [], []>} : vector<256x2xbf16>, vector<2x4xbf16>, vector<256x4xf32> -> vector<256x4xf32>
    %63 = arith.addf %54, %62 : vector<256x4xf32>
    %c0_49 = arith.constant 0 : index
    %c1_50 = arith.constant 1 : index
    %c2_51 = arith.constant 2 : index
    %c0_52 = arith.constant 0 : index
    %64 = vector.load %arg1[%c0_49, %c1_50, %c2_51, %c0_52] : memref<1x20x20x2xf32, #tpu.memory_space<vmem>>, vector<1x16x16x2xf32>
    %65 = vector.shape_cast %64 : vector<1x16x16x2xf32> to vector<16x16x2xf32>
    %66 = vector.shape_cast %65 : vector<16x16x2xf32> to vector<256x2xf32>
    %67 = arith.truncf %66 : vector<256x2xf32> to vector<256x2xbf16>
    %c7 = arith.constant 7 : index
    %c0_53 = arith.constant 0 : index
    %c0_54 = arith.constant 0 : index
    %68 = vector.load %arg2[%c7, %c0_53, %c0_54] : memref<25x2x4xf32, #tpu.memory_space<vmem>>, vector<1x2x4xf32>
    %69 = vector.shape_cast %68 : vector<1x2x4xf32> to vector<2x4xf32>
    %70 = arith.truncf %69 : vector<2x4xf32> to vector<2x4xbf16>
    %cst_55 = arith.constant dense<0.000000e+00> : vector<256x4xf32>
    %71 = tpu.matmul %67, %70, %cst_55 {dimension_numbers = #tpu.dot_dimension_numbers<[1], [0], [0], [1], [0, 0, 1, 1], [], []>} : vector<256x2xbf16>, vector<2x4xbf16>, vector<256x4xf32> -> vector<256x4xf32>
    %72 = arith.addf %63, %71 : vector<256x4xf32>
    %c0_56 = arith.constant 0 : index
    %c1_57 = arith.constant 1 : index
    %c3_58 = arith.constant 3 : index
    %c0_59 = arith.constant 0 : index
    %73 = vector.load %arg1[%c0_56, %c1_57, %c3_58, %c0_59] : memref<1x20x20x2xf32, #tpu.memory_space<vmem>>, vector<1x16x16x2xf32>
    %74 = vector.shape_cast %73 : vector<1x16x16x2xf32> to vector<16x16x2xf32>
    %75 = vector.shape_cast %74 : vector<16x16x2xf32> to vector<256x2xf32>
    %76 = arith.truncf %75 : vector<256x2xf32> to vector<256x2xbf16>
    %c8 = arith.constant 8 : index
    %c0_60 = arith.constant 0 : index
    %c0_61 = arith.constant 0 : index
    %77 = vector.load %arg2[%c8, %c0_60, %c0_61] : memref<25x2x4xf32, #tpu.memory_space<vmem>>, vector<1x2x4xf32>
    %78 = vector.shape_cast %77 : vector<1x2x4xf32> to vector<2x4xf32>
    %79 = arith.truncf %78 : vector<2x4xf32> to vector<2x4xbf16>
    %cst_62 = arith.constant dense<0.000000e+00> : vector<256x4xf32>
    %80 = tpu.matmul %76, %79, %cst_62 {dimension_numbers = #tpu.dot_dimension_numbers<[1], [0], [0], [1], [0, 0, 1, 1], [], []>} : vector<256x2xbf16>, vector<2x4xbf16>, vector<256x4xf32> -> vector<256x4xf32>
    %81 = arith.addf %72, %80 : vector<256x4xf32>
    %c0_63 = arith.constant 0 : index
    %c1_64 = arith.constant 1 : index
    %c4_65 = arith.constant 4 : index
    %c0_66 = arith.constant 0 : index
    %82 = vector.load %arg1[%c0_63, %c1_64, %c4_65, %c0_66] : memref<1x20x20x2xf32, #tpu.memory_space<vmem>>, vector<1x16x16x2xf32>
    %83 = vector.shape_cast %82 : vector<1x16x16x2xf32> to vector<16x16x2xf32>
    %84 = vector.shape_cast %83 : vector<16x16x2xf32> to vector<256x2xf32>
    %85 = arith.truncf %84 : vector<256x2xf32> to vector<256x2xbf16>
    %c9 = arith.constant 9 : index
    %c0_67 = arith.constant 0 : index
    %c0_68 = arith.constant 0 : index
    %86 = vector.load %arg2[%c9, %c0_67, %c0_68] : memref<25x2x4xf32, #tpu.memory_space<vmem>>, vector<1x2x4xf32>
    %87 = vector.shape_cast %86 : vector<1x2x4xf32> to vector<2x4xf32>
    %88 = arith.truncf %87 : vector<2x4xf32> to vector<2x4xbf16>
    %cst_69 = arith.constant dense<0.000000e+00> : vector<256x4xf32>
    %89 = tpu.matmul %85, %88, %cst_69 {dimension_numbers = #tpu.dot_dimension_numbers<[1], [0], [0], [1], [0, 0, 1, 1], [], []>} : vector<256x2xbf16>, vector<2x4xbf16>, vector<256x4xf32> -> vector<256x4xf32>
    %90 = arith.addf %81, %89 : vector<256x4xf32>
    %c0_70 = arith.constant 0 : index
    %c2_71 = arith.constant 2 : index
    %c0_72 = arith.constant 0 : index
    %c0_73 = arith.constant 0 : index
    %91 = vector.load %arg1[%c0_70, %c2_71, %c0_72, %c0_73] : memref<1x20x20x2xf32, #tpu.memory_space<vmem>>, vector<1x16x16x2xf32>
    %92 = vector.shape_cast %91 : vector<1x16x16x2xf32> to vector<16x16x2xf32>
    %93 = vector.shape_cast %92 : vector<16x16x2xf32> to vector<256x2xf32>
    %94 = arith.truncf %93 : vector<256x2xf32> to vector<256x2xbf16>
    %c10 = arith.constant 10 : index
    %c0_74 = arith.constant 0 : index
    %c0_75 = arith.constant 0 : index
    %95 = vector.load %arg2[%c10, %c0_74, %c0_75] : memref<25x2x4xf32, #tpu.memory_space<vmem>>, vector<1x2x4xf32>
    %96 = vector.shape_cast %95 : vector<1x2x4xf32> to vector<2x4xf32>
    %97 = arith.truncf %96 : vector<2x4xf32> to vector<2x4xbf16>
    %cst_76 = arith.constant dense<0.000000e+00> : vector<256x4xf32>
    %98 = tpu.matmul %94, %97, %cst_76 {dimension_numbers = #tpu.dot_dimension_numbers<[1], [0], [0], [1], [0, 0, 1, 1], [], []>} : vector<256x2xbf16>, vector<2x4xbf16>, vector<256x4xf32> -> vector<256x4xf32>
    %99 = arith.addf %90, %98 : vector<256x4xf32>
    %c0_77 = arith.constant 0 : index
    %c2_78 = arith.constant 2 : index
    %c1_79 = arith.constant 1 : index
    %c0_80 = arith.constant 0 : index
    %100 = vector.load %arg1[%c0_77, %c2_78, %c1_79, %c0_80] : memref<1x20x20x2xf32, #tpu.memory_space<vmem>>, vector<1x16x16x2xf32>
    %101 = vector.shape_cast %100 : vector<1x16x16x2xf32> to vector<16x16x2xf32>
    %102 = vector.shape_cast %101 : vector<16x16x2xf32> to vector<256x2xf32>
    %103 = arith.truncf %102 : vector<256x2xf32> to vector<256x2xbf16>
    %c11 = arith.constant 11 : index
    %c0_81 = arith.constant 0 : index
    %c0_82 = arith.constant 0 : index
    %104 = vector.load %arg2[%c11, %c0_81, %c0_82] : memref<25x2x4xf32, #tpu.memory_space<vmem>>, vector<1x2x4xf32>
    %105 = vector.shape_cast %104 : vector<1x2x4xf32> to vector<2x4xf32>
    %106 = arith.truncf %105 : vector<2x4xf32> to vector<2x4xbf16>
    %cst_83 = arith.constant dense<0.000000e+00> : vector<256x4xf32>
    %107 = tpu.matmul %103, %106, %cst_83 {dimension_numbers = #tpu.dot_dimension_numbers<[1], [0], [0], [1], [0, 0, 1, 1], [], []>} : vector<256x2xbf16>, vector<2x4xbf16>, vector<256x4xf32> -> vector<256x4xf32>
    %108 = arith.addf %99, %107 : vector<256x4xf32>
    %c0_84 = arith.constant 0 : index
    %c2_85 = arith.constant 2 : index
    %c2_86 = arith.constant 2 : index
    %c0_87 = arith.constant 0 : index
    %109 = vector.load %arg1[%c0_84, %c2_85, %c2_86, %c0_87] : memref<1x20x20x2xf32, #tpu.memory_space<vmem>>, vector<1x16x16x2xf32>
    %110 = vector.shape_cast %109 : vector<1x16x16x2xf32> to vector<16x16x2xf32>
    %111 = vector.shape_cast %110 : vector<16x16x2xf32> to vector<256x2xf32>
    %112 = arith.truncf %111 : vector<256x2xf32> to vector<256x2xbf16>
    %c12 = arith.constant 12 : index
    %c0_88 = arith.constant 0 : index
    %c0_89 = arith.constant 0 : index
    %113 = vector.load %arg2[%c12, %c0_88, %c0_89] : memref<25x2x4xf32, #tpu.memory_space<vmem>>, vector<1x2x4xf32>
    %114 = vector.shape_cast %113 : vector<1x2x4xf32> to vector<2x4xf32>
    %115 = arith.truncf %114 : vector<2x4xf32> to vector<2x4xbf16>
    %cst_90 = arith.constant dense<0.000000e+00> : vector<256x4xf32>
    %116 = tpu.matmul %112, %115, %cst_90 {dimension_numbers = #tpu.dot_dimension_numbers<[1], [0], [0], [1], [0, 0, 1, 1], [], []>} : vector<256x2xbf16>, vector<2x4xbf16>, vector<256x4xf32> -> vector<256x4xf32>
    %117 = arith.addf %108, %116 : vector<256x4xf32>
    %c0_91 = arith.constant 0 : index
    %c2_92 = arith.constant 2 : index
    %c3_93 = arith.constant 3 : index
    %c0_94 = arith.constant 0 : index
    %118 = vector.load %arg1[%c0_91, %c2_92, %c3_93, %c0_94] : memref<1x20x20x2xf32, #tpu.memory_space<vmem>>, vector<1x16x16x2xf32>
    %119 = vector.shape_cast %118 : vector<1x16x16x2xf32> to vector<16x16x2xf32>
    %120 = vector.shape_cast %119 : vector<16x16x2xf32> to vector<256x2xf32>
    %121 = arith.truncf %120 : vector<256x2xf32> to vector<256x2xbf16>
    %c13 = arith.constant 13 : index
    %c0_95 = arith.constant 0 : index
    %c0_96 = arith.constant 0 : index
    %122 = vector.load %arg2[%c13, %c0_95, %c0_96] : memref<25x2x4xf32, #tpu.memory_space<vmem>>, vector<1x2x4xf32>
    %123 = vector.shape_cast %122 : vector<1x2x4xf32> to vector<2x4xf32>
    %124 = arith.truncf %123 : vector<2x4xf32> to vector<2x4xbf16>
    %cst_97 = arith.constant dense<0.000000e+00> : vector<256x4xf32>
    %125 = tpu.matmul %121, %124, %cst_97 {dimension_numbers = #tpu.dot_dimension_numbers<[1], [0], [0], [1], [0, 0, 1, 1], [], []>} : vector<256x2xbf16>, vector<2x4xbf16>, vector<256x4xf32> -> vector<256x4xf32>
    %126 = arith.addf %117, %125 : vector<256x4xf32>
    %c0_98 = arith.constant 0 : index
    %c2_99 = arith.constant 2 : index
    %c4_100 = arith.constant 4 : index
    %c0_101 = arith.constant 0 : index
    %127 = vector.load %arg1[%c0_98, %c2_99, %c4_100, %c0_101] : memref<1x20x20x2xf32, #tpu.memory_space<vmem>>, vector<1x16x16x2xf32>
    %128 = vector.shape_cast %127 : vector<1x16x16x2xf32> to vector<16x16x2xf32>
    %129 = vector.shape_cast %128 : vector<16x16x2xf32> to vector<256x2xf32>
    %130 = arith.truncf %129 : vector<256x2xf32> to vector<256x2xbf16>
    %c14 = arith.constant 14 : index
    %c0_102 = arith.constant 0 : index
    %c0_103 = arith.constant 0 : index
    %131 = vector.load %arg2[%c14, %c0_102, %c0_103] : memref<25x2x4xf32, #tpu.memory_space<vmem>>, vector<1x2x4xf32>
    %132 = vector.shape_cast %131 : vector<1x2x4xf32> to vector<2x4xf32>
    %133 = arith.truncf %132 : vector<2x4xf32> to vector<2x4xbf16>
    %cst_104 = arith.constant dense<0.000000e+00> : vector<256x4xf32>
    %134 = tpu.matmul %130, %133, %cst_104 {dimension_numbers = #tpu.dot_dimension_numbers<[1], [0], [0], [1], [0, 0, 1, 1], [], []>} : vector<256x2xbf16>, vector<2x4xbf16>, vector<256x4xf32> -> vector<256x4xf32>
    %135 = arith.addf %126, %134 : vector<256x4xf32>
    %c0_105 = arith.constant 0 : index
    %c3_106 = arith.constant 3 : index
    %c0_107 = arith.constant 0 : index
    %c0_108 = arith.constant 0 : index
    %136 = vector.load %arg1[%c0_105, %c3_106, %c0_107, %c0_108] : memref<1x20x20x2xf32, #tpu.memory_space<vmem>>, vector<1x16x16x2xf32>
    %137 = vector.shape_cast %136 : vector<1x16x16x2xf32> to vector<16x16x2xf32>
    %138 = vector.shape_cast %137 : vector<16x16x2xf32> to vector<256x2xf32>
    %139 = arith.truncf %138 : vector<256x2xf32> to vector<256x2xbf16>
    %c15 = arith.constant 15 : index
    %c0_109 = arith.constant 0 : index
    %c0_110 = arith.constant 0 : index
    %140 = vector.load %arg2[%c15, %c0_109, %c0_110] : memref<25x2x4xf32, #tpu.memory_space<vmem>>, vector<1x2x4xf32>
    %141 = vector.shape_cast %140 : vector<1x2x4xf32> to vector<2x4xf32>
    %142 = arith.truncf %141 : vector<2x4xf32> to vector<2x4xbf16>
    %cst_111 = arith.constant dense<0.000000e+00> : vector<256x4xf32>
    %143 = tpu.matmul %139, %142, %cst_111 {dimension_numbers = #tpu.dot_dimension_numbers<[1], [0], [0], [1], [0, 0, 1, 1], [], []>} : vector<256x2xbf16>, vector<2x4xbf16>, vector<256x4xf32> -> vector<256x4xf32>
    %144 = arith.addf %135, %143 : vector<256x4xf32>
    %c0_112 = arith.constant 0 : index
    %c3_113 = arith.constant 3 : index
    %c1_114 = arith.constant 1 : index
    %c0_115 = arith.constant 0 : index
    %145 = vector.load %arg1[%c0_112, %c3_113, %c1_114, %c0_115] : memref<1x20x20x2xf32, #tpu.memory_space<vmem>>, vector<1x16x16x2xf32>
    %146 = vector.shape_cast %145 : vector<1x16x16x2xf32> to vector<16x16x2xf32>
    %147 = vector.shape_cast %146 : vector<16x16x2xf32> to vector<256x2xf32>
    %148 = arith.truncf %147 : vector<256x2xf32> to vector<256x2xbf16>
    %c16 = arith.constant 16 : index
    %c0_116 = arith.constant 0 : index
    %c0_117 = arith.constant 0 : index
    %149 = vector.load %arg2[%c16, %c0_116, %c0_117] : memref<25x2x4xf32, #tpu.memory_space<vmem>>, vector<1x2x4xf32>
    %150 = vector.shape_cast %149 : vector<1x2x4xf32> to vector<2x4xf32>
    %151 = arith.truncf %150 : vector<2x4xf32> to vector<2x4xbf16>
    %cst_118 = arith.constant dense<0.000000e+00> : vector<256x4xf32>
    %152 = tpu.matmul %148, %151, %cst_118 {dimension_numbers = #tpu.dot_dimension_numbers<[1], [0], [0], [1], [0, 0, 1, 1], [], []>} : vector<256x2xbf16>, vector<2x4xbf16>, vector<256x4xf32> -> vector<256x4xf32>
    %153 = arith.addf %144, %152 : vector<256x4xf32>
    %c0_119 = arith.constant 0 : index
    %c3_120 = arith.constant 3 : index
    %c2_121 = arith.constant 2 : index
    %c0_122 = arith.constant 0 : index
    %154 = vector.load %arg1[%c0_119, %c3_120, %c2_121, %c0_122] : memref<1x20x20x2xf32, #tpu.memory_space<vmem>>, vector<1x16x16x2xf32>
    %155 = vector.shape_cast %154 : vector<1x16x16x2xf32> to vector<16x16x2xf32>
    %156 = vector.shape_cast %155 : vector<16x16x2xf32> to vector<256x2xf32>
    %157 = arith.truncf %156 : vector<256x2xf32> to vector<256x2xbf16>
    %c17 = arith.constant 17 : index
    %c0_123 = arith.constant 0 : index
    %c0_124 = arith.constant 0 : index
    %158 = vector.load %arg2[%c17, %c0_123, %c0_124] : memref<25x2x4xf32, #tpu.memory_space<vmem>>, vector<1x2x4xf32>
    %159 = vector.shape_cast %158 : vector<1x2x4xf32> to vector<2x4xf32>
    %160 = arith.truncf %159 : vector<2x4xf32> to vector<2x4xbf16>
    %cst_125 = arith.constant dense<0.000000e+00> : vector<256x4xf32>
    %161 = tpu.matmul %157, %160, %cst_125 {dimension_numbers = #tpu.dot_dimension_numbers<[1], [0], [0], [1], [0, 0, 1, 1], [], []>} : vector<256x2xbf16>, vector<2x4xbf16>, vector<256x4xf32> -> vector<256x4xf32>
    %162 = arith.addf %153, %161 : vector<256x4xf32>
    %c0_126 = arith.constant 0 : index
    %c3_127 = arith.constant 3 : index
    %c3_128 = arith.constant 3 : index
    %c0_129 = arith.constant 0 : index
    %163 = vector.load %arg1[%c0_126, %c3_127, %c3_128, %c0_129] : memref<1x20x20x2xf32, #tpu.memory_space<vmem>>, vector<1x16x16x2xf32>
    %164 = vector.shape_cast %163 : vector<1x16x16x2xf32> to vector<16x16x2xf32>
    %165 = vector.shape_cast %164 : vector<16x16x2xf32> to vector<256x2xf32>
    %166 = arith.truncf %165 : vector<256x2xf32> to vector<256x2xbf16>
    %c18 = arith.constant 18 : index
    %c0_130 = arith.constant 0 : index
    %c0_131 = arith.constant 0 : index
    %167 = vector.load %arg2[%c18, %c0_130, %c0_131] : memref<25x2x4xf32, #tpu.memory_space<vmem>>, vector<1x2x4xf32>
    %168 = vector.shape_cast %167 : vector<1x2x4xf32> to vector<2x4xf32>
    %169 = arith.truncf %168 : vector<2x4xf32> to vector<2x4xbf16>
    %cst_132 = arith.constant dense<0.000000e+00> : vector<256x4xf32>
    %170 = tpu.matmul %166, %169, %cst_132 {dimension_numbers = #tpu.dot_dimension_numbers<[1], [0], [0], [1], [0, 0, 1, 1], [], []>} : vector<256x2xbf16>, vector<2x4xbf16>, vector<256x4xf32> -> vector<256x4xf32>
    %171 = arith.addf %162, %170 : vector<256x4xf32>
    %c0_133 = arith.constant 0 : index
    %c3_134 = arith.constant 3 : index
    %c4_135 = arith.constant 4 : index
    %c0_136 = arith.constant 0 : index
    %172 = vector.load %arg1[%c0_133, %c3_134, %c4_135, %c0_136] : memref<1x20x20x2xf32, #tpu.memory_space<vmem>>, vector<1x16x16x2xf32>
    %173 = vector.shape_cast %172 : vector<1x16x16x2xf32> to vector<16x16x2xf32>
    %174 = vector.shape_cast %173 : vector<16x16x2xf32> to vector<256x2xf32>
    %175 = arith.truncf %174 : vector<256x2xf32> to vector<256x2xbf16>
    %c19 = arith.constant 19 : index
    %c0_137 = arith.constant 0 : index
    %c0_138 = arith.constant 0 : index
    %176 = vector.load %arg2[%c19, %c0_137, %c0_138] : memref<25x2x4xf32, #tpu.memory_space<vmem>>, vector<1x2x4xf32>
    %177 = vector.shape_cast %176 : vector<1x2x4xf32> to vector<2x4xf32>
    %178 = arith.truncf %177 : vector<2x4xf32> to vector<2x4xbf16>
    %cst_139 = arith.constant dense<0.000000e+00> : vector<256x4xf32>
    %179 = tpu.matmul %175, %178, %cst_139 {dimension_numbers = #tpu.dot_dimension_numbers<[1], [0], [0], [1], [0, 0, 1, 1], [], []>} : vector<256x2xbf16>, vector<2x4xbf16>, vector<256x4xf32> -> vector<256x4xf32>
    %180 = arith.addf %171, %179 : vector<256x4xf32>
    %c0_140 = arith.constant 0 : index
    %c4_141 = arith.constant 4 : index
    %c0_142 = arith.constant 0 : index
    %c0_143 = arith.constant 0 : index
    %181 = vector.load %arg1[%c0_140, %c4_141, %c0_142, %c0_143] : memref<1x20x20x2xf32, #tpu.memory_space<vmem>>, vector<1x16x16x2xf32>
    %182 = vector.shape_cast %181 : vector<1x16x16x2xf32> to vector<16x16x2xf32>
    %183 = vector.shape_cast %182 : vector<16x16x2xf32> to vector<256x2xf32>
    %184 = arith.truncf %183 : vector<256x2xf32> to vector<256x2xbf16>
    %c20 = arith.constant 20 : index
    %c0_144 = arith.constant 0 : index
    %c0_145 = arith.constant 0 : index
    %185 = vector.load %arg2[%c20, %c0_144, %c0_145] : memref<25x2x4xf32, #tpu.memory_space<vmem>>, vector<1x2x4xf32>
    %186 = vector.shape_cast %185 : vector<1x2x4xf32> to vector<2x4xf32>
    %187 = arith.truncf %186 : vector<2x4xf32> to vector<2x4xbf16>
    %cst_146 = arith.constant dense<0.000000e+00> : vector<256x4xf32>
    %188 = tpu.matmul %184, %187, %cst_146 {dimension_numbers = #tpu.dot_dimension_numbers<[1], [0], [0], [1], [0, 0, 1, 1], [], []>} : vector<256x2xbf16>, vector<2x4xbf16>, vector<256x4xf32> -> vector<256x4xf32>
    %189 = arith.addf %180, %188 : vector<256x4xf32>
    %c0_147 = arith.constant 0 : index
    %c4_148 = arith.constant 4 : index
    %c1_149 = arith.constant 1 : index
    %c0_150 = arith.constant 0 : index
    %190 = vector.load %arg1[%c0_147, %c4_148, %c1_149, %c0_150] : memref<1x20x20x2xf32, #tpu.memory_space<vmem>>, vector<1x16x16x2xf32>
    %191 = vector.shape_cast %190 : vector<1x16x16x2xf32> to vector<16x16x2xf32>
    %192 = vector.shape_cast %191 : vector<16x16x2xf32> to vector<256x2xf32>
    %193 = arith.truncf %192 : vector<256x2xf32> to vector<256x2xbf16>
    %c21 = arith.constant 21 : index
    %c0_151 = arith.constant 0 : index
    %c0_152 = arith.constant 0 : index
    %194 = vector.load %arg2[%c21, %c0_151, %c0_152] : memref<25x2x4xf32, #tpu.memory_space<vmem>>, vector<1x2x4xf32>
    %195 = vector.shape_cast %194 : vector<1x2x4xf32> to vector<2x4xf32>
    %196 = arith.truncf %195 : vector<2x4xf32> to vector<2x4xbf16>
    %cst_153 = arith.constant dense<0.000000e+00> : vector<256x4xf32>
    %197 = tpu.matmul %193, %196, %cst_153 {dimension_numbers = #tpu.dot_dimension_numbers<[1], [0], [0], [1], [0, 0, 1, 1], [], []>} : vector<256x2xbf16>, vector<2x4xbf16>, vector<256x4xf32> -> vector<256x4xf32>
    %198 = arith.addf %189, %197 : vector<256x4xf32>
    %c0_154 = arith.constant 0 : index
    %c4_155 = arith.constant 4 : index
    %c2_156 = arith.constant 2 : index
    %c0_157 = arith.constant 0 : index
    %199 = vector.load %arg1[%c0_154, %c4_155, %c2_156, %c0_157] : memref<1x20x20x2xf32, #tpu.memory_space<vmem>>, vector<1x16x16x2xf32>
    %200 = vector.shape_cast %199 : vector<1x16x16x2xf32> to vector<16x16x2xf32>
    %201 = vector.shape_cast %200 : vector<16x16x2xf32> to vector<256x2xf32>
    %202 = arith.truncf %201 : vector<256x2xf32> to vector<256x2xbf16>
    %c22 = arith.constant 22 : index
    %c0_158 = arith.constant 0 : index
    %c0_159 = arith.constant 0 : index
    %203 = vector.load %arg2[%c22, %c0_158, %c0_159] : memref<25x2x4xf32, #tpu.memory_space<vmem>>, vector<1x2x4xf32>
    %204 = vector.shape_cast %203 : vector<1x2x4xf32> to vector<2x4xf32>
    %205 = arith.truncf %204 : vector<2x4xf32> to vector<2x4xbf16>
    %cst_160 = arith.constant dense<0.000000e+00> : vector<256x4xf32>
    %206 = tpu.matmul %202, %205, %cst_160 {dimension_numbers = #tpu.dot_dimension_numbers<[1], [0], [0], [1], [0, 0, 1, 1], [], []>} : vector<256x2xbf16>, vector<2x4xbf16>, vector<256x4xf32> -> vector<256x4xf32>
    %207 = arith.addf %198, %206 : vector<256x4xf32>
    %c0_161 = arith.constant 0 : index
    %c4_162 = arith.constant 4 : index
    %c3_163 = arith.constant 3 : index
    %c0_164 = arith.constant 0 : index
    %208 = vector.load %arg1[%c0_161, %c4_162, %c3_163, %c0_164] : memref<1x20x20x2xf32, #tpu.memory_space<vmem>>, vector<1x16x16x2xf32>
    %209 = vector.shape_cast %208 : vector<1x16x16x2xf32> to vector<16x16x2xf32>
    %210 = vector.shape_cast %209 : vector<16x16x2xf32> to vector<256x2xf32>
    %211 = arith.truncf %210 : vector<256x2xf32> to vector<256x2xbf16>
    %c23 = arith.constant 23 : index
    %c0_165 = arith.constant 0 : index
    %c0_166 = arith.constant 0 : index
    %212 = vector.load %arg2[%c23, %c0_165, %c0_166] : memref<25x2x4xf32, #tpu.memory_space<vmem>>, vector<1x2x4xf32>
    %213 = vector.shape_cast %212 : vector<1x2x4xf32> to vector<2x4xf32>
    %214 = arith.truncf %213 : vector<2x4xf32> to vector<2x4xbf16>
    %cst_167 = arith.constant dense<0.000000e+00> : vector<256x4xf32>
    %215 = tpu.matmul %211, %214, %cst_167 {dimension_numbers = #tpu.dot_dimension_numbers<[1], [0], [0], [1], [0, 0, 1, 1], [], []>} : vector<256x2xbf16>, vector<2x4xbf16>, vector<256x4xf32> -> vector<256x4xf32>
    %216 = arith.addf %207, %215 : vector<256x4xf32>
    %c0_168 = arith.constant 0 : index
    %c4_169 = arith.constant 4 : index
    %c4_170 = arith.constant 4 : index
    %c0_171 = arith.constant 0 : index
    %217 = vector.load %arg1[%c0_168, %c4_169, %c4_170, %c0_171] : memref<1x20x20x2xf32, #tpu.memory_space<vmem>>, vector<1x16x16x2xf32>
    %218 = vector.shape_cast %217 : vector<1x16x16x2xf32> to vector<16x16x2xf32>
    %219 = vector.shape_cast %218 : vector<16x16x2xf32> to vector<256x2xf32>
    %220 = arith.truncf %219 : vector<256x2xf32> to vector<256x2xbf16>
    %c24 = arith.constant 24 : index
    %c0_172 = arith.constant 0 : index
    %c0_173 = arith.constant 0 : index
    %221 = vector.load %arg2[%c24, %c0_172, %c0_173] : memref<25x2x4xf32, #tpu.memory_space<vmem>>, vector<1x2x4xf32>
    %222 = vector.shape_cast %221 : vector<1x2x4xf32> to vector<2x4xf32>
    %223 = arith.truncf %222 : vector<2x4xf32> to vector<2x4xbf16>
    %cst_174 = arith.constant dense<0.000000e+00> : vector<256x4xf32>
    %224 = tpu.matmul %220, %223, %cst_174 {dimension_numbers = #tpu.dot_dimension_numbers<[1], [0], [0], [1], [0, 0, 1, 1], [], []>} : vector<256x2xbf16>, vector<2x4xbf16>, vector<256x4xf32> -> vector<256x4xf32>
    %225 = arith.addf %216, %224 : vector<256x4xf32>
    %c0_175 = arith.constant 0 : index
    %c0_176 = arith.constant 0 : index
    %226 = vector.load %arg3[%c0_175, %c0_176] : memref<1x4xf32, #tpu.memory_space<vmem>>, vector<1x4xf32>
    %227 = vector.broadcast %226 : vector<1x4xf32> to vector<256x4xf32>
    %228 = arith.mulf %225, %227 : vector<256x4xf32>
    %c0_177 = arith.constant 0 : index
    %c0_178 = arith.constant 0 : index
    %229 = vector.load %arg4[%c0_177, %c0_178] : memref<1x4xf32, #tpu.memory_space<vmem>>, vector<1x4xf32>
    %230 = vector.broadcast %229 : vector<1x4xf32> to vector<256x4xf32>
    %231 = arith.addf %228, %230 : vector<256x4xf32>
    %cst_179 = arith.constant 0.000000e+00 : f32
    %232 = vector.broadcast %cst_179 : f32 to vector<256x4xf32>
    %233 = arith.maximumf %231, %232 : vector<256x4xf32>
    %234 = vector.shape_cast %233 : vector<256x4xf32> to vector<16x16x4xf32>
    %c0_180 = arith.constant 0 : index
    %c0_181 = arith.constant 0 : index
    %c0_182 = arith.constant 0 : index
    %c0_183 = arith.constant 0 : index
    %235 = vector.load %arg5[%c0_180, %c0_181, %c0_182, %c0_183] : memref<1x16x16x4xf32, #tpu.memory_space<vmem>>, vector<1x16x16x4xf32>
    %236 = vector.shape_cast %235 : vector<1x16x16x4xf32> to vector<16x16x4xf32>
    %237 = vector.shape_cast %234 : vector<16x16x4xf32> to vector<1x16x16x4xf32>
    tpu.vector_store %arg5[%c0_180, %c0_181, %c0_182, %c0_183], %237 {strides = array<i32>} : memref<1x16x16x4xf32, #tpu.memory_space<vmem>>, vector<1x16x16x4xf32>,
    return
  }
  func.func @transform_0(%arg0: i32) -> (i32, i32, i32, i32) {
    %c0_i32 = arith.constant 0 : i32
    %c0_i32_0 = arith.constant 0 : i32
    %c0_i32_1 = arith.constant 0 : i32
    %c0_i32_2 = arith.constant 0 : i32
    return %arg0, %c0_i32, %c0_i32_0, %c0_i32_1 : i32, i32, i32, i32
  }
  func.func @transform_1(%arg0: i32) -> (i32, i32, i32) {
    %c0_i32 = arith.constant 0 : i32
    %c0_i32_0 = arith.constant 0 : i32
    %c0_i32_1 = arith.constant 0 : i32
    %c0_i32_2 = arith.constant 0 : i32
    return %c0_i32, %c0_i32_0, %c0_i32_1 : i32, i32, i32
  }
  func.func @transform_2(%arg0: i32) -> (i32, i32) {
    %c0_i32 = arith.constant 0 : i32
    %c0_i32_0 = arith.constant 0 : i32
    %c0_i32_1 = arith.constant 0 : i32
    return %c0_i32, %c0_i32_0 : i32, i32
  }
  func.func @transform_3(%arg0: i32) -> (i32, i32) {
    %c0_i32 = arith.constant 0 : i32
    %c0_i32_0 = arith.constant 0 : i32
    %c0_i32_1 = arith.constant 0 : i32
    return %c0_i32, %c0_i32_0 : i32, i32
  }
  func.func @transform_4(%arg0: i32) -> (i32, i32, i32, i32) {
    %c0_i32 = arith.constant 0 : i32
    %c0_i32_0 = arith.constant 0 : i32
    %c0_i32_1 = arith.constant 0 : i32
    %c0_i32_2 = arith.constant 0 : i32
    return %arg0, %c0_i32, %c0_i32_0, %c0_i32_1 : i32, i32, i32, i32
  }
}

module attributes {stable_mosaic.version = 11 : i64} {
  func.func @_conv_tap_bn_relu_kernel(%arg0: i32, %arg1: memref<1x18x18x4xf32, #tpu.memory_space<vmem>>, %arg2: memref<9x4x8xf32, #tpu.memory_space<vmem>>, %arg3: memref<1x8xf32, #tpu.memory_space<vmem>>, %arg4: memref<1x8xf32, #tpu.memory_space<vmem>>, %arg5: memref<1x16x16x8xf32, #tpu.memory_space<vmem>>) attributes {dimension_semantics = [#tpu.dimension_semantics<parallel>], iteration_bounds = array<i64: 2>, scalar_prefetch = 0 : i64, scratch_operands = 0 : i64, tpu.core_type = #tpu.core_type<tc>, window_params = [{transform_indices = @transform_0, window_bounds = array<i64: 1, 18, 18, 4>}, {pipeline_mode = #tpu.pipeline_mode<synchronous>, transform_indices = @transform_1, window_bounds = array<i64: 9, 4, 8>}, {pipeline_mode = #tpu.pipeline_mode<synchronous>, transform_indices = @transform_2, window_bounds = array<i64: 1, 8>}, {pipeline_mode = #tpu.pipeline_mode<synchronous>, transform_indices = @transform_3, window_bounds = array<i64: 1, 8>}, {transform_indices = @transform_4, window_bounds = array<i64: 1, 16, 16, 8>}]} {
    %cst = arith.constant 0.000000e+00 : f32
    %0 = vector.broadcast %cst : f32 to vector<256x8xf32>
    %c0 = arith.constant 0 : index
    %c0_0 = arith.constant 0 : index
    %c0_1 = arith.constant 0 : index
    %c0_2 = arith.constant 0 : index
    %1 = vector.load %arg1[%c0, %c0_0, %c0_1, %c0_2] : memref<1x18x18x4xf32, #tpu.memory_space<vmem>>, vector<1x16x16x4xf32>
    %2 = vector.shape_cast %1 : vector<1x16x16x4xf32> to vector<16x16x4xf32>
    %3 = vector.shape_cast %2 : vector<16x16x4xf32> to vector<256x4xf32>
    %4 = arith.truncf %3 : vector<256x4xf32> to vector<256x4xbf16>
    %c0_3 = arith.constant 0 : index
    %c0_4 = arith.constant 0 : index
    %c0_5 = arith.constant 0 : index
    %5 = vector.load %arg2[%c0_3, %c0_4, %c0_5] : memref<9x4x8xf32, #tpu.memory_space<vmem>>, vector<1x4x8xf32>
    %6 = vector.shape_cast %5 : vector<1x4x8xf32> to vector<4x8xf32>
    %7 = arith.truncf %6 : vector<4x8xf32> to vector<4x8xbf16>
    %cst_6 = arith.constant dense<0.000000e+00> : vector<256x8xf32>
    %8 = tpu.matmul %4, %7, %cst_6 {dimension_numbers = #tpu.dot_dimension_numbers<[1], [0], [0], [1], [0, 0, 1, 1], [], []>} : vector<256x4xbf16>, vector<4x8xbf16>, vector<256x8xf32> -> vector<256x8xf32>
    %9 = arith.addf %0, %8 : vector<256x8xf32>
    %c0_7 = arith.constant 0 : index
    %c0_8 = arith.constant 0 : index
    %c1 = arith.constant 1 : index
    %c0_9 = arith.constant 0 : index
    %10 = vector.load %arg1[%c0_7, %c0_8, %c1, %c0_9] : memref<1x18x18x4xf32, #tpu.memory_space<vmem>>, vector<1x16x16x4xf32>
    %11 = vector.shape_cast %10 : vector<1x16x16x4xf32> to vector<16x16x4xf32>
    %12 = vector.shape_cast %11 : vector<16x16x4xf32> to vector<256x4xf32>
    %13 = arith.truncf %12 : vector<256x4xf32> to vector<256x4xbf16>
    %c1_10 = arith.constant 1 : index
    %c0_11 = arith.constant 0 : index
    %c0_12 = arith.constant 0 : index
    %14 = vector.load %arg2[%c1_10, %c0_11, %c0_12] : memref<9x4x8xf32, #tpu.memory_space<vmem>>, vector<1x4x8xf32>
    %15 = vector.shape_cast %14 : vector<1x4x8xf32> to vector<4x8xf32>
    %16 = arith.truncf %15 : vector<4x8xf32> to vector<4x8xbf16>
    %cst_13 = arith.constant dense<0.000000e+00> : vector<256x8xf32>
    %17 = tpu.matmul %13, %16, %cst_13 {dimension_numbers = #tpu.dot_dimension_numbers<[1], [0], [0], [1], [0, 0, 1, 1], [], []>} : vector<256x4xbf16>, vector<4x8xbf16>, vector<256x8xf32> -> vector<256x8xf32>
    %18 = arith.addf %9, %17 : vector<256x8xf32>
    %c0_14 = arith.constant 0 : index
    %c0_15 = arith.constant 0 : index
    %c2 = arith.constant 2 : index
    %c0_16 = arith.constant 0 : index
    %19 = vector.load %arg1[%c0_14, %c0_15, %c2, %c0_16] : memref<1x18x18x4xf32, #tpu.memory_space<vmem>>, vector<1x16x16x4xf32>
    %20 = vector.shape_cast %19 : vector<1x16x16x4xf32> to vector<16x16x4xf32>
    %21 = vector.shape_cast %20 : vector<16x16x4xf32> to vector<256x4xf32>
    %22 = arith.truncf %21 : vector<256x4xf32> to vector<256x4xbf16>
    %c2_17 = arith.constant 2 : index
    %c0_18 = arith.constant 0 : index
    %c0_19 = arith.constant 0 : index
    %23 = vector.load %arg2[%c2_17, %c0_18, %c0_19] : memref<9x4x8xf32, #tpu.memory_space<vmem>>, vector<1x4x8xf32>
    %24 = vector.shape_cast %23 : vector<1x4x8xf32> to vector<4x8xf32>
    %25 = arith.truncf %24 : vector<4x8xf32> to vector<4x8xbf16>
    %cst_20 = arith.constant dense<0.000000e+00> : vector<256x8xf32>
    %26 = tpu.matmul %22, %25, %cst_20 {dimension_numbers = #tpu.dot_dimension_numbers<[1], [0], [0], [1], [0, 0, 1, 1], [], []>} : vector<256x4xbf16>, vector<4x8xbf16>, vector<256x8xf32> -> vector<256x8xf32>
    %27 = arith.addf %18, %26 : vector<256x8xf32>
    %c0_21 = arith.constant 0 : index
    %c1_22 = arith.constant 1 : index
    %c0_23 = arith.constant 0 : index
    %c0_24 = arith.constant 0 : index
    %28 = vector.load %arg1[%c0_21, %c1_22, %c0_23, %c0_24] : memref<1x18x18x4xf32, #tpu.memory_space<vmem>>, vector<1x16x16x4xf32>
    %29 = vector.shape_cast %28 : vector<1x16x16x4xf32> to vector<16x16x4xf32>
    %30 = vector.shape_cast %29 : vector<16x16x4xf32> to vector<256x4xf32>
    %31 = arith.truncf %30 : vector<256x4xf32> to vector<256x4xbf16>
    %c3 = arith.constant 3 : index
    %c0_25 = arith.constant 0 : index
    %c0_26 = arith.constant 0 : index
    %32 = vector.load %arg2[%c3, %c0_25, %c0_26] : memref<9x4x8xf32, #tpu.memory_space<vmem>>, vector<1x4x8xf32>
    %33 = vector.shape_cast %32 : vector<1x4x8xf32> to vector<4x8xf32>
    %34 = arith.truncf %33 : vector<4x8xf32> to vector<4x8xbf16>
    %cst_27 = arith.constant dense<0.000000e+00> : vector<256x8xf32>
    %35 = tpu.matmul %31, %34, %cst_27 {dimension_numbers = #tpu.dot_dimension_numbers<[1], [0], [0], [1], [0, 0, 1, 1], [], []>} : vector<256x4xbf16>, vector<4x8xbf16>, vector<256x8xf32> -> vector<256x8xf32>
    %36 = arith.addf %27, %35 : vector<256x8xf32>
    %c0_28 = arith.constant 0 : index
    %c1_29 = arith.constant 1 : index
    %c1_30 = arith.constant 1 : index
    %c0_31 = arith.constant 0 : index
    %37 = vector.load %arg1[%c0_28, %c1_29, %c1_30, %c0_31] : memref<1x18x18x4xf32, #tpu.memory_space<vmem>>, vector<1x16x16x4xf32>
    %38 = vector.shape_cast %37 : vector<1x16x16x4xf32> to vector<16x16x4xf32>
    %39 = vector.shape_cast %38 : vector<16x16x4xf32> to vector<256x4xf32>
    %40 = arith.truncf %39 : vector<256x4xf32> to vector<256x4xbf16>
    %c4 = arith.constant 4 : index
    %c0_32 = arith.constant 0 : index
    %c0_33 = arith.constant 0 : index
    %41 = vector.load %arg2[%c4, %c0_32, %c0_33] : memref<9x4x8xf32, #tpu.memory_space<vmem>>, vector<1x4x8xf32>
    %42 = vector.shape_cast %41 : vector<1x4x8xf32> to vector<4x8xf32>
    %43 = arith.truncf %42 : vector<4x8xf32> to vector<4x8xbf16>
    %cst_34 = arith.constant dense<0.000000e+00> : vector<256x8xf32>
    %44 = tpu.matmul %40, %43, %cst_34 {dimension_numbers = #tpu.dot_dimension_numbers<[1], [0], [0], [1], [0, 0, 1, 1], [], []>} : vector<256x4xbf16>, vector<4x8xbf16>, vector<256x8xf32> -> vector<256x8xf32>
    %45 = arith.addf %36, %44 : vector<256x8xf32>
    %c0_35 = arith.constant 0 : index
    %c1_36 = arith.constant 1 : index
    %c2_37 = arith.constant 2 : index
    %c0_38 = arith.constant 0 : index
    %46 = vector.load %arg1[%c0_35, %c1_36, %c2_37, %c0_38] : memref<1x18x18x4xf32, #tpu.memory_space<vmem>>, vector<1x16x16x4xf32>
    %47 = vector.shape_cast %46 : vector<1x16x16x4xf32> to vector<16x16x4xf32>
    %48 = vector.shape_cast %47 : vector<16x16x4xf32> to vector<256x4xf32>
    %49 = arith.truncf %48 : vector<256x4xf32> to vector<256x4xbf16>
    %c5 = arith.constant 5 : index
    %c0_39 = arith.constant 0 : index
    %c0_40 = arith.constant 0 : index
    %50 = vector.load %arg2[%c5, %c0_39, %c0_40] : memref<9x4x8xf32, #tpu.memory_space<vmem>>, vector<1x4x8xf32>
    %51 = vector.shape_cast %50 : vector<1x4x8xf32> to vector<4x8xf32>
    %52 = arith.truncf %51 : vector<4x8xf32> to vector<4x8xbf16>
    %cst_41 = arith.constant dense<0.000000e+00> : vector<256x8xf32>
    %53 = tpu.matmul %49, %52, %cst_41 {dimension_numbers = #tpu.dot_dimension_numbers<[1], [0], [0], [1], [0, 0, 1, 1], [], []>} : vector<256x4xbf16>, vector<4x8xbf16>, vector<256x8xf32> -> vector<256x8xf32>
    %54 = arith.addf %45, %53 : vector<256x8xf32>
    %c0_42 = arith.constant 0 : index
    %c2_43 = arith.constant 2 : index
    %c0_44 = arith.constant 0 : index
    %c0_45 = arith.constant 0 : index
    %55 = vector.load %arg1[%c0_42, %c2_43, %c0_44, %c0_45] : memref<1x18x18x4xf32, #tpu.memory_space<vmem>>, vector<1x16x16x4xf32>
    %56 = vector.shape_cast %55 : vector<1x16x16x4xf32> to vector<16x16x4xf32>
    %57 = vector.shape_cast %56 : vector<16x16x4xf32> to vector<256x4xf32>
    %58 = arith.truncf %57 : vector<256x4xf32> to vector<256x4xbf16>
    %c6 = arith.constant 6 : index
    %c0_46 = arith.constant 0 : index
    %c0_47 = arith.constant 0 : index
    %59 = vector.load %arg2[%c6, %c0_46, %c0_47] : memref<9x4x8xf32, #tpu.memory_space<vmem>>, vector<1x4x8xf32>
    %60 = vector.shape_cast %59 : vector<1x4x8xf32> to vector<4x8xf32>
    %61 = arith.truncf %60 : vector<4x8xf32> to vector<4x8xbf16>
    %cst_48 = arith.constant dense<0.000000e+00> : vector<256x8xf32>
    %62 = tpu.matmul %58, %61, %cst_48 {dimension_numbers = #tpu.dot_dimension_numbers<[1], [0], [0], [1], [0, 0, 1, 1], [], []>} : vector<256x4xbf16>, vector<4x8xbf16>, vector<256x8xf32> -> vector<256x8xf32>
    %63 = arith.addf %54, %62 : vector<256x8xf32>
    %c0_49 = arith.constant 0 : index
    %c2_50 = arith.constant 2 : index
    %c1_51 = arith.constant 1 : index
    %c0_52 = arith.constant 0 : index
    %64 = vector.load %arg1[%c0_49, %c2_50, %c1_51, %c0_52] : memref<1x18x18x4xf32, #tpu.memory_space<vmem>>, vector<1x16x16x4xf32>
    %65 = vector.shape_cast %64 : vector<1x16x16x4xf32> to vector<16x16x4xf32>
    %66 = vector.shape_cast %65 : vector<16x16x4xf32> to vector<256x4xf32>
    %67 = arith.truncf %66 : vector<256x4xf32> to vector<256x4xbf16>
    %c7 = arith.constant 7 : index
    %c0_53 = arith.constant 0 : index
    %c0_54 = arith.constant 0 : index
    %68 = vector.load %arg2[%c7, %c0_53, %c0_54] : memref<9x4x8xf32, #tpu.memory_space<vmem>>, vector<1x4x8xf32>
    %69 = vector.shape_cast %68 : vector<1x4x8xf32> to vector<4x8xf32>
    %70 = arith.truncf %69 : vector<4x8xf32> to vector<4x8xbf16>
    %cst_55 = arith.constant dense<0.000000e+00> : vector<256x8xf32>
    %71 = tpu.matmul %67, %70, %cst_55 {dimension_numbers = #tpu.dot_dimension_numbers<[1], [0], [0], [1], [0, 0, 1, 1], [], []>} : vector<256x4xbf16>, vector<4x8xbf16>, vector<256x8xf32> -> vector<256x8xf32>
    %72 = arith.addf %63, %71 : vector<256x8xf32>
    %c0_56 = arith.constant 0 : index
    %c2_57 = arith.constant 2 : index
    %c2_58 = arith.constant 2 : index
    %c0_59 = arith.constant 0 : index
    %73 = vector.load %arg1[%c0_56, %c2_57, %c2_58, %c0_59] : memref<1x18x18x4xf32, #tpu.memory_space<vmem>>, vector<1x16x16x4xf32>
    %74 = vector.shape_cast %73 : vector<1x16x16x4xf32> to vector<16x16x4xf32>
    %75 = vector.shape_cast %74 : vector<16x16x4xf32> to vector<256x4xf32>
    %76 = arith.truncf %75 : vector<256x4xf32> to vector<256x4xbf16>
    %c8 = arith.constant 8 : index
    %c0_60 = arith.constant 0 : index
    %c0_61 = arith.constant 0 : index
    %77 = vector.load %arg2[%c8, %c0_60, %c0_61] : memref<9x4x8xf32, #tpu.memory_space<vmem>>, vector<1x4x8xf32>
    %78 = vector.shape_cast %77 : vector<1x4x8xf32> to vector<4x8xf32>
    %79 = arith.truncf %78 : vector<4x8xf32> to vector<4x8xbf16>
    %cst_62 = arith.constant dense<0.000000e+00> : vector<256x8xf32>
    %80 = tpu.matmul %76, %79, %cst_62 {dimension_numbers = #tpu.dot_dimension_numbers<[1], [0], [0], [1], [0, 0, 1, 1], [], []>} : vector<256x4xbf16>, vector<4x8xbf16>, vector<256x8xf32> -> vector<256x8xf32>
    %81 = arith.addf %72, %80 : vector<256x8xf32>
    %c0_63 = arith.constant 0 : index
    %c0_64 = arith.constant 0 : index
    %82 = vector.load %arg3[%c0_63, %c0_64] : memref<1x8xf32, #tpu.memory_space<vmem>>, vector<1x8xf32>
    %83 = vector.broadcast %82 : vector<1x8xf32> to vector<256x8xf32>
    %84 = arith.mulf %81, %83 : vector<256x8xf32>
    %c0_65 = arith.constant 0 : index
    %c0_66 = arith.constant 0 : index
    %85 = vector.load %arg4[%c0_65, %c0_66] : memref<1x8xf32, #tpu.memory_space<vmem>>, vector<1x8xf32>
    %86 = vector.broadcast %85 : vector<1x8xf32> to vector<256x8xf32>
    %87 = arith.addf %84, %86 : vector<256x8xf32>
    %cst_67 = arith.constant 0.000000e+00 : f32
    %88 = vector.broadcast %cst_67 : f32 to vector<256x8xf32>
    %89 = arith.maximumf %87, %88 : vector<256x8xf32>
    %90 = vector.shape_cast %89 : vector<256x8xf32> to vector<16x16x8xf32>
    %c0_68 = arith.constant 0 : index
    %c0_69 = arith.constant 0 : index
    %c0_70 = arith.constant 0 : index
    %c0_71 = arith.constant 0 : index
    %91 = vector.load %arg5[%c0_68, %c0_69, %c0_70, %c0_71] : memref<1x16x16x8xf32, #tpu.memory_space<vmem>>, vector<1x16x16x8xf32>
    %92 = vector.shape_cast %91 : vector<1x16x16x8xf32> to vector<16x16x8xf32>
    %93 = vector.shape_cast %90 : vector<16x16x8xf32> to vector<1x16x16x8xf32>
    tpu.vector_store %arg5[%c0_68, %c0_69, %c0_70, %c0_71], %93 {strides = array<i32>} : memref<1x16x16x8xf32, #tpu.memory_space<vmem>>, vector<1x16x16x8xf32>,
    return
  }
  func.func @transform_0(%arg0: i32) -> (i32, i32, i32, i32) {
    %c0_i32 = arith.constant 0 : i32
    %c0_i32_0 = arith.constant 0 : i32
    %c0_i32_1 = arith.constant 0 : i32
    %c0_i32_2 = arith.constant 0 : i32
    return %arg0, %c0_i32, %c0_i32_0, %c0_i32_1 : i32, i32, i32, i32
  }
  func.func @transform_1(%arg0: i32) -> (i32, i32, i32) {
    %c0_i32 = arith.constant 0 : i32
    %c0_i32_0 = arith.constant 0 : i32
    %c0_i32_1 = arith.constant 0 : i32
    %c0_i32_2 = arith.constant 0 : i32
    return %c0_i32, %c0_i32_0, %c0_i32_1 : i32, i32, i32
  }
  func.func @transform_2(%arg0: i32) -> (i32, i32) {
    %c0_i32 = arith.constant 0 : i32
    %c0_i32_0 = arith.constant 0 : i32
    %c0_i32_1 = arith.constant 0 : i32
    return %c0_i32, %c0_i32_0 : i32, i32
  }
  func.func @transform_3(%arg0: i32) -> (i32, i32) {
    %c0_i32 = arith.constant 0 : i32
    %c0_i32_0 = arith.constant 0 : i32
    %c0_i32_1 = arith.constant 0 : i32
    return %c0_i32, %c0_i32_0 : i32, i32
  }
  func.func @transform_4(%arg0: i32) -> (i32, i32, i32, i32) {
    %c0_i32 = arith.constant 0 : i32
    %c0_i32_0 = arith.constant 0 : i32
    %c0_i32_1 = arith.constant 0 : i32
    %c0_i32_2 = arith.constant 0 : i32
    return %arg0, %c0_i32, %c0_i32_0, %c0_i32_1 : i32, i32, i32, i32
  }
}

module attributes {stable_mosaic.version = 11 : i64} {
  func.func @_maxpool_conv_bn_relu_kernel(%arg0: i32, %arg1: memref<1x18x18x4xf32, #tpu.memory_space<vmem>>, %arg2: memref<4x4xf32, #tpu.memory_space<vmem>>, %arg3: memref<1x4xf32, #tpu.memory_space<vmem>>, %arg4: memref<1x4xf32, #tpu.memory_space<vmem>>, %arg5: memref<1x16x16x4xf32, #tpu.memory_space<vmem>>) attributes {dimension_semantics = [#tpu.dimension_semantics<parallel>], iteration_bounds = array<i64: 2>, scalar_prefetch = 0 : i64, scratch_operands = 0 : i64, tpu.core_type = #tpu.core_type<tc>, window_params = [{transform_indices = @transform_0, window_bounds = array<i64: 1, 18, 18, 4>}, {pipeline_mode = #tpu.pipeline_mode<synchronous>, transform_indices = @transform_1, window_bounds = array<i64: 4, 4>}, {pipeline_mode = #tpu.pipeline_mode<synchronous>, transform_indices = @transform_2, window_bounds = array<i64: 1, 4>}, {pipeline_mode = #tpu.pipeline_mode<synchronous>, transform_indices = @transform_3, window_bounds = array<i64: 1, 4>}, {transform_indices = @transform_4, window_bounds = array<i64: 1, 16, 16, 4>}]} {
    %c0 = arith.constant 0 : index
    %c0_0 = arith.constant 0 : index
    %c0_1 = arith.constant 0 : index
    %c0_2 = arith.constant 0 : index
    %0 = vector.load %arg1[%c0, %c0_0, %c0_1, %c0_2] : memref<1x18x18x4xf32, #tpu.memory_space<vmem>>, vector<1x16x16x4xf32>
    %1 = vector.shape_cast %0 : vector<1x16x16x4xf32> to vector<16x16x4xf32>
    %c0_3 = arith.constant 0 : index
    %c0_4 = arith.constant 0 : index
    %c1 = arith.constant 1 : index
    %c0_5 = arith.constant 0 : index
    %2 = vector.load %arg1[%c0_3, %c0_4, %c1, %c0_5] : memref<1x18x18x4xf32, #tpu.memory_space<vmem>>, vector<1x16x16x4xf32>
    %3 = vector.shape_cast %2 : vector<1x16x16x4xf32> to vector<16x16x4xf32>
    %4 = arith.maximumf %1, %3 : vector<16x16x4xf32>
    %c0_6 = arith.constant 0 : index
    %c0_7 = arith.constant 0 : index
    %c2 = arith.constant 2 : index
    %c0_8 = arith.constant 0 : index
    %5 = vector.load %arg1[%c0_6, %c0_7, %c2, %c0_8] : memref<1x18x18x4xf32, #tpu.memory_space<vmem>>, vector<1x16x16x4xf32>
    %6 = vector.shape_cast %5 : vector<1x16x16x4xf32> to vector<16x16x4xf32>
    %7 = arith.maximumf %4, %6 : vector<16x16x4xf32>
    %c0_9 = arith.constant 0 : index
    %c1_10 = arith.constant 1 : index
    %c0_11 = arith.constant 0 : index
    %c0_12 = arith.constant 0 : index
    %8 = vector.load %arg1[%c0_9, %c1_10, %c0_11, %c0_12] : memref<1x18x18x4xf32, #tpu.memory_space<vmem>>, vector<1x16x16x4xf32>
    %9 = vector.shape_cast %8 : vector<1x16x16x4xf32> to vector<16x16x4xf32>
    %10 = arith.maximumf %7, %9 : vector<16x16x4xf32>
    %c0_13 = arith.constant 0 : index
    %c1_14 = arith.constant 1 : index
    %c1_15 = arith.constant 1 : index
    %c0_16 = arith.constant 0 : index
    %11 = vector.load %arg1[%c0_13, %c1_14, %c1_15, %c0_16] : memref<1x18x18x4xf32, #tpu.memory_space<vmem>>, vector<1x16x16x4xf32>
    %12 = vector.shape_cast %11 : vector<1x16x16x4xf32> to vector<16x16x4xf32>
    %13 = arith.maximumf %10, %12 : vector<16x16x4xf32>
    %c0_17 = arith.constant 0 : index
    %c1_18 = arith.constant 1 : index
    %c2_19 = arith.constant 2 : index
    %c0_20 = arith.constant 0 : index
    %14 = vector.load %arg1[%c0_17, %c1_18, %c2_19, %c0_20] : memref<1x18x18x4xf32, #tpu.memory_space<vmem>>, vector<1x16x16x4xf32>
    %15 = vector.shape_cast %14 : vector<1x16x16x4xf32> to vector<16x16x4xf32>
    %16 = arith.maximumf %13, %15 : vector<16x16x4xf32>
    %c0_21 = arith.constant 0 : index
    %c2_22 = arith.constant 2 : index
    %c0_23 = arith.constant 0 : index
    %c0_24 = arith.constant 0 : index
    %17 = vector.load %arg1[%c0_21, %c2_22, %c0_23, %c0_24] : memref<1x18x18x4xf32, #tpu.memory_space<vmem>>, vector<1x16x16x4xf32>
    %18 = vector.shape_cast %17 : vector<1x16x16x4xf32> to vector<16x16x4xf32>
    %19 = arith.maximumf %16, %18 : vector<16x16x4xf32>
    %c0_25 = arith.constant 0 : index
    %c2_26 = arith.constant 2 : index
    %c1_27 = arith.constant 1 : index
    %c0_28 = arith.constant 0 : index
    %20 = vector.load %arg1[%c0_25, %c2_26, %c1_27, %c0_28] : memref<1x18x18x4xf32, #tpu.memory_space<vmem>>, vector<1x16x16x4xf32>
    %21 = vector.shape_cast %20 : vector<1x16x16x4xf32> to vector<16x16x4xf32>
    %22 = arith.maximumf %19, %21 : vector<16x16x4xf32>
    %c0_29 = arith.constant 0 : index
    %c2_30 = arith.constant 2 : index
    %c2_31 = arith.constant 2 : index
    %c0_32 = arith.constant 0 : index
    %23 = vector.load %arg1[%c0_29, %c2_30, %c2_31, %c0_32] : memref<1x18x18x4xf32, #tpu.memory_space<vmem>>, vector<1x16x16x4xf32>
    %24 = vector.shape_cast %23 : vector<1x16x16x4xf32> to vector<16x16x4xf32>
    %25 = arith.maximumf %22, %24 : vector<16x16x4xf32>
    %26 = vector.shape_cast %25 : vector<16x16x4xf32> to vector<256x4xf32>
    %27 = arith.truncf %26 : vector<256x4xf32> to vector<256x4xbf16>
    %c0_33 = arith.constant 0 : index
    %c0_34 = arith.constant 0 : index
    %28 = vector.load %arg2[%c0_33, %c0_34] : memref<4x4xf32, #tpu.memory_space<vmem>>, vector<4x4xf32>
    %29 = arith.truncf %28 : vector<4x4xf32> to vector<4x4xbf16>
    %cst = arith.constant dense<0.000000e+00> : vector<256x4xf32>
    %30 = tpu.matmul %27, %29, %cst {dimension_numbers = #tpu.dot_dimension_numbers<[1], [0], [0], [1], [0, 0, 1, 1], [], []>} : vector<256x4xbf16>, vector<4x4xbf16>, vector<256x4xf32> -> vector<256x4xf32>
    %c0_35 = arith.constant 0 : index
    %c0_36 = arith.constant 0 : index
    %31 = vector.load %arg3[%c0_35, %c0_36] : memref<1x4xf32, #tpu.memory_space<vmem>>, vector<1x4xf32>
    %32 = vector.broadcast %31 : vector<1x4xf32> to vector<256x4xf32>
    %33 = arith.mulf %30, %32 : vector<256x4xf32>
    %c0_37 = arith.constant 0 : index
    %c0_38 = arith.constant 0 : index
    %34 = vector.load %arg4[%c0_37, %c0_38] : memref<1x4xf32, #tpu.memory_space<vmem>>, vector<1x4xf32>
    %35 = vector.broadcast %34 : vector<1x4xf32> to vector<256x4xf32>
    %36 = arith.addf %33, %35 : vector<256x4xf32>
    %cst_39 = arith.constant 0.000000e+00 : f32
    %37 = vector.broadcast %cst_39 : f32 to vector<256x4xf32>
    %38 = arith.maximumf %36, %37 : vector<256x4xf32>
    %39 = vector.shape_cast %38 : vector<256x4xf32> to vector<16x16x4xf32>
    %c0_40 = arith.constant 0 : index
    %c0_41 = arith.constant 0 : index
    %c0_42 = arith.constant 0 : index
    %c0_43 = arith.constant 0 : index
    %40 = vector.load %arg5[%c0_40, %c0_41, %c0_42, %c0_43] : memref<1x16x16x4xf32, #tpu.memory_space<vmem>>, vector<1x16x16x4xf32>
    %41 = vector.shape_cast %40 : vector<1x16x16x4xf32> to vector<16x16x4xf32>
    %42 = vector.shape_cast %39 : vector<16x16x4xf32> to vector<1x16x16x4xf32>
    tpu.vector_store %arg5[%c0_40, %c0_41, %c0_42, %c0_43], %42 {strides = array<i32>} : memref<1x16x16x4xf32, #tpu.memory_space<vmem>>, vector<1x16x16x4xf32>,
    return
  }
  func.func @transform_0(%arg0: i32) -> (i32, i32, i32, i32) {
    %c0_i32 = arith.constant 0 : i32
    %c0_i32_0 = arith.constant 0 : i32
    %c0_i32_1 = arith.constant 0 : i32
    %c0_i32_2 = arith.constant 0 : i32
    return %arg0, %c0_i32, %c0_i32_0, %c0_i32_1 : i32, i32, i32, i32
  }
  func.func @transform_1(%arg0: i32) -> (i32, i32) {
    %c0_i32 = arith.constant 0 : i32
    %c0_i32_0 = arith.constant 0 : i32
    %c0_i32_1 = arith.constant 0 : i32
    return %c0_i32, %c0_i32_0 : i32, i32
  }
  func.func @transform_2(%arg0: i32) -> (i32, i32) {
    %c0_i32 = arith.constant 0 : i32
    %c0_i32_0 = arith.constant 0 : i32
    %c0_i32_1 = arith.constant 0 : i32
    return %c0_i32, %c0_i32_0 : i32, i32
  }
  func.func @transform_3(%arg0: i32) -> (i32, i32) {
    %c0_i32 = arith.constant 0 : i32
    %c0_i32_0 = arith.constant 0 : i32
    %c0_i32_1 = arith.constant 0 : i32
    return %c0_i32, %c0_i32_0 : i32, i32
  }
  func.func @transform_4(%arg0: i32) -> (i32, i32, i32, i32) {
    %c0_i32 = arith.constant 0 : i32
    %c0_i32_0 = arith.constant 0 : i32
    %c0_i32_1 = arith.constant 0 : i32
    %c0_i32_2 = arith.constant 0 : i32
    return %arg0, %c0_i32, %c0_i32_0, %c0_i32_1 : i32, i32, i32, i32
  }
}

</mosaic_0001>

<llo_original>
// kernel: inception_block.4
$region0: #{inception_block.4}
  #allocation0 [shape = 'u32[]', space=smem, size = 0x4, offset = 0x4, fixed_abs, tag = 'smem constant byte address 0x4 - core index']
  #allocation1 [shape = 'u32[72,128]{1,0:T(1,128)}', space=vmem, size = 0x9000, scoped, tag = 'internal scratch']
  #allocation2 [shape = 'f32[256,10]{1,0:T(8,128)}', space=vmem, size = 0x20000, scoped, tag = 'scratch operand']
  %s0 = inlined_call_operand.vmem [shape: f32[512,4], index: 0, kind: input, shape index: {}]
  %s1 = inlined_call_operand.vmem [shape: f32[4,10], index: 1, kind: input, shape index: {}]
  %s2 = inlined_call_operand.vmem [shape: f32[1,10], index: 2, kind: input, shape index: {}]
  %s3 = inlined_call_operand.vmem [shape: f32[1,10], index: 3, kind: input, shape index: {}]
  %s4 = inlined_call_operand.vmem [shape: f32[512,10], index: 4, kind: output, shape index: {}]
  %s5 = sld [smem:[#allocation0]]
  $region57: #{inception_block.4} parent=0
    _
  %s7 = ssub.s32 1, %s5
  %s8 = scalar_select 0, %s7, %s5
  loop: start=0, step=1, limit=4
  $region2: #{inception_block.4} parent=0 // loop_pre_header
    _
  $region3: #{inception_block.4} parent=0 // loop_header
    %s10 = sphi 0, %s14
    %p11 = scmp.ge.s32.totalorder %s10, 4
    %s17 = sphi 0, %s36
    %s18 = sphi 0, %s32
    %s19 = sphi 0, %s28
    %s20 = sphi 0, %s17
    %s21 = sphi 0, %s18
    %s22 = sphi 0, %s19
    %s23 = sphi 0, %s20
    %s24 = sphi 0, %s21
    %s25 = sphi 0, %s22
    %s41 = sphi 0, %s43
    %s44 = sphi 0, %s41
    %s45 = sphi 0, %s44
    %s61 = sphi 0, %s45
    %s69 = sphi 0, %s71
    %s72 = sphi 0, %s69
    %s73 = sphi 0, %s72
    %s89 = sphi 0, %s73
    %s95 = sphi 0, %s97
    %s98 = sphi 0, %s95
    %s99 = sphi 0, %s98
    %s115 = sphi 0, %s99
    %s121 = sphi 0, %s123
    %s124 = sphi 0, %s121
    %s125 = sphi 0, %s124
    %s141 = sphi 0, %s125
    %s149 = sphi 0, %s151
    %s152 = sphi 0, %s149
    %s153 = sphi 0, %s152
    %s169 = sphi 0, %s153
  $region4: #{inception_block.4} parent=0 // loop_header_branch
    %13 = sbr.rel (%p11) target = $region8
  $region5: #{inception_block.4} parent=0 // loop_body
    %s15 = ssub.s32 %s10, 1
    %s16 = ssub.s32 %s10, 2
    %s26 = sadd.s32 1, %s19
    %p27 = scmp.ge.s32.totalorder %s26, 1
    %s28 = scalar_select %p27, 0, %s26
    %s29 = sadd.s32 1, %s18
    %s30 = scalar_select %p27, %s29, %s18
    %p31 = scmp.ge.s32.totalorder %s30, 1
    %s32 = scalar_select %p31, 0, %s30
    %s33 = sadd.s32 1, %s17
    %s34 = scalar_select %p31, %s33, %s17
    %p35 = scmp.ge.s32.totalorder %s34, 2
    %s36 = scalar_select %p35, 0, %s34
    %s37 = ssub.s32 %s17, %s36
    %s38 = ssub.s32 %s19, %s28
    %s39 = sor.u32 %s37, %s38
    %p40 = scmp.eq.s32.totalorder %s39, 0
    %s42 = sadd.s32 %s41, 1
    %s43 = scalar_select %p40, %s41, %s42
    %p46 = pneg %p40
    %p47 = scmp.eq.s32.totalorder %s10, 1
    %p48 = por %p46, %p47
    %p49 = scmp.ne.s32.totalorder %s41, %s44
    %p50 = scmp.eq.s32.totalorder %s10, 0
    %p51 = por %p49, %p50
    %p52 = scmp.ne.s32.totalorder %s41, %s44
    %p53 = scmp.eq.s32.totalorder %s15, 1
    %p54 = por %p52, %p53
    %p55 = scmp.ne.s32.totalorder %s44, %s45
    %p56 = scmp.eq.s32.totalorder %s15, 0
    %p57 = por %p55, %p56
    %p58 = scmp.ne.s32.totalorder %s44, %s45
    %p59 = scmp.eq.s32.totalorder %s16, 1
    %p60 = por %p58, %p59
    %p62 = scmp.ne.s32.totalorder %s45, %s61
    %p63 = scmp.eq.s32.totalorder %s16, 0
    %p64 = por %p62, %p63
    %s65 = ssub.s32 %s19, %s28
    %s66 = ssub.s32 %s18, %s32
    %s67 = sor.u32 %s65, %s66
    %p68 = scmp.eq.s32.totalorder %s67, 0
    %s70 = sadd.s32 %s69, 1
    %s71 = scalar_select %p68, %s69, %s70
    %p74 = pneg %p68
    %p75 = scmp.eq.s32.totalorder %s10, 1
    %p76 = por %p74, %p75
    %p77 = scmp.ne.s32.totalorder %s69, %s72
    %p78 = scmp.eq.s32.totalorder %s10, 0
    %p79 = por %p77, %p78
    %p80 = scmp.ne.s32.totalorder %s69, %s72
    %p81 = scmp.eq.s32.totalorder %s15, 1
    %p82 = por %p80, %p81
    %p83 = scmp.ne.s32.totalorder %s72, %s73
    %p84 = scmp.eq.s32.totalorder %s15, 0
    %p85 = por %p83, %p84
    %p86 = scmp.ne.s32.totalorder %s72, %s73
    %p87 = scmp.eq.s32.totalorder %s16, 1
    %p88 = por %p86, %p87
    %p90 = scmp.ne.s32.totalorder %s73, %s89
    %p91 = scmp.eq.s32.totalorder %s16, 0
    %p92 = por %p90, %p91
    %s93 = ssub.s32 %s18, %s32
    %p94 = scmp.eq.s32.totalorder %s93, 0
    %s96 = sadd.s32 %s95, 1
    %s97 = scalar_select %p94, %s95, %s96
    %p100 = pneg %p94
    %p101 = scmp.eq.s32.totalorder %s10, 1
    %p102 = por %p100, %p101
    %p103 = scmp.ne.s32.totalorder %s95, %s98
    %p104 = scmp.eq.s32.totalorder %s10, 0
    %p105 = por %p103, %p104
    %p106 = scmp.ne.s32.totalorder %s95, %s98
    %p107 = scmp.eq.s32.totalorder %s15, 1
    %p108 = por %p106, %p107
    %p109 = scmp.ne.s32.totalorder %s98, %s99
    %p110 = scmp.eq.s32.totalorder %s15, 0
    %p111 = por %p109, %p110
    %p112 = scmp.ne.s32.totalorder %s98, %s99
    %p113 = scmp.eq.s32.totalorder %s16, 1
    %p114 = por %p112, %p113
    %p116 = scmp.ne.s32.totalorder %s99, %s115
    %p117 = scmp.eq.s32.totalorder %s16, 0
    %p118 = por %p116, %p117
    %s119 = ssub.s32 %s18, %s32
    %p120 = scmp.eq.s32.totalorder %s119, 0
    %s122 = sadd.s32 %s121, 1
    %s123 = scalar_select %p120, %s121, %s122
    %p126 = pneg %p120
    %p127 = scmp.eq.s32.totalorder %s10, 1
    %p128 = por %p126, %p127
    %p129 = scmp.ne.s32.totalorder %s121, %s124
    %p130 = scmp.eq.s32.totalorder %s10, 0
    %p131 = por %p129, %p130
    %p132 = scmp.ne.s32.totalorder %s121, %s124
    %p133 = scmp.eq.s32.totalorder %s15, 1
    %p134 = por %p132, %p133
    %p135 = scmp.ne.s32.totalorder %s124, %s125
    %p136 = scmp.eq.s32.totalorder %s15, 0
    %p137 = por %p135, %p136
    %p138 = scmp.ne.s32.totalorder %s124, %s125
    %p139 = scmp.eq.s32.totalorder %s16, 1
    %p140 = por %p138, %p139
    %p142 = scmp.ne.s32.totalorder %s125, %s141
    %p143 = scmp.eq.s32.totalorder %s16, 0
    %p144 = por %p142, %p143
    %s145 = ssub.s32 %s17, %s36
    %s146 = ssub.s32 %s18, %s32
    %s147 = sor.u32 %s145, %s146
    %p148 = scmp.eq.s32.totalorder %s147, 0
    %s150 = sadd.s32 %s149, 1
    %s151 = scalar_select %p148, %s149, %s150
    %p154 = pneg %p148
    %p155 = scmp.eq.s32.totalorder %s10, 1
    %p156 = por %p154, %p155
    %p157 = scmp.ne.s32.totalorder %s149, %s152
    %p158 = scmp.eq.s32.totalorder %s10, 0
    %p159 = por %p157, %p158
    %p160 = scmp.ne.s32.totalorder %s149, %s152
    %p161 = scmp.eq.s32.totalorder %s15, 1
    %p162 = por %p160, %p161
    %p163 = scmp.ne.s32.totalorder %s152, %s153
    %p164 = scmp.eq.s32.totalorder %s15, 0
    %p165 = por %p163, %p164
    %p166 = scmp.ne.s32.totalorder %s152, %s153
    %p167 = scmp.eq.s32.totalorder %s16, 1
    %p168 = por %p166, %p167
    %p170 = scmp.ne.s32.totalorder %s153, %s169
    %p171 = scmp.eq.s32.totalorder %s16, 0
    %p172 = por %p170, %p171
    %p173 = scmp.le.s32.totalorder 1, %s10
    %p174 = scmp.lt.s32.totalorder %s10, 3
    %p175 = pnand %p173, %p174
    %p176 = pneg %p175
    // Predicated region
    $region9: #{inception_block.4} parent=5 // pred_check
      _
    $region10: #{inception_block.4} parent=5 // pred_check_branch
      %178 = sbr.rel (%p175) target = $region12
    $region11: #{inception_block.4} parent=5 // pred_region
      %s179 = ssub.s32 %s10, 1
      // Predicated region
      $region13: #{inception_block.4} parent=11 // pred_check
        %p180 = pneg %p85
      $region14: #{inception_block.4} parent=11 // pred_check_branch
        %182 = sbr.rel (%p180) target = $region16
      $region15: #{inception_block.4} parent=11 // pred_region
        %p183 = scmp.lt.s32.totalorder %s22, 0
        %s184 = scalar_select %p183, %s22, 0
        %p185 = scmp.lt.s32.totalorder %s21, 0
        %s186 = scalar_select %p185, %s21, 0
        %s187 = sadd.s32 %s186, %s184
        %s188 = smul.addr %s187, 4
        %s189 = scalar_lea.vmem %s1, %s188
      $region16: #{inception_block.4} parent=11 // pred_fallthru
        _
      // Predicated region
      $region17: #{inception_block.4} parent=11 // pred_check
        %p190 = pneg %p111
      $region18: #{inception_block.4} parent=11 // pred_check_branch
        %192 = sbr.rel (%p190) target = $region20
      $region19: #{inception_block.4} parent=11 // pred_region
        %p193 = scmp.lt.s32.totalorder %s21, 0
        %s194 = scalar_select %p193, %s21, 0
        %s195 = scalar_lea.vmem %s2, %s194
      $region20: #{inception_block.4} parent=11 // pred_fallthru
        _
      // Predicated region
      $region21: #{inception_block.4} parent=11 // pred_check
        %p196 = pneg %p137
      $region22: #{inception_block.4} parent=11 // pred_check_branch
        %198 = sbr.rel (%p196) target = $region24
      $region23: #{inception_block.4} parent=11 // pred_region
        %p199 = scmp.lt.s32.totalorder %s21, 0
        %s200 = scalar_select %p199, %s21, 0
        %s201 = scalar_lea.vmem %s3, %s200
      $region24: #{inception_block.4} parent=11 // pred_fallthru
        _
    $region12: #{inception_block.4} parent=5 // pred_fallthru
      _
    %p202 = scmp.lt.s32.totalorder %s10, 2
    // Predicated region
    $region25: #{inception_block.4} parent=5 // pred_check
      %p203 = pneg %p202
    $region26: #{inception_block.4} parent=5 // pred_check_branch
      %205 = sbr.rel (%p203) target = $region28
    $region27: #{inception_block.4} parent=5 // pred_region
      // Predicated region
      $region29: #{inception_block.4} parent=27 // pred_check
        %p206 = pneg %p51
      $region30: #{inception_block.4} parent=27 // pred_check_branch
        %208 = sbr.rel (%p206) target = $region32
      $region31: #{inception_block.4} parent=27 // pred_region
        %s209 = smul.u32 32, %s17
        %p210 = scmp.lt.s32.totalorder %s209, 63
        %s211 = scalar_select %p210, %s209, 63
        %p212 = scmp.lt.s32.totalorder %s19, 0
        %s213 = scalar_select %p212, %s19, 0
        %s214 = sadd.s32 %s213, %s211
        %s215 = smul.addr %s214, 8
        %s216 = scalar_lea.vmem %s0, %s215
        %s217 = smul.u32 32, %s17
      $region32: #{inception_block.4} parent=27 // pred_fallthru
        _
    $region28: #{inception_block.4} parent=5 // pred_fallthru
      _
    %p218 = scmp.le.s32.totalorder 1, %s10
    %p219 = scmp.lt.s32.totalorder %s10, 3
    %p220 = pnand %p218, %p219
    %p221 = pneg %p220
    // Predicated region
    $region33: #{inception_block.4} parent=5 // pred_check
      _
    $region34: #{inception_block.4} parent=5 // pred_check_branch
      %223 = sbr.rel (%p220) target = $region36
    $region35: #{inception_block.4} parent=5 // pred_region
      %s224 = ssub.s32 %s10, 1
      %s225 = smul.u32 32, %s20
      %p226 = scmp.lt.s32.totalorder %s225, 63
      %s227 = scalar_select %p226, %s225, 63
      %p228 = scmp.lt.s32.totalorder %s22, 0
      %s229 = scalar_select %p228, %s22, 0
      %s230 = sadd.s32 %s229, %s227
      %s231 = smul.addr %s230, 8
      %s232 = scalar_lea.vmem %s0, %s231
      %p233 = pneg %p57
      %p234 = pneg %p54
      %p235 = scmp.lt.s32.totalorder %s22, 0
      %s236 = scalar_select %p235, %s22, 0
      %p237 = scmp.lt.s32.totalorder %s21, 0
      %s238 = scalar_select %p237, %s21, 0
      %s239 = sadd.s32 %s238, %s236
      %s240 = smul.addr %s239, 4
      %s241 = scalar_lea.vmem %s1, %s240
      %p242 = pneg %p85
      %p243 = pneg %p82
      %p244 = scmp.lt.s32.totalorder %s21, 0
      %s245 = scalar_select %p244, %s21, 0
      %s246 = scalar_lea.vmem %s2, %s245
      %p247 = pneg %p111
      %p248 = pneg %p108
      %p249 = scmp.lt.s32.totalorder %s21, 0
      %s250 = scalar_select %p249, %s21, 0
      %s251 = scalar_lea.vmem %s3, %s250
      %p252 = pneg %p137
      %p253 = pneg %p134
      %p254 = pneg %p165
      %p255 = pneg %p162
      %s256 = smul.u32 32, %s20
      %p257 = scmp.lt.s32.totalorder %s256, 63
      %s258 = scalar_select %p257, %s256, 63
      %p259 = scmp.lt.s32.totalorder %s21, 0
      %s260 = scalar_select %p259, %s21, 0
      %s261 = sadd.s32 %s260, %s258
      %s262 = smul.addr %s261, 8
      %s263 = scalar_lea.vmem %s4, %s262
      %s264 = smul.u32 32, %s20
      %p265 = scmp.lt.s32.totalorder %s264, 63
      %s266 = scalar_select %p265, %s264, 63
      %p267 = scmp.lt.s32.totalorder %s22, 0
      %s268 = scalar_select %p267, %s22, 0
      %s269 = sadd.s32 %s268, %s266
      %s270 = smul.addr %s269, 8
      %s271 = scalar_lea.vmem %s0, %s270
      %s272 = smul.u32 32, %s20
      %p273 = scmp.lt.s32.totalorder %s22, 0
      %s274 = scalar_select %p273, %s22, 0
      %p275 = scmp.lt.s32.totalorder %s21, 0
      %s276 = scalar_select %p275, %s21, 0
      %s277 = sadd.s32 %s276, %s274
      %s278 = smul.addr %s277, 4
      %s279 = scalar_lea.vmem %s1, %s278
      %p280 = scmp.lt.s32.totalorder %s21, 0
      %s281 = scalar_select %p280, %s21, 0
      %s282 = scalar_lea.vmem %s2, %s281
      %p283 = scmp.lt.s32.totalorder %s21, 0
      %s284 = scalar_select %p283, %s21, 0
      %s285 = scalar_lea.vmem %s3, %s284
      %s286 = smul.u32 32, %s20
      %p287 = scmp.lt.s32.totalorder %s286, 63
      %s288 = scalar_select %p287, %s286, 63
      %p289 = scmp.lt.s32.totalorder %s21, 0
      %s290 = scalar_select %p289, %s21, 0
      %s291 = sadd.s32 %s290, %s288
      %s292 = smul.addr %s291, 8
      %s293 = scalar_lea.vmem %s4, %s292
      %s294 = smul.u32 32, %s20
      %p296 = scmp.eq.s32.totalorder %s22, 0
      // Predicated region
      $region37: #{inception_block.4} parent=35 // pred_check
        %p297 = pneg %p296
      $region38: #{inception_block.4} parent=35 // pred_check_branch
        %299 = sbr.rel (%p297) target = $region40
      $region39: #{inception_block.4} parent=35 // pred_region
        %vm300 = vcmask 80896
        %301 = vst.msk [vmem:[#allocation2] sm:$0xff] %vm300, 0.0
        %302 = vst.msk [vmem:[#allocation2 + $0x8] sm:$0xff] %vm300, 0.0
        %303 = vst.msk [vmem:[#allocation2 + $0x10] sm:$0xff] %vm300, 0.0
        %304 = vst.msk [vmem:[#allocation2 + $0x18] sm:$0xff] %vm300, 0.0
        %305 = vst.msk [vmem:[#allocation2 + $0x20] sm:$0xff] %vm300, 0.0
        %306 = vst.msk [vmem:[#allocation2 + $0x28] sm:$0xff] %vm300, 0.0
        %307 = vst.msk [vmem:[#allocation2 + $0x30] sm:$0xff] %vm300, 0.0
        %308 = vst.msk [vmem:[#allocation2 + $0x38] sm:$0xff] %vm300, 0.0
        %309 = vst.msk [vmem:[#allocation2 + $0x40] sm:$0xff] %vm300, 0.0
        %310 = vst.msk [vmem:[#allocation2 + $0x48] sm:$0xff] %vm300, 0.0
        %311 = vst.msk [vmem:[#allocation2 + $0x50] sm:$0xff] %vm300, 0.0
        %312 = vst.msk [vmem:[#allocation2 + $0x58] sm:$0xff] %vm300, 0.0
        %313 = vst.msk [vmem:[#allocation2 + $0x60] sm:$0xff] %vm300, 0.0
        %314 = vst.msk [vmem:[#allocation2 + $0x68] sm:$0xff] %vm300, 0.0
        %315 = vst.msk [vmem:[#allocation2 + $0x70] sm:$0xff] %vm300, 0.0
        %316 = vst.msk [vmem:[#allocation2 + $0x78] sm:$0xff] %vm300, 0.0
        %317 = vst.msk [vmem:[#allocation2 + $0x80] sm:$0xff] %vm300, 0.0
        %318 = vst.msk [vmem:[#allocation2 + $0x88] sm:$0xff] %vm300, 0.0
        %319 = vst.msk [vmem:[#allocation2 + $0x90] sm:$0xff] %vm300, 0.0
        %320 = vst.msk [vmem:[#allocation2 + $0x98] sm:$0xff] %vm300, 0.0
        %321 = vst.msk [vmem:[#allocation2 + $0xa0] sm:$0xff] %vm300, 0.0
        %322 = vst.msk [vmem:[#allocation2 + $0xa8] sm:$0xff] %vm300, 0.0
        %323 = vst.msk [vmem:[#allocation2 + $0xb0] sm:$0xff] %vm300, 0.0
        %324 = vst.msk [vmem:[#allocation2 + $0xb8] sm:$0xff] %vm300, 0.0
        %325 = vst.msk [vmem:[#allocation2 + $0xc0] sm:$0xff] %vm300, 0.0
        %326 = vst.msk [vmem:[#allocation2 + $0xc8] sm:$0xff] %vm300, 0.0
        %327 = vst.msk [vmem:[#allocation2 + $0xd0] sm:$0xff] %vm300, 0.0
        %328 = vst.msk [vmem:[#allocation2 + $0xd8] sm:$0xff] %vm300, 0.0
        %329 = vst.msk [vmem:[#allocation2 + $0xe0] sm:$0xff] %vm300, 0.0
        %330 = vst.msk [vmem:[#allocation2 + $0xe8] sm:$0xff] %vm300, 0.0
        %331 = vst.msk [vmem:[#allocation2 + $0xf0] sm:$0xff] %vm300, 0.0
        %332 = vst.msk [vmem:[#allocation2 + $0xf8] sm:$0xff] %vm300, 0.0
      $region40: #{inception_block.4} parent=35 // pred_fallthru
        _
      %v333 = vld [vmem:[#allocation2] sm:$0xff]
      %v334 = vld [vmem:[#allocation2 + $0x8] sm:$0xff]
      %v335 = vld [vmem:[#allocation2 + $0x10] sm:$0xff]
      %v336 = vld [vmem:[#allocation2 + $0x18] sm:$0xff]
      %v337 = vld [vmem:[#allocation2 + $0x20] sm:$0xff]
      %v338 = vld [vmem:[#allocation2 + $0x28] sm:$0xff]
      %v339 = vld [vmem:[#allocation2 + $0x30] sm:$0xff]
      %v340 = vld [vmem:[#allocation2 + $0x38] sm:$0xff]
      %v341 = vld [vmem:[#allocation2 + $0x40] sm:$0xff]
      %v342 = vld [vmem:[#allocation2 + $0x48] sm:$0xff]
      %v343 = vld [vmem:[#allocation2 + $0x50] sm:$0xff]
      %v344 = vld [vmem:[#allocation2 + $0x58] sm:$0xff]
      %v345 = vld [vmem:[#allocation2 + $0x60] sm:$0xff]
      %v346 = vld [vmem:[#allocation2 + $0x68] sm:$0xff]
      %v347 = vld [vmem:[#allocation2 + $0x70] sm:$0xff]
      %v348 = vld [vmem:[#allocation2 + $0x78] sm:$0xff]
      %v349 = vld [vmem:[#allocation2 + $0x80] sm:$0xff]
      %v350 = vld [vmem:[#allocation2 + $0x88] sm:$0xff]
      %v351 = vld [vmem:[#allocation2 + $0x90] sm:$0xff]
      %v352 = vld [vmem:[#allocation2 + $0x98] sm:$0xff]
      %v353 = vld [vmem:[#allocation2 + $0xa0] sm:$0xff]
      %v354 = vld [vmem:[#allocation2 + $0xa8] sm:$0xff]
      %v355 = vld [vmem:[#allocation2 + $0xb0] sm:$0xff]
      %v356 = vld [vmem:[#allocation2 + $0xb8] sm:$0xff]
      %v357 = vld [vmem:[#allocation2 + $0xc0] sm:$0xff]
      %v358 = vld [vmem:[#allocation2 + $0xc8] sm:$0xff]
      %v359 = vld [vmem:[#allocation2 + $0xd0] sm:$0xff]
      %v360 = vld [vmem:[#allocation2 + $0xd8] sm:$0xff]
      %v361 = vld [vmem:[#allocation2 + $0xe0] sm:$0xff]
      %v362 = vld [vmem:[#allocation2 + $0xe8] sm:$0xff]
      %v363 = vld [vmem:[#allocation2 + $0xf0] sm:$0xff]
      %v364 = vld [vmem:[#allocation2 + $0xf8] sm:$0xff]
      %v365 = vld [vmem:[%s271] sm:$0xff]
      %v366 = vld [vmem:[%s271 + $0x8] sm:$0xff]
      %v367 = vld [vmem:[%s271 + $0x10] sm:$0xff]
      %v368 = vld [vmem:[%s271 + $0x18] sm:$0xff]
      %v369 = vld [vmem:[%s271 + $0x20] sm:$0xff]
      %v370 = vld [vmem:[%s271 + $0x28] sm:$0xff]
      %v371 = vld [vmem:[%s271 + $0x30] sm:$0xff]
      %v372 = vld [vmem:[%s271 + $0x38] sm:$0xff]
      %v373 = vld [vmem:[%s271 + $0x40] sm:$0xff]
      %v374 = vld [vmem:[%s271 + $0x48] sm:$0xff]
      %v375 = vld [vmem:[%s271 + $0x50] sm:$0xff]
      %v376 = vld [vmem:[%s271 + $0x58] sm:$0xff]
      %v377 = vld [vmem:[%s271 + $0x60] sm:$0xff]
      %v378 = vld [vmem:[%s271 + $0x68] sm:$0xff]
      %v379 = vld [vmem:[%s271 + $0x70] sm:$0xff]
      %v380 = vld [vmem:[%s271 + $0x78] sm:$0xff]
      %v381 = vld [vmem:[%s271 + $0x80] sm:$0xff]
      %v382 = vld [vmem:[%s271 + $0x88] sm:$0xff]
      %v383 = vld [vmem:[%s271 + $0x90] sm:$0xff]
      %v384 = vld [vmem:[%s271 + $0x98] sm:$0xff]
      %v385 = vld [vmem:[%s271 + $0xa0] sm:$0xff]
      %v386 = vld [vmem:[%s271 + $0xa8] sm:$0xff]
      %v387 = vld [vmem:[%s271 + $0xb0] sm:$0xff]
      %v388 = vld [vmem:[%s271 + $0xb8] sm:$0xff]
      %v389 = vld [vmem:[%s271 + $0xc0] sm:$0xff]
      %v390 = vld [vmem:[%s271 + $0xc8] sm:$0xff]
      %v391 = vld [vmem:[%s271 + $0xd0] sm:$0xff]
      %v392 = vld [vmem:[%s271 + $0xd8] sm:$0xff]
      %v393 = vld [vmem:[%s271 + $0xe0] sm:$0xff]
      %v394 = vld [vmem:[%s271 + $0xe8] sm:$0xff]
      %v395 = vld [vmem:[%s271 + $0xf0] sm:$0xff]
      %v396 = vld [vmem:[%s271 + $0xf8] sm:$0xff]
      %v397 = vpack.c.bf16 %v366, %v365
      %v398 = vpack.c.bf16 %v368, %v367
      %v399 = vpack.c.bf16 %v370, %v369
      %v400 = vpack.c.bf16 %v372, %v371
      %v401 = vpack.c.bf16 %v374, %v373
      %v402 = vpack.c.bf16 %v376, %v375
      %v403 = vpack.c.bf16 %v378, %v377
      %v404 = vpack.c.bf16 %v380, %v379
      %v405 = vpack.c.bf16 %v382, %v381
      %v406 = vpack.c.bf16 %v384, %v383
      %v407 = vpack.c.bf16 %v386, %v385
      %v408 = vpack.c.bf16 %v388, %v387
      %v409 = vpack.c.bf16 %v390, %v389
      %v410 = vpack.c.bf16 %v392, %v391
      %v411 = vpack.c.bf16 %v394, %v393
      %v412 = vpack.c.bf16 %v396, %v395
      %v413 = vld [vmem:[%s279] sm:$0xf]
      %v414 = vpack.c.bf16 %v413, %v413
      %vm415 = vcmask 31744
      %v417 = vsel %vm415, %v397, 0
      %v420 = vsel %vm415, %v398, 0
      %v423 = vsel %vm415, %v399, 0
      %v426 = vsel %vm415, %v400, 0
      %v429 = vsel %vm415, %v401, 0
      %v432 = vsel %vm415, %v402, 0
      %v435 = vsel %vm415, %v403, 0
      %v438 = vsel %vm415, %v404, 0
      %v441 = vsel %vm415, %v405, 0
      %v444 = vsel %vm415, %v406, 0
      %v447 = vsel %vm415, %v407, 0
      %v450 = vsel %vm415, %v408, 0
      %v453 = vsel %vm415, %v409, 0
      %v456 = vsel %vm415, %v410, 0
      %v459 = vsel %vm415, %v411, 0
      %v462 = vsel %vm415, %v412, 0
      %vm464 = vcmask 1041408
      %v466 = vsel %vm464, %v414, 0
      %468 = vmatpush.bf16.msra.mxu0 0
      %469 = vmatpush.bf16.msra.mxu0 0
      %470 = vmatpush.bf16.msra.mxu0 0
      %471 = vmatpush.bf16.msra.mxu0 0
      %472 = vmatpush.bf16.msra.mxu0 0
      %473 = vmatpush.bf16.msra.mxu0 0
      %474 = vmatpush.bf16.msra.mxu0 0
      %475 = vmatpush.bf16.msra.mxu0 %v466
      %476 = vmatmul.bf16.gmra.mxu0 %v417
      %v477 = vpop.f32.mrf.mxu0
      %v478 = vadd.f32 0.0, %v477
      %v479 = vpop.f32.mrf.mxu0
      %v480 = vadd.f32 0.0, %v479
      %481 = vmatmul.bf16.gmra.mxu0 %v420
      %v482 = vpop.f32.mrf.mxu0
      %v483 = vadd.f32 0.0, %v482
      %v484 = vpop.f32.mrf.mxu0
      %v485 = vadd.f32 0.0, %v484
      %486 = vmatmul.bf16.gmra.mxu0 %v423
      %v487 = vpop.f32.mrf.mxu0
      %v488 = vadd.f32 0.0, %v487
      %v489 = vpop.f32.mrf.mxu0
      %v490 = vadd.f32 0.0, %v489
      %491 = vmatmul.bf16.gmra.mxu0 %v426
      %v492 = vpop.f32.mrf.mxu0
      %v493 = vadd.f32 0.0, %v492
      %v494 = vpop.f32.mrf.mxu0
      %v495 = vadd.f32 0.0, %v494
      %496 = vmatmul.bf16.gmra.mxu0 %v429
      %v497 = vpop.f32.mrf.mxu0
      %v498 = vadd.f32 0.0, %v497
      %v499 = vpop.f32.mrf.mxu0
      %v500 = vadd.f32 0.0, %v499
      %501 = vmatmul.bf16.gmra.mxu0 %v432
      %v502 = vpop.f32.mrf.mxu0
      %v503 = vadd.f32 0.0, %v502
      %v504 = vpop.f32.mrf.mxu0
      %v505 = vadd.f32 0.0, %v504
      %506 = vmatmul.bf16.gmra.mxu0 %v435
      %v507 = vpop.f32.mrf.mxu0
      %v508 = vadd.f32 0.0, %v507
      %v509 = vpop.f32.mrf.mxu0
      %v510 = vadd.f32 0.0, %v509
      %511 = vmatmul.bf16.gmra.mxu0 %v438
      %v512 = vpop.f32.mrf.mxu0
      %v513 = vadd.f32 0.0, %v512
      %v514 = vpop.f32.mrf.mxu0
      %v515 = vadd.f32 0.0, %v514
      %516 = vmatmul.bf16.gmra.mxu0 %v441
      %v517 = vpop.f32.mrf.mxu0
      %v518 = vadd.f32 0.0, %v517
      %v519 = vpop.f32.mrf.mxu0
      %v520 = vadd.f32 0.0, %v519
      %521 = vmatmul.bf16.gmra.mxu0 %v444
      %v522 = vpop.f32.mrf.mxu0
      %v523 = vadd.f32 0.0, %v522
      %v524 = vpop.f32.mrf.mxu0
      %v525 = vadd.f32 0.0, %v524
      %526 = vmatmul.bf16.gmra.mxu0 %v447
      %v527 = vpop.f32.mrf.mxu0
      %v528 = vadd.f32 0.0, %v527
      %v529 = vpop.f32.mrf.mxu0
      %v530 = vadd.f32 0.0, %v529
      %531 = vmatmul.bf16.gmra.mxu0 %v450
      %v532 = vpop.f32.mrf.mxu0
      %v533 = vadd.f32 0.0, %v532
      %v534 = vpop.f32.mrf.mxu0
      %v535 = vadd.f32 0.0, %v534
      %536 = vmatmul.bf16.gmra.mxu0 %v453
      %v537 = vpop.f32.mrf.mxu0
      %v538 = vadd.f32 0.0, %v537
      %v539 = vpop.f32.mrf.mxu0
      %v540 = vadd.f32 0.0, %v539
      %541 = vmatmul.bf16.gmra.mxu0 %v456
      %v542 = vpop.f32.mrf.mxu0
      %v543 = vadd.f32 0.0, %v542
      %v544 = vpop.f32.mrf.mxu0
      %v545 = vadd.f32 0.0, %v544
      %546 = vmatmul.bf16.gmra.mxu0 %v459
      %v547 = vpop.f32.mrf.mxu0
      %v548 = vadd.f32 0.0, %v547
      %v549 = vpop.f32.mrf.mxu0
      %v550 = vadd.f32 0.0, %v549
      %551 = vmatmul.bf16.gmra.mxu0 %v462
      %v552 = vpop.f32.mrf.mxu0
      %v553 = vadd.f32 0.0, %v552
      %v554 = vpop.f32.mrf.mxu0
      %v555 = vadd.f32 0.0, %v554
      %556 = vdwg.mxu0
      %v557 = vadd.f32 %v333, %v478
      %v558 = vadd.f32 %v334, %v480
      %v559 = vadd.f32 %v335, %v483
      %v560 = vadd.f32 %v336, %v485
      %v561 = vadd.f32 %v337, %v488
      %v562 = vadd.f32 %v338, %v490
      %v563 = vadd.f32 %v339, %v493
      %v564 = vadd.f32 %v340, %v495
      %v565 = vadd.f32 %v341, %v498
      %v566 = vadd.f32 %v342, %v500
      %v567 = vadd.f32 %v343, %v503
      %v568 = vadd.f32 %v344, %v505
      %v569 = vadd.f32 %v345, %v508
      %v570 = vadd.f32 %v346, %v510
      %v571 = vadd.f32 %v347, %v513
      %v572 = vadd.f32 %v348, %v515
      %v573 = vadd.f32 %v349, %v518
      %v574 = vadd.f32 %v350, %v520
      %v575 = vadd.f32 %v351, %v523
      %v576 = vadd.f32 %v352, %v525
      %v577 = vadd.f32 %v353, %v528
      %v578 = vadd.f32 %v354, %v530
      %v579 = vadd.f32 %v355, %v533
      %v580 = vadd.f32 %v356, %v535
      %v581 = vadd.f32 %v357, %v538
      %v582 = vadd.f32 %v358, %v540
      %v583 = vadd.f32 %v359, %v543
      %v584 = vadd.f32 %v360, %v545
      %v585 = vadd.f32 %v361, %v548
      %v586 = vadd.f32 %v362, %v550
      %v587 = vadd.f32 %v363, %v553
      %v588 = vadd.f32 %v364, %v555
      %vm589 = vcmask 80896
      %590 = vst.msk [vmem:[#allocation2] sm:$0xff] %vm589, %v557
      %591 = vst.msk [vmem:[#allocation2 + $0x8] sm:$0xff] %vm589, %v558
      %592 = vst.msk [vmem:[#allocation2 + $0x10] sm:$0xff] %vm589, %v559
      %593 = vst.msk [vmem:[#allocation2 + $0x18] sm:$0xff] %vm589, %v560
      %594 = vst.msk [vmem:[#allocation2 + $0x20] sm:$0xff] %vm589, %v561
      %595 = vst.msk [vmem:[#allocation2 + $0x28] sm:$0xff] %vm589, %v562
      %596 = vst.msk [vmem:[#allocation2 + $0x30] sm:$0xff] %vm589, %v563
      %597 = vst.msk [vmem:[#allocation2 + $0x38] sm:$0xff] %vm589, %v564
      %598 = vst.msk [vmem:[#allocation2 + $0x40] sm:$0xff] %vm589, %v565
      %599 = vst.msk [vmem:[#allocation2 + $0x48] sm:$0xff] %vm589, %v566
      %600 = vst.msk [vmem:[#allocation2 + $0x50] sm:$0xff] %vm589, %v567
      %601 = vst.msk [vmem:[#allocation2 + $0x58] sm:$0xff] %vm589, %v568
      %602 = vst.msk [vmem:[#allocation2 + $0x60] sm:$0xff] %vm589, %v569
      %603 = vst.msk [vmem:[#allocation2 + $0x68] sm:$0xff] %vm589, %v570
      %604 = vst.msk [vmem:[#allocation2 + $0x70] sm:$0xff] %vm589, %v571
      %605 = vst.msk [vmem:[#allocation2 + $0x78] sm:$0xff] %vm589, %v572
      %606 = vst.msk [vmem:[#allocation2 + $0x80] sm:$0xff] %vm589, %v573
      %607 = vst.msk [vmem:[#allocation2 + $0x88] sm:$0xff] %vm589, %v574
      %608 = vst.msk [vmem:[#allocation2 + $0x90] sm:$0xff] %vm589, %v575
      %609 = vst.msk [vmem:[#allocation2 + $0x98] sm:$0xff] %vm589, %v576
      %610 = vst.msk [vmem:[#allocation2 + $0xa0] sm:$0xff] %vm589, %v577
      %611 = vst.msk [vmem:[#allocation2 + $0xa8] sm:$0xff] %vm589, %v578
      %612 = vst.msk [vmem:[#allocation2 + $0xb0] sm:$0xff] %vm589, %v579
      %613 = vst.msk [vmem:[#allocation2 + $0xb8] sm:$0xff] %vm589, %v580
      %614 = vst.msk [vmem:[#allocation2 + $0xc0] sm:$0xff] %vm589, %v581
      %615 = vst.msk [vmem:[#allocation2 + $0xc8] sm:$0xff] %vm589, %v582
      %616 = vst.msk [vmem:[#allocation2 + $0xd0] sm:$0xff] %vm589, %v583
      %617 = vst.msk [vmem:[#allocation2 + $0xd8] sm:$0xff] %vm589, %v584
      %618 = vst.msk [vmem:[#allocation2 + $0xe0] sm:$0xff] %vm589, %v585
      %619 = vst.msk [vmem:[#allocation2 + $0xe8] sm:$0xff] %vm589, %v586
      %620 = vst.msk [vmem:[#allocation2 + $0xf0] sm:$0xff] %vm589, %v587
      %621 = vst.msk [vmem:[#allocation2 + $0xf8] sm:$0xff] %vm589, %v588
      // Predicated region
      $region41: #{inception_block.4} parent=35 // pred_check
        %p622 = pneg %p296
      $region42: #{inception_block.4} parent=35 // pred_check_branch
        %624 = sbr.rel (%p622) target = $region44
      $region43: #{inception_block.4} parent=35 // pred_region
        %v625 = vld [vmem:[#allocation2] sm:$0xff]
        %v626 = vld [vmem:[#allocation2 + $0x8] sm:$0xff]
        %v627 = vld [vmem:[#allocation2 + $0x10] sm:$0xff]
        %v628 = vld [vmem:[#allocation2 + $0x18] sm:$0xff]
        %v629 = vld [vmem:[#allocation2 + $0x20] sm:$0xff]
        %v630 = vld [vmem:[#allocation2 + $0x28] sm:$0xff]
        %v631 = vld [vmem:[#allocation2 + $0x30] sm:$0xff]
        %v632 = vld [vmem:[#allocation2 + $0x38] sm:$0xff]
        %v633 = vld [vmem:[#allocation2 + $0x40] sm:$0xff]
        %v634 = vld [vmem:[#allocation2 + $0x48] sm:$0xff]
        %v635 = vld [vmem:[#allocation2 + $0x50] sm:$0xff]
        %v636 = vld [vmem:[#allocation2 + $0x58] sm:$0xff]
        %v637 = vld [vmem:[#allocation2 + $0x60] sm:$0xff]
        %v638 = vld [vmem:[#allocation2 + $0x68] sm:$0xff]
        %v639 = vld [vmem:[#allocation2 + $0x70] sm:$0xff]
        %v640 = vld [vmem:[#allocation2 + $0x78] sm:$0xff]
        %v641 = vld [vmem:[#allocation2 + $0x80] sm:$0xff]
        %v642 = vld [vmem:[#allocation2 + $0x88] sm:$0xff]
        %v643 = vld [vmem:[#allocation2 + $0x90] sm:$0xff]
        %v644 = vld [vmem:[#allocation2 + $0x98] sm:$0xff]
        %v645 = vld [vmem:[#allocation2 + $0xa0] sm:$0xff]
        %v646 = vld [vmem:[#allocation2 + $0xa8] sm:$0xff]
        %v647 = vld [vmem:[#allocation2 + $0xb0] sm:$0xff]
        %v648 = vld [vmem:[#allocation2 + $0xb8] sm:$0xff]
        %v649 = vld [vmem:[#allocation2 + $0xc0] sm:$0xff]
        %v650 = vld [vmem:[#allocation2 + $0xc8] sm:$0xff]
        %v651 = vld [vmem:[#allocation2 + $0xd0] sm:$0xff]
        %v652 = vld [vmem:[#allocation2 + $0xd8] sm:$0xff]
        %v653 = vld [vmem:[#allocation2 + $0xe0] sm:$0xff]
        %v654 = vld [vmem:[#allocation2 + $0xe8] sm:$0xff]
        %v655 = vld [vmem:[#allocation2 + $0xf0] sm:$0xff]
        %v656 = vld [vmem:[#allocation2 + $0xf8] sm:$0xff]
        %v657 = vld [vmem:[%s282] sm:$0x1]
        %v659 = vperm.slane %v657, 0
        %v661 = vmul.f32 %v625, %v659
        %v662 = vmul.f32 %v626, %v659
        %v663 = vmul.f32 %v627, %v659
        %v664 = vmul.f32 %v628, %v659
        %v665 = vmul.f32 %v629, %v659
        %v666 = vmul.f32 %v630, %v659
        %v667 = vmul.f32 %v631, %v659
        %v668 = vmul.f32 %v632, %v659
        %v669 = vmul.f32 %v633, %v659
        %v670 = vmul.f32 %v634, %v659
        %v671 = vmul.f32 %v635, %v659
        %v672 = vmul.f32 %v636, %v659
        %v673 = vmul.f32 %v637, %v659
        %v674 = vmul.f32 %v638, %v659
        %v675 = vmul.f32 %v639, %v659
        %v676 = vmul.f32 %v640, %v659
        %v677 = vmul.f32 %v641, %v659
        %v678 = vmul.f32 %v642, %v659
        %v679 = vmul.f32 %v643, %v659
        %v680 = vmul.f32 %v644, %v659
        %v681 = vmul.f32 %v645, %v659
        %v682 = vmul.f32 %v646, %v659
        %v683 = vmul.f32 %v647, %v659
        %v684 = vmul.f32 %v648, %v659
        %v685 = vmul.f32 %v649, %v659
        %v686 = vmul.f32 %v650, %v659
        %v687 = vmul.f32 %v651, %v659
        %v688 = vmul.f32 %v652, %v659
        %v689 = vmul.f32 %v653, %v659
        %v690 = vmul.f32 %v654, %v659
        %v691 = vmul.f32 %v655, %v659
        %v692 = vmul.f32 %v656, %v659
        %v693 = vld [vmem:[%s285] sm:$0x1]
        %v695 = vperm.slane %v693, 0
        %v697 = vadd.f32 %v661, %v695
        %v698 = vadd.f32 %v662, %v695
        %v699 = vadd.f32 %v663, %v695
        %v700 = vadd.f32 %v664, %v695
        %v701 = vadd.f32 %v665, %v695
        %v702 = vadd.f32 %v666, %v695
        %v703 = vadd.f32 %v667, %v695
        %v704 = vadd.f32 %v668, %v695
        %v705 = vadd.f32 %v669, %v695
        %v706 = vadd.f32 %v670, %v695
        %v707 = vadd.f32 %v671, %v695
        %v708 = vadd.f32 %v672, %v695
        %v709 = vadd.f32 %v673, %v695
        %v710 = vadd.f32 %v674, %v695
        %v711 = vadd.f32 %v675, %v695
        %v712 = vadd.f32 %v676, %v695
        %v713 = vadd.f32 %v677, %v695
        %v714 = vadd.f32 %v678, %v695
        %v715 = vadd.f32 %v679, %v695
        %v716 = vadd.f32 %v680, %v695
        %v717 = vadd.f32 %v681, %v695
        %v718 = vadd.f32 %v682, %v695
        %v719 = vadd.f32 %v683, %v695
        %v720 = vadd.f32 %v684, %v695
        %v721 = vadd.f32 %v685, %v695
        %v722 = vadd.f32 %v686, %v695
        %v723 = vadd.f32 %v687, %v695
        %v724 = vadd.f32 %v688, %v695
        %v725 = vadd.f32 %v689, %v695
        %v726 = vadd.f32 %v690, %v695
        %v727 = vadd.f32 %v691, %v695
        %v728 = vadd.f32 %v692, %v695
        %v729 = vmax.f32 %v697, 0.0
        %v730 = vmax.f32 %v698, 0.0
        %v731 = vmax.f32 %v699, 0.0
        %v732 = vmax.f32 %v700, 0.0
        %v733 = vmax.f32 %v701, 0.0
        %v734 = vmax.f32 %v702, 0.0
        %v735 = vmax.f32 %v703, 0.0
        %v736 = vmax.f32 %v704, 0.0
        %v737 = vmax.f32 %v705, 0.0
        %v738 = vmax.f32 %v706, 0.0
        %v739 = vmax.f32 %v707, 0.0
        %v740 = vmax.f32 %v708, 0.0
        %v741 = vmax.f32 %v709, 0.0
        %v742 = vmax.f32 %v710, 0.0
        %v743 = vmax.f32 %v711, 0.0
        %v744 = vmax.f32 %v712, 0.0
        %v745 = vmax.f32 %v713, 0.0
        %v746 = vmax.f32 %v714, 0.0
        %v747 = vmax.f32 %v715, 0.0
        %v748 = vmax.f32 %v716, 0.0
        %v749 = vmax.f32 %v717, 0.0
        %v750 = vmax.f32 %v718, 0.0
        %v751 = vmax.f32 %v719, 0.0
        %v752 = vmax.f32 %v720, 0.0
        %v753 = vmax.f32 %v721, 0.0
        %v754 = vmax.f32 %v722, 0.0
        %v755 = vmax.f32 %v723, 0.0
        %v756 = vmax.f32 %v724, 0.0
        %v757 = vmax.f32 %v725, 0.0
        %v758 = vmax.f32 %v726, 0.0
        %v759 = vmax.f32 %v727, 0.0
        %v760 = vmax.f32 %v728, 0.0
        %761 = vst.msk [vmem:[%s293] sm:$0xff] %vm589, %v729
        %762 = vst.msk [vmem:[%s293 + $0x8] sm:$0xff] %vm589, %v730
        %763 = vst.msk [vmem:[%s293 + $0x10] sm:$0xff] %vm589, %v731
        %764 = vst.msk [vmem:[%s293 + $0x18] sm:$0xff] %vm589, %v732
        %765 = vst.msk [vmem:[%s293 + $0x20] sm:$0xff] %vm589, %v733
        %766 = vst.msk [vmem:[%s293 + $0x28] sm:$0xff] %vm589, %v734
        %767 = vst.msk [vmem:[%s293 + $0x30] sm:$0xff] %vm589, %v735
        %768 = vst.msk [vmem:[%s293 + $0x38] sm:$0xff] %vm589, %v736
        %769 = vst.msk [vmem:[%s293 + $0x40] sm:$0xff] %vm589, %v737
        %770 = vst.msk [vmem:[%s293 + $0x48] sm:$0xff] %vm589, %v738
        %771 = vst.msk [vmem:[%s293 + $0x50] sm:$0xff] %vm589, %v739
        %772 = vst.msk [vmem:[%s293 + $0x58] sm:$0xff] %vm589, %v740
        %773 = vst.msk [vmem:[%s293 + $0x60] sm:$0xff] %vm589, %v741
        %774 = vst.msk [vmem:[%s293 + $0x68] sm:$0xff] %vm589, %v742
        %775 = vst.msk [vmem:[%s293 + $0x70] sm:$0xff] %vm589, %v743
        %776 = vst.msk [vmem:[%s293 + $0x78] sm:$0xff] %vm589, %v744
        %777 = vst.msk [vmem:[%s293 + $0x80] sm:$0xff] %vm589, %v745
        %778 = vst.msk [vmem:[%s293 + $0x88] sm:$0xff] %vm589, %v746
        %779 = vst.msk [vmem:[%s293 + $0x90] sm:$0xff] %vm589, %v747
        %780 = vst.msk [vmem:[%s293 + $0x98] sm:$0xff] %vm589, %v748
        %781 = vst.msk [vmem:[%s293 + $0xa0] sm:$0xff] %vm589, %v749
        %782 = vst.msk [vmem:[%s293 + $0xa8] sm:$0xff] %vm589, %v750
        %783 = vst.msk [vmem:[%s293 + $0xb0] sm:$0xff] %vm589, %v751
        %784 = vst.msk [vmem:[%s293 + $0xb8] sm:$0xff] %vm589, %v752
        %785 = vst.msk [vmem:[%s293 + $0xc0] sm:$0xff] %vm589, %v753
        %786 = vst.msk [vmem:[%s293 + $0xc8] sm:$0xff] %vm589, %v754
        %787 = vst.msk [vmem:[%s293 + $0xd0] sm:$0xff] %vm589, %v755
        %788 = vst.msk [vmem:[%s293 + $0xd8] sm:$0xff] %vm589, %v756
        %789 = vst.msk [vmem:[%s293 + $0xe0] sm:$0xff] %vm589, %v757
        %790 = vst.msk [vmem:[%s293 + $0xe8] sm:$0xff] %vm589, %v758
        %791 = vst.msk [vmem:[%s293 + $0xf0] sm:$0xff] %vm589, %v759
        %792 = vst.msk [vmem:[%s293 + $0xf8] sm:$0xff] %vm589, %v760
      $region44: #{inception_block.4} parent=35 // pred_fallthru
        _
      %s793 = smul.u32 32, %s20
      %p794 = scmp.lt.s32.totalorder %s793, 63
      %s795 = scalar_select %p794, %s793, 63
      %p796 = scmp.lt.s32.totalorder %s21, 0
      %s797 = scalar_select %p796, %s21, 0
      %s798 = sadd.s32 %s797, %s795
      %s799 = smul.addr %s798, 8
      %s800 = scalar_lea.vmem %s4, %s799
      // Predicated region
      $region45: #{inception_block.4} parent=35 // pred_check
        %p801 = pneg %p162
      $region46: #{inception_block.4} parent=35 // pred_check_branch
        %803 = sbr.rel (%p801) target = $region48
      $region47: #{inception_block.4} parent=35 // pred_region
        %s804 = smul.u32 32, %s20
      $region48: #{inception_block.4} parent=35 // pred_fallthru
        _
    $region36: #{inception_block.4} parent=5 // pred_fallthru
      _
    %p805 = scmp.le.s32.totalorder 2, %s10
    // Predicated region
    $region49: #{inception_block.4} parent=5 // pred_check
      %p806 = pneg %p805
    $region50: #{inception_block.4} parent=5 // pred_check_branch
      %808 = sbr.rel (%p806) target = $region52
    $region51: #{inception_block.4} parent=5 // pred_region
      %s809 = ssub.s32 %s10, 2
      // Predicated region
      $region53: #{inception_block.4} parent=51 // pred_check
        %p810 = pneg %p168
      $region54: #{inception_block.4} parent=51 // pred_check_branch
        %812 = sbr.rel (%p810) target = $region56
      $region55: #{inception_block.4} parent=51 // pred_region
        %s813 = smul.u32 32, %s23
        %p814 = scmp.lt.s32.totalorder %s813, 63
        %s815 = scalar_select %p814, %s813, 63
        %p816 = scmp.lt.s32.totalorder %s24, 0
        %s817 = scalar_select %p816, %s24, 0
        %s818 = sadd.s32 %s817, %s815
        %s819 = smul.addr %s818, 8
        %s820 = scalar_lea.vmem %s4, %s819
      $region56: #{inception_block.4} parent=51 // pred_fallthru
        _
    $region52: #{inception_block.4} parent=5 // pred_fallthru
      _
  $region6: #{inception_block.4} parent=0 // loop_footer
    %s14 = sadd.s32 1, %s10
  $region7: #{inception_block.4} parent=0 // loop_footer_branch
    %9 = sbr.rel target = $region3
  $region8: #{inception_block.4} parent=0 // loop_exit
    _

// kernel: inception_block.7
$region0: #{inception_block.7}
  #allocation0 [shape = 'u32[]', space=smem, size = 0x4, offset = 0x4, fixed_abs, tag = 'smem constant byte address 0x4 - core index']
  #allocation1 [shape = 'u32[72,128]{1,0:T(1,128)}', space=vmem, size = 0x9000, scoped, tag = 'internal scratch']
  %s0 = inlined_call_operand.vmem [shape: f32[2,18,18,4], index: 0, kind: input, shape index: {}]
  %s1 = inlined_call_operand.vmem [shape: f32[4,4], index: 1, kind: input, shape index: {}]
  %s2 = inlined_call_operand.vmem [shape: f32[1,4], index: 2, kind: input, shape index: {}]
  %s3 = inlined_call_operand.vmem [shape: f32[1,4], index: 3, kind: input, shape index: {}]
  %s4 = inlined_call_operand.vmem [shape: f32[2,16,16,4], index: 4, kind: output, shape index: {}]
  %s5 = sld [smem:[#allocation0]]
  $region49: #{inception_block.7} parent=0
    _
  %s7 = ssub.s32 1, %s5
  %s8 = scalar_select 0, %s7, %s5
  loop: start=0, step=1, limit=4
  $region2: #{inception_block.7} parent=0 // loop_pre_header
    _
  $region3: #{inception_block.7} parent=0 // loop_header
    %s10 = sphi 0, %s14
    %p11 = scmp.ge.s32.totalorder %s10, 4
    %s20 = sphi 0, %s22
    %s23 = sphi 0, %s20
    %s24 = sphi 0, %s23
    %s40 = sphi 0, %s24
    %s44 = sphi 0, %s44
    %s46 = sphi 0, %s44
    %s47 = sphi 0, %s46
    %s61 = sphi 0, %s47
    %s65 = sphi 0, %s65
    %s67 = sphi 0, %s65
    %s68 = sphi 0, %s67
    %s82 = sphi 0, %s68
    %s86 = sphi 0, %s86
    %s88 = sphi 0, %s86
    %s89 = sphi 0, %s88
    %s103 = sphi 0, %s89
    %s109 = sphi 0, %s111
    %s112 = sphi 0, %s109
    %s113 = sphi 0, %s112
    %s129 = sphi 0, %s113
  $region4: #{inception_block.7} parent=0 // loop_header_branch
    %13 = sbr.rel (%p11) target = $region8
  $region5: #{inception_block.7} parent=0 // loop_body
    %s15 = ssub.s32 %s10, 1
    %s16 = ssub.s32 %s10, 2
    %s17 = sadd.s32 %s10, 1
    %s18 = ssub.s32 %s10, %s17
    %p19 = scmp.eq.s32.totalorder %s18, 0
    %s21 = sadd.s32 %s20, 1
    %s22 = scalar_select %p19, %s20, %s21
    %p25 = pneg %p19
    %p26 = scmp.eq.s32.totalorder %s10, 1
    %p27 = por %p25, %p26
    %p28 = scmp.ne.s32.totalorder %s20, %s23
    %p29 = scmp.eq.s32.totalorder %s10, 0
    %p30 = por %p28, %p29
    %p31 = scmp.ne.s32.totalorder %s20, %s23
    %p32 = scmp.eq.s32.totalorder %s15, 1
    %p33 = por %p31, %p32
    %p34 = scmp.ne.s32.totalorder %s23, %s24
    %p35 = scmp.eq.s32.totalorder %s15, 0
    %p36 = por %p34, %p35
    %p37 = scmp.ne.s32.totalorder %s23, %s24
    %p38 = scmp.eq.s32.totalorder %s16, 1
    %p39 = por %p37, %p38
    %p41 = scmp.ne.s32.totalorder %s24, %s40
    %p42 = scmp.eq.s32.totalorder %s16, 0
    %p43 = por %p41, %p42
    %s45 = sadd.s32 %s44, 1
    %p48 = scmp.eq.s32.totalorder %s10, 1
    %p49 = scmp.ne.s32.totalorder %s44, %s46
    %p50 = scmp.eq.s32.totalorder %s10, 0
    %p51 = por %p49, %p50
    %p52 = scmp.ne.s32.totalorder %s44, %s46
    %p53 = scmp.eq.s32.totalorder %s15, 1
    %p54 = por %p52, %p53
    %p55 = scmp.ne.s32.totalorder %s46, %s47
    %p56 = scmp.eq.s32.totalorder %s15, 0
    %p57 = por %p55, %p56
    %p58 = scmp.ne.s32.totalorder %s46, %s47
    %p59 = scmp.eq.s32.totalorder %s16, 1
    %p60 = por %p58, %p59
    %p62 = scmp.ne.s32.totalorder %s47, %s61
    %p63 = scmp.eq.s32.totalorder %s16, 0
    %p64 = por %p62, %p63
    %s66 = sadd.s32 %s65, 1
    %p69 = scmp.eq.s32.totalorder %s10, 1
    %p70 = scmp.ne.s32.totalorder %s65, %s67
    %p71 = scmp.eq.s32.totalorder %s10, 0
    %p72 = por %p70, %p71
    %p73 = scmp.ne.s32.totalorder %s65, %s67
    %p74 = scmp.eq.s32.totalorder %s15, 1
    %p75 = por %p73, %p74
    %p76 = scmp.ne.s32.totalorder %s67, %s68
    %p77 = scmp.eq.s32.totalorder %s15, 0
    %p78 = por %p76, %p77
    %p79 = scmp.ne.s32.totalorder %s67, %s68
    %p80 = scmp.eq.s32.totalorder %s16, 1
    %p81 = por %p79, %p80
    %p83 = scmp.ne.s32.totalorder %s68, %s82
    %p84 = scmp.eq.s32.totalorder %s16, 0
    %p85 = por %p83, %p84
    %s87 = sadd.s32 %s86, 1
    %p90 = scmp.eq.s32.totalorder %s10, 1
    %p91 = scmp.ne.s32.totalorder %s86, %s88
    %p92 = scmp.eq.s32.totalorder %s10, 0
    %p93 = por %p91, %p92
    %p94 = scmp.ne.s32.totalorder %s86, %s88
    %p95 = scmp.eq.s32.totalorder %s15, 1
    %p96 = por %p94, %p95
    %p97 = scmp.ne.s32.totalorder %s88, %s89
    %p98 = scmp.eq.s32.totalorder %s15, 0
    %p99 = por %p97, %p98
    %p100 = scmp.ne.s32.totalorder %s88, %s89
    %p101 = scmp.eq.s32.totalorder %s16, 1
    %p102 = por %p100, %p101
    %p104 = scmp.ne.s32.totalorder %s89, %s103
    %p105 = scmp.eq.s32.totalorder %s16, 0
    %p106 = por %p104, %p105
    %s107 = ssub.s32 %s10, %s17
    %p108 = scmp.eq.s32.totalorder %s107, 0
    %s110 = sadd.s32 %s109, 1
    %s111 = scalar_select %p108, %s109, %s110
    %p114 = pneg %p108
    %p115 = scmp.eq.s32.totalorder %s10, 1
    %p116 = por %p114, %p115
    %p117 = scmp.ne.s32.totalorder %s109, %s112
    %p118 = scmp.eq.s32.totalorder %s10, 0
    %p119 = por %p117, %p118
    %p120 = scmp.ne.s32.totalorder %s109, %s112
    %p121 = scmp.eq.s32.totalorder %s15, 1
    %p122 = por %p120, %p121
    %p123 = scmp.ne.s32.totalorder %s112, %s113
    %p124 = scmp.eq.s32.totalorder %s15, 0
    %p125 = por %p123, %p124
    %p126 = scmp.ne.s32.totalorder %s112, %s113
    %p127 = scmp.eq.s32.totalorder %s16, 1
    %p128 = por %p126, %p127
    %p130 = scmp.ne.s32.totalorder %s113, %s129
    %p131 = scmp.eq.s32.totalorder %s16, 0
    %p132 = por %p130, %p131
    %p133 = scmp.le.s32.totalorder 1, %s10
    %p134 = scmp.lt.s32.totalorder %s10, 3
    %p135 = pnand %p133, %p134
    %p136 = pneg %p135
    // Predicated region
    $region9: #{inception_block.7} parent=5 // pred_check
      _
    $region10: #{inception_block.7} parent=5 // pred_check_branch
      %138 = sbr.rel (%p135) target = $region12
    $region11: #{inception_block.7} parent=5 // pred_region
      %s139 = ssub.s32 %s10, 1
      // Predicated region
      $region13: #{inception_block.7} parent=11 // pred_check
        %p140 = pneg %p57
      $region14: #{inception_block.7} parent=11 // pred_check_branch
        %142 = sbr.rel (%p140) target = $region16
      $region15: #{inception_block.7} parent=11 // pred_region
        _
      $region16: #{inception_block.7} parent=11 // pred_fallthru
        _
      // Predicated region
      $region17: #{inception_block.7} parent=11 // pred_check
        %p143 = pneg %p78
      $region18: #{inception_block.7} parent=11 // pred_check_branch
        %145 = sbr.rel (%p143) target = $region20
      $region19: #{inception_block.7} parent=11 // pred_region
        _
      $region20: #{inception_block.7} parent=11 // pred_fallthru
        _
      // Predicated region
      $region21: #{inception_block.7} parent=11 // pred_check
        %p146 = pneg %p99
      $region22: #{inception_block.7} parent=11 // pred_check_branch
        %148 = sbr.rel (%p146) target = $region24
      $region23: #{inception_block.7} parent=11 // pred_region
        _
      $region24: #{inception_block.7} parent=11 // pred_fallthru
        _
    $region12: #{inception_block.7} parent=5 // pred_fallthru
      _
    %p149 = scmp.lt.s32.totalorder %s10, 2
    // Predicated region
    $region25: #{inception_block.7} parent=5 // pred_check
      %p150 = pneg %p149
    $region26: #{inception_block.7} parent=5 // pred_check_branch
      %152 = sbr.rel (%p150) target = $region28
    $region27: #{inception_block.7} parent=5 // pred_region
      // Predicated region
      $region29: #{inception_block.7} parent=27 // pred_check
        %p153 = pneg %p30
      $region30: #{inception_block.7} parent=27 // pred_check_branch
        %155 = sbr.rel (%p153) target = $region32
      $region31: #{inception_block.7} parent=27 // pred_region
        %p156 = scmp.lt.s32.totalorder %s10, 1
        %s157 = scalar_select %p156, %s10, 1
        %s158 = smul.addr %s157, 54
        %s159 = smul.addr %s158, 8
        %s160 = scalar_lea.vmem %s0, %s159
      $region32: #{inception_block.7} parent=27 // pred_fallthru
        _
    $region28: #{inception_block.7} parent=5 // pred_fallthru
      _
    %p161 = scmp.le.s32.totalorder 1, %s10
    %p162 = scmp.lt.s32.totalorder %s10, 3
    %p163 = pnand %p161, %p162
    %p164 = pneg %p163
    // Predicated region
    $region33: #{inception_block.7} parent=5 // pred_check
      _
    $region34: #{inception_block.7} parent=5 // pred_check_branch
      %166 = sbr.rel (%p163) target = $region36
    $region35: #{inception_block.7} parent=5 // pred_region
      %s167 = ssub.s32 %s10, 1
      %p168 = scmp.lt.s32.totalorder %s15, 1
      %s169 = scalar_select %p168, %s15, 1
      %s170 = smul.addr %s169, 54
      %s171 = smul.addr %s170, 8
      %s172 = scalar_lea.vmem %s0, %s171
      %p173 = pneg %p36
      %p174 = pneg %p33
      %p175 = pneg %p57
      %p176 = pneg %p54
      %p177 = pneg %p78
      %p178 = pneg %p75
      %p179 = pneg %p99
      %p180 = pneg %p96
      %p181 = pneg %p125
      %p182 = pneg %p122
      %p183 = scmp.lt.s32.totalorder %s15, 1
      %s184 = scalar_select %p183, %s15, 1
      %s185 = smul.addr %s184, 32
      %s186 = smul.addr %s185, 8
      %s187 = scalar_lea.vmem %s4, %s186
      %p188 = scmp.lt.s32.totalorder %s15, 1
      %s189 = scalar_select %p188, %s15, 1
      %s190 = smul.addr %s189, 54
      %s191 = smul.addr %s190, 8
      %s192 = scalar_lea.vmem %s0, %s191
      %p193 = scmp.lt.s32.totalorder %s15, 1
      %s194 = scalar_select %p193, %s15, 1
      %s195 = smul.addr %s194, 32
      %s196 = smul.addr %s195, 8
      %s197 = scalar_lea.vmem %s4, %s196
      %v199 = vld [vmem:[%s192] sm:$0xff]
      %v200 = vld [vmem:[%s192 + $0x8] sm:$0xff]
      %v201 = vld [vmem:[%s192 + $0x18] sm:$0xff]
      %v202 = vld [vmem:[%s192 + $0x20] sm:$0xff]
      %v203 = vld [vmem:[%s192 + $0x30] sm:$0xff]
      %v204 = vld [vmem:[%s192 + $0x38] sm:$0xff]
      %v205 = vld [vmem:[%s192 + $0x48] sm:$0xff]
      %v206 = vld [vmem:[%s192 + $0x50] sm:$0xff]
      %v207 = vld [vmem:[%s192 + $0x60] sm:$0xff]
      %v208 = vld [vmem:[%s192 + $0x68] sm:$0xff]
      %v209 = vld [vmem:[%s192 + $0x78] sm:$0xff]
      %v210 = vld [vmem:[%s192 + $0x80] sm:$0xff]
      %v211 = vld [vmem:[%s192 + $0x90] sm:$0xff]
      %v212 = vld [vmem:[%s192 + $0x98] sm:$0xff]
      %v213 = vld [vmem:[%s192 + $0xa8] sm:$0xff]
      %v214 = vld [vmem:[%s192 + $0xb0] sm:$0xff]
      %v215 = vld [vmem:[%s192 + $0xc0] sm:$0xff]
      %v216 = vld [vmem:[%s192 + $0xc8] sm:$0xff]
      %v217 = vld [vmem:[%s192 + $0xd8] sm:$0xff]
      %v218 = vld [vmem:[%s192 + $0xe0] sm:$0xff]
      %v219 = vld [vmem:[%s192 + $0xf0] sm:$0xff]
      %v220 = vld [vmem:[%s192 + $0xf8] sm:$0xff]
      %v221 = vld [vmem:[%s192 + $0x108] sm:$0xff]
      %v222 = vld [vmem:[%s192 + $0x110] sm:$0xff]
      %v223 = vld [vmem:[%s192 + $0x120] sm:$0xff]
      %v224 = vld [vmem:[%s192 + $0x128] sm:$0xff]
      %v225 = vld [vmem:[%s192 + $0x138] sm:$0xff]
      %v226 = vld [vmem:[%s192 + $0x140] sm:$0xff]
      %v227 = vld [vmem:[%s192 + $0x150] sm:$0xff]
      %v228 = vld [vmem:[%s192 + $0x158] sm:$0xff]
      %v229 = vld [vmem:[%s192 + $0x168] sm:$0xff]
      %v230 = vld [vmem:[%s192 + $0x170] sm:$0xff]
      %v231 = vld [vmem:[%s192 + $0x1] sm:$0xff]
      %v232 = vld [vmem:[%s192 + $0x9] sm:$0xff]
      %v233 = vld [vmem:[%s192 + $0x19] sm:$0xff]
      %v234 = vld [vmem:[%s192 + $0x21] sm:$0xff]
      %v235 = vld [vmem:[%s192 + $0x31] sm:$0xff]
      %v236 = vld [vmem:[%s192 + $0x39] sm:$0xff]
      %v237 = vld [vmem:[%s192 + $0x49] sm:$0xff]
      %v238 = vld [vmem:[%s192 + $0x51] sm:$0xff]
      %v239 = vld [vmem:[%s192 + $0x61] sm:$0xff]
      %v240 = vld [vmem:[%s192 + $0x69] sm:$0xff]
      %v241 = vld [vmem:[%s192 + $0x79] sm:$0xff]
      %v242 = vld [vmem:[%s192 + $0x81] sm:$0xff]
      %v243 = vld [vmem:[%s192 + $0x91] sm:$0xff]
      %v244 = vld [vmem:[%s192 + $0x99] sm:$0xff]
      %v245 = vld [vmem:[%s192 + $0xa9] sm:$0xff]
      %v246 = vld [vmem:[%s192 + $0xb1] sm:$0xff]
      %v247 = vld [vmem:[%s192 + $0xc1] sm:$0xff]
      %v248 = vld [vmem:[%s192 + $0xc9] sm:$0xff]
      %v249 = vld [vmem:[%s192 + $0xd9] sm:$0xff]
      %v250 = vld [vmem:[%s192 + $0xe1] sm:$0xff]
      %v251 = vld [vmem:[%s192 + $0xf1] sm:$0xff]
      %v252 = vld [vmem:[%s192 + $0xf9] sm:$0xff]
      %v253 = vld [vmem:[%s192 + $0x109] sm:$0xff]
      %v254 = vld [vmem:[%s192 + $0x111] sm:$0xff]
      %v255 = vld [vmem:[%s192 + $0x121] sm:$0xff]
      %v256 = vld [vmem:[%s192 + $0x129] sm:$0xff]
      %v257 = vld [vmem:[%s192 + $0x139] sm:$0xff]
      %v258 = vld [vmem:[%s192 + $0x141] sm:$0xff]
      %v259 = vld [vmem:[%s192 + $0x151] sm:$0xff]
      %v260 = vld [vmem:[%s192 + $0x159] sm:$0xff]
      %v261 = vld [vmem:[%s192 + $0x169] sm:$0xff]
      %v262 = vld [vmem:[%s192 + $0x171] sm:$0xff]
      %v263 = vmax.f32 %v199, %v231
      %v264 = vmax.f32 %v200, %v232
      %v265 = vmax.f32 %v201, %v233
      %v266 = vmax.f32 %v202, %v234
      %v267 = vmax.f32 %v203, %v235
      %v268 = vmax.f32 %v204, %v236
      %v269 = vmax.f32 %v205, %v237
      %v270 = vmax.f32 %v206, %v238
      %v271 = vmax.f32 %v207, %v239
      %v272 = vmax.f32 %v208, %v240
      %v273 = vmax.f32 %v209, %v241
      %v274 = vmax.f32 %v210, %v242
      %v275 = vmax.f32 %v211, %v243
      %v276 = vmax.f32 %v212, %v244
      %v277 = vmax.f32 %v213, %v245
      %v278 = vmax.f32 %v214, %v246
      %v279 = vmax.f32 %v215, %v247
      %v280 = vmax.f32 %v216, %v248
      %v281 = vmax.f32 %v217, %v249
      %v282 = vmax.f32 %v218, %v250
      %v283 = vmax.f32 %v219, %v251
      %v284 = vmax.f32 %v220, %v252
      %v285 = vmax.f32 %v221, %v253
      %v286 = vmax.f32 %v222, %v254
      %v287 = vmax.f32 %v223, %v255
      %v288 = vmax.f32 %v224, %v256
      %v289 = vmax.f32 %v225, %v257
      %v290 = vmax.f32 %v226, %v258
      %v291 = vmax.f32 %v227, %v259
      %v292 = vmax.f32 %v228, %v260
      %v293 = vmax.f32 %v229, %v261
      %v294 = vmax.f32 %v230, %v262
      %v295 = vld [vmem:[%s192 + $0x2] sm:$0xff]
      %v296 = vld [vmem:[%s192 + $0xa] sm:$0xff]
      %v297 = vld [vmem:[%s192 + $0x1a] sm:$0xff]
      %v298 = vld [vmem:[%s192 + $0x22] sm:$0xff]
      %v299 = vld [vmem:[%s192 + $0x32] sm:$0xff]
      %v300 = vld [vmem:[%s192 + $0x3a] sm:$0xff]
      %v301 = vld [vmem:[%s192 + $0x4a] sm:$0xff]
      %v302 = vld [vmem:[%s192 + $0x52] sm:$0xff]
      %v303 = vld [vmem:[%s192 + $0x62] sm:$0xff]
      %v304 = vld [vmem:[%s192 + $0x6a] sm:$0xff]
      %v305 = vld [vmem:[%s192 + $0x7a] sm:$0xff]
      %v306 = vld [vmem:[%s192 + $0x82] sm:$0xff]
      %v307 = vld [vmem:[%s192 + $0x92] sm:$0xff]
      %v308 = vld [vmem:[%s192 + $0x9a] sm:$0xff]
      %v309 = vld [vmem:[%s192 + $0xaa] sm:$0xff]
      %v310 = vld [vmem:[%s192 + $0xb2] sm:$0xff]
      %v311 = vld [vmem:[%s192 + $0xc2] sm:$0xff]
      %v312 = vld [vmem:[%s192 + $0xca] sm:$0xff]
      %v313 = vld [vmem:[%s192 + $0xda] sm:$0xff]
      %v314 = vld [vmem:[%s192 + $0xe2] sm:$0xff]
      %v315 = vld [vmem:[%s192 + $0xf2] sm:$0xff]
      %v316 = vld [vmem:[%s192 + $0xfa] sm:$0xff]
      %v317 = vld [vmem:[%s192 + $0x10a] sm:$0xff]
      %v318 = vld [vmem:[%s192 + $0x112] sm:$0xff]
      %v319 = vld [vmem:[%s192 + $0x122] sm:$0xff]
      %v320 = vld [vmem:[%s192 + $0x12a] sm:$0xff]
      %v321 = vld [vmem:[%s192 + $0x13a] sm:$0xff]
      %v322 = vld [vmem:[%s192 + $0x142] sm:$0xff]
      %v323 = vld [vmem:[%s192 + $0x152] sm:$0xff]
      %v324 = vld [vmem:[%s192 + $0x15a] sm:$0xff]
      %v325 = vld [vmem:[%s192 + $0x16a] sm:$0xff]
      %v326 = vld [vmem:[%s192 + $0x172] sm:$0xff]
      %v327 = vmax.f32 %v263, %v295
      %v328 = vmax.f32 %v264, %v296
      %v329 = vmax.f32 %v265, %v297
      %v330 = vmax.f32 %v266, %v298
      %v331 = vmax.f32 %v267, %v299
      %v332 = vmax.f32 %v268, %v300
      %v333 = vmax.f32 %v269, %v301
      %v334 = vmax.f32 %v270, %v302
      %v335 = vmax.f32 %v271, %v303
      %v336 = vmax.f32 %v272, %v304
      %v337 = vmax.f32 %v273, %v305
      %v338 = vmax.f32 %v274, %v306
      %v339 = vmax.f32 %v275, %v307
      %v340 = vmax.f32 %v276, %v308
      %v341 = vmax.f32 %v277, %v309
      %v342 = vmax.f32 %v278, %v310
      %v343 = vmax.f32 %v279, %v311
      %v344 = vmax.f32 %v280, %v312
      %v345 = vmax.f32 %v281, %v313
      %v346 = vmax.f32 %v282, %v314
      %v347 = vmax.f32 %v283, %v315
      %v348 = vmax.f32 %v284, %v316
      %v349 = vmax.f32 %v285, %v317
      %v350 = vmax.f32 %v286, %v318
      %v351 = vmax.f32 %v287, %v319
      %v352 = vmax.f32 %v288, %v320
      %v353 = vmax.f32 %v289, %v321
      %v354 = vmax.f32 %v290, %v322
      %v355 = vmax.f32 %v291, %v323
      %v356 = vmax.f32 %v292, %v324
      %v357 = vmax.f32 %v293, %v325
      %v358 = vmax.f32 %v294, %v326
      %s359 = scalar_lea.vmem %s192, 24
      %v360 = vld [vmem:[%s359] sm:$0xff]
      %v361 = vld [vmem:[%s359 + $0x8] sm:$0xff]
      %v362 = vld [vmem:[%s359 + $0x18] sm:$0xff]
      %v363 = vld [vmem:[%s359 + $0x20] sm:$0xff]
      %v364 = vld [vmem:[%s359 + $0x30] sm:$0xff]
      %v365 = vld [vmem:[%s359 + $0x38] sm:$0xff]
      %v366 = vld [vmem:[%s359 + $0x48] sm:$0xff]
      %v367 = vld [vmem:[%s359 + $0x50] sm:$0xff]
      %v368 = vld [vmem:[%s359 + $0x60] sm:$0xff]
      %v369 = vld [vmem:[%s359 + $0x68] sm:$0xff]
      %v370 = vld [vmem:[%s359 + $0x78] sm:$0xff]
      %v371 = vld [vmem:[%s359 + $0x80] sm:$0xff]
      %v372 = vld [vmem:[%s359 + $0x90] sm:$0xff]
      %v373 = vld [vmem:[%s359 + $0x98] sm:$0xff]
      %v374 = vld [vmem:[%s359 + $0xa8] sm:$0xff]
      %v375 = vld [vmem:[%s359 + $0xb0] sm:$0xff]
      %v376 = vld [vmem:[%s359 + $0xc0] sm:$0xff]
      %v377 = vld [vmem:[%s359 + $0xc8] sm:$0xff]
      %v378 = vld [vmem:[%s359 + $0xd8] sm:$0xff]
      %v379 = vld [vmem:[%s359 + $0xe0] sm:$0xff]
      %v380 = vld [vmem:[%s359 + $0xf0] sm:$0xff]
      %v381 = vld [vmem:[%s359 + $0xf8] sm:$0xff]
      %v382 = vld [vmem:[%s359 + $0x108] sm:$0xff]
      %v383 = vld [vmem:[%s359 + $0x110] sm:$0xff]
      %v384 = vld [vmem:[%s359 + $0x120] sm:$0xff]
      %v385 = vld [vmem:[%s359 + $0x128] sm:$0xff]
      %v386 = vld [vmem:[%s359 + $0x138] sm:$0xff]
      %v387 = vld [vmem:[%s359 + $0x140] sm:$0xff]
      %v388 = vld [vmem:[%s359 + $0x150] sm:$0xff]
      %v389 = vld [vmem:[%s359 + $0x158] sm:$0xff]
      %v390 = vld [vmem:[%s359 + $0x168] sm:$0xff]
      %v391 = vld [vmem:[%s359 + $0x170] sm:$0xff]
      %v392 = vmax.f32 %v327, %v360
      %v393 = vmax.f32 %v328, %v361
      %v394 = vmax.f32 %v329, %v362
      %v395 = vmax.f32 %v330, %v363
      %v396 = vmax.f32 %v331, %v364
      %v397 = vmax.f32 %v332, %v365
      %v398 = vmax.f32 %v333, %v366
      %v399 = vmax.f32 %v334, %v367
      %v400 = vmax.f32 %v335, %v368
      %v401 = vmax.f32 %v336, %v369
      %v402 = vmax.f32 %v337, %v370
      %v403 = vmax.f32 %v338, %v371
      %v404 = vmax.f32 %v339, %v372
      %v405 = vmax.f32 %v340, %v373
      %v406 = vmax.f32 %v341, %v374
      %v407 = vmax.f32 %v342, %v375
      %v408 = vmax.f32 %v343, %v376
      %v409 = vmax.f32 %v344, %v377
      %v410 = vmax.f32 %v345, %v378
      %v411 = vmax.f32 %v346, %v379
      %v412 = vmax.f32 %v347, %v380
      %v413 = vmax.f32 %v348, %v381
      %v414 = vmax.f32 %v349, %v382
      %v415 = vmax.f32 %v350, %v383
      %v416 = vmax.f32 %v351, %v384
      %v417 = vmax.f32 %v352, %v385
      %v418 = vmax.f32 %v353, %v386
      %v419 = vmax.f32 %v354, %v387
      %v420 = vmax.f32 %v355, %v388
      %v421 = vmax.f32 %v356, %v389
      %v422 = vmax.f32 %v357, %v390
      %v423 = vmax.f32 %v358, %v391
      %v424 = vld [vmem:[%s359 + $0x1] sm:$0xff]
      %v425 = vld [vmem:[%s359 + $0x9] sm:$0xff]
      %v426 = vld [vmem:[%s359 + $0x19] sm:$0xff]
      %v427 = vld [vmem:[%s359 + $0x21] sm:$0xff]
      %v428 = vld [vmem:[%s359 + $0x31] sm:$0xff]
      %v429 = vld [vmem:[%s359 + $0x39] sm:$0xff]
      %v430 = vld [vmem:[%s359 + $0x49] sm:$0xff]
      %v431 = vld [vmem:[%s359 + $0x51] sm:$0xff]
      %v432 = vld [vmem:[%s359 + $0x61] sm:$0xff]
      %v433 = vld [vmem:[%s359 + $0x69] sm:$0xff]
      %v434 = vld [vmem:[%s359 + $0x79] sm:$0xff]
      %v435 = vld [vmem:[%s359 + $0x81] sm:$0xff]
      %v436 = vld [vmem:[%s359 + $0x91] sm:$0xff]
      %v437 = vld [vmem:[%s359 + $0x99] sm:$0xff]
      %v438 = vld [vmem:[%s359 + $0xa9] sm:$0xff]
      %v439 = vld [vmem:[%s359 + $0xb1] sm:$0xff]
      %v440 = vld [vmem:[%s359 + $0xc1] sm:$0xff]
      %v441 = vld [vmem:[%s359 + $0xc9] sm:$0xff]
      %v442 = vld [vmem:[%s359 + $0xd9] sm:$0xff]
      %v443 = vld [vmem:[%s359 + $0xe1] sm:$0xff]
      %v444 = vld [vmem:[%s359 + $0xf1] sm:$0xff]
      %v445 = vld [vmem:[%s359 + $0xf9] sm:$0xff]
      %v446 = vld [vmem:[%s359 + $0x109] sm:$0xff]
      %v447 = vld [vmem:[%s359 + $0x111] sm:$0xff]
      %v448 = vld [vmem:[%s359 + $0x121] sm:$0xff]
      %v449 = vld [vmem:[%s359 + $0x129] sm:$0xff]
      %v450 = vld [vmem:[%s359 + $0x139] sm:$0xff]
      %v451 = vld [vmem:[%s359 + $0x141] sm:$0xff]
      %v452 = vld [vmem:[%s359 + $0x151] sm:$0xff]
      %v453 = vld [vmem:[%s359 + $0x159] sm:$0xff]
      %v454 = vld [vmem:[%s359 + $0x169] sm:$0xff]
      %v455 = vld [vmem:[%s359 + $0x171] sm:$0xff]
      %v456 = vmax.f32 %v392, %v424
      %v457 = vmax.f32 %v393, %v425
      %v458 = vmax.f32 %v394, %v426
      %v459 = vmax.f32 %v395, %v427
      %v460 = vmax.f32 %v396, %v428
      %v461 = vmax.f32 %v397, %v429
      %v462 = vmax.f32 %v398, %v430
      %v463 = vmax.f32 %v399, %v431
      %v464 = vmax.f32 %v400, %v432
      %v465 = vmax.f32 %v401, %v433
      %v466 = vmax.f32 %v402, %v434
      %v467 = vmax.f32 %v403, %v435
      %v468 = vmax.f32 %v404, %v436
      %v469 = vmax.f32 %v405, %v437
      %v470 = vmax.f32 %v406, %v438
      %v471 = vmax.f32 %v407, %v439
      %v472 = vmax.f32 %v408, %v440
      %v473 = vmax.f32 %v409, %v441
      %v474 = vmax.f32 %v410, %v442
      %v475 = vmax.f32 %v411, %v443
      %v476 = vmax.f32 %v412, %v444
      %v477 = vmax.f32 %v413, %v445
      %v478 = vmax.f32 %v414, %v446
      %v479 = vmax.f32 %v415, %v447
      %v480 = vmax.f32 %v416, %v448
      %v481 = vmax.f32 %v417, %v449
      %v482 = vmax.f32 %v418, %v450
      %v483 = vmax.f32 %v419, %v451
      %v484 = vmax.f32 %v420, %v452
      %v485 = vmax.f32 %v421, %v453
      %v486 = vmax.f32 %v422, %v454
      %v487 = vmax.f32 %v423, %v455
      %v488 = vld [vmem:[%s359 + $0x2] sm:$0xff]
      %v489 = vld [vmem:[%s359 + $0xa] sm:$0xff]
      %v490 = vld [vmem:[%s359 + $0x1a] sm:$0xff]
      %v491 = vld [vmem:[%s359 + $0x22] sm:$0xff]
      %v492 = vld [vmem:[%s359 + $0x32] sm:$0xff]
      %v493 = vld [vmem:[%s359 + $0x3a] sm:$0xff]
      %v494 = vld [vmem:[%s359 + $0x4a] sm:$0xff]
      %v495 = vld [vmem:[%s359 + $0x52] sm:$0xff]
      %v496 = vld [vmem:[%s359 + $0x62] sm:$0xff]
      %v497 = vld [vmem:[%s359 + $0x6a] sm:$0xff]
      %v498 = vld [vmem:[%s359 + $0x7a] sm:$0xff]
      %v499 = vld [vmem:[%s359 + $0x82] sm:$0xff]
      %v500 = vld [vmem:[%s359 + $0x92] sm:$0xff]
      %v501 = vld [vmem:[%s359 + $0x9a] sm:$0xff]
      %v502 = vld [vmem:[%s359 + $0xaa] sm:$0xff]
      %v503 = vld [vmem:[%s359 + $0xb2] sm:$0xff]
      %v504 = vld [vmem:[%s359 + $0xc2] sm:$0xff]
      %v505 = vld [vmem:[%s359 + $0xca] sm:$0xff]
      %v506 = vld [vmem:[%s359 + $0xda] sm:$0xff]
      %v507 = vld [vmem:[%s359 + $0xe2] sm:$0xff]
      %v508 = vld [vmem:[%s359 + $0xf2] sm:$0xff]
      %v509 = vld [vmem:[%s359 + $0xfa] sm:$0xff]
      %v510 = vld [vmem:[%s359 + $0x10a] sm:$0xff]
      %v511 = vld [vmem:[%s359 + $0x112] sm:$0xff]
      %v512 = vld [vmem:[%s359 + $0x122] sm:$0xff]
      %v513 = vld [vmem:[%s359 + $0x12a] sm:$0xff]
      %v514 = vld [vmem:[%s359 + $0x13a] sm:$0xff]
      %v515 = vld [vmem:[%s359 + $0x142] sm:$0xff]
      %v516 = vld [vmem:[%s359 + $0x152] sm:$0xff]
      %v517 = vld [vmem:[%s359 + $0x15a] sm:$0xff]
      %v518 = vld [vmem:[%s359 + $0x16a] sm:$0xff]
      %v519 = vld [vmem:[%s359 + $0x172] sm:$0xff]
      %v520 = vmax.f32 %v456, %v488
      %v521 = vmax.f32 %v457, %v489
      %v522 = vmax.f32 %v458, %v490
      %v523 = vmax.f32 %v459, %v491
      %v524 = vmax.f32 %v460, %v492
      %v525 = vmax.f32 %v461, %v493
      %v526 = vmax.f32 %v462, %v494
      %v527 = vmax.f32 %v463, %v495
      %v528 = vmax.f32 %v464, %v496
      %v529 = vmax.f32 %v465, %v497
      %v530 = vmax.f32 %v466, %v498
      %v531 = vmax.f32 %v467, %v499
      %v532 = vmax.f32 %v468, %v500
      %v533 = vmax.f32 %v469, %v501
      %v534 = vmax.f32 %v470, %v502
      %v535 = vmax.f32 %v471, %v503
      %v536 = vmax.f32 %v472, %v504
      %v537 = vmax.f32 %v473, %v505
      %v538 = vmax.f32 %v474, %v506
      %v539 = vmax.f32 %v475, %v507
      %v540 = vmax.f32 %v476, %v508
      %v541 = vmax.f32 %v477, %v509
      %v542 = vmax.f32 %v478, %v510
      %v543 = vmax.f32 %v479, %v511
      %v544 = vmax.f32 %v480, %v512
      %v545 = vmax.f32 %v481, %v513
      %v546 = vmax.f32 %v482, %v514
      %v547 = vmax.f32 %v483, %v515
      %v548 = vmax.f32 %v484, %v516
      %v549 = vmax.f32 %v485, %v517
      %v550 = vmax.f32 %v486, %v518
      %v551 = vmax.f32 %v487, %v519
      %s552 = scalar_lea.vmem %s192, 48
      %v553 = vld [vmem:[%s552] sm:$0xff]
      %v554 = vld [vmem:[%s552 + $0x8] sm:$0xff]
      %v555 = vld [vmem:[%s552 + $0x18] sm:$0xff]
      %v556 = vld [vmem:[%s552 + $0x20] sm:$0xff]
      %v557 = vld [vmem:[%s552 + $0x30] sm:$0xff]
      %v558 = vld [vmem:[%s552 + $0x38] sm:$0xff]
      %v559 = vld [vmem:[%s552 + $0x48] sm:$0xff]
      %v560 = vld [vmem:[%s552 + $0x50] sm:$0xff]
      %v561 = vld [vmem:[%s552 + $0x60] sm:$0xff]
      %v562 = vld [vmem:[%s552 + $0x68] sm:$0xff]
      %v563 = vld [vmem:[%s552 + $0x78] sm:$0xff]
      %v564 = vld [vmem:[%s552 + $0x80] sm:$0xff]
      %v565 = vld [vmem:[%s552 + $0x90] sm:$0xff]
      %v566 = vld [vmem:[%s552 + $0x98] sm:$0xff]
      %v567 = vld [vmem:[%s552 + $0xa8] sm:$0xff]
      %v568 = vld [vmem:[%s552 + $0xb0] sm:$0xff]
      %v569 = vld [vmem:[%s552 + $0xc0] sm:$0xff]
      %v570 = vld [vmem:[%s552 + $0xc8] sm:$0xff]
      %v571 = vld [vmem:[%s552 + $0xd8] sm:$0xff]
      %v572 = vld [vmem:[%s552 + $0xe0] sm:$0xff]
      %v573 = vld [vmem:[%s552 + $0xf0] sm:$0xff]
      %v574 = vld [vmem:[%s552 + $0xf8] sm:$0xff]
      %v575 = vld [vmem:[%s552 + $0x108] sm:$0xff]
      %v576 = vld [vmem:[%s552 + $0x110] sm:$0xff]
      %v577 = vld [vmem:[%s552 + $0x120] sm:$0xff]
      %v578 = vld [vmem:[%s552 + $0x128] sm:$0xff]
      %v579 = vld [vmem:[%s552 + $0x138] sm:$0xff]
      %v580 = vld [vmem:[%s552 + $0x140] sm:$0xff]
      %v581 = vld [vmem:[%s552 + $0x150] sm:$0xff]
      %v582 = vld [vmem:[%s552 + $0x158] sm:$0xff]
      %v583 = vld [vmem:[%s552 + $0x168] sm:$0xff]
      %v584 = vld [vmem:[%s552 + $0x170] sm:$0xff]
      %v585 = vmax.f32 %v520, %v553
      %v586 = vmax.f32 %v521, %v554
      %v587 = vmax.f32 %v522, %v555
      %v588 = vmax.f32 %v523, %v556
      %v589 = vmax.f32 %v524, %v557
      %v590 = vmax.f32 %v525, %v558
      %v591 = vmax.f32 %v526, %v559
      %v592 = vmax.f32 %v527, %v560
      %v593 = vmax.f32 %v528, %v561
      %v594 = vmax.f32 %v529, %v562
      %v595 = vmax.f32 %v530, %v563
      %v596 = vmax.f32 %v531, %v564
      %v597 = vmax.f32 %v532, %v565
      %v598 = vmax.f32 %v533, %v566
      %v599 = vmax.f32 %v534, %v567
      %v600 = vmax.f32 %v535, %v568
      %v601 = vmax.f32 %v536, %v569
      %v602 = vmax.f32 %v537, %v570
      %v603 = vmax.f32 %v538, %v571
      %v604 = vmax.f32 %v539, %v572
      %v605 = vmax.f32 %v540, %v573
      %v606 = vmax.f32 %v541, %v574
      %v607 = vmax.f32 %v542, %v575
      %v608 = vmax.f32 %v543, %v576
      %v609 = vmax.f32 %v544, %v577
      %v610 = vmax.f32 %v545, %v578
      %v611 = vmax.f32 %v546, %v579
      %v612 = vmax.f32 %v547, %v580
      %v613 = vmax.f32 %v548, %v581
      %v614 = vmax.f32 %v549, %v582
      %v615 = vmax.f32 %v550, %v583
      %v616 = vmax.f32 %v551, %v584
      %v617 = vld [vmem:[%s552 + $0x1] sm:$0xff]
      %v618 = vld [vmem:[%s552 + $0x9] sm:$0xff]
      %v619 = vld [vmem:[%s552 + $0x19] sm:$0xff]
      %v620 = vld [vmem:[%s552 + $0x21] sm:$0xff]
      %v621 = vld [vmem:[%s552 + $0x31] sm:$0xff]
      %v622 = vld [vmem:[%s552 + $0x39] sm:$0xff]
      %v623 = vld [vmem:[%s552 + $0x49] sm:$0xff]
      %v624 = vld [vmem:[%s552 + $0x51] sm:$0xff]
      %v625 = vld [vmem:[%s552 + $0x61] sm:$0xff]
      %v626 = vld [vmem:[%s552 + $0x69] sm:$0xff]
      %v627 = vld [vmem:[%s552 + $0x79] sm:$0xff]
      %v628 = vld [vmem:[%s552 + $0x81] sm:$0xff]
      %v629 = vld [vmem:[%s552 + $0x91] sm:$0xff]
      %v630 = vld [vmem:[%s552 + $0x99] sm:$0xff]
      %v631 = vld [vmem:[%s552 + $0xa9] sm:$0xff]
      %v632 = vld [vmem:[%s552 + $0xb1] sm:$0xff]
      %v633 = vld [vmem:[%s552 + $0xc1] sm:$0xff]
      %v634 = vld [vmem:[%s552 + $0xc9] sm:$0xff]
      %v635 = vld [vmem:[%s552 + $0xd9] sm:$0xff]
      %v636 = vld [vmem:[%s552 + $0xe1] sm:$0xff]
      %v637 = vld [vmem:[%s552 + $0xf1] sm:$0xff]
      %v638 = vld [vmem:[%s552 + $0xf9] sm:$0xff]
      %v639 = vld [vmem:[%s552 + $0x109] sm:$0xff]
      %v640 = vld [vmem:[%s552 + $0x111] sm:$0xff]
      %v641 = vld [vmem:[%s552 + $0x121] sm:$0xff]
      %v642 = vld [vmem:[%s552 + $0x129] sm:$0xff]
      %v643 = vld [vmem:[%s552 + $0x139] sm:$0xff]
      %v644 = vld [vmem:[%s552 + $0x141] sm:$0xff]
      %v645 = vld [vmem:[%s552 + $0x151] sm:$0xff]
      %v646 = vld [vmem:[%s552 + $0x159] sm:$0xff]
      %v647 = vld [vmem:[%s552 + $0x169] sm:$0xff]
      %v648 = vld [vmem:[%s552 + $0x171] sm:$0xff]
      %v649 = vmax.f32 %v585, %v617
      %v650 = vmax.f32 %v586, %v618
      %v651 = vmax.f32 %v587, %v619
      %v652 = vmax.f32 %v588, %v620
      %v653 = vmax.f32 %v589, %v621
      %v654 = vmax.f32 %v590, %v622
      %v655 = vmax.f32 %v591, %v623
      %v656 = vmax.f32 %v592, %v624
      %v657 = vmax.f32 %v593, %v625
      %v658 = vmax.f32 %v594, %v626
      %v659 = vmax.f32 %v595, %v627
      %v660 = vmax.f32 %v596, %v628
      %v661 = vmax.f32 %v597, %v629
      %v662 = vmax.f32 %v598, %v630
      %v663 = vmax.f32 %v599, %v631
      %v664 = vmax.f32 %v600, %v632
      %v665 = vmax.f32 %v601, %v633
      %v666 = vmax.f32 %v602, %v634
      %v667 = vmax.f32 %v603, %v635
      %v668 = vmax.f32 %v604, %v636
      %v669 = vmax.f32 %v605, %v637
      %v670 = vmax.f32 %v606, %v638
      %v671 = vmax.f32 %v607, %v639
      %v672 = vmax.f32 %v608, %v640
      %v673 = vmax.f32 %v609, %v641
      %v674 = vmax.f32 %v610, %v642
      %v675 = vmax.f32 %v611, %v643
      %v676 = vmax.f32 %v612, %v644
      %v677 = vmax.f32 %v613, %v645
      %v678 = vmax.f32 %v614, %v646
      %v679 = vmax.f32 %v615, %v647
      %v680 = vmax.f32 %v616, %v648
      %v681 = vld [vmem:[%s552 + $0x2] sm:$0xff]
      %v682 = vld [vmem:[%s552 + $0xa] sm:$0xff]
      %v683 = vld [vmem:[%s552 + $0x1a] sm:$0xff]
      %v684 = vld [vmem:[%s552 + $0x22] sm:$0xff]
      %v685 = vld [vmem:[%s552 + $0x32] sm:$0xff]
      %v686 = vld [vmem:[%s552 + $0x3a] sm:$0xff]
      %v687 = vld [vmem:[%s552 + $0x4a] sm:$0xff]
      %v688 = vld [vmem:[%s552 + $0x52] sm:$0xff]
      %v689 = vld [vmem:[%s552 + $0x62] sm:$0xff]
      %v690 = vld [vmem:[%s552 + $0x6a] sm:$0xff]
      %v691 = vld [vmem:[%s552 + $0x7a] sm:$0xff]
      %v692 = vld [vmem:[%s552 + $0x82] sm:$0xff]
      %v693 = vld [vmem:[%s552 + $0x92] sm:$0xff]
      %v694 = vld [vmem:[%s552 + $0x9a] sm:$0xff]
      %v695 = vld [vmem:[%s552 + $0xaa] sm:$0xff]
      %v696 = vld [vmem:[%s552 + $0xb2] sm:$0xff]
      %v697 = vld [vmem:[%s552 + $0xc2] sm:$0xff]
      %v698 = vld [vmem:[%s552 + $0xca] sm:$0xff]
      %v699 = vld [vmem:[%s552 + $0xda] sm:$0xff]
      %v700 = vld [vmem:[%s552 + $0xe2] sm:$0xff]
      %v701 = vld [vmem:[%s552 + $0xf2] sm:$0xff]
      %v702 = vld [vmem:[%s552 + $0xfa] sm:$0xff]
      %v703 = vld [vmem:[%s552 + $0x10a] sm:$0xff]
      %v704 = vld [vmem:[%s552 + $0x112] sm:$0xff]
      %v705 = vld [vmem:[%s552 + $0x122] sm:$0xff]
      %v706 = vld [vmem:[%s552 + $0x12a] sm:$0xff]
      %v707 = vld [vmem:[%s552 + $0x13a] sm:$0xff]
      %v708 = vld [vmem:[%s552 + $0x142] sm:$0xff]
      %v709 = vld [vmem:[%s552 + $0x152] sm:$0xff]
      %v710 = vld [vmem:[%s552 + $0x15a] sm:$0xff]
      %v711 = vld [vmem:[%s552 + $0x16a] sm:$0xff]
      %v712 = vld [vmem:[%s552 + $0x172] sm:$0xff]
      %v713 = vmax.f32 %v649, %v681
      %v714 = vmax.f32 %v650, %v682
      %v715 = vmax.f32 %v651, %v683
      %v716 = vmax.f32 %v652, %v684
      %v717 = vmax.f32 %v653, %v685
      %v718 = vmax.f32 %v654, %v686
      %v719 = vmax.f32 %v655, %v687
      %v720 = vmax.f32 %v656, %v688
      %v721 = vmax.f32 %v657, %v689
      %v722 = vmax.f32 %v658, %v690
      %v723 = vmax.f32 %v659, %v691
      %v724 = vmax.f32 %v660, %v692
      %v725 = vmax.f32 %v661, %v693
      %v726 = vmax.f32 %v662, %v694
      %v727 = vmax.f32 %v663, %v695
      %v728 = vmax.f32 %v664, %v696
      %v729 = vmax.f32 %v665, %v697
      %v730 = vmax.f32 %v666, %v698
      %v731 = vmax.f32 %v667, %v699
      %v732 = vmax.f32 %v668, %v700
      %v733 = vmax.f32 %v669, %v701
      %v734 = vmax.f32 %v670, %v702
      %v735 = vmax.f32 %v671, %v703
      %v736 = vmax.f32 %v672, %v704
      %v737 = vmax.f32 %v673, %v705
      %v738 = vmax.f32 %v674, %v706
      %v739 = vmax.f32 %v675, %v707
      %v740 = vmax.f32 %v676, %v708
      %v741 = vmax.f32 %v677, %v709
      %v742 = vmax.f32 %v678, %v710
      %v743 = vmax.f32 %v679, %v711
      %v744 = vmax.f32 %v680, %v712
      %v745 = vpack.c.bf16 %v714, %v713
      %v746 = vpack.c.bf16 %v716, %v715
      %v747 = vpack.c.bf16 %v718, %v717
      %v748 = vpack.c.bf16 %v720, %v719
      %v749 = vpack.c.bf16 %v722, %v721
      %v750 = vpack.c.bf16 %v724, %v723
      %v751 = vpack.c.bf16 %v726, %v725
      %v752 = vpack.c.bf16 %v728, %v727
      %v753 = vpack.c.bf16 %v730, %v729
      %v754 = vpack.c.bf16 %v732, %v731
      %v755 = vpack.c.bf16 %v734, %v733
      %v756 = vpack.c.bf16 %v736, %v735
      %v757 = vpack.c.bf16 %v738, %v737
      %v758 = vpack.c.bf16 %v740, %v739
      %v759 = vpack.c.bf16 %v742, %v741
      %v760 = vpack.c.bf16 %v744, %v743
      %v761 = vld [vmem:[%s1] sm:$0xf]
      %v762 = vpack.c.bf16 %v761, %v761
      %vm763 = vcmask 31744
      %v765 = vsel %vm763, %v745, 0
      %v768 = vsel %vm763, %v746, 0
      %v771 = vsel %vm763, %v747, 0
      %v774 = vsel %vm763, %v748, 0
      %v777 = vsel %vm763, %v749, 0
      %v780 = vsel %vm763, %v750, 0
      %v783 = vsel %vm763, %v751, 0
      %v786 = vsel %vm763, %v752, 0
      %v789 = vsel %vm763, %v753, 0
      %v792 = vsel %vm763, %v754, 0
      %v795 = vsel %vm763, %v755, 0
      %v798 = vsel %vm763, %v756, 0
      %v801 = vsel %vm763, %v757, 0
      %v804 = vsel %vm763, %v758, 0
      %v807 = vsel %vm763, %v759, 0
      %v810 = vsel %vm763, %v760, 0
      %vm812 = vcmask 1041408
      %v814 = vsel %vm812, %v762, 0
      %816 = vmatpush.bf16.msra.mxu0 0
      %817 = vmatpush.bf16.msra.mxu0 0
      %818 = vmatpush.bf16.msra.mxu0 0
      %819 = vmatpush.bf16.msra.mxu0 0
      %820 = vmatpush.bf16.msra.mxu0 0
      %821 = vmatpush.bf16.msra.mxu0 0
      %822 = vmatpush.bf16.msra.mxu0 0
      %823 = vmatpush.bf16.msra.mxu0 %v814
      %824 = vmatmul.bf16.gmra.mxu0 %v765
      %v825 = vpop.f32.mrf.mxu0
      %v826 = vadd.f32 0.0, %v825
      %v827 = vpop.f32.mrf.mxu0
      %v828 = vadd.f32 0.0, %v827
      %829 = vmatmul.bf16.gmra.mxu0 %v768
      %v830 = vpop.f32.mrf.mxu0
      %v831 = vadd.f32 0.0, %v830
      %v832 = vpop.f32.mrf.mxu0
      %v833 = vadd.f32 0.0, %v832
      %834 = vmatmul.bf16.gmra.mxu0 %v771
      %v835 = vpop.f32.mrf.mxu0
      %v836 = vadd.f32 0.0, %v835
      %v837 = vpop.f32.mrf.mxu0
      %v838 = vadd.f32 0.0, %v837
      %839 = vmatmul.bf16.gmra.mxu0 %v774
      %v840 = vpop.f32.mrf.mxu0
      %v841 = vadd.f32 0.0, %v840
      %v842 = vpop.f32.mrf.mxu0
      %v843 = vadd.f32 0.0, %v842
      %844 = vmatmul.bf16.gmra.mxu0 %v777
      %v845 = vpop.f32.mrf.mxu0
      %v846 = vadd.f32 0.0, %v845
      %v847 = vpop.f32.mrf.mxu0
      %v848 = vadd.f32 0.0, %v847
      %849 = vmatmul.bf16.gmra.mxu0 %v780
      %v850 = vpop.f32.mrf.mxu0
      %v851 = vadd.f32 0.0, %v850
      %v852 = vpop.f32.mrf.mxu0
      %v853 = vadd.f32 0.0, %v852
      %854 = vmatmul.bf16.gmra.mxu0 %v783
      %v855 = vpop.f32.mrf.mxu0
      %v856 = vadd.f32 0.0, %v855
      %v857 = vpop.f32.mrf.mxu0
      %v858 = vadd.f32 0.0, %v857
      %859 = vmatmul.bf16.gmra.mxu0 %v786
      %v860 = vpop.f32.mrf.mxu0
      %v861 = vadd.f32 0.0, %v860
      %v862 = vpop.f32.mrf.mxu0
      %v863 = vadd.f32 0.0, %v862
      %864 = vmatmul.bf16.gmra.mxu0 %v789
      %v865 = vpop.f32.mrf.mxu0
      %v866 = vadd.f32 0.0, %v865
      %v867 = vpop.f32.mrf.mxu0
      %v868 = vadd.f32 0.0, %v867
      %869 = vmatmul.bf16.gmra.mxu0 %v792
      %v870 = vpop.f32.mrf.mxu0
      %v871 = vadd.f32 0.0, %v870
      %v872 = vpop.f32.mrf.mxu0
      %v873 = vadd.f32 0.0, %v872
      %874 = vmatmul.bf16.gmra.mxu0 %v795
      %v875 = vpop.f32.mrf.mxu0
      %v876 = vadd.f32 0.0, %v875
      %v877 = vpop.f32.mrf.mxu0
      %v878 = vadd.f32 0.0, %v877
      %879 = vmatmul.bf16.gmra.mxu0 %v798
      %v880 = vpop.f32.mrf.mxu0
      %v881 = vadd.f32 0.0, %v880
      %v882 = vpop.f32.mrf.mxu0
      %v883 = vadd.f32 0.0, %v882
      %884 = vmatmul.bf16.gmra.mxu0 %v801
      %v885 = vpop.f32.mrf.mxu0
      %v886 = vadd.f32 0.0, %v885
      %v887 = vpop.f32.mrf.mxu0
      %v888 = vadd.f32 0.0, %v887
      %889 = vmatmul.bf16.gmra.mxu0 %v804
      %v890 = vpop.f32.mrf.mxu0
      %v891 = vadd.f32 0.0, %v890
      %v892 = vpop.f32.mrf.mxu0
      %v893 = vadd.f32 0.0, %v892
      %894 = vmatmul.bf16.gmra.mxu0 %v807
      %v895 = vpop.f32.mrf.mxu0
      %v896 = vadd.f32 0.0, %v895
      %v897 = vpop.f32.mrf.mxu0
      %v898 = vadd.f32 0.0, %v897
      %899 = vmatmul.bf16.gmra.mxu0 %v810
      %v900 = vpop.f32.mrf.mxu0
      %v901 = vadd.f32 0.0, %v900
      %v902 = vpop.f32.mrf.mxu0
      %v903 = vadd.f32 0.0, %v902
      %904 = vdwg.mxu0
      %v905 = vld [vmem:[%s2] sm:$0x1]
      %v907 = vperm.slane %v905, 0
      %v909 = vmul.f32 %v826, %v907
      %v910 = vmul.f32 %v828, %v907
      %v911 = vmul.f32 %v831, %v907
      %v912 = vmul.f32 %v833, %v907
      %v913 = vmul.f32 %v836, %v907
      %v914 = vmul.f32 %v838, %v907
      %v915 = vmul.f32 %v841, %v907
      %v916 = vmul.f32 %v843, %v907
      %v917 = vmul.f32 %v846, %v907
      %v918 = vmul.f32 %v848, %v907
      %v919 = vmul.f32 %v851, %v907
      %v920 = vmul.f32 %v853, %v907
      %v921 = vmul.f32 %v856, %v907
      %v922 = vmul.f32 %v858, %v907
      %v923 = vmul.f32 %v861, %v907
      %v924 = vmul.f32 %v863, %v907
      %v925 = vmul.f32 %v866, %v907
      %v926 = vmul.f32 %v868, %v907
      %v927 = vmul.f32 %v871, %v907
      %v928 = vmul.f32 %v873, %v907
      %v929 = vmul.f32 %v876, %v907
      %v930 = vmul.f32 %v878, %v907
      %v931 = vmul.f32 %v881, %v907
      %v932 = vmul.f32 %v883, %v907
      %v933 = vmul.f32 %v886, %v907
      %v934 = vmul.f32 %v888, %v907
      %v935 = vmul.f32 %v891, %v907
      %v936 = vmul.f32 %v893, %v907
      %v937 = vmul.f32 %v896, %v907
      %v938 = vmul.f32 %v898, %v907
      %v939 = vmul.f32 %v901, %v907
      %v940 = vmul.f32 %v903, %v907
      %v941 = vld [vmem:[%s3] sm:$0x1]
      %v943 = vperm.slane %v941, 0
      %v945 = vadd.f32 %v909, %v943
      %v946 = vadd.f32 %v910, %v943
      %v947 = vadd.f32 %v911, %v943
      %v948 = vadd.f32 %v912, %v943
      %v949 = vadd.f32 %v913, %v943
      %v950 = vadd.f32 %v914, %v943
      %v951 = vadd.f32 %v915, %v943
      %v952 = vadd.f32 %v916, %v943
      %v953 = vadd.f32 %v917, %v943
      %v954 = vadd.f32 %v918, %v943
      %v955 = vadd.f32 %v919, %v943
      %v956 = vadd.f32 %v920, %v943
      %v957 = vadd.f32 %v921, %v943
      %v958 = vadd.f32 %v922, %v943
      %v959 = vadd.f32 %v923, %v943
      %v960 = vadd.f32 %v924, %v943
      %v961 = vadd.f32 %v925, %v943
      %v962 = vadd.f32 %v926, %v943
      %v963 = vadd.f32 %v927, %v943
      %v964 = vadd.f32 %v928, %v943
      %v965 = vadd.f32 %v929, %v943
      %v966 = vadd.f32 %v930, %v943
      %v967 = vadd.f32 %v931, %v943
      %v968 = vadd.f32 %v932, %v943
      %v969 = vadd.f32 %v933, %v943
      %v970 = vadd.f32 %v934, %v943
      %v971 = vadd.f32 %v935, %v943
      %v972 = vadd.f32 %v936, %v943
      %v973 = vadd.f32 %v937, %v943
      %v974 = vadd.f32 %v938, %v943
      %v975 = vadd.f32 %v939, %v943
      %v976 = vadd.f32 %v940, %v943
      %v977 = vmax.f32 %v945, 0.0
      %v978 = vmax.f32 %v946, 0.0
      %v979 = vmax.f32 %v947, 0.0
      %v980 = vmax.f32 %v948, 0.0
      %v981 = vmax.f32 %v949, 0.0
      %v982 = vmax.f32 %v950, 0.0
      %v983 = vmax.f32 %v951, 0.0
      %v984 = vmax.f32 %v952, 0.0
      %v985 = vmax.f32 %v953, 0.0
      %v986 = vmax.f32 %v954, 0.0
      %v987 = vmax.f32 %v955, 0.0
      %v988 = vmax.f32 %v956, 0.0
      %v989 = vmax.f32 %v957, 0.0
      %v990 = vmax.f32 %v958, 0.0
      %v991 = vmax.f32 %v959, 0.0
      %v992 = vmax.f32 %v960, 0.0
      %v993 = vmax.f32 %v961, 0.0
      %v994 = vmax.f32 %v962, 0.0
      %v995 = vmax.f32 %v963, 0.0
      %v996 = vmax.f32 %v964, 0.0
      %v997 = vmax.f32 %v965, 0.0
      %v998 = vmax.f32 %v966, 0.0
      %v999 = vmax.f32 %v967, 0.0
      %v1000 = vmax.f32 %v968, 0.0
      %v1001 = vmax.f32 %v969, 0.0
      %v1002 = vmax.f32 %v970, 0.0
      %v1003 = vmax.f32 %v971, 0.0
      %v1004 = vmax.f32 %v972, 0.0
      %v1005 = vmax.f32 %v973, 0.0
      %v1006 = vmax.f32 %v974, 0.0
      %v1007 = vmax.f32 %v975, 0.0
      %v1008 = vmax.f32 %v976, 0.0
      %1009 = vst.msk [vmem:[%s197] sm:$0xff] %vm763, %v977
      %1010 = vst.msk [vmem:[%s197 + $0x8] sm:$0xff] %vm763, %v978
      %1011 = vst.msk [vmem:[%s197 + $0x10] sm:$0xff] %vm763, %v979
      %1012 = vst.msk [vmem:[%s197 + $0x18] sm:$0xff] %vm763, %v980
      %1013 = vst.msk [vmem:[%s197 + $0x20] sm:$0xff] %vm763, %v981
      %1014 = vst.msk [vmem:[%s197 + $0x28] sm:$0xff] %vm763, %v982
      %1015 = vst.msk [vmem:[%s197 + $0x30] sm:$0xff] %vm763, %v983
      %1016 = vst.msk [vmem:[%s197 + $0x38] sm:$0xff] %vm763, %v984
      %1017 = vst.msk [vmem:[%s197 + $0x40] sm:$0xff] %vm763, %v985
      %1018 = vst.msk [vmem:[%s197 + $0x48] sm:$0xff] %vm763, %v986
      %1019 = vst.msk [vmem:[%s197 + $0x50] sm:$0xff] %vm763, %v987
      %1020 = vst.msk [vmem:[%s197 + $0x58] sm:$0xff] %vm763, %v988
      %1021 = vst.msk [vmem:[%s197 + $0x60] sm:$0xff] %vm763, %v989
      %1022 = vst.msk [vmem:[%s197 + $0x68] sm:$0xff] %vm763, %v990
      %1023 = vst.msk [vmem:[%s197 + $0x70] sm:$0xff] %vm763, %v991
      %1024 = vst.msk [vmem:[%s197 + $0x78] sm:$0xff] %vm763, %v992
      %1025 = vst.msk [vmem:[%s197 + $0x80] sm:$0xff] %vm763, %v993
      %1026 = vst.msk [vmem:[%s197 + $0x88] sm:$0xff] %vm763, %v994
      %1027 = vst.msk [vmem:[%s197 + $0x90] sm:$0xff] %vm763, %v995
      %1028 = vst.msk [vmem:[%s197 + $0x98] sm:$0xff] %vm763, %v996
      %1029 = vst.msk [vmem:[%s197 + $0xa0] sm:$0xff] %vm763, %v997
      %1030 = vst.msk [vmem:[%s197 + $0xa8] sm:$0xff] %vm763, %v998
      %1031 = vst.msk [vmem:[%s197 + $0xb0] sm:$0xff] %vm763, %v999
      %1032 = vst.msk [vmem:[%s197 + $0xb8] sm:$0xff] %vm763, %v1000
      %1033 = vst.msk [vmem:[%s197 + $0xc0] sm:$0xff] %vm763, %v1001
      %1034 = vst.msk [vmem:[%s197 + $0xc8] sm:$0xff] %vm763, %v1002
      %1035 = vst.msk [vmem:[%s197 + $0xd0] sm:$0xff] %vm763, %v1003
      %1036 = vst.msk [vmem:[%s197 + $0xd8] sm:$0xff] %vm763, %v1004
      %1037 = vst.msk [vmem:[%s197 + $0xe0] sm:$0xff] %vm763, %v1005
      %1038 = vst.msk [vmem:[%s197 + $0xe8] sm:$0xff] %vm763, %v1006
      %1039 = vst.msk [vmem:[%s197 + $0xf0] sm:$0xff] %vm763, %v1007
      %1040 = vst.msk [vmem:[%s197 + $0xf8] sm:$0xff] %vm763, %v1008
      %p1041 = scmp.lt.s32.totalorder %s15, 1
      %s1042 = scalar_select %p1041, %s15, 1
      %s1043 = smul.addr %s1042, 32
      %s1044 = smul.addr %s1043, 8
      %s1045 = scalar_lea.vmem %s4, %s1044
      // Predicated region
      $region37: #{inception_block.7} parent=35 // pred_check
        %p1046 = pneg %p122
      $region38: #{inception_block.7} parent=35 // pred_check_branch
        %1048 = sbr.rel (%p1046) target = $region40
      $region39: #{inception_block.7} parent=35 // pred_region
        _
      $region40: #{inception_block.7} parent=35 // pred_fallthru
        _
    $region36: #{inception_block.7} parent=5 // pred_fallthru
      _
    %p1049 = scmp.le.s32.totalorder 2, %s10
    // Predicated region
    $region41: #{inception_block.7} parent=5 // pred_check
      %p1050 = pneg %p1049
    $region42: #{inception_block.7} parent=5 // pred_check_branch
      %1052 = sbr.rel (%p1050) target = $region44
    $region43: #{inception_block.7} parent=5 // pred_region
      %s1053 = ssub.s32 %s10, 2
      // Predicated region
      $region45: #{inception_block.7} parent=43 // pred_check
        %p1054 = pneg %p128
      $region46: #{inception_block.7} parent=43 // pred_check_branch
        %1056 = sbr.rel (%p1054) target = $region48
      $region47: #{inception_block.7} parent=43 // pred_region
        %p1057 = scmp.lt.s32.totalorder %s16, 1
        %s1058 = scalar_select %p1057, %s16, 1
        %s1059 = smul.addr %s1058, 32
        %s1060 = smul.addr %s1059, 8
        %s1061 = scalar_lea.vmem %s4, %s1060
      $region48: #{inception_block.7} parent=43 // pred_fallthru
        _
    $region44: #{inception_block.7} parent=5 // pred_fallthru
      _
  $region6: #{inception_block.7} parent=0 // loop_footer
    %s14 = sadd.s32 1, %s10
  $region7: #{inception_block.7} parent=0 // loop_footer_branch
    %9 = sbr.rel target = $region3
  $region8: #{inception_block.7} parent=0 // loop_exit
    _

// kernel: inception_block.5
$region0: #{inception_block.5}
  #allocation0 [shape = 'u32[]', space=smem, size = 0x4, offset = 0x4, fixed_abs, tag = 'smem constant byte address 0x4 - core index']
  #allocation1 [shape = 'u32[72,128]{1,0:T(1,128)}', space=vmem, size = 0x9000, scoped, tag = 'internal scratch']
  %s0 = inlined_call_operand.vmem [shape: f32[2,18,18,4], index: 0, kind: input, shape index: {}]
  %s1 = inlined_call_operand.vmem [shape: f32[9,4,8], index: 1, kind: input, shape index: {}]
  %s2 = inlined_call_operand.vmem [shape: f32[1,8], index: 2, kind: input, shape index: {}]
  %s3 = inlined_call_operand.vmem [shape: f32[1,8], index: 3, kind: input, shape index: {}]
  %s4 = inlined_call_operand.vmem [shape: f32[2,16,16,8], index: 4, kind: output, shape index: {}]
  %s5 = sld [smem:[#allocation0]]
  $region49: #{inception_block.5} parent=0
    _
  %s7 = ssub.s32 1, %s5
  %s8 = scalar_select 0, %s7, %s5
  loop: start=0, step=1, limit=4
  $region2: #{inception_block.5} parent=0 // loop_pre_header
    _
  $region3: #{inception_block.5} parent=0 // loop_header
    %s10 = sphi 0, %s14
    %p11 = scmp.ge.s32.totalorder %s10, 4
    %s20 = sphi 0, %s22
    %s23 = sphi 0, %s20
    %s24 = sphi 0, %s23
    %s40 = sphi 0, %s24
    %s44 = sphi 0, %s44
    %s46 = sphi 0, %s44
    %s47 = sphi 0, %s46
    %s61 = sphi 0, %s47
    %s65 = sphi 0, %s65
    %s67 = sphi 0, %s65
    %s68 = sphi 0, %s67
    %s82 = sphi 0, %s68
    %s86 = sphi 0, %s86
    %s88 = sphi 0, %s86
    %s89 = sphi 0, %s88
    %s103 = sphi 0, %s89
    %s109 = sphi 0, %s111
    %s112 = sphi 0, %s109
    %s113 = sphi 0, %s112
    %s129 = sphi 0, %s113
  $region4: #{inception_block.5} parent=0 // loop_header_branch
    %13 = sbr.rel (%p11) target = $region8
  $region5: #{inception_block.5} parent=0 // loop_body
    %s15 = ssub.s32 %s10, 1
    %s16 = ssub.s32 %s10, 2
    %s17 = sadd.s32 %s10, 1
    %s18 = ssub.s32 %s10, %s17
    %p19 = scmp.eq.s32.totalorder %s18, 0
    %s21 = sadd.s32 %s20, 1
    %s22 = scalar_select %p19, %s20, %s21
    %p25 = pneg %p19
    %p26 = scmp.eq.s32.totalorder %s10, 1
    %p27 = por %p25, %p26
    %p28 = scmp.ne.s32.totalorder %s20, %s23
    %p29 = scmp.eq.s32.totalorder %s10, 0
    %p30 = por %p28, %p29
    %p31 = scmp.ne.s32.totalorder %s20, %s23
    %p32 = scmp.eq.s32.totalorder %s15, 1
    %p33 = por %p31, %p32
    %p34 = scmp.ne.s32.totalorder %s23, %s24
    %p35 = scmp.eq.s32.totalorder %s15, 0
    %p36 = por %p34, %p35
    %p37 = scmp.ne.s32.totalorder %s23, %s24
    %p38 = scmp.eq.s32.totalorder %s16, 1
    %p39 = por %p37, %p38
    %p41 = scmp.ne.s32.totalorder %s24, %s40
    %p42 = scmp.eq.s32.totalorder %s16, 0
    %p43 = por %p41, %p42
    %s45 = sadd.s32 %s44, 1
    %p48 = scmp.eq.s32.totalorder %s10, 1
    %p49 = scmp.ne.s32.totalorder %s44, %s46
    %p50 = scmp.eq.s32.totalorder %s10, 0
    %p51 = por %p49, %p50
    %p52 = scmp.ne.s32.totalorder %s44, %s46
    %p53 = scmp.eq.s32.totalorder %s15, 1
    %p54 = por %p52, %p53
    %p55 = scmp.ne.s32.totalorder %s46, %s47
    %p56 = scmp.eq.s32.totalorder %s15, 0
    %p57 = por %p55, %p56
    %p58 = scmp.ne.s32.totalorder %s46, %s47
    %p59 = scmp.eq.s32.totalorder %s16, 1
    %p60 = por %p58, %p59
    %p62 = scmp.ne.s32.totalorder %s47, %s61
    %p63 = scmp.eq.s32.totalorder %s16, 0
    %p64 = por %p62, %p63
    %s66 = sadd.s32 %s65, 1
    %p69 = scmp.eq.s32.totalorder %s10, 1
    %p70 = scmp.ne.s32.totalorder %s65, %s67
    %p71 = scmp.eq.s32.totalorder %s10, 0
    %p72 = por %p70, %p71
    %p73 = scmp.ne.s32.totalorder %s65, %s67
    %p74 = scmp.eq.s32.totalorder %s15, 1
    %p75 = por %p73, %p74
    %p76 = scmp.ne.s32.totalorder %s67, %s68
    %p77 = scmp.eq.s32.totalorder %s15, 0
    %p78 = por %p76, %p77
    %p79 = scmp.ne.s32.totalorder %s67, %s68
    %p80 = scmp.eq.s32.totalorder %s16, 1
    %p81 = por %p79, %p80
    %p83 = scmp.ne.s32.totalorder %s68, %s82
    %p84 = scmp.eq.s32.totalorder %s16, 0
    %p85 = por %p83, %p84
    %s87 = sadd.s32 %s86, 1
    %p90 = scmp.eq.s32.totalorder %s10, 1
    %p91 = scmp.ne.s32.totalorder %s86, %s88
    %p92 = scmp.eq.s32.totalorder %s10, 0
    %p93 = por %p91, %p92
    %p94 = scmp.ne.s32.totalorder %s86, %s88
    %p95 = scmp.eq.s32.totalorder %s15, 1
    %p96 = por %p94, %p95
    %p97 = scmp.ne.s32.totalorder %s88, %s89
    %p98 = scmp.eq.s32.totalorder %s15, 0
    %p99 = por %p97, %p98
    %p100 = scmp.ne.s32.totalorder %s88, %s89
    %p101 = scmp.eq.s32.totalorder %s16, 1
    %p102 = por %p100, %p101
    %p104 = scmp.ne.s32.totalorder %s89, %s103
    %p105 = scmp.eq.s32.totalorder %s16, 0
    %p106 = por %p104, %p105
    %s107 = ssub.s32 %s10, %s17
    %p108 = scmp.eq.s32.totalorder %s107, 0
    %s110 = sadd.s32 %s109, 1
    %s111 = scalar_select %p108, %s109, %s110
    %p114 = pneg %p108
    %p115 = scmp.eq.s32.totalorder %s10, 1
    %p116 = por %p114, %p115
    %p117 = scmp.ne.s32.totalorder %s109, %s112
    %p118 = scmp.eq.s32.totalorder %s10, 0
    %p119 = por %p117, %p118
    %p120 = scmp.ne.s32.totalorder %s109, %s112
    %p121 = scmp.eq.s32.totalorder %s15, 1
    %p122 = por %p120, %p121
    %p123 = scmp.ne.s32.totalorder %s112, %s113
    %p124 = scmp.eq.s32.totalorder %s15, 0
    %p125 = por %p123, %p124
    %p126 = scmp.ne.s32.totalorder %s112, %s113
    %p127 = scmp.eq.s32.totalorder %s16, 1
    %p128 = por %p126, %p127
    %p130 = scmp.ne.s32.totalorder %s113, %s129
    %p131 = scmp.eq.s32.totalorder %s16, 0
    %p132 = por %p130, %p131
    %p133 = scmp.le.s32.totalorder 1, %s10
    %p134 = scmp.lt.s32.totalorder %s10, 3
    %p135 = pnand %p133, %p134
    %p136 = pneg %p135
    // Predicated region
    $region9: #{inception_block.5} parent=5 // pred_check
      _
    $region10: #{inception_block.5} parent=5 // pred_check_branch
      %138 = sbr.rel (%p135) target = $region12
    $region11: #{inception_block.5} parent=5 // pred_region
      %s139 = ssub.s32 %s10, 1
      // Predicated region
      $region13: #{inception_block.5} parent=11 // pred_check
        %p140 = pneg %p57
      $region14: #{inception_block.5} parent=11 // pred_check_branch
        %142 = sbr.rel (%p140) target = $region16
      $region15: #{inception_block.5} parent=11 // pred_region
        _
      $region16: #{inception_block.5} parent=11 // pred_fallthru
        _
      // Predicated region
      $region17: #{inception_block.5} parent=11 // pred_check
        %p143 = pneg %p78
      $region18: #{inception_block.5} parent=11 // pred_check_branch
        %145 = sbr.rel (%p143) target = $region20
      $region19: #{inception_block.5} parent=11 // pred_region
        _
      $region20: #{inception_block.5} parent=11 // pred_fallthru
        _
      // Predicated region
      $region21: #{inception_block.5} parent=11 // pred_check
        %p146 = pneg %p99
      $region22: #{inception_block.5} parent=11 // pred_check_branch
        %148 = sbr.rel (%p146) target = $region24
      $region23: #{inception_block.5} parent=11 // pred_region
        _
      $region24: #{inception_block.5} parent=11 // pred_fallthru
        _
    $region12: #{inception_block.5} parent=5 // pred_fallthru
      _
    %p149 = scmp.lt.s32.totalorder %s10, 2
    // Predicated region
    $region25: #{inception_block.5} parent=5 // pred_check
      %p150 = pneg %p149
    $region26: #{inception_block.5} parent=5 // pred_check_branch
      %152 = sbr.rel (%p150) target = $region28
    $region27: #{inception_block.5} parent=5 // pred_region
      // Predicated region
      $region29: #{inception_block.5} parent=27 // pred_check
        %p153 = pneg %p30
      $region30: #{inception_block.5} parent=27 // pred_check_branch
        %155 = sbr.rel (%p153) target = $region32
      $region31: #{inception_block.5} parent=27 // pred_region
        %p156 = scmp.lt.s32.totalorder %s10, 1
        %s157 = scalar_select %p156, %s10, 1
        %s158 = smul.addr %s157, 54
        %s159 = smul.addr %s158, 8
        %s160 = scalar_lea.vmem %s0, %s159
      $region32: #{inception_block.5} parent=27 // pred_fallthru
        _
    $region28: #{inception_block.5} parent=5 // pred_fallthru
      _
    %p161 = scmp.le.s32.totalorder 1, %s10
    %p162 = scmp.lt.s32.totalorder %s10, 3
    %p163 = pnand %p161, %p162
    %p164 = pneg %p163
    // Predicated region
    $region33: #{inception_block.5} parent=5 // pred_check
      _
    $region34: #{inception_block.5} parent=5 // pred_check_branch
      %166 = sbr.rel (%p163) target = $region36
    $region35: #{inception_block.5} parent=5 // pred_region
      %s167 = ssub.s32 %s10, 1
      %p168 = scmp.lt.s32.totalorder %s15, 1
      %s169 = scalar_select %p168, %s15, 1
      %s170 = smul.addr %s169, 54
      %s171 = smul.addr %s170, 8
      %s172 = scalar_lea.vmem %s0, %s171
      %p173 = pneg %p36
      %p174 = pneg %p33
      %p175 = pneg %p57
      %p176 = pneg %p54
      %p177 = pneg %p78
      %p178 = pneg %p75
      %p179 = pneg %p99
      %p180 = pneg %p96
      %p181 = pneg %p125
      %p182 = pneg %p122
      %p183 = scmp.lt.s32.totalorder %s15, 1
      %s184 = scalar_select %p183, %s15, 1
      %s185 = smul.addr %s184, 32
      %s186 = smul.addr %s185, 8
      %s187 = scalar_lea.vmem %s4, %s186
      %p188 = scmp.lt.s32.totalorder %s15, 1
      %s189 = scalar_select %p188, %s15, 1
      %s190 = smul.addr %s189, 54
      %s191 = smul.addr %s190, 8
      %s192 = scalar_lea.vmem %s0, %s191
      %p193 = scmp.lt.s32.totalorder %s15, 1
      %s194 = scalar_select %p193, %s15, 1
      %s195 = smul.addr %s194, 32
      %s196 = smul.addr %s195, 8
      %s197 = scalar_lea.vmem %s4, %s196
      %v199 = vld [vmem:[%s192] sm:$0xff]
      %v200 = vld [vmem:[%s192 + $0x8] sm:$0xff]
      %v201 = vld [vmem:[%s192 + $0x18] sm:$0xff]
      %v202 = vld [vmem:[%s192 + $0x20] sm:$0xff]
      %v203 = vld [vmem:[%s192 + $0x30] sm:$0xff]
      %v204 = vld [vmem:[%s192 + $0x38] sm:$0xff]
      %v205 = vld [vmem:[%s192 + $0x48] sm:$0xff]
      %v206 = vld [vmem:[%s192 + $0x50] sm:$0xff]
      %v207 = vld [vmem:[%s192 + $0x60] sm:$0xff]
      %v208 = vld [vmem:[%s192 + $0x68] sm:$0xff]
      %v209 = vld [vmem:[%s192 + $0x78] sm:$0xff]
      %v210 = vld [vmem:[%s192 + $0x80] sm:$0xff]
      %v211 = vld [vmem:[%s192 + $0x90] sm:$0xff]
      %v212 = vld [vmem:[%s192 + $0x98] sm:$0xff]
      %v213 = vld [vmem:[%s192 + $0xa8] sm:$0xff]
      %v214 = vld [vmem:[%s192 + $0xb0] sm:$0xff]
      %v215 = vld [vmem:[%s192 + $0xc0] sm:$0xff]
      %v216 = vld [vmem:[%s192 + $0xc8] sm:$0xff]
      %v217 = vld [vmem:[%s192 + $0xd8] sm:$0xff]
      %v218 = vld [vmem:[%s192 + $0xe0] sm:$0xff]
      %v219 = vld [vmem:[%s192 + $0xf0] sm:$0xff]
      %v220 = vld [vmem:[%s192 + $0xf8] sm:$0xff]
      %v221 = vld [vmem:[%s192 + $0x108] sm:$0xff]
      %v222 = vld [vmem:[%s192 + $0x110] sm:$0xff]
      %v223 = vld [vmem:[%s192 + $0x120] sm:$0xff]
      %v224 = vld [vmem:[%s192 + $0x128] sm:$0xff]
      %v225 = vld [vmem:[%s192 + $0x138] sm:$0xff]
      %v226 = vld [vmem:[%s192 + $0x140] sm:$0xff]
      %v227 = vld [vmem:[%s192 + $0x150] sm:$0xff]
      %v228 = vld [vmem:[%s192 + $0x158] sm:$0xff]
      %v229 = vld [vmem:[%s192 + $0x168] sm:$0xff]
      %v230 = vld [vmem:[%s192 + $0x170] sm:$0xff]
      %v231 = vpack.c.bf16 %v200, %v199
      %v232 = vpack.c.bf16 %v202, %v201
      %v233 = vpack.c.bf16 %v204, %v203
      %v234 = vpack.c.bf16 %v206, %v205
      %v235 = vpack.c.bf16 %v208, %v207
      %v236 = vpack.c.bf16 %v210, %v209
      %v237 = vpack.c.bf16 %v212, %v211
      %v238 = vpack.c.bf16 %v214, %v213
      %v239 = vpack.c.bf16 %v216, %v215
      %v240 = vpack.c.bf16 %v218, %v217
      %v241 = vpack.c.bf16 %v220, %v219
      %v242 = vpack.c.bf16 %v222, %v221
      %v243 = vpack.c.bf16 %v224, %v223
      %v244 = vpack.c.bf16 %v226, %v225
      %v245 = vpack.c.bf16 %v228, %v227
      %v246 = vpack.c.bf16 %v230, %v229
      %v247 = vld [vmem:[%s1] sm:$0xf]
      %v248 = vpack.c.bf16 %v247, %v247
      %v249 = vld [vmem:[%s192 + $0x1] sm:$0xff]
      %v250 = vld [vmem:[%s192 + $0x9] sm:$0xff]
      %v251 = vld [vmem:[%s192 + $0x19] sm:$0xff]
      %v252 = vld [vmem:[%s192 + $0x21] sm:$0xff]
      %v253 = vld [vmem:[%s192 + $0x31] sm:$0xff]
      %v254 = vld [vmem:[%s192 + $0x39] sm:$0xff]
      %v255 = vld [vmem:[%s192 + $0x49] sm:$0xff]
      %v256 = vld [vmem:[%s192 + $0x51] sm:$0xff]
      %v257 = vld [vmem:[%s192 + $0x61] sm:$0xff]
      %v258 = vld [vmem:[%s192 + $0x69] sm:$0xff]
      %v259 = vld [vmem:[%s192 + $0x79] sm:$0xff]
      %v260 = vld [vmem:[%s192 + $0x81] sm:$0xff]
      %v261 = vld [vmem:[%s192 + $0x91] sm:$0xff]
      %v262 = vld [vmem:[%s192 + $0x99] sm:$0xff]
      %v263 = vld [vmem:[%s192 + $0xa9] sm:$0xff]
      %v264 = vld [vmem:[%s192 + $0xb1] sm:$0xff]
      %v265 = vld [vmem:[%s192 + $0xc1] sm:$0xff]
      %v266 = vld [vmem:[%s192 + $0xc9] sm:$0xff]
      %v267 = vld [vmem:[%s192 + $0xd9] sm:$0xff]
      %v268 = vld [vmem:[%s192 + $0xe1] sm:$0xff]
      %v269 = vld [vmem:[%s192 + $0xf1] sm:$0xff]
      %v270 = vld [vmem:[%s192 + $0xf9] sm:$0xff]
      %v271 = vld [vmem:[%s192 + $0x109] sm:$0xff]
      %v272 = vld [vmem:[%s192 + $0x111] sm:$0xff]
      %v273 = vld [vmem:[%s192 + $0x121] sm:$0xff]
      %v274 = vld [vmem:[%s192 + $0x129] sm:$0xff]
      %v275 = vld [vmem:[%s192 + $0x139] sm:$0xff]
      %v276 = vld [vmem:[%s192 + $0x141] sm:$0xff]
      %v277 = vld [vmem:[%s192 + $0x151] sm:$0xff]
      %v278 = vld [vmem:[%s192 + $0x159] sm:$0xff]
      %v279 = vld [vmem:[%s192 + $0x169] sm:$0xff]
      %v280 = vld [vmem:[%s192 + $0x171] sm:$0xff]
      %v281 = vpack.c.bf16 %v250, %v249
      %v282 = vpack.c.bf16 %v252, %v251
      %v283 = vpack.c.bf16 %v254, %v253
      %v284 = vpack.c.bf16 %v256, %v255
      %v285 = vpack.c.bf16 %v258, %v257
      %v286 = vpack.c.bf16 %v260, %v259
      %v287 = vpack.c.bf16 %v262, %v261
      %v288 = vpack.c.bf16 %v264, %v263
      %v289 = vpack.c.bf16 %v266, %v265
      %v290 = vpack.c.bf16 %v268, %v267
      %v291 = vpack.c.bf16 %v270, %v269
      %v292 = vpack.c.bf16 %v272, %v271
      %v293 = vpack.c.bf16 %v274, %v273
      %v294 = vpack.c.bf16 %v276, %v275
      %v295 = vpack.c.bf16 %v278, %v277
      %v296 = vpack.c.bf16 %v280, %v279
      %s297 = scalar_lea.vmem %s1, 4
      %v298 = vld [vmem:[%s297] sm:$0xf]
      %v299 = vpack.c.bf16 %v298, %v298
      %vm300 = vcmask 31744
      %v302 = vsel %vm300, %v281, 0
      %v305 = vsel %vm300, %v282, 0
      %v308 = vsel %vm300, %v283, 0
      %v311 = vsel %vm300, %v284, 0
      %v314 = vsel %vm300, %v285, 0
      %v317 = vsel %vm300, %v286, 0
      %v320 = vsel %vm300, %v287, 0
      %v323 = vsel %vm300, %v288, 0
      %v326 = vsel %vm300, %v289, 0
      %v329 = vsel %vm300, %v290, 0
      %v332 = vsel %vm300, %v291, 0
      %v335 = vsel %vm300, %v292, 0
      %v338 = vsel %vm300, %v293, 0
      %v341 = vsel %vm300, %v294, 0
      %v344 = vsel %vm300, %v295, 0
      %v347 = vsel %vm300, %v296, 0
      %vm349 = vcmask 1041408
      %v351 = vsel %vm349, %v299, 0
      %353 = vmatpush.bf16.msra.mxu0 0
      %354 = vmatpush.bf16.msra.mxu0 0
      %355 = vmatpush.bf16.msra.mxu0 0
      %356 = vmatpush.bf16.msra.mxu0 0
      %357 = vmatpush.bf16.msra.mxu0 0
      %358 = vmatpush.bf16.msra.mxu0 0
      %359 = vmatpush.bf16.msra.mxu0 0
      %360 = vmatpush.bf16.msra.mxu0 %v351
      %361 = vmatmul.bf16.gmra.mxu0 %v302
      %v362 = vpop.f32.mrf.mxu0
      %v363 = vadd.f32 0.0, %v362
      %v364 = vpop.f32.mrf.mxu0
      %v365 = vadd.f32 0.0, %v364
      %366 = vmatmul.bf16.gmra.mxu0 %v305
      %v367 = vpop.f32.mrf.mxu0
      %v368 = vadd.f32 0.0, %v367
      %v369 = vpop.f32.mrf.mxu0
      %v370 = vadd.f32 0.0, %v369
      %371 = vmatmul.bf16.gmra.mxu0 %v308
      %v372 = vpop.f32.mrf.mxu0
      %v373 = vadd.f32 0.0, %v372
      %v374 = vpop.f32.mrf.mxu0
      %v375 = vadd.f32 0.0, %v374
      %376 = vmatmul.bf16.gmra.mxu0 %v311
      %v377 = vpop.f32.mrf.mxu0
      %v378 = vadd.f32 0.0, %v377
      %v379 = vpop.f32.mrf.mxu0
      %v380 = vadd.f32 0.0, %v379
      %381 = vmatmul.bf16.gmra.mxu0 %v314
      %v382 = vpop.f32.mrf.mxu0
      %v383 = vadd.f32 0.0, %v382
      %v384 = vpop.f32.mrf.mxu0
      %v385 = vadd.f32 0.0, %v384
      %386 = vmatmul.bf16.gmra.mxu0 %v317
      %v387 = vpop.f32.mrf.mxu0
      %v388 = vadd.f32 0.0, %v387
      %v389 = vpop.f32.mrf.mxu0
      %v390 = vadd.f32 0.0, %v389
      %391 = vmatmul.bf16.gmra.mxu0 %v320
      %v392 = vpop.f32.mrf.mxu0
      %v393 = vadd.f32 0.0, %v392
      %v394 = vpop.f32.mrf.mxu0
      %v395 = vadd.f32 0.0, %v394
      %396 = vmatmul.bf16.gmra.mxu0 %v323
      %v397 = vpop.f32.mrf.mxu0
      %v398 = vadd.f32 0.0, %v397
      %v399 = vpop.f32.mrf.mxu0
      %v400 = vadd.f32 0.0, %v399
      %401 = vmatmul.bf16.gmra.mxu0 %v326
      %v402 = vpop.f32.mrf.mxu0
      %v403 = vadd.f32 0.0, %v402
      %v404 = vpop.f32.mrf.mxu0
      %v405 = vadd.f32 0.0, %v404
      %406 = vmatmul.bf16.gmra.mxu0 %v329
      %v407 = vpop.f32.mrf.mxu0
      %v408 = vadd.f32 0.0, %v407
      %v409 = vpop.f32.mrf.mxu0
      %v410 = vadd.f32 0.0, %v409
      %411 = vmatmul.bf16.gmra.mxu0 %v332
      %v412 = vpop.f32.mrf.mxu0
      %v413 = vadd.f32 0.0, %v412
      %v414 = vpop.f32.mrf.mxu0
      %v415 = vadd.f32 0.0, %v414
      %416 = vmatmul.bf16.gmra.mxu0 %v335
      %v417 = vpop.f32.mrf.mxu0
      %v418 = vadd.f32 0.0, %v417
      %v419 = vpop.f32.mrf.mxu0
      %v420 = vadd.f32 0.0, %v419
      %421 = vmatmul.bf16.gmra.mxu0 %v338
      %v422 = vpop.f32.mrf.mxu0
      %v423 = vadd.f32 0.0, %v422
      %v424 = vpop.f32.mrf.mxu0
      %v425 = vadd.f32 0.0, %v424
      %426 = vmatmul.bf16.gmra.mxu0 %v341
      %v427 = vpop.f32.mrf.mxu0
      %v428 = vadd.f32 0.0, %v427
      %v429 = vpop.f32.mrf.mxu0
      %v430 = vadd.f32 0.0, %v429
      %431 = vmatmul.bf16.gmra.mxu0 %v344
      %v432 = vpop.f32.mrf.mxu0
      %v433 = vadd.f32 0.0, %v432
      %v434 = vpop.f32.mrf.mxu0
      %v435 = vadd.f32 0.0, %v434
      %436 = vmatmul.bf16.gmra.mxu0 %v347
      %v437 = vpop.f32.mrf.mxu0
      %v438 = vadd.f32 0.0, %v437
      %v439 = vpop.f32.mrf.mxu0
      %v440 = vadd.f32 0.0, %v439
      %441 = vdwg.mxu0
      %v443 = vsel %vm300, %v231, 0
      %v446 = vsel %vm300, %v232, 0
      %v449 = vsel %vm300, %v233, 0
      %v452 = vsel %vm300, %v234, 0
      %v455 = vsel %vm300, %v235, 0
      %v458 = vsel %vm300, %v236, 0
      %v461 = vsel %vm300, %v237, 0
      %v464 = vsel %vm300, %v238, 0
      %v467 = vsel %vm300, %v239, 0
      %v470 = vsel %vm300, %v240, 0
      %v473 = vsel %vm300, %v241, 0
      %v476 = vsel %vm300, %v242, 0
      %v479 = vsel %vm300, %v243, 0
      %v482 = vsel %vm300, %v244, 0
      %v485 = vsel %vm300, %v245, 0
      %v488 = vsel %vm300, %v246, 0
      %v491 = vsel %vm349, %v248, 0
      %493 = vmatpush.bf16.msra.mxu0 0
      %494 = vmatpush.bf16.msra.mxu0 0
      %495 = vmatpush.bf16.msra.mxu0 0
      %496 = vmatpush.bf16.msra.mxu0 0
      %497 = vmatpush.bf16.msra.mxu0 0
      %498 = vmatpush.bf16.msra.mxu0 0
      %499 = vmatpush.bf16.msra.mxu0 0
      %500 = vmatpush.bf16.msra.mxu0 %v491
      %501 = vmatmul.bf16.gmra.mxu0 %v443
      %v502 = vpop.f32.mrf.mxu0
      %v503 = vadd.f32 %v363, %v502
      %v504 = vpop.f32.mrf.mxu0
      %v505 = vadd.f32 %v365, %v504
      %506 = vmatmul.bf16.gmra.mxu0 %v446
      %v507 = vpop.f32.mrf.mxu0
      %v508 = vadd.f32 %v368, %v507
      %v509 = vpop.f32.mrf.mxu0
      %v510 = vadd.f32 %v370, %v509
      %511 = vmatmul.bf16.gmra.mxu0 %v449
      %v512 = vpop.f32.mrf.mxu0
      %v513 = vadd.f32 %v373, %v512
      %v514 = vpop.f32.mrf.mxu0
      %v515 = vadd.f32 %v375, %v514
      %516 = vmatmul.bf16.gmra.mxu0 %v452
      %v517 = vpop.f32.mrf.mxu0
      %v518 = vadd.f32 %v378, %v517
      %v519 = vpop.f32.mrf.mxu0
      %v520 = vadd.f32 %v380, %v519
      %521 = vmatmul.bf16.gmra.mxu0 %v455
      %v522 = vpop.f32.mrf.mxu0
      %v523 = vadd.f32 %v383, %v522
      %v524 = vpop.f32.mrf.mxu0
      %v525 = vadd.f32 %v385, %v524
      %526 = vmatmul.bf16.gmra.mxu0 %v458
      %v527 = vpop.f32.mrf.mxu0
      %v528 = vadd.f32 %v388, %v527
      %v529 = vpop.f32.mrf.mxu0
      %v530 = vadd.f32 %v390, %v529
      %531 = vmatmul.bf16.gmra.mxu0 %v461
      %v532 = vpop.f32.mrf.mxu0
      %v533 = vadd.f32 %v393, %v532
      %v534 = vpop.f32.mrf.mxu0
      %v535 = vadd.f32 %v395, %v534
      %536 = vmatmul.bf16.gmra.mxu0 %v464
      %v537 = vpop.f32.mrf.mxu0
      %v538 = vadd.f32 %v398, %v537
      %v539 = vpop.f32.mrf.mxu0
      %v540 = vadd.f32 %v400, %v539
      %541 = vmatmul.bf16.gmra.mxu0 %v467
      %v542 = vpop.f32.mrf.mxu0
      %v543 = vadd.f32 %v403, %v542
      %v544 = vpop.f32.mrf.mxu0
      %v545 = vadd.f32 %v405, %v544
      %546 = vmatmul.bf16.gmra.mxu0 %v470
      %v547 = vpop.f32.mrf.mxu0
      %v548 = vadd.f32 %v408, %v547
      %v549 = vpop.f32.mrf.mxu0
      %v550 = vadd.f32 %v410, %v549
      %551 = vmatmul.bf16.gmra.mxu0 %v473
      %v552 = vpop.f32.mrf.mxu0
      %v553 = vadd.f32 %v413, %v552
      %v554 = vpop.f32.mrf.mxu0
      %v555 = vadd.f32 %v415, %v554
      %556 = vmatmul.bf16.gmra.mxu0 %v476
      %v557 = vpop.f32.mrf.mxu0
      %v558 = vadd.f32 %v418, %v557
      %v559 = vpop.f32.mrf.mxu0
      %v560 = vadd.f32 %v420, %v559
      %561 = vmatmul.bf16.gmra.mxu0 %v479
      %v562 = vpop.f32.mrf.mxu0
      %v563 = vadd.f32 %v423, %v562
      %v564 = vpop.f32.mrf.mxu0
      %v565 = vadd.f32 %v425, %v564
      %566 = vmatmul.bf16.gmra.mxu0 %v482
      %v567 = vpop.f32.mrf.mxu0
      %v568 = vadd.f32 %v428, %v567
      %v569 = vpop.f32.mrf.mxu0
      %v570 = vadd.f32 %v430, %v569
      %571 = vmatmul.bf16.gmra.mxu0 %v485
      %v572 = vpop.f32.mrf.mxu0
      %v573 = vadd.f32 %v433, %v572
      %v574 = vpop.f32.mrf.mxu0
      %v575 = vadd.f32 %v435, %v574
      %576 = vmatmul.bf16.gmra.mxu0 %v488
      %v577 = vpop.f32.mrf.mxu0
      %v578 = vadd.f32 %v438, %v577
      %v579 = vpop.f32.mrf.mxu0
      %v580 = vadd.f32 %v440, %v579
      %581 = vdwg.mxu0
      %v582 = vld [vmem:[%s192 + $0x2] sm:$0xff]
      %v583 = vld [vmem:[%s192 + $0xa] sm:$0xff]
      %v584 = vld [vmem:[%s192 + $0x1a] sm:$0xff]
      %v585 = vld [vmem:[%s192 + $0x22] sm:$0xff]
      %v586 = vld [vmem:[%s192 + $0x32] sm:$0xff]
      %v587 = vld [vmem:[%s192 + $0x3a] sm:$0xff]
      %v588 = vld [vmem:[%s192 + $0x4a] sm:$0xff]
      %v589 = vld [vmem:[%s192 + $0x52] sm:$0xff]
      %v590 = vld [vmem:[%s192 + $0x62] sm:$0xff]
      %v591 = vld [vmem:[%s192 + $0x6a] sm:$0xff]
      %v592 = vld [vmem:[%s192 + $0x7a] sm:$0xff]
      %v593 = vld [vmem:[%s192 + $0x82] sm:$0xff]
      %v594 = vld [vmem:[%s192 + $0x92] sm:$0xff]
      %v595 = vld [vmem:[%s192 + $0x9a] sm:$0xff]
      %v596 = vld [vmem:[%s192 + $0xaa] sm:$0xff]
      %v597 = vld [vmem:[%s192 + $0xb2] sm:$0xff]
      %v598 = vld [vmem:[%s192 + $0xc2] sm:$0xff]
      %v599 = vld [vmem:[%s192 + $0xca] sm:$0xff]
      %v600 = vld [vmem:[%s192 + $0xda] sm:$0xff]
      %v601 = vld [vmem:[%s192 + $0xe2] sm:$0xff]
      %v602 = vld [vmem:[%s192 + $0xf2] sm:$0xff]
      %v603 = vld [vmem:[%s192 + $0xfa] sm:$0xff]
      %v604 = vld [vmem:[%s192 + $0x10a] sm:$0xff]
      %v605 = vld [vmem:[%s192 + $0x112] sm:$0xff]
      %v606 = vld [vmem:[%s192 + $0x122] sm:$0xff]
      %v607 = vld [vmem:[%s192 + $0x12a] sm:$0xff]
      %v608 = vld [vmem:[%s192 + $0x13a] sm:$0xff]
      %v609 = vld [vmem:[%s192 + $0x142] sm:$0xff]
      %v610 = vld [vmem:[%s192 + $0x152] sm:$0xff]
      %v611 = vld [vmem:[%s192 + $0x15a] sm:$0xff]
      %v612 = vld [vmem:[%s192 + $0x16a] sm:$0xff]
      %v613 = vld [vmem:[%s192 + $0x172] sm:$0xff]
      %v614 = vpack.c.bf16 %v583, %v582
      %v615 = vpack.c.bf16 %v585, %v584
      %v616 = vpack.c.bf16 %v587, %v586
      %v617 = vpack.c.bf16 %v589, %v588
      %v618 = vpack.c.bf16 %v591, %v590
      %v619 = vpack.c.bf16 %v593, %v592
      %v620 = vpack.c.bf16 %v595, %v594
      %v621 = vpack.c.bf16 %v597, %v596
      %v622 = vpack.c.bf16 %v599, %v598
      %v623 = vpack.c.bf16 %v601, %v600
      %v624 = vpack.c.bf16 %v603, %v602
      %v625 = vpack.c.bf16 %v605, %v604
      %v626 = vpack.c.bf16 %v607, %v606
      %v627 = vpack.c.bf16 %v609, %v608
      %v628 = vpack.c.bf16 %v611, %v610
      %v629 = vpack.c.bf16 %v613, %v612
      %s630 = scalar_lea.vmem %s1, 8
      %v631 = vld [vmem:[%s630] sm:$0xf]
      %v632 = vpack.c.bf16 %v631, %v631
      %v634 = vsel %vm300, %v614, 0
      %v637 = vsel %vm300, %v615, 0
      %v640 = vsel %vm300, %v616, 0
      %v643 = vsel %vm300, %v617, 0
      %v646 = vsel %vm300, %v618, 0
      %v649 = vsel %vm300, %v619, 0
      %v652 = vsel %vm300, %v620, 0
      %v655 = vsel %vm300, %v621, 0
      %v658 = vsel %vm300, %v622, 0
      %v661 = vsel %vm300, %v623, 0
      %v664 = vsel %vm300, %v624, 0
      %v667 = vsel %vm300, %v625, 0
      %v670 = vsel %vm300, %v626, 0
      %v673 = vsel %vm300, %v627, 0
      %v676 = vsel %vm300, %v628, 0
      %v679 = vsel %vm300, %v629, 0
      %v682 = vsel %vm349, %v632, 0
      %684 = vmatpush.bf16.msra.mxu0 0
      %685 = vmatpush.bf16.msra.mxu0 0
      %686 = vmatpush.bf16.msra.mxu0 0
      %687 = vmatpush.bf16.msra.mxu0 0
      %688 = vmatpush.bf16.msra.mxu0 0
      %689 = vmatpush.bf16.msra.mxu0 0
      %690 = vmatpush.bf16.msra.mxu0 0
      %691 = vmatpush.bf16.msra.mxu0 %v682
      %692 = vmatmul.bf16.gmra.mxu0 %v634
      %v693 = vpop.f32.mrf.mxu0
      %v694 = vadd.f32 0.0, %v693
      %v695 = vpop.f32.mrf.mxu0
      %v696 = vadd.f32 0.0, %v695
      %697 = vmatmul.bf16.gmra.mxu0 %v637
      %v698 = vpop.f32.mrf.mxu0
      %v699 = vadd.f32 0.0, %v698
      %v700 = vpop.f32.mrf.mxu0
      %v701 = vadd.f32 0.0, %v700
      %702 = vmatmul.bf16.gmra.mxu0 %v640
      %v703 = vpop.f32.mrf.mxu0
      %v704 = vadd.f32 0.0, %v703
      %v705 = vpop.f32.mrf.mxu0
      %v706 = vadd.f32 0.0, %v705
      %707 = vmatmul.bf16.gmra.mxu0 %v643
      %v708 = vpop.f32.mrf.mxu0
      %v709 = vadd.f32 0.0, %v708
      %v710 = vpop.f32.mrf.mxu0
      %v711 = vadd.f32 0.0, %v710
      %712 = vmatmul.bf16.gmra.mxu0 %v646
      %v713 = vpop.f32.mrf.mxu0
      %v714 = vadd.f32 0.0, %v713
      %v715 = vpop.f32.mrf.mxu0
      %v716 = vadd.f32 0.0, %v715
      %717 = vmatmul.bf16.gmra.mxu0 %v649
      %v718 = vpop.f32.mrf.mxu0
      %v719 = vadd.f32 0.0, %v718
      %v720 = vpop.f32.mrf.mxu0
      %v721 = vadd.f32 0.0, %v720
      %722 = vmatmul.bf16.gmra.mxu0 %v652
      %v723 = vpop.f32.mrf.mxu0
      %v724 = vadd.f32 0.0, %v723
      %v725 = vpop.f32.mrf.mxu0
      %v726 = vadd.f32 0.0, %v725
      %727 = vmatmul.bf16.gmra.mxu0 %v655
      %v728 = vpop.f32.mrf.mxu0
      %v729 = vadd.f32 0.0, %v728
      %v730 = vpop.f32.mrf.mxu0
      %v731 = vadd.f32 0.0, %v730
      %732 = vmatmul.bf16.gmra.mxu0 %v658
      %v733 = vpop.f32.mrf.mxu0
      %v734 = vadd.f32 0.0, %v733
      %v735 = vpop.f32.mrf.mxu0
      %v736 = vadd.f32 0.0, %v735
      %737 = vmatmul.bf16.gmra.mxu0 %v661
      %v738 = vpop.f32.mrf.mxu0
      %v739 = vadd.f32 0.0, %v738
      %v740 = vpop.f32.mrf.mxu0
      %v741 = vadd.f32 0.0, %v740
      %742 = vmatmul.bf16.gmra.mxu0 %v664
      %v743 = vpop.f32.mrf.mxu0
      %v744 = vadd.f32 0.0, %v743
      %v745 = vpop.f32.mrf.mxu0
      %v746 = vadd.f32 0.0, %v745
      %747 = vmatmul.bf16.gmra.mxu0 %v667
      %v748 = vpop.f32.mrf.mxu0
      %v749 = vadd.f32 0.0, %v748
      %v750 = vpop.f32.mrf.mxu0
      %v751 = vadd.f32 0.0, %v750
      %752 = vmatmul.bf16.gmra.mxu0 %v670
      %v753 = vpop.f32.mrf.mxu0
      %v754 = vadd.f32 0.0, %v753
      %v755 = vpop.f32.mrf.mxu0
      %v756 = vadd.f32 0.0, %v755
      %757 = vmatmul.bf16.gmra.mxu0 %v673
      %v758 = vpop.f32.mrf.mxu0
      %v759 = vadd.f32 0.0, %v758
      %v760 = vpop.f32.mrf.mxu0
      %v761 = vadd.f32 0.0, %v760
      %762 = vmatmul.bf16.gmra.mxu0 %v676
      %v763 = vpop.f32.mrf.mxu0
      %v764 = vadd.f32 0.0, %v763
      %v765 = vpop.f32.mrf.mxu0
      %v766 = vadd.f32 0.0, %v765
      %767 = vmatmul.bf16.gmra.mxu0 %v679
      %v768 = vpop.f32.mrf.mxu0
      %v769 = vadd.f32 0.0, %v768
      %v770 = vpop.f32.mrf.mxu0
      %v771 = vadd.f32 0.0, %v770
      %772 = vdwg.mxu0
      %v773 = vadd.f32 %v503, %v694
      %v774 = vadd.f32 %v505, %v696
      %v775 = vadd.f32 %v508, %v699
      %v776 = vadd.f32 %v510, %v701
      %v777 = vadd.f32 %v513, %v704
      %v778 = vadd.f32 %v515, %v706
      %v779 = vadd.f32 %v518, %v709
      %v780 = vadd.f32 %v520, %v711
      %v781 = vadd.f32 %v523, %v714
      %v782 = vadd.f32 %v525, %v716
      %v783 = vadd.f32 %v528, %v719
      %v784 = vadd.f32 %v530, %v721
      %v785 = vadd.f32 %v533, %v724
      %v786 = vadd.f32 %v535, %v726
      %v787 = vadd.f32 %v538, %v729
      %v788 = vadd.f32 %v540, %v731
      %v789 = vadd.f32 %v543, %v734
      %v790 = vadd.f32 %v545, %v736
      %v791 = vadd.f32 %v548, %v739
      %v792 = vadd.f32 %v550, %v741
      %v793 = vadd.f32 %v553, %v744
      %v794 = vadd.f32 %v555, %v746
      %v795 = vadd.f32 %v558, %v749
      %v796 = vadd.f32 %v560, %v751
      %v797 = vadd.f32 %v563, %v754
      %v798 = vadd.f32 %v565, %v756
      %v799 = vadd.f32 %v568, %v759
      %v800 = vadd.f32 %v570, %v761
      %v801 = vadd.f32 %v573, %v764
      %v802 = vadd.f32 %v575, %v766
      %v803 = vadd.f32 %v578, %v769
      %v804 = vadd.f32 %v580, %v771
      %s805 = scalar_lea.vmem %s192, 24
      %v806 = vld [vmem:[%s805] sm:$0xff]
      %v807 = vld [vmem:[%s805 + $0x8] sm:$0xff]
      %v808 = vld [vmem:[%s805 + $0x18] sm:$0xff]
      %v809 = vld [vmem:[%s805 + $0x20] sm:$0xff]
      %v810 = vld [vmem:[%s805 + $0x30] sm:$0xff]
      %v811 = vld [vmem:[%s805 + $0x38] sm:$0xff]
      %v812 = vld [vmem:[%s805 + $0x48] sm:$0xff]
      %v813 = vld [vmem:[%s805 + $0x50] sm:$0xff]
      %v814 = vld [vmem:[%s805 + $0x60] sm:$0xff]
      %v815 = vld [vmem:[%s805 + $0x68] sm:$0xff]
      %v816 = vld [vmem:[%s805 + $0x78] sm:$0xff]
      %v817 = vld [vmem:[%s805 + $0x80] sm:$0xff]
      %v818 = vld [vmem:[%s805 + $0x90] sm:$0xff]
      %v819 = vld [vmem:[%s805 + $0x98] sm:$0xff]
      %v820 = vld [vmem:[%s805 + $0xa8] sm:$0xff]
      %v821 = vld [vmem:[%s805 + $0xb0] sm:$0xff]
      %v822 = vld [vmem:[%s805 + $0xc0] sm:$0xff]
      %v823 = vld [vmem:[%s805 + $0xc8] sm:$0xff]
      %v824 = vld [vmem:[%s805 + $0xd8] sm:$0xff]
      %v825 = vld [vmem:[%s805 + $0xe0] sm:$0xff]
      %v826 = vld [vmem:[%s805 + $0xf0] sm:$0xff]
      %v827 = vld [vmem:[%s805 + $0xf8] sm:$0xff]
      %v828 = vld [vmem:[%s805 + $0x108] sm:$0xff]
      %v829 = vld [vmem:[%s805 + $0x110] sm:$0xff]
      %v830 = vld [vmem:[%s805 + $0x120] sm:$0xff]
      %v831 = vld [vmem:[%s805 + $0x128] sm:$0xff]
      %v832 = vld [vmem:[%s805 + $0x138] sm:$0xff]
      %v833 = vld [vmem:[%s805 + $0x140] sm:$0xff]
      %v834 = vld [vmem:[%s805 + $0x150] sm:$0xff]
      %v835 = vld [vmem:[%s805 + $0x158] sm:$0xff]
      %v836 = vld [vmem:[%s805 + $0x168] sm:$0xff]
      %v837 = vld [vmem:[%s805 + $0x170] sm:$0xff]
      %v838 = vpack.c.bf16 %v807, %v806
      %v839 = vpack.c.bf16 %v809, %v808
      %v840 = vpack.c.bf16 %v811, %v810
      %v841 = vpack.c.bf16 %v813, %v812
      %v842 = vpack.c.bf16 %v815, %v814
      %v843 = vpack.c.bf16 %v817, %v816
      %v844 = vpack.c.bf16 %v819, %v818
      %v845 = vpack.c.bf16 %v821, %v820
      %v846 = vpack.c.bf16 %v823, %v822
      %v847 = vpack.c.bf16 %v825, %v824
      %v848 = vpack.c.bf16 %v827, %v826
      %v849 = vpack.c.bf16 %v829, %v828
      %v850 = vpack.c.bf16 %v831, %v830
      %v851 = vpack.c.bf16 %v833, %v832
      %v852 = vpack.c.bf16 %v835, %v834
      %v853 = vpack.c.bf16 %v837, %v836
      %s854 = scalar_lea.vmem %s1, 12
      %v855 = vld [vmem:[%s854] sm:$0xf]
      %v856 = vpack.c.bf16 %v855, %v855
      %v858 = vsel %vm300, %v838, 0
      %v861 = vsel %vm300, %v839, 0
      %v864 = vsel %vm300, %v840, 0
      %v867 = vsel %vm300, %v841, 0
      %v870 = vsel %vm300, %v842, 0
      %v873 = vsel %vm300, %v843, 0
      %v876 = vsel %vm300, %v844, 0
      %v879 = vsel %vm300, %v845, 0
      %v882 = vsel %vm300, %v846, 0
      %v885 = vsel %vm300, %v847, 0
      %v888 = vsel %vm300, %v848, 0
      %v891 = vsel %vm300, %v849, 0
      %v894 = vsel %vm300, %v850, 0
      %v897 = vsel %vm300, %v851, 0
      %v900 = vsel %vm300, %v852, 0
      %v903 = vsel %vm300, %v853, 0
      %v906 = vsel %vm349, %v856, 0
      %908 = vmatpush.bf16.msra.mxu0 0
      %909 = vmatpush.bf16.msra.mxu0 0
      %910 = vmatpush.bf16.msra.mxu0 0
      %911 = vmatpush.bf16.msra.mxu0 0
      %912 = vmatpush.bf16.msra.mxu0 0
      %913 = vmatpush.bf16.msra.mxu0 0
      %914 = vmatpush.bf16.msra.mxu0 0
      %915 = vmatpush.bf16.msra.mxu0 %v906
      %916 = vmatmul.bf16.gmra.mxu0 %v858
      %v917 = vpop.f32.mrf.mxu0
      %v918 = vadd.f32 0.0, %v917
      %v919 = vpop.f32.mrf.mxu0
      %v920 = vadd.f32 0.0, %v919
      %921 = vmatmul.bf16.gmra.mxu0 %v861
      %v922 = vpop.f32.mrf.mxu0
      %v923 = vadd.f32 0.0, %v922
      %v924 = vpop.f32.mrf.mxu0
      %v925 = vadd.f32 0.0, %v924
      %926 = vmatmul.bf16.gmra.mxu0 %v864
      %v927 = vpop.f32.mrf.mxu0
      %v928 = vadd.f32 0.0, %v927
      %v929 = vpop.f32.mrf.mxu0
      %v930 = vadd.f32 0.0, %v929
      %931 = vmatmul.bf16.gmra.mxu0 %v867
      %v932 = vpop.f32.mrf.mxu0
      %v933 = vadd.f32 0.0, %v932
      %v934 = vpop.f32.mrf.mxu0
      %v935 = vadd.f32 0.0, %v934
      %936 = vmatmul.bf16.gmra.mxu0 %v870
      %v937 = vpop.f32.mrf.mxu0
      %v938 = vadd.f32 0.0, %v937
      %v939 = vpop.f32.mrf.mxu0
      %v940 = vadd.f32 0.0, %v939
      %941 = vmatmul.bf16.gmra.mxu0 %v873
      %v942 = vpop.f32.mrf.mxu0
      %v943 = vadd.f32 0.0, %v942
      %v944 = vpop.f32.mrf.mxu0
      %v945 = vadd.f32 0.0, %v944
      %946 = vmatmul.bf16.gmra.mxu0 %v876
      %v947 = vpop.f32.mrf.mxu0
      %v948 = vadd.f32 0.0, %v947
      %v949 = vpop.f32.mrf.mxu0
      %v950 = vadd.f32 0.0, %v949
      %951 = vmatmul.bf16.gmra.mxu0 %v879
      %v952 = vpop.f32.mrf.mxu0
      %v953 = vadd.f32 0.0, %v952
      %v954 = vpop.f32.mrf.mxu0
      %v955 = vadd.f32 0.0, %v954
      %956 = vmatmul.bf16.gmra.mxu0 %v882
      %v957 = vpop.f32.mrf.mxu0
      %v958 = vadd.f32 0.0, %v957
      %v959 = vpop.f32.mrf.mxu0
      %v960 = vadd.f32 0.0, %v959
      %961 = vmatmul.bf16.gmra.mxu0 %v885
      %v962 = vpop.f32.mrf.mxu0
      %v963 = vadd.f32 0.0, %v962
      %v964 = vpop.f32.mrf.mxu0
      %v965 = vadd.f32 0.0, %v964
      %966 = vmatmul.bf16.gmra.mxu0 %v888
      %v967 = vpop.f32.mrf.mxu0
      %v968 = vadd.f32 0.0, %v967
      %v969 = vpop.f32.mrf.mxu0
      %v970 = vadd.f32 0.0, %v969
      %971 = vmatmul.bf16.gmra.mxu0 %v891
      %v972 = vpop.f32.mrf.mxu0
      %v973 = vadd.f32 0.0, %v972
      %v974 = vpop.f32.mrf.mxu0
      %v975 = vadd.f32 0.0, %v974
      %976 = vmatmul.bf16.gmra.mxu0 %v894
      %v977 = vpop.f32.mrf.mxu0
      %v978 = vadd.f32 0.0, %v977
      %v979 = vpop.f32.mrf.mxu0
      %v980 = vadd.f32 0.0, %v979
      %981 = vmatmul.bf16.gmra.mxu0 %v897
      %v982 = vpop.f32.mrf.mxu0
      %v983 = vadd.f32 0.0, %v982
      %v984 = vpop.f32.mrf.mxu0
      %v985 = vadd.f32 0.0, %v984
      %986 = vmatmul.bf16.gmra.mxu0 %v900
      %v987 = vpop.f32.mrf.mxu0
      %v988 = vadd.f32 0.0, %v987
      %v989 = vpop.f32.mrf.mxu0
      %v990 = vadd.f32 0.0, %v989
      %991 = vmatmul.bf16.gmra.mxu0 %v903
      %v992 = vpop.f32.mrf.mxu0
      %v993 = vadd.f32 0.0, %v992
      %v994 = vpop.f32.mrf.mxu0
      %v995 = vadd.f32 0.0, %v994
      %996 = vdwg.mxu0
      %v997 = vadd.f32 %v773, %v918
      %v998 = vadd.f32 %v774, %v920
      %v999 = vadd.f32 %v775, %v923
      %v1000 = vadd.f32 %v776, %v925
      %v1001 = vadd.f32 %v777, %v928
      %v1002 = vadd.f32 %v778, %v930
      %v1003 = vadd.f32 %v779, %v933
      %v1004 = vadd.f32 %v780, %v935
      %v1005 = vadd.f32 %v781, %v938
      %v1006 = vadd.f32 %v782, %v940
      %v1007 = vadd.f32 %v783, %v943
      %v1008 = vadd.f32 %v784, %v945
      %v1009 = vadd.f32 %v785, %v948
      %v1010 = vadd.f32 %v786, %v950
      %v1011 = vadd.f32 %v787, %v953
      %v1012 = vadd.f32 %v788, %v955
      %v1013 = vadd.f32 %v789, %v958
      %v1014 = vadd.f32 %v790, %v960
      %v1015 = vadd.f32 %v791, %v963
      %v1016 = vadd.f32 %v792, %v965
      %v1017 = vadd.f32 %v793, %v968
      %v1018 = vadd.f32 %v794, %v970
      %v1019 = vadd.f32 %v795, %v973
      %v1020 = vadd.f32 %v796, %v975
      %v1021 = vadd.f32 %v797, %v978
      %v1022 = vadd.f32 %v798, %v980
      %v1023 = vadd.f32 %v799, %v983
      %v1024 = vadd.f32 %v800, %v985
      %v1025 = vadd.f32 %v801, %v988
      %v1026 = vadd.f32 %v802, %v990
      %v1027 = vadd.f32 %v803, %v993
      %v1028 = vadd.f32 %v804, %v995
      %v1029 = vld [vmem:[%s805 + $0x1] sm:$0xff]
      %v1030 = vld [vmem:[%s805 + $0x9] sm:$0xff]
      %v1031 = vld [vmem:[%s805 + $0x19] sm:$0xff]
      %v1032 = vld [vmem:[%s805 + $0x21] sm:$0xff]
      %v1033 = vld [vmem:[%s805 + $0x31] sm:$0xff]
      %v1034 = vld [vmem:[%s805 + $0x39] sm:$0xff]
      %v1035 = vld [vmem:[%s805 + $0x49] sm:$0xff]
      %v1036 = vld [vmem:[%s805 + $0x51] sm:$0xff]
      %v1037 = vld [vmem:[%s805 + $0x61] sm:$0xff]
      %v1038 = vld [vmem:[%s805 + $0x69] sm:$0xff]
      %v1039 = vld [vmem:[%s805 + $0x79] sm:$0xff]
      %v1040 = vld [vmem:[%s805 + $0x81] sm:$0xff]
      %v1041 = vld [vmem:[%s805 + $0x91] sm:$0xff]
      %v1042 = vld [vmem:[%s805 + $0x99] sm:$0xff]
      %v1043 = vld [vmem:[%s805 + $0xa9] sm:$0xff]
      %v1044 = vld [vmem:[%s805 + $0xb1] sm:$0xff]
      %v1045 = vld [vmem:[%s805 + $0xc1] sm:$0xff]
      %v1046 = vld [vmem:[%s805 + $0xc9] sm:$0xff]
      %v1047 = vld [vmem:[%s805 + $0xd9] sm:$0xff]
      %v1048 = vld [vmem:[%s805 + $0xe1] sm:$0xff]
      %v1049 = vld [vmem:[%s805 + $0xf1] sm:$0xff]
      %v1050 = vld [vmem:[%s805 + $0xf9] sm:$0xff]
      %v1051 = vld [vmem:[%s805 + $0x109] sm:$0xff]
      %v1052 = vld [vmem:[%s805 + $0x111] sm:$0xff]
      %v1053 = vld [vmem:[%s805 + $0x121] sm:$0xff]
      %v1054 = vld [vmem:[%s805 + $0x129] sm:$0xff]
      %v1055 = vld [vmem:[%s805 + $0x139] sm:$0xff]
      %v1056 = vld [vmem:[%s805 + $0x141] sm:$0xff]
      %v1057 = vld [vmem:[%s805 + $0x151] sm:$0xff]
      %v1058 = vld [vmem:[%s805 + $0x159] sm:$0xff]
      %v1059 = vld [vmem:[%s805 + $0x169] sm:$0xff]
      %v1060 = vld [vmem:[%s805 + $0x171] sm:$0xff]
      %v1061 = vpack.c.bf16 %v1030, %v1029
      %v1062 = vpack.c.bf16 %v1032, %v1031
      %v1063 = vpack.c.bf16 %v1034, %v1033
      %v1064 = vpack.c.bf16 %v1036, %v1035
      %v1065 = vpack.c.bf16 %v1038, %v1037
      %v1066 = vpack.c.bf16 %v1040, %v1039
      %v1067 = vpack.c.bf16 %v1042, %v1041
      %v1068 = vpack.c.bf16 %v1044, %v1043
      %v1069 = vpack.c.bf16 %v1046, %v1045
      %v1070 = vpack.c.bf16 %v1048, %v1047
      %v1071 = vpack.c.bf16 %v1050, %v1049
      %v1072 = vpack.c.bf16 %v1052, %v1051
      %v1073 = vpack.c.bf16 %v1054, %v1053
      %v1074 = vpack.c.bf16 %v1056, %v1055
      %v1075 = vpack.c.bf16 %v1058, %v1057
      %v1076 = vpack.c.bf16 %v1060, %v1059
      %s1077 = scalar_lea.vmem %s1, 16
      %v1078 = vld [vmem:[%s1077] sm:$0xf]
      %v1079 = vpack.c.bf16 %v1078, %v1078
      %v1081 = vsel %vm300, %v1061, 0
      %v1084 = vsel %vm300, %v1062, 0
      %v1087 = vsel %vm300, %v1063, 0
      %v1090 = vsel %vm300, %v1064, 0
      %v1093 = vsel %vm300, %v1065, 0
      %v1096 = vsel %vm300, %v1066, 0
      %v1099 = vsel %vm300, %v1067, 0
      %v1102 = vsel %vm300, %v1068, 0
      %v1105 = vsel %vm300, %v1069, 0
      %v1108 = vsel %vm300, %v1070, 0
      %v1111 = vsel %vm300, %v1071, 0
      %v1114 = vsel %vm300, %v1072, 0
      %v1117 = vsel %vm300, %v1073, 0
      %v1120 = vsel %vm300, %v1074, 0
      %v1123 = vsel %vm300, %v1075, 0
      %v1126 = vsel %vm300, %v1076, 0
      %v1129 = vsel %vm349, %v1079, 0
      %1131 = vmatpush.bf16.msra.mxu0 0
      %1132 = vmatpush.bf16.msra.mxu0 0
      %1133 = vmatpush.bf16.msra.mxu0 0
      %1134 = vmatpush.bf16.msra.mxu0 0
      %1135 = vmatpush.bf16.msra.mxu0 0
      %1136 = vmatpush.bf16.msra.mxu0 0
      %1137 = vmatpush.bf16.msra.mxu0 0
      %1138 = vmatpush.bf16.msra.mxu0 %v1129
      %1139 = vmatmul.bf16.gmra.mxu0 %v1081
      %v1140 = vpop.f32.mrf.mxu0
      %v1141 = vadd.f32 0.0, %v1140
      %v1142 = vpop.f32.mrf.mxu0
      %v1143 = vadd.f32 0.0, %v1142
      %1144 = vmatmul.bf16.gmra.mxu0 %v1084
      %v1145 = vpop.f32.mrf.mxu0
      %v1146 = vadd.f32 0.0, %v1145
      %v1147 = vpop.f32.mrf.mxu0
      %v1148 = vadd.f32 0.0, %v1147
      %1149 = vmatmul.bf16.gmra.mxu0 %v1087
      %v1150 = vpop.f32.mrf.mxu0
      %v1151 = vadd.f32 0.0, %v1150
      %v1152 = vpop.f32.mrf.mxu0
      %v1153 = vadd.f32 0.0, %v1152
      %1154 = vmatmul.bf16.gmra.mxu0 %v1090
      %v1155 = vpop.f32.mrf.mxu0
      %v1156 = vadd.f32 0.0, %v1155
      %v1157 = vpop.f32.mrf.mxu0
      %v1158 = vadd.f32 0.0, %v1157
      %1159 = vmatmul.bf16.gmra.mxu0 %v1093
      %v1160 = vpop.f32.mrf.mxu0
      %v1161 = vadd.f32 0.0, %v1160
      %v1162 = vpop.f32.mrf.mxu0
      %v1163 = vadd.f32 0.0, %v1162
      %1164 = vmatmul.bf16.gmra.mxu0 %v1096
      %v1165 = vpop.f32.mrf.mxu0
      %v1166 = vadd.f32 0.0, %v1165
      %v1167 = vpop.f32.mrf.mxu0
      %v1168 = vadd.f32 0.0, %v1167
      %1169 = vmatmul.bf16.gmra.mxu0 %v1099
      %v1170 = vpop.f32.mrf.mxu0
      %v1171 = vadd.f32 0.0, %v1170
      %v1172 = vpop.f32.mrf.mxu0
      %v1173 = vadd.f32 0.0, %v1172
      %1174 = vmatmul.bf16.gmra.mxu0 %v1102
      %v1175 = vpop.f32.mrf.mxu0
      %v1176 = vadd.f32 0.0, %v1175
      %v1177 = vpop.f32.mrf.mxu0
      %v1178 = vadd.f32 0.0, %v1177
      %1179 = vmatmul.bf16.gmra.mxu0 %v1105
      %v1180 = vpop.f32.mrf.mxu0
      %v1181 = vadd.f32 0.0, %v1180
      %v1182 = vpop.f32.mrf.mxu0
      %v1183 = vadd.f32 0.0, %v1182
      %1184 = vmatmul.bf16.gmra.mxu0 %v1108
      %v1185 = vpop.f32.mrf.mxu0
      %v1186 = vadd.f32 0.0, %v1185
      %v1187 = vpop.f32.mrf.mxu0
      %v1188 = vadd.f32 0.0, %v1187
      %1189 = vmatmul.bf16.gmra.mxu0 %v1111
      %v1190 = vpop.f32.mrf.mxu0
      %v1191 = vadd.f32 0.0, %v1190
      %v1192 = vpop.f32.mrf.mxu0
      %v1193 = vadd.f32 0.0, %v1192
      %1194 = vmatmul.bf16.gmra.mxu0 %v1114
      %v1195 = vpop.f32.mrf.mxu0
      %v1196 = vadd.f32 0.0, %v1195
      %v1197 = vpop.f32.mrf.mxu0
      %v1198 = vadd.f32 0.0, %v1197
      %1199 = vmatmul.bf16.gmra.mxu0 %v1117
      %v1200 = vpop.f32.mrf.mxu0
      %v1201 = vadd.f32 0.0, %v1200
      %v1202 = vpop.f32.mrf.mxu0
      %v1203 = vadd.f32 0.0, %v1202
      %1204 = vmatmul.bf16.gmra.mxu0 %v1120
      %v1205 = vpop.f32.mrf.mxu0
      %v1206 = vadd.f32 0.0, %v1205
      %v1207 = vpop.f32.mrf.mxu0
      %v1208 = vadd.f32 0.0, %v1207
      %1209 = vmatmul.bf16.gmra.mxu0 %v1123
      %v1210 = vpop.f32.mrf.mxu0
      %v1211 = vadd.f32 0.0, %v1210
      %v1212 = vpop.f32.mrf.mxu0
      %v1213 = vadd.f32 0.0, %v1212
      %1214 = vmatmul.bf16.gmra.mxu0 %v1126
      %v1215 = vpop.f32.mrf.mxu0
      %v1216 = vadd.f32 0.0, %v1215
      %v1217 = vpop.f32.mrf.mxu0
      %v1218 = vadd.f32 0.0, %v1217
      %1219 = vdwg.mxu0
      %v1220 = vadd.f32 %v997, %v1141
      %v1221 = vadd.f32 %v998, %v1143
      %v1222 = vadd.f32 %v999, %v1146
      %v1223 = vadd.f32 %v1000, %v1148
      %v1224 = vadd.f32 %v1001, %v1151
      %v1225 = vadd.f32 %v1002, %v1153
      %v1226 = vadd.f32 %v1003, %v1156
      %v1227 = vadd.f32 %v1004, %v1158
      %v1228 = vadd.f32 %v1005, %v1161
      %v1229 = vadd.f32 %v1006, %v1163
      %v1230 = vadd.f32 %v1007, %v1166
      %v1231 = vadd.f32 %v1008, %v1168
      %v1232 = vadd.f32 %v1009, %v1171
      %v1233 = vadd.f32 %v1010, %v1173
      %v1234 = vadd.f32 %v1011, %v1176
      %v1235 = vadd.f32 %v1012, %v1178
      %v1236 = vadd.f32 %v1013, %v1181
      %v1237 = vadd.f32 %v1014, %v1183
      %v1238 = vadd.f32 %v1015, %v1186
      %v1239 = vadd.f32 %v1016, %v1188
      %v1240 = vadd.f32 %v1017, %v1191
      %v1241 = vadd.f32 %v1018, %v1193
      %v1242 = vadd.f32 %v1019, %v1196
      %v1243 = vadd.f32 %v1020, %v1198
      %v1244 = vadd.f32 %v1021, %v1201
      %v1245 = vadd.f32 %v1022, %v1203
      %v1246 = vadd.f32 %v1023, %v1206
      %v1247 = vadd.f32 %v1024, %v1208
      %v1248 = vadd.f32 %v1025, %v1211
      %v1249 = vadd.f32 %v1026, %v1213
      %v1250 = vadd.f32 %v1027, %v1216
      %v1251 = vadd.f32 %v1028, %v1218
      %v1252 = vld [vmem:[%s805 + $0x2] sm:$0xff]
      %v1253 = vld [vmem:[%s805 + $0xa] sm:$0xff]
      %v1254 = vld [vmem:[%s805 + $0x1a] sm:$0xff]
      %v1255 = vld [vmem:[%s805 + $0x22] sm:$0xff]
      %v1256 = vld [vmem:[%s805 + $0x32] sm:$0xff]
      %v1257 = vld [vmem:[%s805 + $0x3a] sm:$0xff]
      %v1258 = vld [vmem:[%s805 + $0x4a] sm:$0xff]
      %v1259 = vld [vmem:[%s805 + $0x52] sm:$0xff]
      %v1260 = vld [vmem:[%s805 + $0x62] sm:$0xff]
      %v1261 = vld [vmem:[%s805 + $0x6a] sm:$0xff]
      %v1262 = vld [vmem:[%s805 + $0x7a] sm:$0xff]
      %v1263 = vld [vmem:[%s805 + $0x82] sm:$0xff]
      %v1264 = vld [vmem:[%s805 + $0x92] sm:$0xff]
      %v1265 = vld [vmem:[%s805 + $0x9a] sm:$0xff]
      %v1266 = vld [vmem:[%s805 + $0xaa] sm:$0xff]
      %v1267 = vld [vmem:[%s805 + $0xb2] sm:$0xff]
      %v1268 = vld [vmem:[%s805 + $0xc2] sm:$0xff]
      %v1269 = vld [vmem:[%s805 + $0xca] sm:$0xff]
      %v1270 = vld [vmem:[%s805 + $0xda] sm:$0xff]
      %v1271 = vld [vmem:[%s805 + $0xe2] sm:$0xff]
      %v1272 = vld [vmem:[%s805 + $0xf2] sm:$0xff]
      %v1273 = vld [vmem:[%s805 + $0xfa] sm:$0xff]
      %v1274 = vld [vmem:[%s805 + $0x10a] sm:$0xff]
      %v1275 = vld [vmem:[%s805 + $0x112] sm:$0xff]
      %v1276 = vld [vmem:[%s805 + $0x122] sm:$0xff]
      %v1277 = vld [vmem:[%s805 + $0x12a] sm:$0xff]
      %v1278 = vld [vmem:[%s805 + $0x13a] sm:$0xff]
      %v1279 = vld [vmem:[%s805 + $0x142] sm:$0xff]
      %v1280 = vld [vmem:[%s805 + $0x152] sm:$0xff]
      %v1281 = vld [vmem:[%s805 + $0x15a] sm:$0xff]
      %v1282 = vld [vmem:[%s805 + $0x16a] sm:$0xff]
      %v1283 = vld [vmem:[%s805 + $0x172] sm:$0xff]
      %v1284 = vpack.c.bf16 %v1253, %v1252
      %v1285 = vpack.c.bf16 %v1255, %v1254
      %v1286 = vpack.c.bf16 %v1257, %v1256
      %v1287 = vpack.c.bf16 %v1259, %v1258
      %v1288 = vpack.c.bf16 %v1261, %v1260
      %v1289 = vpack.c.bf16 %v1263, %v1262
      %v1290 = vpack.c.bf16 %v1265, %v1264
      %v1291 = vpack.c.bf16 %v1267, %v1266
      %v1292 = vpack.c.bf16 %v1269, %v1268
      %v1293 = vpack.c.bf16 %v1271, %v1270
      %v1294 = vpack.c.bf16 %v1273, %v1272
      %v1295 = vpack.c.bf16 %v1275, %v1274
      %v1296 = vpack.c.bf16 %v1277, %v1276
      %v1297 = vpack.c.bf16 %v1279, %v1278
      %v1298 = vpack.c.bf16 %v1281, %v1280
      %v1299 = vpack.c.bf16 %v1283, %v1282
      %s1300 = scalar_lea.vmem %s1, 20
      %v1301 = vld [vmem:[%s1300] sm:$0xf]
      %v1302 = vpack.c.bf16 %v1301, %v1301
      %v1304 = vsel %vm300, %v1284, 0
      %v1307 = vsel %vm300, %v1285, 0
      %v1310 = vsel %vm300, %v1286, 0
      %v1313 = vsel %vm300, %v1287, 0
      %v1316 = vsel %vm300, %v1288, 0
      %v1319 = vsel %vm300, %v1289, 0
      %v1322 = vsel %vm300, %v1290, 0
      %v1325 = vsel %vm300, %v1291, 0
      %v1328 = vsel %vm300, %v1292, 0
      %v1331 = vsel %vm300, %v1293, 0
      %v1334 = vsel %vm300, %v1294, 0
      %v1337 = vsel %vm300, %v1295, 0
      %v1340 = vsel %vm300, %v1296, 0
      %v1343 = vsel %vm300, %v1297, 0
      %v1346 = vsel %vm300, %v1298, 0
      %v1349 = vsel %vm300, %v1299, 0
      %v1352 = vsel %vm349, %v1302, 0
      %1354 = vmatpush.bf16.msra.mxu0 0
      %1355 = vmatpush.bf16.msra.mxu0 0
      %1356 = vmatpush.bf16.msra.mxu0 0
      %1357 = vmatpush.bf16.msra.mxu0 0
      %1358 = vmatpush.bf16.msra.mxu0 0
      %1359 = vmatpush.bf16.msra.mxu0 0
      %1360 = vmatpush.bf16.msra.mxu0 0
      %1361 = vmatpush.bf16.msra.mxu0 %v1352
      %1362 = vmatmul.bf16.gmra.mxu0 %v1304
      %v1363 = vpop.f32.mrf.mxu0
      %v1364 = vadd.f32 0.0, %v1363
      %v1365 = vpop.f32.mrf.mxu0
      %v1366 = vadd.f32 0.0, %v1365
      %1367 = vmatmul.bf16.gmra.mxu0 %v1307
      %v1368 = vpop.f32.mrf.mxu0
      %v1369 = vadd.f32 0.0, %v1368
      %v1370 = vpop.f32.mrf.mxu0
      %v1371 = vadd.f32 0.0, %v1370
      %1372 = vmatmul.bf16.gmra.mxu0 %v1310
      %v1373 = vpop.f32.mrf.mxu0
      %v1374 = vadd.f32 0.0, %v1373
      %v1375 = vpop.f32.mrf.mxu0
      %v1376 = vadd.f32 0.0, %v1375
      %1377 = vmatmul.bf16.gmra.mxu0 %v1313
      %v1378 = vpop.f32.mrf.mxu0
      %v1379 = vadd.f32 0.0, %v1378
      %v1380 = vpop.f32.mrf.mxu0
      %v1381 = vadd.f32 0.0, %v1380
      %1382 = vmatmul.bf16.gmra.mxu0 %v1316
      %v1383 = vpop.f32.mrf.mxu0
      %v1384 = vadd.f32 0.0, %v1383
      %v1385 = vpop.f32.mrf.mxu0
      %v1386 = vadd.f32 0.0, %v1385
      %1387 = vmatmul.bf16.gmra.mxu0 %v1319
      %v1388 = vpop.f32.mrf.mxu0
      %v1389 = vadd.f32 0.0, %v1388
      %v1390 = vpop.f32.mrf.mxu0
      %v1391 = vadd.f32 0.0, %v1390
      %1392 = vmatmul.bf16.gmra.mxu0 %v1322
      %v1393 = vpop.f32.mrf.mxu0
      %v1394 = vadd.f32 0.0, %v1393
      %v1395 = vpop.f32.mrf.mxu0
      %v1396 = vadd.f32 0.0, %v1395
      %1397 = vmatmul.bf16.gmra.mxu0 %v1325
      %v1398 = vpop.f32.mrf.mxu0
      %v1399 = vadd.f32 0.0, %v1398
      %v1400 = vpop.f32.mrf.mxu0
      %v1401 = vadd.f32 0.0, %v1400
      %1402 = vmatmul.bf16.gmra.mxu0 %v1328
      %v1403 = vpop.f32.mrf.mxu0
      %v1404 = vadd.f32 0.0, %v1403
      %v1405 = vpop.f32.mrf.mxu0
      %v1406 = vadd.f32 0.0, %v1405
      %1407 = vmatmul.bf16.gmra.mxu0 %v1331
      %v1408 = vpop.f32.mrf.mxu0
      %v1409 = vadd.f32 0.0, %v1408
      %v1410 = vpop.f32.mrf.mxu0
      %v1411 = vadd.f32 0.0, %v1410
      %1412 = vmatmul.bf16.gmra.mxu0 %v1334
      %v1413 = vpop.f32.mrf.mxu0
      %v1414 = vadd.f32 0.0, %v1413
      %v1415 = vpop.f32.mrf.mxu0
      %v1416 = vadd.f32 0.0, %v1415
      %1417 = vmatmul.bf16.gmra.mxu0 %v1337
      %v1418 = vpop.f32.mrf.mxu0
      %v1419 = vadd.f32 0.0, %v1418
      %v1420 = vpop.f32.mrf.mxu0
      %v1421 = vadd.f32 0.0, %v1420
      %1422 = vmatmul.bf16.gmra.mxu0 %v1340
      %v1423 = vpop.f32.mrf.mxu0
      %v1424 = vadd.f32 0.0, %v1423
      %v1425 = vpop.f32.mrf.mxu0
      %v1426 = vadd.f32 0.0, %v1425
      %1427 = vmatmul.bf16.gmra.mxu0 %v1343
      %v1428 = vpop.f32.mrf.mxu0
      %v1429 = vadd.f32 0.0, %v1428
      %v1430 = vpop.f32.mrf.mxu0
      %v1431 = vadd.f32 0.0, %v1430
      %1432 = vmatmul.bf16.gmra.mxu0 %v1346
      %v1433 = vpop.f32.mrf.mxu0
      %v1434 = vadd.f32 0.0, %v1433
      %v1435 = vpop.f32.mrf.mxu0
      %v1436 = vadd.f32 0.0, %v1435
      %1437 = vmatmul.bf16.gmra.mxu0 %v1349
      %v1438 = vpop.f32.mrf.mxu0
      %v1439 = vadd.f32 0.0, %v1438
      %v1440 = vpop.f32.mrf.mxu0
      %v1441 = vadd.f32 0.0, %v1440
      %1442 = vdwg.mxu0
      %v1443 = vadd.f32 %v1220, %v1364
      %v1444 = vadd.f32 %v1221, %v1366
      %v1445 = vadd.f32 %v1222, %v1369
      %v1446 = vadd.f32 %v1223, %v1371
      %v1447 = vadd.f32 %v1224, %v1374
      %v1448 = vadd.f32 %v1225, %v1376
      %v1449 = vadd.f32 %v1226, %v1379
      %v1450 = vadd.f32 %v1227, %v1381
      %v1451 = vadd.f32 %v1228, %v1384
      %v1452 = vadd.f32 %v1229, %v1386
      %v1453 = vadd.f32 %v1230, %v1389
      %v1454 = vadd.f32 %v1231, %v1391
      %v1455 = vadd.f32 %v1232, %v1394
      %v1456 = vadd.f32 %v1233, %v1396
      %v1457 = vadd.f32 %v1234, %v1399
      %v1458 = vadd.f32 %v1235, %v1401
      %v1459 = vadd.f32 %v1236, %v1404
      %v1460 = vadd.f32 %v1237, %v1406
      %v1461 = vadd.f32 %v1238, %v1409
      %v1462 = vadd.f32 %v1239, %v1411
      %v1463 = vadd.f32 %v1240, %v1414
      %v1464 = vadd.f32 %v1241, %v1416
      %v1465 = vadd.f32 %v1242, %v1419
      %v1466 = vadd.f32 %v1243, %v1421
      %v1467 = vadd.f32 %v1244, %v1424
      %v1468 = vadd.f32 %v1245, %v1426
      %v1469 = vadd.f32 %v1246, %v1429
      %v1470 = vadd.f32 %v1247, %v1431
      %v1471 = vadd.f32 %v1248, %v1434
      %v1472 = vadd.f32 %v1249, %v1436
      %v1473 = vadd.f32 %v1250, %v1439
      %v1474 = vadd.f32 %v1251, %v1441
      %s1475 = scalar_lea.vmem %s192, 48
      %v1476 = vld [vmem:[%s1475] sm:$0xff]
      %v1477 = vld [vmem:[%s1475 + $0x8] sm:$0xff]
      %v1478 = vld [vmem:[%s1475 + $0x18] sm:$0xff]
      %v1479 = vld [vmem:[%s1475 + $0x20] sm:$0xff]
      %v1480 = vld [vmem:[%s1475 + $0x30] sm:$0xff]
      %v1481 = vld [vmem:[%s1475 + $0x38] sm:$0xff]
      %v1482 = vld [vmem:[%s1475 + $0x48] sm:$0xff]
      %v1483 = vld [vmem:[%s1475 + $0x50] sm:$0xff]
      %v1484 = vld [vmem:[%s1475 + $0x60] sm:$0xff]
      %v1485 = vld [vmem:[%s1475 + $0x68] sm:$0xff]
      %v1486 = vld [vmem:[%s1475 + $0x78] sm:$0xff]
      %v1487 = vld [vmem:[%s1475 + $0x80] sm:$0xff]
      %v1488 = vld [vmem:[%s1475 + $0x90] sm:$0xff]
      %v1489 = vld [vmem:[%s1475 + $0x98] sm:$0xff]
      %v1490 = vld [vmem:[%s1475 + $0xa8] sm:$0xff]
      %v1491 = vld [vmem:[%s1475 + $0xb0] sm:$0xff]
      %v1492 = vld [vmem:[%s1475 + $0xc0] sm:$0xff]
      %v1493 = vld [vmem:[%s1475 + $0xc8] sm:$0xff]
      %v1494 = vld [vmem:[%s1475 + $0xd8] sm:$0xff]
      %v1495 = vld [vmem:[%s1475 + $0xe0] sm:$0xff]
      %v1496 = vld [vmem:[%s1475 + $0xf0] sm:$0xff]
      %v1497 = vld [vmem:[%s1475 + $0xf8] sm:$0xff]
      %v1498 = vld [vmem:[%s1475 + $0x108] sm:$0xff]
      %v1499 = vld [vmem:[%s1475 + $0x110] sm:$0xff]
      %v1500 = vld [vmem:[%s1475 + $0x120] sm:$0xff]
      %v1501 = vld [vmem:[%s1475 + $0x128] sm:$0xff]
      %v1502 = vld [vmem:[%s1475 + $0x138] sm:$0xff]
      %v1503 = vld [vmem:[%s1475 + $0x140] sm:$0xff]
      %v1504 = vld [vmem:[%s1475 + $0x150] sm:$0xff]
      %v1505 = vld [vmem:[%s1475 + $0x158] sm:$0xff]
      %v1506 = vld [vmem:[%s1475 + $0x168] sm:$0xff]
      %v1507 = vld [vmem:[%s1475 + $0x170] sm:$0xff]
      %v1508 = vpack.c.bf16 %v1477, %v1476
      %v1509 = vpack.c.bf16 %v1479, %v1478
      %v1510 = vpack.c.bf16 %v1481, %v1480
      %v1511 = vpack.c.bf16 %v1483, %v1482
      %v1512 = vpack.c.bf16 %v1485, %v1484
      %v1513 = vpack.c.bf16 %v1487, %v1486
      %v1514 = vpack.c.bf16 %v1489, %v1488
      %v1515 = vpack.c.bf16 %v1491, %v1490
      %v1516 = vpack.c.bf16 %v1493, %v1492
      %v1517 = vpack.c.bf16 %v1495, %v1494
      %v1518 = vpack.c.bf16 %v1497, %v1496
      %v1519 = vpack.c.bf16 %v1499, %v1498
      %v1520 = vpack.c.bf16 %v1501, %v1500
      %v1521 = vpack.c.bf16 %v1503, %v1502
      %v1522 = vpack.c.bf16 %v1505, %v1504
      %v1523 = vpack.c.bf16 %v1507, %v1506
      %s1524 = scalar_lea.vmem %s1, 24
      %v1525 = vld [vmem:[%s1524] sm:$0xf]
      %v1526 = vpack.c.bf16 %v1525, %v1525
      %v1528 = vsel %vm300, %v1508, 0
      %v1531 = vsel %vm300, %v1509, 0
      %v1534 = vsel %vm300, %v1510, 0
      %v1537 = vsel %vm300, %v1511, 0
      %v1540 = vsel %vm300, %v1512, 0
      %v1543 = vsel %vm300, %v1513, 0
      %v1546 = vsel %vm300, %v1514, 0
      %v1549 = vsel %vm300, %v1515, 0
      %v1552 = vsel %vm300, %v1516, 0
      %v1555 = vsel %vm300, %v1517, 0
      %v1558 = vsel %vm300, %v1518, 0
      %v1561 = vsel %vm300, %v1519, 0
      %v1564 = vsel %vm300, %v1520, 0
      %v1567 = vsel %vm300, %v1521, 0
      %v1570 = vsel %vm300, %v1522, 0
      %v1573 = vsel %vm300, %v1523, 0
      %v1576 = vsel %vm349, %v1526, 0
      %1578 = vmatpush.bf16.msra.mxu0 0
      %1579 = vmatpush.bf16.msra.mxu0 0
      %1580 = vmatpush.bf16.msra.mxu0 0
      %1581 = vmatpush.bf16.msra.mxu0 0
      %1582 = vmatpush.bf16.msra.mxu0 0
      %1583 = vmatpush.bf16.msra.mxu0 0
      %1584 = vmatpush.bf16.msra.mxu0 0
      %1585 = vmatpush.bf16.msra.mxu0 %v1576
      %1586 = vmatmul.bf16.gmra.mxu0 %v1528
      %v1587 = vpop.f32.mrf.mxu0
      %v1588 = vadd.f32 0.0, %v1587
      %v1589 = vpop.f32.mrf.mxu0
      %v1590 = vadd.f32 0.0, %v1589
      %1591 = vmatmul.bf16.gmra.mxu0 %v1531
      %v1592 = vpop.f32.mrf.mxu0
      %v1593 = vadd.f32 0.0, %v1592
      %v1594 = vpop.f32.mrf.mxu0
      %v1595 = vadd.f32 0.0, %v1594
      %1596 = vmatmul.bf16.gmra.mxu0 %v1534
      %v1597 = vpop.f32.mrf.mxu0
      %v1598 = vadd.f32 0.0, %v1597
      %v1599 = vpop.f32.mrf.mxu0
      %v1600 = vadd.f32 0.0, %v1599
      %1601 = vmatmul.bf16.gmra.mxu0 %v1537
      %v1602 = vpop.f32.mrf.mxu0
      %v1603 = vadd.f32 0.0, %v1602
      %v1604 = vpop.f32.mrf.mxu0
      %v1605 = vadd.f32 0.0, %v1604
      %1606 = vmatmul.bf16.gmra.mxu0 %v1540
      %v1607 = vpop.f32.mrf.mxu0
      %v1608 = vadd.f32 0.0, %v1607
      %v1609 = vpop.f32.mrf.mxu0
      %v1610 = vadd.f32 0.0, %v1609
      %1611 = vmatmul.bf16.gmra.mxu0 %v1543
      %v1612 = vpop.f32.mrf.mxu0
      %v1613 = vadd.f32 0.0, %v1612
      %v1614 = vpop.f32.mrf.mxu0
      %v1615 = vadd.f32 0.0, %v1614
      %1616 = vmatmul.bf16.gmra.mxu0 %v1546
      %v1617 = vpop.f32.mrf.mxu0
      %v1618 = vadd.f32 0.0, %v1617
      %v1619 = vpop.f32.mrf.mxu0
      %v1620 = vadd.f32 0.0, %v1619
      %1621 = vmatmul.bf16.gmra.mxu0 %v1549
      %v1622 = vpop.f32.mrf.mxu0
      %v1623 = vadd.f32 0.0, %v1622
      %v1624 = vpop.f32.mrf.mxu0
      %v1625 = vadd.f32 0.0, %v1624
      %1626 = vmatmul.bf16.gmra.mxu0 %v1552
      %v1627 = vpop.f32.mrf.mxu0
      %v1628 = vadd.f32 0.0, %v1627
      %v1629 = vpop.f32.mrf.mxu0
      %v1630 = vadd.f32 0.0, %v1629
      %1631 = vmatmul.bf16.gmra.mxu0 %v1555
      %v1632 = vpop.f32.mrf.mxu0
      %v1633 = vadd.f32 0.0, %v1632
      %v1634 = vpop.f32.mrf.mxu0
      %v1635 = vadd.f32 0.0, %v1634
      %1636 = vmatmul.bf16.gmra.mxu0 %v1558
      %v1637 = vpop.f32.mrf.mxu0
      %v1638 = vadd.f32 0.0, %v1637
      %v1639 = vpop.f32.mrf.mxu0
      %v1640 = vadd.f32 0.0, %v1639
      %1641 = vmatmul.bf16.gmra.mxu0 %v1561
      %v1642 = vpop.f32.mrf.mxu0
      %v1643 = vadd.f32 0.0, %v1642
      %v1644 = vpop.f32.mrf.mxu0
      %v1645 = vadd.f32 0.0, %v1644
      %1646 = vmatmul.bf16.gmra.mxu0 %v1564
      %v1647 = vpop.f32.mrf.mxu0
      %v1648 = vadd.f32 0.0, %v1647
      %v1649 = vpop.f32.mrf.mxu0
      %v1650 = vadd.f32 0.0, %v1649
      %1651 = vmatmul.bf16.gmra.mxu0 %v1567
      %v1652 = vpop.f32.mrf.mxu0
      %v1653 = vadd.f32 0.0, %v1652
      %v1654 = vpop.f32.mrf.mxu0
      %v1655 = vadd.f32 0.0, %v1654
      %1656 = vmatmul.bf16.gmra.mxu0 %v1570
      %v1657 = vpop.f32.mrf.mxu0
      %v1658 = vadd.f32 0.0, %v1657
      %v1659 = vpop.f32.mrf.mxu0
      %v1660 = vadd.f32 0.0, %v1659
      %1661 = vmatmul.bf16.gmra.mxu0 %v1573
      %v1662 = vpop.f32.mrf.mxu0
      %v1663 = vadd.f32 0.0, %v1662
      %v1664 = vpop.f32.mrf.mxu0
      %v1665 = vadd.f32 0.0, %v1664
      %1666 = vdwg.mxu0
      %v1667 = vadd.f32 %v1443, %v1588
      %v1668 = vadd.f32 %v1444, %v1590
      %v1669 = vadd.f32 %v1445, %v1593
      %v1670 = vadd.f32 %v1446, %v1595
      %v1671 = vadd.f32 %v1447, %v1598
      %v1672 = vadd.f32 %v1448, %v1600
      %v1673 = vadd.f32 %v1449, %v1603
      %v1674 = vadd.f32 %v1450, %v1605
      %v1675 = vadd.f32 %v1451, %v1608
      %v1676 = vadd.f32 %v1452, %v1610
      %v1677 = vadd.f32 %v1453, %v1613
      %v1678 = vadd.f32 %v1454, %v1615
      %v1679 = vadd.f32 %v1455, %v1618
      %v1680 = vadd.f32 %v1456, %v1620
      %v1681 = vadd.f32 %v1457, %v1623
      %v1682 = vadd.f32 %v1458, %v1625
      %v1683 = vadd.f32 %v1459, %v1628
      %v1684 = vadd.f32 %v1460, %v1630
      %v1685 = vadd.f32 %v1461, %v1633
      %v1686 = vadd.f32 %v1462, %v1635
      %v1687 = vadd.f32 %v1463, %v1638
      %v1688 = vadd.f32 %v1464, %v1640
      %v1689 = vadd.f32 %v1465, %v1643
      %v1690 = vadd.f32 %v1466, %v1645
      %v1691 = vadd.f32 %v1467, %v1648
      %v1692 = vadd.f32 %v1468, %v1650
      %v1693 = vadd.f32 %v1469, %v1653
      %v1694 = vadd.f32 %v1470, %v1655
      %v1695 = vadd.f32 %v1471, %v1658
      %v1696 = vadd.f32 %v1472, %v1660
      %v1697 = vadd.f32 %v1473, %v1663
      %v1698 = vadd.f32 %v1474, %v1665
      %v1699 = vld [vmem:[%s1475 + $0x1] sm:$0xff]
      %v1700 = vld [vmem:[%s1475 + $0x9] sm:$0xff]
      %v1701 = vld [vmem:[%s1475 + $0x19] sm:$0xff]
      %v1702 = vld [vmem:[%s1475 + $0x21] sm:$0xff]
      %v1703 = vld [vmem:[%s1475 + $0x31] sm:$0xff]
      %v1704 = vld [vmem:[%s1475 + $0x39] sm:$0xff]
      %v1705 = vld [vmem:[%s1475 + $0x49] sm:$0xff]
      %v1706 = vld [vmem:[%s1475 + $0x51] sm:$0xff]
      %v1707 = vld [vmem:[%s1475 + $0x61] sm:$0xff]
      %v1708 = vld [vmem:[%s1475 + $0x69] sm:$0xff]
      %v1709 = vld [vmem:[%s1475 + $0x79] sm:$0xff]
      %v1710 = vld [vmem:[%s1475 + $0x81] sm:$0xff]
      %v1711 = vld [vmem:[%s1475 + $0x91] sm:$0xff]
      %v1712 = vld [vmem:[%s1475 + $0x99] sm:$0xff]
      %v1713 = vld [vmem:[%s1475 + $0xa9] sm:$0xff]
      %v1714 = vld [vmem:[%s1475 + $0xb1] sm:$0xff]
      %v1715 = vld [vmem:[%s1475 + $0xc1] sm:$0xff]
      %v1716 = vld [vmem:[%s1475 + $0xc9] sm:$0xff]
      %v1717 = vld [vmem:[%s1475 + $0xd9] sm:$0xff]
      %v1718 = vld [vmem:[%s1475 + $0xe1] sm:$0xff]
      %v1719 = vld [vmem:[%s1475 + $0xf1] sm:$0xff]
      %v1720 = vld [vmem:[%s1475 + $0xf9] sm:$0xff]
      %v1721 = vld [vmem:[%s1475 + $0x109] sm:$0xff]
      %v1722 = vld [vmem:[%s1475 + $0x111] sm:$0xff]
      %v1723 = vld [vmem:[%s1475 + $0x121] sm:$0xff]
      %v1724 = vld [vmem:[%s1475 + $0x129] sm:$0xff]
      %v1725 = vld [vmem:[%s1475 + $0x139] sm:$0xff]
      %v1726 = vld [vmem:[%s1475 + $0x141] sm:$0xff]
      %v1727 = vld [vmem:[%s1475 + $0x151] sm:$0xff]
      %v1728 = vld [vmem:[%s1475 + $0x159] sm:$0xff]
      %v1729 = vld [vmem:[%s1475 + $0x169] sm:$0xff]
      %v1730 = vld [vmem:[%s1475 + $0x171] sm:$0xff]
      %v1731 = vpack.c.bf16 %v1700, %v1699
      %v1732 = vpack.c.bf16 %v1702, %v1701
      %v1733 = vpack.c.bf16 %v1704, %v1703
      %v1734 = vpack.c.bf16 %v1706, %v1705
      %v1735 = vpack.c.bf16 %v1708, %v1707
      %v1736 = vpack.c.bf16 %v1710, %v1709
      %v1737 = vpack.c.bf16 %v1712, %v1711
      %v1738 = vpack.c.bf16 %v1714, %v1713
      %v1739 = vpack.c.bf16 %v1716, %v1715
      %v1740 = vpack.c.bf16 %v1718, %v1717
      %v1741 = vpack.c.bf16 %v1720, %v1719
      %v1742 = vpack.c.bf16 %v1722, %v1721
      %v1743 = vpack.c.bf16 %v1724, %v1723
      %v1744 = vpack.c.bf16 %v1726, %v1725
      %v1745 = vpack.c.bf16 %v1728, %v1727
      %v1746 = vpack.c.bf16 %v1730, %v1729
      %s1747 = scalar_lea.vmem %s1, 28
      %v1748 = vld [vmem:[%s1747] sm:$0xf]
      %v1749 = vpack.c.bf16 %v1748, %v1748
      %v1751 = vsel %vm300, %v1731, 0
      %v1754 = vsel %vm300, %v1732, 0
      %v1757 = vsel %vm300, %v1733, 0
      %v1760 = vsel %vm300, %v1734, 0
      %v1763 = vsel %vm300, %v1735, 0
      %v1766 = vsel %vm300, %v1736, 0
      %v1769 = vsel %vm300, %v1737, 0
      %v1772 = vsel %vm300, %v1738, 0
      %v1775 = vsel %vm300, %v1739, 0
      %v1778 = vsel %vm300, %v1740, 0
      %v1781 = vsel %vm300, %v1741, 0
      %v1784 = vsel %vm300, %v1742, 0
      %v1787 = vsel %vm300, %v1743, 0
      %v1790 = vsel %vm300, %v1744, 0
      %v1793 = vsel %vm300, %v1745, 0
      %v1796 = vsel %vm300, %v1746, 0
      %v1799 = vsel %vm349, %v1749, 0
      %1801 = vmatpush.bf16.msra.mxu0 0
      %1802 = vmatpush.bf16.msra.mxu0 0
      %1803 = vmatpush.bf16.msra.mxu0 0
      %1804 = vmatpush.bf16.msra.mxu0 0
      %1805 = vmatpush.bf16.msra.mxu0 0
      %1806 = vmatpush.bf16.msra.mxu0 0
      %1807 = vmatpush.bf16.msra.mxu0 0
      %1808 = vmatpush.bf16.msra.mxu0 %v1799
      %1809 = vmatmul.bf16.gmra.mxu0 %v1751
      %v1810 = vpop.f32.mrf.mxu0
      %v1811 = vadd.f32 0.0, %v1810
      %v1812 = vpop.f32.mrf.mxu0
      %v1813 = vadd.f32 0.0, %v1812
      %1814 = vmatmul.bf16.gmra.mxu0 %v1754
      %v1815 = vpop.f32.mrf.mxu0
      %v1816 = vadd.f32 0.0, %v1815
      %v1817 = vpop.f32.mrf.mxu0
      %v1818 = vadd.f32 0.0, %v1817
      %1819 = vmatmul.bf16.gmra.mxu0 %v1757
      %v1820 = vpop.f32.mrf.mxu0
      %v1821 = vadd.f32 0.0, %v1820
      %v1822 = vpop.f32.mrf.mxu0
      %v1823 = vadd.f32 0.0, %v1822
      %1824 = vmatmul.bf16.gmra.mxu0 %v1760
      %v1825 = vpop.f32.mrf.mxu0
      %v1826 = vadd.f32 0.0, %v1825
      %v1827 = vpop.f32.mrf.mxu0
      %v1828 = vadd.f32 0.0, %v1827
      %1829 = vmatmul.bf16.gmra.mxu0 %v1763
      %v1830 = vpop.f32.mrf.mxu0
      %v1831 = vadd.f32 0.0, %v1830
      %v1832 = vpop.f32.mrf.mxu0
      %v1833 = vadd.f32 0.0, %v1832
      %1834 = vmatmul.bf16.gmra.mxu0 %v1766
      %v1835 = vpop.f32.mrf.mxu0
      %v1836 = vadd.f32 0.0, %v1835
      %v1837 = vpop.f32.mrf.mxu0
      %v1838 = vadd.f32 0.0, %v1837
      %1839 = vmatmul.bf16.gmra.mxu0 %v1769
      %v1840 = vpop.f32.mrf.mxu0
      %v1841 = vadd.f32 0.0, %v1840
      %v1842 = vpop.f32.mrf.mxu0
      %v1843 = vadd.f32 0.0, %v1842
      %1844 = vmatmul.bf16.gmra.mxu0 %v1772
      %v1845 = vpop.f32.mrf.mxu0
      %v1846 = vadd.f32 0.0, %v1845
      %v1847 = vpop.f32.mrf.mxu0
      %v1848 = vadd.f32 0.0, %v1847
      %1849 = vmatmul.bf16.gmra.mxu0 %v1775
      %v1850 = vpop.f32.mrf.mxu0
      %v1851 = vadd.f32 0.0, %v1850
      %v1852 = vpop.f32.mrf.mxu0
      %v1853 = vadd.f32 0.0, %v1852
      %1854 = vmatmul.bf16.gmra.mxu0 %v1778
      %v1855 = vpop.f32.mrf.mxu0
      %v1856 = vadd.f32 0.0, %v1855
      %v1857 = vpop.f32.mrf.mxu0
      %v1858 = vadd.f32 0.0, %v1857
      %1859 = vmatmul.bf16.gmra.mxu0 %v1781
      %v1860 = vpop.f32.mrf.mxu0
      %v1861 = vadd.f32 0.0, %v1860
      %v1862 = vpop.f32.mrf.mxu0
      %v1863 = vadd.f32 0.0, %v1862
      %1864 = vmatmul.bf16.gmra.mxu0 %v1784
      %v1865 = vpop.f32.mrf.mxu0
      %v1866 = vadd.f32 0.0, %v1865
      %v1867 = vpop.f32.mrf.mxu0
      %v1868 = vadd.f32 0.0, %v1867
      %1869 = vmatmul.bf16.gmra.mxu0 %v1787
      %v1870 = vpop.f32.mrf.mxu0
      %v1871 = vadd.f32 0.0, %v1870
      %v1872 = vpop.f32.mrf.mxu0
      %v1873 = vadd.f32 0.0, %v1872
      %1874 = vmatmul.bf16.gmra.mxu0 %v1790
      %v1875 = vpop.f32.mrf.mxu0
      %v1876 = vadd.f32 0.0, %v1875
      %v1877 = vpop.f32.mrf.mxu0
      %v1878 = vadd.f32 0.0, %v1877
      %1879 = vmatmul.bf16.gmra.mxu0 %v1793
      %v1880 = vpop.f32.mrf.mxu0
      %v1881 = vadd.f32 0.0, %v1880
      %v1882 = vpop.f32.mrf.mxu0
      %v1883 = vadd.f32 0.0, %v1882
      %1884 = vmatmul.bf16.gmra.mxu0 %v1796
      %v1885 = vpop.f32.mrf.mxu0
      %v1886 = vadd.f32 0.0, %v1885
      %v1887 = vpop.f32.mrf.mxu0
      %v1888 = vadd.f32 0.0, %v1887
      %1889 = vdwg.mxu0
      %v1890 = vadd.f32 %v1667, %v1811
      %v1891 = vadd.f32 %v1668, %v1813
      %v1892 = vadd.f32 %v1669, %v1816
      %v1893 = vadd.f32 %v1670, %v1818
      %v1894 = vadd.f32 %v1671, %v1821
      %v1895 = vadd.f32 %v1672, %v1823
      %v1896 = vadd.f32 %v1673, %v1826
      %v1897 = vadd.f32 %v1674, %v1828
      %v1898 = vadd.f32 %v1675, %v1831
      %v1899 = vadd.f32 %v1676, %v1833
      %v1900 = vadd.f32 %v1677, %v1836
      %v1901 = vadd.f32 %v1678, %v1838
      %v1902 = vadd.f32 %v1679, %v1841
      %v1903 = vadd.f32 %v1680, %v1843
      %v1904 = vadd.f32 %v1681, %v1846
      %v1905 = vadd.f32 %v1682, %v1848
      %v1906 = vadd.f32 %v1683, %v1851
      %v1907 = vadd.f32 %v1684, %v1853
      %v1908 = vadd.f32 %v1685, %v1856
      %v1909 = vadd.f32 %v1686, %v1858
      %v1910 = vadd.f32 %v1687, %v1861
      %v1911 = vadd.f32 %v1688, %v1863
      %v1912 = vadd.f32 %v1689, %v1866
      %v1913 = vadd.f32 %v1690, %v1868
      %v1914 = vadd.f32 %v1691, %v1871
      %v1915 = vadd.f32 %v1692, %v1873
      %v1916 = vadd.f32 %v1693, %v1876
      %v1917 = vadd.f32 %v1694, %v1878
      %v1918 = vadd.f32 %v1695, %v1881
      %v1919 = vadd.f32 %v1696, %v1883
      %v1920 = vadd.f32 %v1697, %v1886
      %v1921 = vadd.f32 %v1698, %v1888
      %v1922 = vld [vmem:[%s1475 + $0x2] sm:$0xff]
      %v1923 = vld [vmem:[%s1475 + $0xa] sm:$0xff]
      %v1924 = vld [vmem:[%s1475 + $0x1a] sm:$0xff]
      %v1925 = vld [vmem:[%s1475 + $0x22] sm:$0xff]
      %v1926 = vld [vmem:[%s1475 + $0x32] sm:$0xff]
      %v1927 = vld [vmem:[%s1475 + $0x3a] sm:$0xff]
      %v1928 = vld [vmem:[%s1475 + $0x4a] sm:$0xff]
      %v1929 = vld [vmem:[%s1475 + $0x52] sm:$0xff]
      %v1930 = vld [vmem:[%s1475 + $0x62] sm:$0xff]
      %v1931 = vld [vmem:[%s1475 + $0x6a] sm:$0xff]
      %v1932 = vld [vmem:[%s1475 + $0x7a] sm:$0xff]
      %v1933 = vld [vmem:[%s1475 + $0x82] sm:$0xff]
      %v1934 = vld [vmem:[%s1475 + $0x92] sm:$0xff]
      %v1935 = vld [vmem:[%s1475 + $0x9a] sm:$0xff]
      %v1936 = vld [vmem:[%s1475 + $0xaa] sm:$0xff]
      %v1937 = vld [vmem:[%s1475 + $0xb2] sm:$0xff]
      %v1938 = vld [vmem:[%s1475 + $0xc2] sm:$0xff]
      %v1939 = vld [vmem:[%s1475 + $0xca] sm:$0xff]
      %v1940 = vld [vmem:[%s1475 + $0xda] sm:$0xff]
      %v1941 = vld [vmem:[%s1475 + $0xe2] sm:$0xff]
      %v1942 = vld [vmem:[%s1475 + $0xf2] sm:$0xff]
      %v1943 = vld [vmem:[%s1475 + $0xfa] sm:$0xff]
      %v1944 = vld [vmem:[%s1475 + $0x10a] sm:$0xff]
      %v1945 = vld [vmem:[%s1475 + $0x112] sm:$0xff]
      %v1946 = vld [vmem:[%s1475 + $0x122] sm:$0xff]
      %v1947 = vld [vmem:[%s1475 + $0x12a] sm:$0xff]
      %v1948 = vld [vmem:[%s1475 + $0x13a] sm:$0xff]
      %v1949 = vld [vmem:[%s1475 + $0x142] sm:$0xff]
      %v1950 = vld [vmem:[%s1475 + $0x152] sm:$0xff]
      %v1951 = vld [vmem:[%s1475 + $0x15a] sm:$0xff]
      %v1952 = vld [vmem:[%s1475 + $0x16a] sm:$0xff]
      %v1953 = vld [vmem:[%s1475 + $0x172] sm:$0xff]
      %v1954 = vpack.c.bf16 %v1923, %v1922
      %v1955 = vpack.c.bf16 %v1925, %v1924
      %v1956 = vpack.c.bf16 %v1927, %v1926
      %v1957 = vpack.c.bf16 %v1929, %v1928
      %v1958 = vpack.c.bf16 %v1931, %v1930
      %v1959 = vpack.c.bf16 %v1933, %v1932
      %v1960 = vpack.c.bf16 %v1935, %v1934
      %v1961 = vpack.c.bf16 %v1937, %v1936
      %v1962 = vpack.c.bf16 %v1939, %v1938
      %v1963 = vpack.c.bf16 %v1941, %v1940
      %v1964 = vpack.c.bf16 %v1943, %v1942
      %v1965 = vpack.c.bf16 %v1945, %v1944
      %v1966 = vpack.c.bf16 %v1947, %v1946
      %v1967 = vpack.c.bf16 %v1949, %v1948
      %v1968 = vpack.c.bf16 %v1951, %v1950
      %v1969 = vpack.c.bf16 %v1953, %v1952
      %s1970 = scalar_lea.vmem %s1, 32
      %v1971 = vld [vmem:[%s1970] sm:$0xf]
      %v1972 = vpack.c.bf16 %v1971, %v1971
      %v1974 = vsel %vm300, %v1954, 0
      %v1977 = vsel %vm300, %v1955, 0
      %v1980 = vsel %vm300, %v1956, 0
      %v1983 = vsel %vm300, %v1957, 0
      %v1986 = vsel %vm300, %v1958, 0
      %v1989 = vsel %vm300, %v1959, 0
      %v1992 = vsel %vm300, %v1960, 0
      %v1995 = vsel %vm300, %v1961, 0
      %v1998 = vsel %vm300, %v1962, 0
      %v2001 = vsel %vm300, %v1963, 0
      %v2004 = vsel %vm300, %v1964, 0
      %v2007 = vsel %vm300, %v1965, 0
      %v2010 = vsel %vm300, %v1966, 0
      %v2013 = vsel %vm300, %v1967, 0
      %v2016 = vsel %vm300, %v1968, 0
      %v2019 = vsel %vm300, %v1969, 0
      %v2022 = vsel %vm349, %v1972, 0
      %2024 = vmatpush.bf16.msra.mxu0 0
      %2025 = vmatpush.bf16.msra.mxu0 0
      %2026 = vmatpush.bf16.msra.mxu0 0
      %2027 = vmatpush.bf16.msra.mxu0 0
      %2028 = vmatpush.bf16.msra.mxu0 0
      %2029 = vmatpush.bf16.msra.mxu0 0
      %2030 = vmatpush.bf16.msra.mxu0 0
      %2031 = vmatpush.bf16.msra.mxu0 %v2022
      %2032 = vmatmul.bf16.gmra.mxu0 %v1974
      %v2033 = vpop.f32.mrf.mxu0
      %v2034 = vadd.f32 0.0, %v2033
      %v2035 = vpop.f32.mrf.mxu0
      %v2036 = vadd.f32 0.0, %v2035
      %2037 = vmatmul.bf16.gmra.mxu0 %v1977
      %v2038 = vpop.f32.mrf.mxu0
      %v2039 = vadd.f32 0.0, %v2038
      %v2040 = vpop.f32.mrf.mxu0
      %v2041 = vadd.f32 0.0, %v2040
      %2042 = vmatmul.bf16.gmra.mxu0 %v1980
      %v2043 = vpop.f32.mrf.mxu0
      %v2044 = vadd.f32 0.0, %v2043
      %v2045 = vpop.f32.mrf.mxu0
      %v2046 = vadd.f32 0.0, %v2045
      %2047 = vmatmul.bf16.gmra.mxu0 %v1983
      %v2048 = vpop.f32.mrf.mxu0
      %v2049 = vadd.f32 0.0, %v2048
      %v2050 = vpop.f32.mrf.mxu0
      %v2051 = vadd.f32 0.0, %v2050
      %2052 = vmatmul.bf16.gmra.mxu0 %v1986
      %v2053 = vpop.f32.mrf.mxu0
      %v2054 = vadd.f32 0.0, %v2053
      %v2055 = vpop.f32.mrf.mxu0
      %v2056 = vadd.f32 0.0, %v2055
      %2057 = vmatmul.bf16.gmra.mxu0 %v1989
      %v2058 = vpop.f32.mrf.mxu0
      %v2059 = vadd.f32 0.0, %v2058
      %v2060 = vpop.f32.mrf.mxu0
      %v2061 = vadd.f32 0.0, %v2060
      %2062 = vmatmul.bf16.gmra.mxu0 %v1992
      %v2063 = vpop.f32.mrf.mxu0
      %v2064 = vadd.f32 0.0, %v2063
      %v2065 = vpop.f32.mrf.mxu0
      %v2066 = vadd.f32 0.0, %v2065
      %2067 = vmatmul.bf16.gmra.mxu0 %v1995
      %v2068 = vpop.f32.mrf.mxu0
      %v2069 = vadd.f32 0.0, %v2068
      %v2070 = vpop.f32.mrf.mxu0
      %v2071 = vadd.f32 0.0, %v2070
      %2072 = vmatmul.bf16.gmra.mxu0 %v1998
      %v2073 = vpop.f32.mrf.mxu0
      %v2074 = vadd.f32 0.0, %v2073
      %v2075 = vpop.f32.mrf.mxu0
      %v2076 = vadd.f32 0.0, %v2075
      %2077 = vmatmul.bf16.gmra.mxu0 %v2001
      %v2078 = vpop.f32.mrf.mxu0
      %v2079 = vadd.f32 0.0, %v2078
      %v2080 = vpop.f32.mrf.mxu0
      %v2081 = vadd.f32 0.0, %v2080
      %2082 = vmatmul.bf16.gmra.mxu0 %v2004
      %v2083 = vpop.f32.mrf.mxu0
      %v2084 = vadd.f32 0.0, %v2083
      %v2085 = vpop.f32.mrf.mxu0
      %v2086 = vadd.f32 0.0, %v2085
      %2087 = vmatmul.bf16.gmra.mxu0 %v2007
      %v2088 = vpop.f32.mrf.mxu0
      %v2089 = vadd.f32 0.0, %v2088
      %v2090 = vpop.f32.mrf.mxu0
      %v2091 = vadd.f32 0.0, %v2090
      %2092 = vmatmul.bf16.gmra.mxu0 %v2010
      %v2093 = vpop.f32.mrf.mxu0
      %v2094 = vadd.f32 0.0, %v2093
      %v2095 = vpop.f32.mrf.mxu0
      %v2096 = vadd.f32 0.0, %v2095
      %2097 = vmatmul.bf16.gmra.mxu0 %v2013
      %v2098 = vpop.f32.mrf.mxu0
      %v2099 = vadd.f32 0.0, %v2098
      %v2100 = vpop.f32.mrf.mxu0
      %v2101 = vadd.f32 0.0, %v2100
      %2102 = vmatmul.bf16.gmra.mxu0 %v2016
      %v2103 = vpop.f32.mrf.mxu0
      %v2104 = vadd.f32 0.0, %v2103
      %v2105 = vpop.f32.mrf.mxu0
      %v2106 = vadd.f32 0.0, %v2105
      %2107 = vmatmul.bf16.gmra.mxu0 %v2019
      %v2108 = vpop.f32.mrf.mxu0
      %v2109 = vadd.f32 0.0, %v2108
      %v2110 = vpop.f32.mrf.mxu0
      %v2111 = vadd.f32 0.0, %v2110
      %2112 = vdwg.mxu0
      %v2113 = vadd.f32 %v1890, %v2034
      %v2114 = vadd.f32 %v1891, %v2036
      %v2115 = vadd.f32 %v1892, %v2039
      %v2116 = vadd.f32 %v1893, %v2041
      %v2117 = vadd.f32 %v1894, %v2044
      %v2118 = vadd.f32 %v1895, %v2046
      %v2119 = vadd.f32 %v1896, %v2049
      %v2120 = vadd.f32 %v1897, %v2051
      %v2121 = vadd.f32 %v1898, %v2054
      %v2122 = vadd.f32 %v1899, %v2056
      %v2123 = vadd.f32 %v1900, %v2059
      %v2124 = vadd.f32 %v1901, %v2061
      %v2125 = vadd.f32 %v1902, %v2064
      %v2126 = vadd.f32 %v1903, %v2066
      %v2127 = vadd.f32 %v1904, %v2069
      %v2128 = vadd.f32 %v1905, %v2071
      %v2129 = vadd.f32 %v1906, %v2074
      %v2130 = vadd.f32 %v1907, %v2076
      %v2131 = vadd.f32 %v1908, %v2079
      %v2132 = vadd.f32 %v1909, %v2081
      %v2133 = vadd.f32 %v1910, %v2084
      %v2134 = vadd.f32 %v1911, %v2086
      %v2135 = vadd.f32 %v1912, %v2089
      %v2136 = vadd.f32 %v1913, %v2091
      %v2137 = vadd.f32 %v1914, %v2094
      %v2138 = vadd.f32 %v1915, %v2096
      %v2139 = vadd.f32 %v1916, %v2099
      %v2140 = vadd.f32 %v1917, %v2101
      %v2141 = vadd.f32 %v1918, %v2104
      %v2142 = vadd.f32 %v1919, %v2106
      %v2143 = vadd.f32 %v1920, %v2109
      %v2144 = vadd.f32 %v1921, %v2111
      %v2145 = vld [vmem:[%s2] sm:$0x1]
      %v2147 = vperm.slane %v2145, 0
      %v2149 = vmul.f32 %v2113, %v2147
      %v2150 = vmul.f32 %v2114, %v2147
      %v2151 = vmul.f32 %v2115, %v2147
      %v2152 = vmul.f32 %v2116, %v2147
      %v2153 = vmul.f32 %v2117, %v2147
      %v2154 = vmul.f32 %v2118, %v2147
      %v2155 = vmul.f32 %v2119, %v2147
      %v2156 = vmul.f32 %v2120, %v2147
      %v2157 = vmul.f32 %v2121, %v2147
      %v2158 = vmul.f32 %v2122, %v2147
      %v2159 = vmul.f32 %v2123, %v2147
      %v2160 = vmul.f32 %v2124, %v2147
      %v2161 = vmul.f32 %v2125, %v2147
      %v2162 = vmul.f32 %v2126, %v2147
      %v2163 = vmul.f32 %v2127, %v2147
      %v2164 = vmul.f32 %v2128, %v2147
      %v2165 = vmul.f32 %v2129, %v2147
      %v2166 = vmul.f32 %v2130, %v2147
      %v2167 = vmul.f32 %v2131, %v2147
      %v2168 = vmul.f32 %v2132, %v2147
      %v2169 = vmul.f32 %v2133, %v2147
      %v2170 = vmul.f32 %v2134, %v2147
      %v2171 = vmul.f32 %v2135, %v2147
      %v2172 = vmul.f32 %v2136, %v2147
      %v2173 = vmul.f32 %v2137, %v2147
      %v2174 = vmul.f32 %v2138, %v2147
      %v2175 = vmul.f32 %v2139, %v2147
      %v2176 = vmul.f32 %v2140, %v2147
      %v2177 = vmul.f32 %v2141, %v2147
      %v2178 = vmul.f32 %v2142, %v2147
      %v2179 = vmul.f32 %v2143, %v2147
      %v2180 = vmul.f32 %v2144, %v2147
      %v2181 = vld [vmem:[%s3] sm:$0x1]
      %v2183 = vperm.slane %v2181, 0
      %v2185 = vadd.f32 %v2149, %v2183
      %v2186 = vadd.f32 %v2150, %v2183
      %v2187 = vadd.f32 %v2151, %v2183
      %v2188 = vadd.f32 %v2152, %v2183
      %v2189 = vadd.f32 %v2153, %v2183
      %v2190 = vadd.f32 %v2154, %v2183
      %v2191 = vadd.f32 %v2155, %v2183
      %v2192 = vadd.f32 %v2156, %v2183
      %v2193 = vadd.f32 %v2157, %v2183
      %v2194 = vadd.f32 %v2158, %v2183
      %v2195 = vadd.f32 %v2159, %v2183
      %v2196 = vadd.f32 %v2160, %v2183
      %v2197 = vadd.f32 %v2161, %v2183
      %v2198 = vadd.f32 %v2162, %v2183
      %v2199 = vadd.f32 %v2163, %v2183
      %v2200 = vadd.f32 %v2164, %v2183
      %v2201 = vadd.f32 %v2165, %v2183
      %v2202 = vadd.f32 %v2166, %v2183
      %v2203 = vadd.f32 %v2167, %v2183
      %v2204 = vadd.f32 %v2168, %v2183
      %v2205 = vadd.f32 %v2169, %v2183
      %v2206 = vadd.f32 %v2170, %v2183
      %v2207 = vadd.f32 %v2171, %v2183
      %v2208 = vadd.f32 %v2172, %v2183
      %v2209 = vadd.f32 %v2173, %v2183
      %v2210 = vadd.f32 %v2174, %v2183
      %v2211 = vadd.f32 %v2175, %v2183
      %v2212 = vadd.f32 %v2176, %v2183
      %v2213 = vadd.f32 %v2177, %v2183
      %v2214 = vadd.f32 %v2178, %v2183
      %v2215 = vadd.f32 %v2179, %v2183
      %v2216 = vadd.f32 %v2180, %v2183
      %v2217 = vmax.f32 %v2185, 0.0
      %v2218 = vmax.f32 %v2186, 0.0
      %v2219 = vmax.f32 %v2187, 0.0
      %v2220 = vmax.f32 %v2188, 0.0
      %v2221 = vmax.f32 %v2189, 0.0
      %v2222 = vmax.f32 %v2190, 0.0
      %v2223 = vmax.f32 %v2191, 0.0
      %v2224 = vmax.f32 %v2192, 0.0
      %v2225 = vmax.f32 %v2193, 0.0
      %v2226 = vmax.f32 %v2194, 0.0
      %v2227 = vmax.f32 %v2195, 0.0
      %v2228 = vmax.f32 %v2196, 0.0
      %v2229 = vmax.f32 %v2197, 0.0
      %v2230 = vmax.f32 %v2198, 0.0
      %v2231 = vmax.f32 %v2199, 0.0
      %v2232 = vmax.f32 %v2200, 0.0
      %v2233 = vmax.f32 %v2201, 0.0
      %v2234 = vmax.f32 %v2202, 0.0
      %v2235 = vmax.f32 %v2203, 0.0
      %v2236 = vmax.f32 %v2204, 0.0
      %v2237 = vmax.f32 %v2205, 0.0
      %v2238 = vmax.f32 %v2206, 0.0
      %v2239 = vmax.f32 %v2207, 0.0
      %v2240 = vmax.f32 %v2208, 0.0
      %v2241 = vmax.f32 %v2209, 0.0
      %v2242 = vmax.f32 %v2210, 0.0
      %v2243 = vmax.f32 %v2211, 0.0
      %v2244 = vmax.f32 %v2212, 0.0
      %v2245 = vmax.f32 %v2213, 0.0
      %v2246 = vmax.f32 %v2214, 0.0
      %v2247 = vmax.f32 %v2215, 0.0
      %v2248 = vmax.f32 %v2216, 0.0
      %vm2249 = vcmask 64512
      %2250 = vst.msk [vmem:[%s197] sm:$0xff] %vm2249, %v2217
      %2251 = vst.msk [vmem:[%s197 + $0x8] sm:$0xff] %vm2249, %v2218
      %2252 = vst.msk [vmem:[%s197 + $0x10] sm:$0xff] %vm2249, %v2219
      %2253 = vst.msk [vmem:[%s197 + $0x18] sm:$0xff] %vm2249, %v2220
      %2254 = vst.msk [vmem:[%s197 + $0x20] sm:$0xff] %vm2249, %v2221
      %2255 = vst.msk [vmem:[%s197 + $0x28] sm:$0xff] %vm2249, %v2222
      %2256 = vst.msk [vmem:[%s197 + $0x30] sm:$0xff] %vm2249, %v2223
      %2257 = vst.msk [vmem:[%s197 + $0x38] sm:$0xff] %vm2249, %v2224
      %2258 = vst.msk [vmem:[%s197 + $0x40] sm:$0xff] %vm2249, %v2225
      %2259 = vst.msk [vmem:[%s197 + $0x48] sm:$0xff] %vm2249, %v2226
      %2260 = vst.msk [vmem:[%s197 + $0x50] sm:$0xff] %vm2249, %v2227
      %2261 = vst.msk [vmem:[%s197 + $0x58] sm:$0xff] %vm2249, %v2228
      %2262 = vst.msk [vmem:[%s197 + $0x60] sm:$0xff] %vm2249, %v2229
      %2263 = vst.msk [vmem:[%s197 + $0x68] sm:$0xff] %vm2249, %v2230
      %2264 = vst.msk [vmem:[%s197 + $0x70] sm:$0xff] %vm2249, %v2231
      %2265 = vst.msk [vmem:[%s197 + $0x78] sm:$0xff] %vm2249, %v2232
      %2266 = vst.msk [vmem:[%s197 + $0x80] sm:$0xff] %vm2249, %v2233
      %2267 = vst.msk [vmem:[%s197 + $0x88] sm:$0xff] %vm2249, %v2234
      %2268 = vst.msk [vmem:[%s197 + $0x90] sm:$0xff] %vm2249, %v2235
      %2269 = vst.msk [vmem:[%s197 + $0x98] sm:$0xff] %vm2249, %v2236
      %2270 = vst.msk [vmem:[%s197 + $0xa0] sm:$0xff] %vm2249, %v2237
      %2271 = vst.msk [vmem:[%s197 + $0xa8] sm:$0xff] %vm2249, %v2238
      %2272 = vst.msk [vmem:[%s197 + $0xb0] sm:$0xff] %vm2249, %v2239
      %2273 = vst.msk [vmem:[%s197 + $0xb8] sm:$0xff] %vm2249, %v2240
      %2274 = vst.msk [vmem:[%s197 + $0xc0] sm:$0xff] %vm2249, %v2241
      %2275 = vst.msk [vmem:[%s197 + $0xc8] sm:$0xff] %vm2249, %v2242
      %2276 = vst.msk [vmem:[%s197 + $0xd0] sm:$0xff] %vm2249, %v2243
      %2277 = vst.msk [vmem:[%s197 + $0xd8] sm:$0xff] %vm2249, %v2244
      %2278 = vst.msk [vmem:[%s197 + $0xe0] sm:$0xff] %vm2249, %v2245
      %2279 = vst.msk [vmem:[%s197 + $0xe8] sm:$0xff] %vm2249, %v2246
      %2280 = vst.msk [vmem:[%s197 + $0xf0] sm:$0xff] %vm2249, %v2247
      %2281 = vst.msk [vmem:[%s197 + $0xf8] sm:$0xff] %vm2249, %v2248
      %p2282 = scmp.lt.s32.totalorder %s15, 1
      %s2283 = scalar_select %p2282, %s15, 1
      %s2284 = smul.addr %s2283, 32
      %s2285 = smul.addr %s2284, 8
      %s2286 = scalar_lea.vmem %s4, %s2285
      // Predicated region
      $region37: #{inception_block.5} parent=35 // pred_check
        %p2287 = pneg %p122
      $region38: #{inception_block.5} parent=35 // pred_check_branch
        %2289 = sbr.rel (%p2287) target = $region40
      $region39: #{inception_block.5} parent=35 // pred_region
        _
      $region40: #{inception_block.5} parent=35 // pred_fallthru
        _
    $region36: #{inception_block.5} parent=5 // pred_fallthru
      _
    %p2290 = scmp.le.s32.totalorder 2, %s10
    // Predicated region
    $region41: #{inception_block.5} parent=5 // pred_check
      %p2291 = pneg %p2290
    $region42: #{inception_block.5} parent=5 // pred_check_branch
      %2293 = sbr.rel (%p2291) target = $region44
    $region43: #{inception_block.5} parent=5 // pred_region
      %s2294 = ssub.s32 %s10, 2
      // Predicated region
      $region45: #{inception_block.5} parent=43 // pred_check
        %p2295 = pneg %p128
      $region46: #{inception_block.5} parent=43 // pred_check_branch
        %2297 = sbr.rel (%p2295) target = $region48
      $region47: #{inception_block.5} parent=43 // pred_region
        %p2298 = scmp.lt.s32.totalorder %s16, 1
        %s2299 = scalar_select %p2298, %s16, 1
        %s2300 = smul.addr %s2299, 32
        %s2301 = smul.addr %s2300, 8
        %s2302 = scalar_lea.vmem %s4, %s2301
      $region48: #{inception_block.5} parent=43 // pred_fallthru
        _
    $region44: #{inception_block.5} parent=5 // pred_fallthru
      _
  $region6: #{inception_block.5} parent=0 // loop_footer
    %s14 = sadd.s32 1, %s10
  $region7: #{inception_block.5} parent=0 // loop_footer_branch
    %9 = sbr.rel target = $region3
  $region8: #{inception_block.5} parent=0 // loop_exit
    _

// kernel: inception_block.6
$region0: #{inception_block.6}
  #allocation0 [shape = 'u32[]', space=smem, size = 0x4, offset = 0x4, fixed_abs, tag = 'smem constant byte address 0x4 - core index']
  #allocation1 [shape = 'u32[72,128]{1,0:T(1,128)}', space=vmem, size = 0x9000, scoped, tag = 'internal scratch']
  %s0 = inlined_call_operand.vmem [shape: f32[2,20,20,2], index: 0, kind: input, shape index: {}]
  %s1 = inlined_call_operand.vmem [shape: f32[25,2,4], index: 1, kind: input, shape index: {}]
  %s2 = inlined_call_operand.vmem [shape: f32[1,4], index: 2, kind: input, shape index: {}]
  %s3 = inlined_call_operand.vmem [shape: f32[1,4], index: 3, kind: input, shape index: {}]
  %s4 = inlined_call_operand.vmem [shape: f32[2,16,16,4], index: 4, kind: output, shape index: {}]
  %s5 = sld [smem:[#allocation0]]
  $region49: #{inception_block.6} parent=0
    _
  %s7 = ssub.s32 1, %s5
  %s8 = scalar_select 0, %s7, %s5
  loop: start=0, step=1, limit=4
  $region2: #{inception_block.6} parent=0 // loop_pre_header
    _
  $region3: #{inception_block.6} parent=0 // loop_header
    %s10 = sphi 0, %s14
    %p11 = scmp.ge.s32.totalorder %s10, 4
    %s20 = sphi 0, %s22
    %s23 = sphi 0, %s20
    %s24 = sphi 0, %s23
    %s40 = sphi 0, %s24
    %s44 = sphi 0, %s44
    %s46 = sphi 0, %s44
    %s47 = sphi 0, %s46
    %s61 = sphi 0, %s47
    %s65 = sphi 0, %s65
    %s67 = sphi 0, %s65
    %s68 = sphi 0, %s67
    %s82 = sphi 0, %s68
    %s86 = sphi 0, %s86
    %s88 = sphi 0, %s86
    %s89 = sphi 0, %s88
    %s103 = sphi 0, %s89
    %s109 = sphi 0, %s111
    %s112 = sphi 0, %s109
    %s113 = sphi 0, %s112
    %s129 = sphi 0, %s113
  $region4: #{inception_block.6} parent=0 // loop_header_branch
    %13 = sbr.rel (%p11) target = $region8
  $region5: #{inception_block.6} parent=0 // loop_body
    %s15 = ssub.s32 %s10, 1
    %s16 = ssub.s32 %s10, 2
    %s17 = sadd.s32 %s10, 1
    %s18 = ssub.s32 %s10, %s17
    %p19 = scmp.eq.s32.totalorder %s18, 0
    %s21 = sadd.s32 %s20, 1
    %s22 = scalar_select %p19, %s20, %s21
    %p25 = pneg %p19
    %p26 = scmp.eq.s32.totalorder %s10, 1
    %p27 = por %p25, %p26
    %p28 = scmp.ne.s32.totalorder %s20, %s23
    %p29 = scmp.eq.s32.totalorder %s10, 0
    %p30 = por %p28, %p29
    %p31 = scmp.ne.s32.totalorder %s20, %s23
    %p32 = scmp.eq.s32.totalorder %s15, 1
    %p33 = por %p31, %p32
    %p34 = scmp.ne.s32.totalorder %s23, %s24
    %p35 = scmp.eq.s32.totalorder %s15, 0
    %p36 = por %p34, %p35
    %p37 = scmp.ne.s32.totalorder %s23, %s24
    %p38 = scmp.eq.s32.totalorder %s16, 1
    %p39 = por %p37, %p38
    %p41 = scmp.ne.s32.totalorder %s24, %s40
    %p42 = scmp.eq.s32.totalorder %s16, 0
    %p43 = por %p41, %p42
    %s45 = sadd.s32 %s44, 1
    %p48 = scmp.eq.s32.totalorder %s10, 1
    %p49 = scmp.ne.s32.totalorder %s44, %s46
    %p50 = scmp.eq.s32.totalorder %s10, 0
    %p51 = por %p49, %p50
    %p52 = scmp.ne.s32.totalorder %s44, %s46
    %p53 = scmp.eq.s32.totalorder %s15, 1
    %p54 = por %p52, %p53
    %p55 = scmp.ne.s32.totalorder %s46, %s47
    %p56 = scmp.eq.s32.totalorder %s15, 0
    %p57 = por %p55, %p56
    %p58 = scmp.ne.s32.totalorder %s46, %s47
    %p59 = scmp.eq.s32.totalorder %s16, 1
    %p60 = por %p58, %p59
    %p62 = scmp.ne.s32.totalorder %s47, %s61
    %p63 = scmp.eq.s32.totalorder %s16, 0
    %p64 = por %p62, %p63
    %s66 = sadd.s32 %s65, 1
    %p69 = scmp.eq.s32.totalorder %s10, 1
    %p70 = scmp.ne.s32.totalorder %s65, %s67
    %p71 = scmp.eq.s32.totalorder %s10, 0
    %p72 = por %p70, %p71
    %p73 = scmp.ne.s32.totalorder %s65, %s67
    %p74 = scmp.eq.s32.totalorder %s15, 1
    %p75 = por %p73, %p74
    %p76 = scmp.ne.s32.totalorder %s67, %s68
    %p77 = scmp.eq.s32.totalorder %s15, 0
    %p78 = por %p76, %p77
    %p79 = scmp.ne.s32.totalorder %s67, %s68
    %p80 = scmp.eq.s32.totalorder %s16, 1
    %p81 = por %p79, %p80
    %p83 = scmp.ne.s32.totalorder %s68, %s82
    %p84 = scmp.eq.s32.totalorder %s16, 0
    %p85 = por %p83, %p84
    %s87 = sadd.s32 %s86, 1
    %p90 = scmp.eq.s32.totalorder %s10, 1
    %p91 = scmp.ne.s32.totalorder %s86, %s88
    %p92 = scmp.eq.s32.totalorder %s10, 0
    %p93 = por %p91, %p92
    %p94 = scmp.ne.s32.totalorder %s86, %s88
    %p95 = scmp.eq.s32.totalorder %s15, 1
    %p96 = por %p94, %p95
    %p97 = scmp.ne.s32.totalorder %s88, %s89
    %p98 = scmp.eq.s32.totalorder %s15, 0
    %p99 = por %p97, %p98
    %p100 = scmp.ne.s32.totalorder %s88, %s89
    %p101 = scmp.eq.s32.totalorder %s16, 1
    %p102 = por %p100, %p101
    %p104 = scmp.ne.s32.totalorder %s89, %s103
    %p105 = scmp.eq.s32.totalorder %s16, 0
    %p106 = por %p104, %p105
    %s107 = ssub.s32 %s10, %s17
    %p108 = scmp.eq.s32.totalorder %s107, 0
    %s110 = sadd.s32 %s109, 1
    %s111 = scalar_select %p108, %s109, %s110
    %p114 = pneg %p108
    %p115 = scmp.eq.s32.totalorder %s10, 1
    %p116 = por %p114, %p115
    %p117 = scmp.ne.s32.totalorder %s109, %s112
    %p118 = scmp.eq.s32.totalorder %s10, 0
    %p119 = por %p117, %p118
    %p120 = scmp.ne.s32.totalorder %s109, %s112
    %p121 = scmp.eq.s32.totalorder %s15, 1
    %p122 = por %p120, %p121
    %p123 = scmp.ne.s32.totalorder %s112, %s113
    %p124 = scmp.eq.s32.totalorder %s15, 0
    %p125 = por %p123, %p124
    %p126 = scmp.ne.s32.totalorder %s112, %s113
    %p127 = scmp.eq.s32.totalorder %s16, 1
    %p128 = por %p126, %p127
    %p130 = scmp.ne.s32.totalorder %s113, %s129
    %p131 = scmp.eq.s32.totalorder %s16, 0
    %p132 = por %p130, %p131
    %p133 = scmp.le.s32.totalorder 1, %s10
    %p134 = scmp.lt.s32.totalorder %s10, 3
    %p135 = pnand %p133, %p134
    %p136 = pneg %p135
    // Predicated region
    $region9: #{inception_block.6} parent=5 // pred_check
      _
    $region10: #{inception_block.6} parent=5 // pred_check_branch
      %138 = sbr.rel (%p135) target = $region12
    $region11: #{inception_block.6} parent=5 // pred_region
      %s139 = ssub.s32 %s10, 1
      // Predicated region
      $region13: #{inception_block.6} parent=11 // pred_check
        %p140 = pneg %p57
      $region14: #{inception_block.6} parent=11 // pred_check_branch
        %142 = sbr.rel (%p140) target = $region16
      $region15: #{inception_block.6} parent=11 // pred_region
        _
      $region16: #{inception_block.6} parent=11 // pred_fallthru
        _
      // Predicated region
      $region17: #{inception_block.6} parent=11 // pred_check
        %p143 = pneg %p78
      $region18: #{inception_block.6} parent=11 // pred_check_branch
        %145 = sbr.rel (%p143) target = $region20
      $region19: #{inception_block.6} parent=11 // pred_region
        _
      $region20: #{inception_block.6} parent=11 // pred_fallthru
        _
      // Predicated region
      $region21: #{inception_block.6} parent=11 // pred_check
        %p146 = pneg %p99
      $region22: #{inception_block.6} parent=11 // pred_check_branch
        %148 = sbr.rel (%p146) target = $region24
      $region23: #{inception_block.6} parent=11 // pred_region
        _
      $region24: #{inception_block.6} parent=11 // pred_fallthru
        _
    $region12: #{inception_block.6} parent=5 // pred_fallthru
      _
    %p149 = scmp.lt.s32.totalorder %s10, 2
    // Predicated region
    $region25: #{inception_block.6} parent=5 // pred_check
      %p150 = pneg %p149
    $region26: #{inception_block.6} parent=5 // pred_check_branch
      %152 = sbr.rel (%p150) target = $region28
    $region27: #{inception_block.6} parent=5 // pred_region
      // Predicated region
      $region29: #{inception_block.6} parent=27 // pred_check
        %p153 = pneg %p30
      $region30: #{inception_block.6} parent=27 // pred_check_branch
        %155 = sbr.rel (%p153) target = $region32
      $region31: #{inception_block.6} parent=27 // pred_region
        %p156 = scmp.lt.s32.totalorder %s10, 1
        %s157 = scalar_select %p156, %s10, 1
        %s158 = smul.addr %s157, 60
        %s159 = smul.addr %s158, 8
        %s160 = scalar_lea.vmem %s0, %s159
      $region32: #{inception_block.6} parent=27 // pred_fallthru
        _
    $region28: #{inception_block.6} parent=5 // pred_fallthru
      _
    %p161 = scmp.le.s32.totalorder 1, %s10
    %p162 = scmp.lt.s32.totalorder %s10, 3
    %p163 = pnand %p161, %p162
    %p164 = pneg %p163
    // Predicated region
    $region33: #{inception_block.6} parent=5 // pred_check
      _
    $region34: #{inception_block.6} parent=5 // pred_check_branch
      %166 = sbr.rel (%p163) target = $region36
    $region35: #{inception_block.6} parent=5 // pred_region
      %s167 = ssub.s32 %s10, 1
      %p168 = scmp.lt.s32.totalorder %s15, 1
      %s169 = scalar_select %p168, %s15, 1
      %s170 = smul.addr %s169, 60
      %s171 = smul.addr %s170, 8
      %s172 = scalar_lea.vmem %s0, %s171
      %p173 = pneg %p36
      %p174 = pneg %p33
      %p175 = pneg %p57
      %p176 = pneg %p54
      %p177 = pneg %p78
      %p178 = pneg %p75
      %p179 = pneg %p99
      %p180 = pneg %p96
      %p181 = pneg %p125
      %p182 = pneg %p122
      %p183 = scmp.lt.s32.totalorder %s15, 1
      %s184 = scalar_select %p183, %s15, 1
      %s185 = smul.addr %s184, 32
      %s186 = smul.addr %s185, 8
      %s187 = scalar_lea.vmem %s4, %s186
      %p188 = scmp.lt.s32.totalorder %s15, 1
      %s189 = scalar_select %p188, %s15, 1
      %s190 = smul.addr %s189, 60
      %s191 = smul.addr %s190, 8
      %s192 = scalar_lea.vmem %s0, %s191
      %p193 = scmp.lt.s32.totalorder %s15, 1
      %s194 = scalar_select %p193, %s15, 1
      %s195 = smul.addr %s194, 32
      %s196 = smul.addr %s195, 8
      %s197 = scalar_lea.vmem %s4, %s196
      %v199 = vld [vmem:[%s192] sm:$0xff]
      %v200 = vld [vmem:[%s192 + $0x8] sm:$0xff]
      %v201 = vld [vmem:[%s192 + $0x18] sm:$0xff]
      %v202 = vld [vmem:[%s192 + $0x20] sm:$0xff]
      %v203 = vld [vmem:[%s192 + $0x30] sm:$0xff]
      %v204 = vld [vmem:[%s192 + $0x38] sm:$0xff]
      %v205 = vld [vmem:[%s192 + $0x48] sm:$0xff]
      %v206 = vld [vmem:[%s192 + $0x50] sm:$0xff]
      %v207 = vld [vmem:[%s192 + $0x60] sm:$0xff]
      %v208 = vld [vmem:[%s192 + $0x68] sm:$0xff]
      %v209 = vld [vmem:[%s192 + $0x78] sm:$0xff]
      %v210 = vld [vmem:[%s192 + $0x80] sm:$0xff]
      %v211 = vld [vmem:[%s192 + $0x90] sm:$0xff]
      %v212 = vld [vmem:[%s192 + $0x98] sm:$0xff]
      %v213 = vld [vmem:[%s192 + $0xa8] sm:$0xff]
      %v214 = vld [vmem:[%s192 + $0xb0] sm:$0xff]
      %v215 = vld [vmem:[%s192 + $0xc0] sm:$0xff]
      %v216 = vld [vmem:[%s192 + $0xc8] sm:$0xff]
      %v217 = vld [vmem:[%s192 + $0xd8] sm:$0xff]
      %v218 = vld [vmem:[%s192 + $0xe0] sm:$0xff]
      %v219 = vld [vmem:[%s192 + $0xf0] sm:$0xff]
      %v220 = vld [vmem:[%s192 + $0xf8] sm:$0xff]
      %v221 = vld [vmem:[%s192 + $0x108] sm:$0xff]
      %v222 = vld [vmem:[%s192 + $0x110] sm:$0xff]
      %v223 = vld [vmem:[%s192 + $0x120] sm:$0xff]
      %v224 = vld [vmem:[%s192 + $0x128] sm:$0xff]
      %v225 = vld [vmem:[%s192 + $0x138] sm:$0xff]
      %v226 = vld [vmem:[%s192 + $0x140] sm:$0xff]
      %v227 = vld [vmem:[%s192 + $0x150] sm:$0xff]
      %v228 = vld [vmem:[%s192 + $0x158] sm:$0xff]
      %v229 = vld [vmem:[%s192 + $0x168] sm:$0xff]
      %v230 = vld [vmem:[%s192 + $0x170] sm:$0xff]
      %v231 = vpack.c.bf16 %v200, %v199
      %v232 = vpack.c.bf16 %v202, %v201
      %v233 = vpack.c.bf16 %v204, %v203
      %v234 = vpack.c.bf16 %v206, %v205
      %v235 = vpack.c.bf16 %v208, %v207
      %v236 = vpack.c.bf16 %v210, %v209
      %v237 = vpack.c.bf16 %v212, %v211
      %v238 = vpack.c.bf16 %v214, %v213
      %v239 = vpack.c.bf16 %v216, %v215
      %v240 = vpack.c.bf16 %v218, %v217
      %v241 = vpack.c.bf16 %v220, %v219
      %v242 = vpack.c.bf16 %v222, %v221
      %v243 = vpack.c.bf16 %v224, %v223
      %v244 = vpack.c.bf16 %v226, %v225
      %v245 = vpack.c.bf16 %v228, %v227
      %v246 = vpack.c.bf16 %v230, %v229
      %v247 = vld [vmem:[%s1] sm:$0x3]
      %v248 = vpack.c.bf16 %v247, %v247
      %v249 = vld [vmem:[%s192 + $0x1] sm:$0xff]
      %v250 = vld [vmem:[%s192 + $0x9] sm:$0xff]
      %v251 = vld [vmem:[%s192 + $0x19] sm:$0xff]
      %v252 = vld [vmem:[%s192 + $0x21] sm:$0xff]
      %v253 = vld [vmem:[%s192 + $0x31] sm:$0xff]
      %v254 = vld [vmem:[%s192 + $0x39] sm:$0xff]
      %v255 = vld [vmem:[%s192 + $0x49] sm:$0xff]
      %v256 = vld [vmem:[%s192 + $0x51] sm:$0xff]
      %v257 = vld [vmem:[%s192 + $0x61] sm:$0xff]
      %v258 = vld [vmem:[%s192 + $0x69] sm:$0xff]
      %v259 = vld [vmem:[%s192 + $0x79] sm:$0xff]
      %v260 = vld [vmem:[%s192 + $0x81] sm:$0xff]
      %v261 = vld [vmem:[%s192 + $0x91] sm:$0xff]
      %v262 = vld [vmem:[%s192 + $0x99] sm:$0xff]
      %v263 = vld [vmem:[%s192 + $0xa9] sm:$0xff]
      %v264 = vld [vmem:[%s192 + $0xb1] sm:$0xff]
      %v265 = vld [vmem:[%s192 + $0xc1] sm:$0xff]
      %v266 = vld [vmem:[%s192 + $0xc9] sm:$0xff]
      %v267 = vld [vmem:[%s192 + $0xd9] sm:$0xff]
      %v268 = vld [vmem:[%s192 + $0xe1] sm:$0xff]
      %v269 = vld [vmem:[%s192 + $0xf1] sm:$0xff]
      %v270 = vld [vmem:[%s192 + $0xf9] sm:$0xff]
      %v271 = vld [vmem:[%s192 + $0x109] sm:$0xff]
      %v272 = vld [vmem:[%s192 + $0x111] sm:$0xff]
      %v273 = vld [vmem:[%s192 + $0x121] sm:$0xff]
      %v274 = vld [vmem:[%s192 + $0x129] sm:$0xff]
      %v275 = vld [vmem:[%s192 + $0x139] sm:$0xff]
      %v276 = vld [vmem:[%s192 + $0x141] sm:$0xff]
      %v277 = vld [vmem:[%s192 + $0x151] sm:$0xff]
      %v278 = vld [vmem:[%s192 + $0x159] sm:$0xff]
      %v279 = vld [vmem:[%s192 + $0x169] sm:$0xff]
      %v280 = vld [vmem:[%s192 + $0x171] sm:$0xff]
      %v281 = vpack.c.bf16 %v250, %v249
      %v282 = vpack.c.bf16 %v252, %v251
      %v283 = vpack.c.bf16 %v254, %v253
      %v284 = vpack.c.bf16 %v256, %v255
      %v285 = vpack.c.bf16 %v258, %v257
      %v286 = vpack.c.bf16 %v260, %v259
      %v287 = vpack.c.bf16 %v262, %v261
      %v288 = vpack.c.bf16 %v264, %v263
      %v289 = vpack.c.bf16 %v266, %v265
      %v290 = vpack.c.bf16 %v268, %v267
      %v291 = vpack.c.bf16 %v270, %v269
      %v292 = vpack.c.bf16 %v272, %v271
      %v293 = vpack.c.bf16 %v274, %v273
      %v294 = vpack.c.bf16 %v276, %v275
      %v295 = vpack.c.bf16 %v278, %v277
      %v296 = vpack.c.bf16 %v280, %v279
      %s297 = scalar_lea.vmem %s1, 2
      %v298 = vld [vmem:[%s297] sm:$0x3]
      %v299 = vpack.c.bf16 %v298, %v298
      %vm300 = vcmask 15360
      %v302 = vsel %vm300, %v281, 0
      %v305 = vsel %vm300, %v282, 0
      %v308 = vsel %vm300, %v283, 0
      %v311 = vsel %vm300, %v284, 0
      %v314 = vsel %vm300, %v285, 0
      %v317 = vsel %vm300, %v286, 0
      %v320 = vsel %vm300, %v287, 0
      %v323 = vsel %vm300, %v288, 0
      %v326 = vsel %vm300, %v289, 0
      %v329 = vsel %vm300, %v290, 0
      %v332 = vsel %vm300, %v291, 0
      %v335 = vsel %vm300, %v292, 0
      %v338 = vsel %vm300, %v293, 0
      %v341 = vsel %vm300, %v294, 0
      %v344 = vsel %vm300, %v295, 0
      %v347 = vsel %vm300, %v296, 0
      %vm349 = vcmask 1040384
      %v351 = vsel %vm349, %v299, 0
      %353 = vmatpush.bf16.msra.mxu0 0
      %354 = vmatpush.bf16.msra.mxu0 0
      %355 = vmatpush.bf16.msra.mxu0 0
      %356 = vmatpush.bf16.msra.mxu0 0
      %357 = vmatpush.bf16.msra.mxu0 0
      %358 = vmatpush.bf16.msra.mxu0 0
      %359 = vmatpush.bf16.msra.mxu0 0
      %360 = vmatpush.bf16.msra.mxu0 %v351
      %361 = vmatmul.bf16.gmra.mxu0 %v302
      %v362 = vpop.f32.mrf.mxu0
      %v363 = vadd.f32 0.0, %v362
      %v364 = vpop.f32.mrf.mxu0
      %v365 = vadd.f32 0.0, %v364
      %366 = vmatmul.bf16.gmra.mxu0 %v305
      %v367 = vpop.f32.mrf.mxu0
      %v368 = vadd.f32 0.0, %v367
      %v369 = vpop.f32.mrf.mxu0
      %v370 = vadd.f32 0.0, %v369
      %371 = vmatmul.bf16.gmra.mxu0 %v308
      %v372 = vpop.f32.mrf.mxu0
      %v373 = vadd.f32 0.0, %v372
      %v374 = vpop.f32.mrf.mxu0
      %v375 = vadd.f32 0.0, %v374
      %376 = vmatmul.bf16.gmra.mxu0 %v311
      %v377 = vpop.f32.mrf.mxu0
      %v378 = vadd.f32 0.0, %v377
      %v379 = vpop.f32.mrf.mxu0
      %v380 = vadd.f32 0.0, %v379
      %381 = vmatmul.bf16.gmra.mxu0 %v314
      %v382 = vpop.f32.mrf.mxu0
      %v383 = vadd.f32 0.0, %v382
      %v384 = vpop.f32.mrf.mxu0
      %v385 = vadd.f32 0.0, %v384
      %386 = vmatmul.bf16.gmra.mxu0 %v317
      %v387 = vpop.f32.mrf.mxu0
      %v388 = vadd.f32 0.0, %v387
      %v389 = vpop.f32.mrf.mxu0
      %v390 = vadd.f32 0.0, %v389
      %391 = vmatmul.bf16.gmra.mxu0 %v320
      %v392 = vpop.f32.mrf.mxu0
      %v393 = vadd.f32 0.0, %v392
      %v394 = vpop.f32.mrf.mxu0
      %v395 = vadd.f32 0.0, %v394
      %396 = vmatmul.bf16.gmra.mxu0 %v323
      %v397 = vpop.f32.mrf.mxu0
      %v398 = vadd.f32 0.0, %v397
      %v399 = vpop.f32.mrf.mxu0
      %v400 = vadd.f32 0.0, %v399
      %401 = vmatmul.bf16.gmra.mxu0 %v326
      %v402 = vpop.f32.mrf.mxu0
      %v403 = vadd.f32 0.0, %v402
      %v404 = vpop.f32.mrf.mxu0
      %v405 = vadd.f32 0.0, %v404
      %406 = vmatmul.bf16.gmra.mxu0 %v329
      %v407 = vpop.f32.mrf.mxu0
      %v408 = vadd.f32 0.0, %v407
      %v409 = vpop.f32.mrf.mxu0
      %v410 = vadd.f32 0.0, %v409
      %411 = vmatmul.bf16.gmra.mxu0 %v332
      %v412 = vpop.f32.mrf.mxu0
      %v413 = vadd.f32 0.0, %v412
      %v414 = vpop.f32.mrf.mxu0
      %v415 = vadd.f32 0.0, %v414
      %416 = vmatmul.bf16.gmra.mxu0 %v335
      %v417 = vpop.f32.mrf.mxu0
      %v418 = vadd.f32 0.0, %v417
      %v419 = vpop.f32.mrf.mxu0
      %v420 = vadd.f32 0.0, %v419
      %421 = vmatmul.bf16.gmra.mxu0 %v338
      %v422 = vpop.f32.mrf.mxu0
      %v423 = vadd.f32 0.0, %v422
      %v424 = vpop.f32.mrf.mxu0
      %v425 = vadd.f32 0.0, %v424
      %426 = vmatmul.bf16.gmra.mxu0 %v341
      %v427 = vpop.f32.mrf.mxu0
      %v428 = vadd.f32 0.0, %v427
      %v429 = vpop.f32.mrf.mxu0
      %v430 = vadd.f32 0.0, %v429
      %431 = vmatmul.bf16.gmra.mxu0 %v344
      %v432 = vpop.f32.mrf.mxu0
      %v433 = vadd.f32 0.0, %v432
      %v434 = vpop.f32.mrf.mxu0
      %v435 = vadd.f32 0.0, %v434
      %436 = vmatmul.bf16.gmra.mxu0 %v347
      %v437 = vpop.f32.mrf.mxu0
      %v438 = vadd.f32 0.0, %v437
      %v439 = vpop.f32.mrf.mxu0
      %v440 = vadd.f32 0.0, %v439
      %441 = vdwg.mxu0
      %v443 = vsel %vm300, %v231, 0
      %v446 = vsel %vm300, %v232, 0
      %v449 = vsel %vm300, %v233, 0
      %v452 = vsel %vm300, %v234, 0
      %v455 = vsel %vm300, %v235, 0
      %v458 = vsel %vm300, %v236, 0
      %v461 = vsel %vm300, %v237, 0
      %v464 = vsel %vm300, %v238, 0
      %v467 = vsel %vm300, %v239, 0
      %v470 = vsel %vm300, %v240, 0
      %v473 = vsel %vm300, %v241, 0
      %v476 = vsel %vm300, %v242, 0
      %v479 = vsel %vm300, %v243, 0
      %v482 = vsel %vm300, %v244, 0
      %v485 = vsel %vm300, %v245, 0
      %v488 = vsel %vm300, %v246, 0
      %v491 = vsel %vm349, %v248, 0
      %493 = vmatpush.bf16.msra.mxu0 0
      %494 = vmatpush.bf16.msra.mxu0 0
      %495 = vmatpush.bf16.msra.mxu0 0
      %496 = vmatpush.bf16.msra.mxu0 0
      %497 = vmatpush.bf16.msra.mxu0 0
      %498 = vmatpush.bf16.msra.mxu0 0
      %499 = vmatpush.bf16.msra.mxu0 0
      %500 = vmatpush.bf16.msra.mxu0 %v491
      %501 = vmatmul.bf16.gmra.mxu0 %v443
      %v502 = vpop.f32.mrf.mxu0
      %v503 = vadd.f32 %v363, %v502
      %v504 = vpop.f32.mrf.mxu0
      %v505 = vadd.f32 %v365, %v504
      %506 = vmatmul.bf16.gmra.mxu0 %v446
      %v507 = vpop.f32.mrf.mxu0
      %v508 = vadd.f32 %v368, %v507
      %v509 = vpop.f32.mrf.mxu0
      %v510 = vadd.f32 %v370, %v509
      %511 = vmatmul.bf16.gmra.mxu0 %v449
      %v512 = vpop.f32.mrf.mxu0
      %v513 = vadd.f32 %v373, %v512
      %v514 = vpop.f32.mrf.mxu0
      %v515 = vadd.f32 %v375, %v514
      %516 = vmatmul.bf16.gmra.mxu0 %v452
      %v517 = vpop.f32.mrf.mxu0
      %v518 = vadd.f32 %v378, %v517
      %v519 = vpop.f32.mrf.mxu0
      %v520 = vadd.f32 %v380, %v519
      %521 = vmatmul.bf16.gmra.mxu0 %v455
      %v522 = vpop.f32.mrf.mxu0
      %v523 = vadd.f32 %v383, %v522
      %v524 = vpop.f32.mrf.mxu0
      %v525 = vadd.f32 %v385, %v524
      %526 = vmatmul.bf16.gmra.mxu0 %v458
      %v527 = vpop.f32.mrf.mxu0
      %v528 = vadd.f32 %v388, %v527
      %v529 = vpop.f32.mrf.mxu0
      %v530 = vadd.f32 %v390, %v529
      %531 = vmatmul.bf16.gmra.mxu0 %v461
      %v532 = vpop.f32.mrf.mxu0
      %v533 = vadd.f32 %v393, %v532
      %v534 = vpop.f32.mrf.mxu0
      %v535 = vadd.f32 %v395, %v534
      %536 = vmatmul.bf16.gmra.mxu0 %v464
      %v537 = vpop.f32.mrf.mxu0
      %v538 = vadd.f32 %v398, %v537
      %v539 = vpop.f32.mrf.mxu0
      %v540 = vadd.f32 %v400, %v539
      %541 = vmatmul.bf16.gmra.mxu0 %v467
      %v542 = vpop.f32.mrf.mxu0
      %v543 = vadd.f32 %v403, %v542
      %v544 = vpop.f32.mrf.mxu0
      %v545 = vadd.f32 %v405, %v544
      %546 = vmatmul.bf16.gmra.mxu0 %v470
      %v547 = vpop.f32.mrf.mxu0
      %v548 = vadd.f32 %v408, %v547
      %v549 = vpop.f32.mrf.mxu0
      %v550 = vadd.f32 %v410, %v549
      %551 = vmatmul.bf16.gmra.mxu0 %v473
      %v552 = vpop.f32.mrf.mxu0
      %v553 = vadd.f32 %v413, %v552
      %v554 = vpop.f32.mrf.mxu0
      %v555 = vadd.f32 %v415, %v554
      %556 = vmatmul.bf16.gmra.mxu0 %v476
      %v557 = vpop.f32.mrf.mxu0
      %v558 = vadd.f32 %v418, %v557
      %v559 = vpop.f32.mrf.mxu0
      %v560 = vadd.f32 %v420, %v559
      %561 = vmatmul.bf16.gmra.mxu0 %v479
      %v562 = vpop.f32.mrf.mxu0
      %v563 = vadd.f32 %v423, %v562
      %v564 = vpop.f32.mrf.mxu0
      %v565 = vadd.f32 %v425, %v564
      %566 = vmatmul.bf16.gmra.mxu0 %v482
      %v567 = vpop.f32.mrf.mxu0
      %v568 = vadd.f32 %v428, %v567
      %v569 = vpop.f32.mrf.mxu0
      %v570 = vadd.f32 %v430, %v569
      %571 = vmatmul.bf16.gmra.mxu0 %v485
      %v572 = vpop.f32.mrf.mxu0
      %v573 = vadd.f32 %v433, %v572
      %v574 = vpop.f32.mrf.mxu0
      %v575 = vadd.f32 %v435, %v574
      %576 = vmatmul.bf16.gmra.mxu0 %v488
      %v577 = vpop.f32.mrf.mxu0
      %v578 = vadd.f32 %v438, %v577
      %v579 = vpop.f32.mrf.mxu0
      %v580 = vadd.f32 %v440, %v579
      %581 = vdwg.mxu0
      %v582 = vld [vmem:[%s192 + $0x2] sm:$0xff]
      %v583 = vld [vmem:[%s192 + $0xa] sm:$0xff]
      %v584 = vld [vmem:[%s192 + $0x1a] sm:$0xff]
      %v585 = vld [vmem:[%s192 + $0x22] sm:$0xff]
      %v586 = vld [vmem:[%s192 + $0x32] sm:$0xff]
      %v587 = vld [vmem:[%s192 + $0x3a] sm:$0xff]
      %v588 = vld [vmem:[%s192 + $0x4a] sm:$0xff]
      %v589 = vld [vmem:[%s192 + $0x52] sm:$0xff]
      %v590 = vld [vmem:[%s192 + $0x62] sm:$0xff]
      %v591 = vld [vmem:[%s192 + $0x6a] sm:$0xff]
      %v592 = vld [vmem:[%s192 + $0x7a] sm:$0xff]
      %v593 = vld [vmem:[%s192 + $0x82] sm:$0xff]
      %v594 = vld [vmem:[%s192 + $0x92] sm:$0xff]
      %v595 = vld [vmem:[%s192 + $0x9a] sm:$0xff]
      %v596 = vld [vmem:[%s192 + $0xaa] sm:$0xff]
      %v597 = vld [vmem:[%s192 + $0xb2] sm:$0xff]
      %v598 = vld [vmem:[%s192 + $0xc2] sm:$0xff]
      %v599 = vld [vmem:[%s192 + $0xca] sm:$0xff]
      %v600 = vld [vmem:[%s192 + $0xda] sm:$0xff]
      %v601 = vld [vmem:[%s192 + $0xe2] sm:$0xff]
      %v602 = vld [vmem:[%s192 + $0xf2] sm:$0xff]
      %v603 = vld [vmem:[%s192 + $0xfa] sm:$0xff]
      %v604 = vld [vmem:[%s192 + $0x10a] sm:$0xff]
      %v605 = vld [vmem:[%s192 + $0x112] sm:$0xff]
      %v606 = vld [vmem:[%s192 + $0x122] sm:$0xff]
      %v607 = vld [vmem:[%s192 + $0x12a] sm:$0xff]
      %v608 = vld [vmem:[%s192 + $0x13a] sm:$0xff]
      %v609 = vld [vmem:[%s192 + $0x142] sm:$0xff]
      %v610 = vld [vmem:[%s192 + $0x152] sm:$0xff]
      %v611 = vld [vmem:[%s192 + $0x15a] sm:$0xff]
      %v612 = vld [vmem:[%s192 + $0x16a] sm:$0xff]
      %v613 = vld [vmem:[%s192 + $0x172] sm:$0xff]
      %v614 = vpack.c.bf16 %v583, %v582
      %v615 = vpack.c.bf16 %v585, %v584
      %v616 = vpack.c.bf16 %v587, %v586
      %v617 = vpack.c.bf16 %v589, %v588
      %v618 = vpack.c.bf16 %v591, %v590
      %v619 = vpack.c.bf16 %v593, %v592
      %v620 = vpack.c.bf16 %v595, %v594
      %v621 = vpack.c.bf16 %v597, %v596
      %v622 = vpack.c.bf16 %v599, %v598
      %v623 = vpack.c.bf16 %v601, %v600
      %v624 = vpack.c.bf16 %v603, %v602
      %v625 = vpack.c.bf16 %v605, %v604
      %v626 = vpack.c.bf16 %v607, %v606
      %v627 = vpack.c.bf16 %v609, %v608
      %v628 = vpack.c.bf16 %v611, %v610
      %v629 = vpack.c.bf16 %v613, %v612
      %s630 = scalar_lea.vmem %s1, 4
      %v631 = vld [vmem:[%s630] sm:$0x3]
      %v632 = vpack.c.bf16 %v631, %v631
      %v634 = vsel %vm300, %v614, 0
      %v637 = vsel %vm300, %v615, 0
      %v640 = vsel %vm300, %v616, 0
      %v643 = vsel %vm300, %v617, 0
      %v646 = vsel %vm300, %v618, 0
      %v649 = vsel %vm300, %v619, 0
      %v652 = vsel %vm300, %v620, 0
      %v655 = vsel %vm300, %v621, 0
      %v658 = vsel %vm300, %v622, 0
      %v661 = vsel %vm300, %v623, 0
      %v664 = vsel %vm300, %v624, 0
      %v667 = vsel %vm300, %v625, 0
      %v670 = vsel %vm300, %v626, 0
      %v673 = vsel %vm300, %v627, 0
      %v676 = vsel %vm300, %v628, 0
      %v679 = vsel %vm300, %v629, 0
      %v682 = vsel %vm349, %v632, 0
      %684 = vmatpush.bf16.msra.mxu0 0
      %685 = vmatpush.bf16.msra.mxu0 0
      %686 = vmatpush.bf16.msra.mxu0 0
      %687 = vmatpush.bf16.msra.mxu0 0
      %688 = vmatpush.bf16.msra.mxu0 0
      %689 = vmatpush.bf16.msra.mxu0 0
      %690 = vmatpush.bf16.msra.mxu0 0
      %691 = vmatpush.bf16.msra.mxu0 %v682
      %692 = vmatmul.bf16.gmra.mxu0 %v634
      %v693 = vpop.f32.mrf.mxu0
      %v694 = vadd.f32 0.0, %v693
      %v695 = vpop.f32.mrf.mxu0
      %v696 = vadd.f32 0.0, %v695
      %697 = vmatmul.bf16.gmra.mxu0 %v637
      %v698 = vpop.f32.mrf.mxu0
      %v699 = vadd.f32 0.0, %v698
      %v700 = vpop.f32.mrf.mxu0
      %v701 = vadd.f32 0.0, %v700
      %702 = vmatmul.bf16.gmra.mxu0 %v640
      %v703 = vpop.f32.mrf.mxu0
      %v704 = vadd.f32 0.0, %v703
      %v705 = vpop.f32.mrf.mxu0
      %v706 = vadd.f32 0.0, %v705
      %707 = vmatmul.bf16.gmra.mxu0 %v643
      %v708 = vpop.f32.mrf.mxu0
      %v709 = vadd.f32 0.0, %v708
      %v710 = vpop.f32.mrf.mxu0
      %v711 = vadd.f32 0.0, %v710
      %712 = vmatmul.bf16.gmra.mxu0 %v646
      %v713 = vpop.f32.mrf.mxu0
      %v714 = vadd.f32 0.0, %v713
      %v715 = vpop.f32.mrf.mxu0
      %v716 = vadd.f32 0.0, %v715
      %717 = vmatmul.bf16.gmra.mxu0 %v649
      %v718 = vpop.f32.mrf.mxu0
      %v719 = vadd.f32 0.0, %v718
      %v720 = vpop.f32.mrf.mxu0
      %v721 = vadd.f32 0.0, %v720
      %722 = vmatmul.bf16.gmra.mxu0 %v652
      %v723 = vpop.f32.mrf.mxu0
      %v724 = vadd.f32 0.0, %v723
      %v725 = vpop.f32.mrf.mxu0
      %v726 = vadd.f32 0.0, %v725
      %727 = vmatmul.bf16.gmra.mxu0 %v655
      %v728 = vpop.f32.mrf.mxu0
      %v729 = vadd.f32 0.0, %v728
      %v730 = vpop.f32.mrf.mxu0
      %v731 = vadd.f32 0.0, %v730
      %732 = vmatmul.bf16.gmra.mxu0 %v658
      %v733 = vpop.f32.mrf.mxu0
      %v734 = vadd.f32 0.0, %v733
      %v735 = vpop.f32.mrf.mxu0
      %v736 = vadd.f32 0.0, %v735
      %737 = vmatmul.bf16.gmra.mxu0 %v661
      %v738 = vpop.f32.mrf.mxu0
      %v739 = vadd.f32 0.0, %v738
      %v740 = vpop.f32.mrf.mxu0
      %v741 = vadd.f32 0.0, %v740
      %742 = vmatmul.bf16.gmra.mxu0 %v664
      %v743 = vpop.f32.mrf.mxu0
      %v744 = vadd.f32 0.0, %v743
      %v745 = vpop.f32.mrf.mxu0
      %v746 = vadd.f32 0.0, %v745
      %747 = vmatmul.bf16.gmra.mxu0 %v667
      %v748 = vpop.f32.mrf.mxu0
      %v749 = vadd.f32 0.0, %v748
      %v750 = vpop.f32.mrf.mxu0
      %v751 = vadd.f32 0.0, %v750
      %752 = vmatmul.bf16.gmra.mxu0 %v670
      %v753 = vpop.f32.mrf.mxu0
      %v754 = vadd.f32 0.0, %v753
      %v755 = vpop.f32.mrf.mxu0
      %v756 = vadd.f32 0.0, %v755
      %757 = vmatmul.bf16.gmra.mxu0 %v673
      %v758 = vpop.f32.mrf.mxu0
      %v759 = vadd.f32 0.0, %v758
      %v760 = vpop.f32.mrf.mxu0
      %v761 = vadd.f32 0.0, %v760
      %762 = vmatmul.bf16.gmra.mxu0 %v676
      %v763 = vpop.f32.mrf.mxu0
      %v764 = vadd.f32 0.0, %v763
      %v765 = vpop.f32.mrf.mxu0
      %v766 = vadd.f32 0.0, %v765
      %767 = vmatmul.bf16.gmra.mxu0 %v679
      %v768 = vpop.f32.mrf.mxu0
      %v769 = vadd.f32 0.0, %v768
      %v770 = vpop.f32.mrf.mxu0
      %v771 = vadd.f32 0.0, %v770
      %772 = vdwg.mxu0
      %v773 = vadd.f32 %v503, %v694
      %v774 = vadd.f32 %v505, %v696
      %v775 = vadd.f32 %v508, %v699
      %v776 = vadd.f32 %v510, %v701
      %v777 = vadd.f32 %v513, %v704
      %v778 = vadd.f32 %v515, %v706
      %v779 = vadd.f32 %v518, %v709
      %v780 = vadd.f32 %v520, %v711
      %v781 = vadd.f32 %v523, %v714
      %v782 = vadd.f32 %v525, %v716
      %v783 = vadd.f32 %v528, %v719
      %v784 = vadd.f32 %v530, %v721
      %v785 = vadd.f32 %v533, %v724
      %v786 = vadd.f32 %v535, %v726
      %v787 = vadd.f32 %v538, %v729
      %v788 = vadd.f32 %v540, %v731
      %v789 = vadd.f32 %v543, %v734
      %v790 = vadd.f32 %v545, %v736
      %v791 = vadd.f32 %v548, %v739
      %v792 = vadd.f32 %v550, %v741
      %v793 = vadd.f32 %v553, %v744
      %v794 = vadd.f32 %v555, %v746
      %v795 = vadd.f32 %v558, %v749
      %v796 = vadd.f32 %v560, %v751
      %v797 = vadd.f32 %v563, %v754
      %v798 = vadd.f32 %v565, %v756
      %v799 = vadd.f32 %v568, %v759
      %v800 = vadd.f32 %v570, %v761
      %v801 = vadd.f32 %v573, %v764
      %v802 = vadd.f32 %v575, %v766
      %v803 = vadd.f32 %v578, %v769
      %v804 = vadd.f32 %v580, %v771
      %v805 = vld [vmem:[%s192 + $0x3] sm:$0xff]
      %v806 = vld [vmem:[%s192 + $0xb] sm:$0xff]
      %v807 = vld [vmem:[%s192 + $0x1b] sm:$0xff]
      %v808 = vld [vmem:[%s192 + $0x23] sm:$0xff]
      %v809 = vld [vmem:[%s192 + $0x33] sm:$0xff]
      %v810 = vld [vmem:[%s192 + $0x3b] sm:$0xff]
      %v811 = vld [vmem:[%s192 + $0x4b] sm:$0xff]
      %v812 = vld [vmem:[%s192 + $0x53] sm:$0xff]
      %v813 = vld [vmem:[%s192 + $0x63] sm:$0xff]
      %v814 = vld [vmem:[%s192 + $0x6b] sm:$0xff]
      %v815 = vld [vmem:[%s192 + $0x7b] sm:$0xff]
      %v816 = vld [vmem:[%s192 + $0x83] sm:$0xff]
      %v817 = vld [vmem:[%s192 + $0x93] sm:$0xff]
      %v818 = vld [vmem:[%s192 + $0x9b] sm:$0xff]
      %v819 = vld [vmem:[%s192 + $0xab] sm:$0xff]
      %v820 = vld [vmem:[%s192 + $0xb3] sm:$0xff]
      %v821 = vld [vmem:[%s192 + $0xc3] sm:$0xff]
      %v822 = vld [vmem:[%s192 + $0xcb] sm:$0xff]
      %v823 = vld [vmem:[%s192 + $0xdb] sm:$0xff]
      %v824 = vld [vmem:[%s192 + $0xe3] sm:$0xff]
      %v825 = vld [vmem:[%s192 + $0xf3] sm:$0xff]
      %v826 = vld [vmem:[%s192 + $0xfb] sm:$0xff]
      %v827 = vld [vmem:[%s192 + $0x10b] sm:$0xff]
      %v828 = vld [vmem:[%s192 + $0x113] sm:$0xff]
      %v829 = vld [vmem:[%s192 + $0x123] sm:$0xff]
      %v830 = vld [vmem:[%s192 + $0x12b] sm:$0xff]
      %v831 = vld [vmem:[%s192 + $0x13b] sm:$0xff]
      %v832 = vld [vmem:[%s192 + $0x143] sm:$0xff]
      %v833 = vld [vmem:[%s192 + $0x153] sm:$0xff]
      %v834 = vld [vmem:[%s192 + $0x15b] sm:$0xff]
      %v835 = vld [vmem:[%s192 + $0x16b] sm:$0xff]
      %v836 = vld [vmem:[%s192 + $0x173] sm:$0xff]
      %v837 = vpack.c.bf16 %v806, %v805
      %v838 = vpack.c.bf16 %v808, %v807
      %v839 = vpack.c.bf16 %v810, %v809
      %v840 = vpack.c.bf16 %v812, %v811
      %v841 = vpack.c.bf16 %v814, %v813
      %v842 = vpack.c.bf16 %v816, %v815
      %v843 = vpack.c.bf16 %v818, %v817
      %v844 = vpack.c.bf16 %v820, %v819
      %v845 = vpack.c.bf16 %v822, %v821
      %v846 = vpack.c.bf16 %v824, %v823
      %v847 = vpack.c.bf16 %v826, %v825
      %v848 = vpack.c.bf16 %v828, %v827
      %v849 = vpack.c.bf16 %v830, %v829
      %v850 = vpack.c.bf16 %v832, %v831
      %v851 = vpack.c.bf16 %v834, %v833
      %v852 = vpack.c.bf16 %v836, %v835
      %s853 = scalar_lea.vmem %s1, 6
      %v854 = vld [vmem:[%s853] sm:$0x3]
      %v855 = vpack.c.bf16 %v854, %v854
      %v857 = vsel %vm300, %v837, 0
      %v860 = vsel %vm300, %v838, 0
      %v863 = vsel %vm300, %v839, 0
      %v866 = vsel %vm300, %v840, 0
      %v869 = vsel %vm300, %v841, 0
      %v872 = vsel %vm300, %v842, 0
      %v875 = vsel %vm300, %v843, 0
      %v878 = vsel %vm300, %v844, 0
      %v881 = vsel %vm300, %v845, 0
      %v884 = vsel %vm300, %v846, 0
      %v887 = vsel %vm300, %v847, 0
      %v890 = vsel %vm300, %v848, 0
      %v893 = vsel %vm300, %v849, 0
      %v896 = vsel %vm300, %v850, 0
      %v899 = vsel %vm300, %v851, 0
      %v902 = vsel %vm300, %v852, 0
      %v905 = vsel %vm349, %v855, 0
      %907 = vmatpush.bf16.msra.mxu0 0
      %908 = vmatpush.bf16.msra.mxu0 0
      %909 = vmatpush.bf16.msra.mxu0 0
      %910 = vmatpush.bf16.msra.mxu0 0
      %911 = vmatpush.bf16.msra.mxu0 0
      %912 = vmatpush.bf16.msra.mxu0 0
      %913 = vmatpush.bf16.msra.mxu0 0
      %914 = vmatpush.bf16.msra.mxu0 %v905
      %915 = vmatmul.bf16.gmra.mxu0 %v857
      %v916 = vpop.f32.mrf.mxu0
      %v917 = vadd.f32 0.0, %v916
      %v918 = vpop.f32.mrf.mxu0
      %v919 = vadd.f32 0.0, %v918
      %920 = vmatmul.bf16.gmra.mxu0 %v860
      %v921 = vpop.f32.mrf.mxu0
      %v922 = vadd.f32 0.0, %v921
      %v923 = vpop.f32.mrf.mxu0
      %v924 = vadd.f32 0.0, %v923
      %925 = vmatmul.bf16.gmra.mxu0 %v863
      %v926 = vpop.f32.mrf.mxu0
      %v927 = vadd.f32 0.0, %v926
      %v928 = vpop.f32.mrf.mxu0
      %v929 = vadd.f32 0.0, %v928
      %930 = vmatmul.bf16.gmra.mxu0 %v866
      %v931 = vpop.f32.mrf.mxu0
      %v932 = vadd.f32 0.0, %v931
      %v933 = vpop.f32.mrf.mxu0
      %v934 = vadd.f32 0.0, %v933
      %935 = vmatmul.bf16.gmra.mxu0 %v869
      %v936 = vpop.f32.mrf.mxu0
      %v937 = vadd.f32 0.0, %v936
      %v938 = vpop.f32.mrf.mxu0
      %v939 = vadd.f32 0.0, %v938
      %940 = vmatmul.bf16.gmra.mxu0 %v872
      %v941 = vpop.f32.mrf.mxu0
      %v942 = vadd.f32 0.0, %v941
      %v943 = vpop.f32.mrf.mxu0
      %v944 = vadd.f32 0.0, %v943
      %945 = vmatmul.bf16.gmra.mxu0 %v875
      %v946 = vpop.f32.mrf.mxu0
      %v947 = vadd.f32 0.0, %v946
      %v948 = vpop.f32.mrf.mxu0
      %v949 = vadd.f32 0.0, %v948
      %950 = vmatmul.bf16.gmra.mxu0 %v878
      %v951 = vpop.f32.mrf.mxu0
      %v952 = vadd.f32 0.0, %v951
      %v953 = vpop.f32.mrf.mxu0
      %v954 = vadd.f32 0.0, %v953
      %955 = vmatmul.bf16.gmra.mxu0 %v881
      %v956 = vpop.f32.mrf.mxu0
      %v957 = vadd.f32 0.0, %v956
      %v958 = vpop.f32.mrf.mxu0
      %v959 = vadd.f32 0.0, %v958
      %960 = vmatmul.bf16.gmra.mxu0 %v884
      %v961 = vpop.f32.mrf.mxu0
      %v962 = vadd.f32 0.0, %v961
      %v963 = vpop.f32.mrf.mxu0
      %v964 = vadd.f32 0.0, %v963
      %965 = vmatmul.bf16.gmra.mxu0 %v887
      %v966 = vpop.f32.mrf.mxu0
      %v967 = vadd.f32 0.0, %v966
      %v968 = vpop.f32.mrf.mxu0
      %v969 = vadd.f32 0.0, %v968
      %970 = vmatmul.bf16.gmra.mxu0 %v890
      %v971 = vpop.f32.mrf.mxu0
      %v972 = vadd.f32 0.0, %v971
      %v973 = vpop.f32.mrf.mxu0
      %v974 = vadd.f32 0.0, %v973
      %975 = vmatmul.bf16.gmra.mxu0 %v893
      %v976 = vpop.f32.mrf.mxu0
      %v977 = vadd.f32 0.0, %v976
      %v978 = vpop.f32.mrf.mxu0
      %v979 = vadd.f32 0.0, %v978
      %980 = vmatmul.bf16.gmra.mxu0 %v896
      %v981 = vpop.f32.mrf.mxu0
      %v982 = vadd.f32 0.0, %v981
      %v983 = vpop.f32.mrf.mxu0
      %v984 = vadd.f32 0.0, %v983
      %985 = vmatmul.bf16.gmra.mxu0 %v899
      %v986 = vpop.f32.mrf.mxu0
      %v987 = vadd.f32 0.0, %v986
      %v988 = vpop.f32.mrf.mxu0
      %v989 = vadd.f32 0.0, %v988
      %990 = vmatmul.bf16.gmra.mxu0 %v902
      %v991 = vpop.f32.mrf.mxu0
      %v992 = vadd.f32 0.0, %v991
      %v993 = vpop.f32.mrf.mxu0
      %v994 = vadd.f32 0.0, %v993
      %995 = vdwg.mxu0
      %v996 = vadd.f32 %v773, %v917
      %v997 = vadd.f32 %v774, %v919
      %v998 = vadd.f32 %v775, %v922
      %v999 = vadd.f32 %v776, %v924
      %v1000 = vadd.f32 %v777, %v927
      %v1001 = vadd.f32 %v778, %v929
      %v1002 = vadd.f32 %v779, %v932
      %v1003 = vadd.f32 %v780, %v934
      %v1004 = vadd.f32 %v781, %v937
      %v1005 = vadd.f32 %v782, %v939
      %v1006 = vadd.f32 %v783, %v942
      %v1007 = vadd.f32 %v784, %v944
      %v1008 = vadd.f32 %v785, %v947
      %v1009 = vadd.f32 %v786, %v949
      %v1010 = vadd.f32 %v787, %v952
      %v1011 = vadd.f32 %v788, %v954
      %v1012 = vadd.f32 %v789, %v957
      %v1013 = vadd.f32 %v790, %v959
      %v1014 = vadd.f32 %v791, %v962
      %v1015 = vadd.f32 %v792, %v964
      %v1016 = vadd.f32 %v793, %v967
      %v1017 = vadd.f32 %v794, %v969
      %v1018 = vadd.f32 %v795, %v972
      %v1019 = vadd.f32 %v796, %v974
      %v1020 = vadd.f32 %v797, %v977
      %v1021 = vadd.f32 %v798, %v979
      %v1022 = vadd.f32 %v799, %v982
      %v1023 = vadd.f32 %v800, %v984
      %v1024 = vadd.f32 %v801, %v987
      %v1025 = vadd.f32 %v802, %v989
      %v1026 = vadd.f32 %v803, %v992
      %v1027 = vadd.f32 %v804, %v994
      %v1028 = vld [vmem:[%s192 + $0x4] sm:$0xff]
      %v1029 = vld [vmem:[%s192 + $0xc] sm:$0xff]
      %v1030 = vld [vmem:[%s192 + $0x1c] sm:$0xff]
      %v1031 = vld [vmem:[%s192 + $0x24] sm:$0xff]
      %v1032 = vld [vmem:[%s192 + $0x34] sm:$0xff]
      %v1033 = vld [vmem:[%s192 + $0x3c] sm:$0xff]
      %v1034 = vld [vmem:[%s192 + $0x4c] sm:$0xff]
      %v1035 = vld [vmem:[%s192 + $0x54] sm:$0xff]
      %v1036 = vld [vmem:[%s192 + $0x64] sm:$0xff]
      %v1037 = vld [vmem:[%s192 + $0x6c] sm:$0xff]
      %v1038 = vld [vmem:[%s192 + $0x7c] sm:$0xff]
      %v1039 = vld [vmem:[%s192 + $0x84] sm:$0xff]
      %v1040 = vld [vmem:[%s192 + $0x94] sm:$0xff]
      %v1041 = vld [vmem:[%s192 + $0x9c] sm:$0xff]
      %v1042 = vld [vmem:[%s192 + $0xac] sm:$0xff]
      %v1043 = vld [vmem:[%s192 + $0xb4] sm:$0xff]
      %v1044 = vld [vmem:[%s192 + $0xc4] sm:$0xff]
      %v1045 = vld [vmem:[%s192 + $0xcc] sm:$0xff]
      %v1046 = vld [vmem:[%s192 + $0xdc] sm:$0xff]
      %v1047 = vld [vmem:[%s192 + $0xe4] sm:$0xff]
      %v1048 = vld [vmem:[%s192 + $0xf4] sm:$0xff]
      %v1049 = vld [vmem:[%s192 + $0xfc] sm:$0xff]
      %v1050 = vld [vmem:[%s192 + $0x10c] sm:$0xff]
      %v1051 = vld [vmem:[%s192 + $0x114] sm:$0xff]
      %v1052 = vld [vmem:[%s192 + $0x124] sm:$0xff]
      %v1053 = vld [vmem:[%s192 + $0x12c] sm:$0xff]
      %v1054 = vld [vmem:[%s192 + $0x13c] sm:$0xff]
      %v1055 = vld [vmem:[%s192 + $0x144] sm:$0xff]
      %v1056 = vld [vmem:[%s192 + $0x154] sm:$0xff]
      %v1057 = vld [vmem:[%s192 + $0x15c] sm:$0xff]
      %v1058 = vld [vmem:[%s192 + $0x16c] sm:$0xff]
      %v1059 = vld [vmem:[%s192 + $0x174] sm:$0xff]
      %v1060 = vpack.c.bf16 %v1029, %v1028
      %v1061 = vpack.c.bf16 %v1031, %v1030
      %v1062 = vpack.c.bf16 %v1033, %v1032
      %v1063 = vpack.c.bf16 %v1035, %v1034
      %v1064 = vpack.c.bf16 %v1037, %v1036
      %v1065 = vpack.c.bf16 %v1039, %v1038
      %v1066 = vpack.c.bf16 %v1041, %v1040
      %v1067 = vpack.c.bf16 %v1043, %v1042
      %v1068 = vpack.c.bf16 %v1045, %v1044
      %v1069 = vpack.c.bf16 %v1047, %v1046
      %v1070 = vpack.c.bf16 %v1049, %v1048
      %v1071 = vpack.c.bf16 %v1051, %v1050
      %v1072 = vpack.c.bf16 %v1053, %v1052
      %v1073 = vpack.c.bf16 %v1055, %v1054
      %v1074 = vpack.c.bf16 %v1057, %v1056
      %v1075 = vpack.c.bf16 %v1059, %v1058
      %s1076 = scalar_lea.vmem %s1, 8
      %v1077 = vld [vmem:[%s1076] sm:$0x3]
      %v1078 = vpack.c.bf16 %v1077, %v1077
      %v1080 = vsel %vm300, %v1060, 0
      %v1083 = vsel %vm300, %v1061, 0
      %v1086 = vsel %vm300, %v1062, 0
      %v1089 = vsel %vm300, %v1063, 0
      %v1092 = vsel %vm300, %v1064, 0
      %v1095 = vsel %vm300, %v1065, 0
      %v1098 = vsel %vm300, %v1066, 0
      %v1101 = vsel %vm300, %v1067, 0
      %v1104 = vsel %vm300, %v1068, 0
      %v1107 = vsel %vm300, %v1069, 0
      %v1110 = vsel %vm300, %v1070, 0
      %v1113 = vsel %vm300, %v1071, 0
      %v1116 = vsel %vm300, %v1072, 0
      %v1119 = vsel %vm300, %v1073, 0
      %v1122 = vsel %vm300, %v1074, 0
      %v1125 = vsel %vm300, %v1075, 0
      %v1128 = vsel %vm349, %v1078, 0
      %1130 = vmatpush.bf16.msra.mxu0 0
      %1131 = vmatpush.bf16.msra.mxu0 0
      %1132 = vmatpush.bf16.msra.mxu0 0
      %1133 = vmatpush.bf16.msra.mxu0 0
      %1134 = vmatpush.bf16.msra.mxu0 0
      %1135 = vmatpush.bf16.msra.mxu0 0
      %1136 = vmatpush.bf16.msra.mxu0 0
      %1137 = vmatpush.bf16.msra.mxu0 %v1128
      %1138 = vmatmul.bf16.gmra.mxu0 %v1080
      %v1139 = vpop.f32.mrf.mxu0
      %v1140 = vadd.f32 0.0, %v1139
      %v1141 = vpop.f32.mrf.mxu0
      %v1142 = vadd.f32 0.0, %v1141
      %1143 = vmatmul.bf16.gmra.mxu0 %v1083
      %v1144 = vpop.f32.mrf.mxu0
      %v1145 = vadd.f32 0.0, %v1144
      %v1146 = vpop.f32.mrf.mxu0
      %v1147 = vadd.f32 0.0, %v1146
      %1148 = vmatmul.bf16.gmra.mxu0 %v1086
      %v1149 = vpop.f32.mrf.mxu0
      %v1150 = vadd.f32 0.0, %v1149
      %v1151 = vpop.f32.mrf.mxu0
      %v1152 = vadd.f32 0.0, %v1151
      %1153 = vmatmul.bf16.gmra.mxu0 %v1089
      %v1154 = vpop.f32.mrf.mxu0
      %v1155 = vadd.f32 0.0, %v1154
      %v1156 = vpop.f32.mrf.mxu0
      %v1157 = vadd.f32 0.0, %v1156
      %1158 = vmatmul.bf16.gmra.mxu0 %v1092
      %v1159 = vpop.f32.mrf.mxu0
      %v1160 = vadd.f32 0.0, %v1159
      %v1161 = vpop.f32.mrf.mxu0
      %v1162 = vadd.f32 0.0, %v1161
      %1163 = vmatmul.bf16.gmra.mxu0 %v1095
      %v1164 = vpop.f32.mrf.mxu0
      %v1165 = vadd.f32 0.0, %v1164
      %v1166 = vpop.f32.mrf.mxu0
      %v1167 = vadd.f32 0.0, %v1166
      %1168 = vmatmul.bf16.gmra.mxu0 %v1098
      %v1169 = vpop.f32.mrf.mxu0
      %v1170 = vadd.f32 0.0, %v1169
      %v1171 = vpop.f32.mrf.mxu0
      %v1172 = vadd.f32 0.0, %v1171
      %1173 = vmatmul.bf16.gmra.mxu0 %v1101
      %v1174 = vpop.f32.mrf.mxu0
      %v1175 = vadd.f32 0.0, %v1174
      %v1176 = vpop.f32.mrf.mxu0
      %v1177 = vadd.f32 0.0, %v1176
      %1178 = vmatmul.bf16.gmra.mxu0 %v1104
      %v1179 = vpop.f32.mrf.mxu0
      %v1180 = vadd.f32 0.0, %v1179
      %v1181 = vpop.f32.mrf.mxu0
      %v1182 = vadd.f32 0.0, %v1181
      %1183 = vmatmul.bf16.gmra.mxu0 %v1107
      %v1184 = vpop.f32.mrf.mxu0
      %v1185 = vadd.f32 0.0, %v1184
      %v1186 = vpop.f32.mrf.mxu0
      %v1187 = vadd.f32 0.0, %v1186
      %1188 = vmatmul.bf16.gmra.mxu0 %v1110
      %v1189 = vpop.f32.mrf.mxu0
      %v1190 = vadd.f32 0.0, %v1189
      %v1191 = vpop.f32.mrf.mxu0
      %v1192 = vadd.f32 0.0, %v1191
      %1193 = vmatmul.bf16.gmra.mxu0 %v1113
      %v1194 = vpop.f32.mrf.mxu0
      %v1195 = vadd.f32 0.0, %v1194
      %v1196 = vpop.f32.mrf.mxu0
      %v1197 = vadd.f32 0.0, %v1196
      %1198 = vmatmul.bf16.gmra.mxu0 %v1116
      %v1199 = vpop.f32.mrf.mxu0
      %v1200 = vadd.f32 0.0, %v1199
      %v1201 = vpop.f32.mrf.mxu0
      %v1202 = vadd.f32 0.0, %v1201
      %1203 = vmatmul.bf16.gmra.mxu0 %v1119
      %v1204 = vpop.f32.mrf.mxu0
      %v1205 = vadd.f32 0.0, %v1204
      %v1206 = vpop.f32.mrf.mxu0
      %v1207 = vadd.f32 0.0, %v1206
      %1208 = vmatmul.bf16.gmra.mxu0 %v1122
      %v1209 = vpop.f32.mrf.mxu0
      %v1210 = vadd.f32 0.0, %v1209
      %v1211 = vpop.f32.mrf.mxu0
      %v1212 = vadd.f32 0.0, %v1211
      %1213 = vmatmul.bf16.gmra.mxu0 %v1125
      %v1214 = vpop.f32.mrf.mxu0
      %v1215 = vadd.f32 0.0, %v1214
      %v1216 = vpop.f32.mrf.mxu0
      %v1217 = vadd.f32 0.0, %v1216
      %1218 = vdwg.mxu0
      %v1219 = vadd.f32 %v996, %v1140
      %v1220 = vadd.f32 %v997, %v1142
      %v1221 = vadd.f32 %v998, %v1145
      %v1222 = vadd.f32 %v999, %v1147
      %v1223 = vadd.f32 %v1000, %v1150
      %v1224 = vadd.f32 %v1001, %v1152
      %v1225 = vadd.f32 %v1002, %v1155
      %v1226 = vadd.f32 %v1003, %v1157
      %v1227 = vadd.f32 %v1004, %v1160
      %v1228 = vadd.f32 %v1005, %v1162
      %v1229 = vadd.f32 %v1006, %v1165
      %v1230 = vadd.f32 %v1007, %v1167
      %v1231 = vadd.f32 %v1008, %v1170
      %v1232 = vadd.f32 %v1009, %v1172
      %v1233 = vadd.f32 %v1010, %v1175
      %v1234 = vadd.f32 %v1011, %v1177
      %v1235 = vadd.f32 %v1012, %v1180
      %v1236 = vadd.f32 %v1013, %v1182
      %v1237 = vadd.f32 %v1014, %v1185
      %v1238 = vadd.f32 %v1015, %v1187
      %v1239 = vadd.f32 %v1016, %v1190
      %v1240 = vadd.f32 %v1017, %v1192
      %v1241 = vadd.f32 %v1018, %v1195
      %v1242 = vadd.f32 %v1019, %v1197
      %v1243 = vadd.f32 %v1020, %v1200
      %v1244 = vadd.f32 %v1021, %v1202
      %v1245 = vadd.f32 %v1022, %v1205
      %v1246 = vadd.f32 %v1023, %v1207
      %v1247 = vadd.f32 %v1024, %v1210
      %v1248 = vadd.f32 %v1025, %v1212
      %v1249 = vadd.f32 %v1026, %v1215
      %v1250 = vadd.f32 %v1027, %v1217
      %s1251 = scalar_lea.vmem %s192, 24
      %v1252 = vld [vmem:[%s1251] sm:$0xff]
      %v1253 = vld [vmem:[%s1251 + $0x8] sm:$0xff]
      %v1254 = vld [vmem:[%s1251 + $0x18] sm:$0xff]
      %v1255 = vld [vmem:[%s1251 + $0x20] sm:$0xff]
      %v1256 = vld [vmem:[%s1251 + $0x30] sm:$0xff]
      %v1257 = vld [vmem:[%s1251 + $0x38] sm:$0xff]
      %v1258 = vld [vmem:[%s1251 + $0x48] sm:$0xff]
      %v1259 = vld [vmem:[%s1251 + $0x50] sm:$0xff]
      %v1260 = vld [vmem:[%s1251 + $0x60] sm:$0xff]
      %v1261 = vld [vmem:[%s1251 + $0x68] sm:$0xff]
      %v1262 = vld [vmem:[%s1251 + $0x78] sm:$0xff]
      %v1263 = vld [vmem:[%s1251 + $0x80] sm:$0xff]
      %v1264 = vld [vmem:[%s1251 + $0x90] sm:$0xff]
      %v1265 = vld [vmem:[%s1251 + $0x98] sm:$0xff]
      %v1266 = vld [vmem:[%s1251 + $0xa8] sm:$0xff]
      %v1267 = vld [vmem:[%s1251 + $0xb0] sm:$0xff]
      %v1268 = vld [vmem:[%s1251 + $0xc0] sm:$0xff]
      %v1269 = vld [vmem:[%s1251 + $0xc8] sm:$0xff]
      %v1270 = vld [vmem:[%s1251 + $0xd8] sm:$0xff]
      %v1271 = vld [vmem:[%s1251 + $0xe0] sm:$0xff]
      %v1272 = vld [vmem:[%s1251 + $0xf0] sm:$0xff]
      %v1273 = vld [vmem:[%s1251 + $0xf8] sm:$0xff]
      %v1274 = vld [vmem:[%s1251 + $0x108] sm:$0xff]
      %v1275 = vld [vmem:[%s1251 + $0x110] sm:$0xff]
      %v1276 = vld [vmem:[%s1251 + $0x120] sm:$0xff]
      %v1277 = vld [vmem:[%s1251 + $0x128] sm:$0xff]
      %v1278 = vld [vmem:[%s1251 + $0x138] sm:$0xff]
      %v1279 = vld [vmem:[%s1251 + $0x140] sm:$0xff]
      %v1280 = vld [vmem:[%s1251 + $0x150] sm:$0xff]
      %v1281 = vld [vmem:[%s1251 + $0x158] sm:$0xff]
      %v1282 = vld [vmem:[%s1251 + $0x168] sm:$0xff]
      %v1283 = vld [vmem:[%s1251 + $0x170] sm:$0xff]
      %v1284 = vpack.c.bf16 %v1253, %v1252
      %v1285 = vpack.c.bf16 %v1255, %v1254
      %v1286 = vpack.c.bf16 %v1257, %v1256
      %v1287 = vpack.c.bf16 %v1259, %v1258
      %v1288 = vpack.c.bf16 %v1261, %v1260
      %v1289 = vpack.c.bf16 %v1263, %v1262
      %v1290 = vpack.c.bf16 %v1265, %v1264
      %v1291 = vpack.c.bf16 %v1267, %v1266
      %v1292 = vpack.c.bf16 %v1269, %v1268
      %v1293 = vpack.c.bf16 %v1271, %v1270
      %v1294 = vpack.c.bf16 %v1273, %v1272
      %v1295 = vpack.c.bf16 %v1275, %v1274
      %v1296 = vpack.c.bf16 %v1277, %v1276
      %v1297 = vpack.c.bf16 %v1279, %v1278
      %v1298 = vpack.c.bf16 %v1281, %v1280
      %v1299 = vpack.c.bf16 %v1283, %v1282
      %s1300 = scalar_lea.vmem %s1, 10
      %v1301 = vld [vmem:[%s1300] sm:$0x3]
      %v1302 = vpack.c.bf16 %v1301, %v1301
      %v1304 = vsel %vm300, %v1284, 0
      %v1307 = vsel %vm300, %v1285, 0
      %v1310 = vsel %vm300, %v1286, 0
      %v1313 = vsel %vm300, %v1287, 0
      %v1316 = vsel %vm300, %v1288, 0
      %v1319 = vsel %vm300, %v1289, 0
      %v1322 = vsel %vm300, %v1290, 0
      %v1325 = vsel %vm300, %v1291, 0
      %v1328 = vsel %vm300, %v1292, 0
      %v1331 = vsel %vm300, %v1293, 0
      %v1334 = vsel %vm300, %v1294, 0
      %v1337 = vsel %vm300, %v1295, 0
      %v1340 = vsel %vm300, %v1296, 0
      %v1343 = vsel %vm300, %v1297, 0
      %v1346 = vsel %vm300, %v1298, 0
      %v1349 = vsel %vm300, %v1299, 0
      %v1352 = vsel %vm349, %v1302, 0
      %1354 = vmatpush.bf16.msra.mxu0 0
      %1355 = vmatpush.bf16.msra.mxu0 0
      %1356 = vmatpush.bf16.msra.mxu0 0
      %1357 = vmatpush.bf16.msra.mxu0 0
      %1358 = vmatpush.bf16.msra.mxu0 0
      %1359 = vmatpush.bf16.msra.mxu0 0
      %1360 = vmatpush.bf16.msra.mxu0 0
      %1361 = vmatpush.bf16.msra.mxu0 %v1352
      %1362 = vmatmul.bf16.gmra.mxu0 %v1304
      %v1363 = vpop.f32.mrf.mxu0
      %v1364 = vadd.f32 0.0, %v1363
      %v1365 = vpop.f32.mrf.mxu0
      %v1366 = vadd.f32 0.0, %v1365
      %1367 = vmatmul.bf16.gmra.mxu0 %v1307
      %v1368 = vpop.f32.mrf.mxu0
      %v1369 = vadd.f32 0.0, %v1368
      %v1370 = vpop.f32.mrf.mxu0
      %v1371 = vadd.f32 0.0, %v1370
      %1372 = vmatmul.bf16.gmra.mxu0 %v1310
      %v1373 = vpop.f32.mrf.mxu0
      %v1374 = vadd.f32 0.0, %v1373
      %v1375 = vpop.f32.mrf.mxu0
      %v1376 = vadd.f32 0.0, %v1375
      %1377 = vmatmul.bf16.gmra.mxu0 %v1313
      %v1378 = vpop.f32.mrf.mxu0
      %v1379 = vadd.f32 0.0, %v1378
      %v1380 = vpop.f32.mrf.mxu0
      %v1381 = vadd.f32 0.0, %v1380
      %1382 = vmatmul.bf16.gmra.mxu0 %v1316
      %v1383 = vpop.f32.mrf.mxu0
      %v1384 = vadd.f32 0.0, %v1383
      %v1385 = vpop.f32.mrf.mxu0
      %v1386 = vadd.f32 0.0, %v1385
      %1387 = vmatmul.bf16.gmra.mxu0 %v1319
      %v1388 = vpop.f32.mrf.mxu0
      %v1389 = vadd.f32 0.0, %v1388
      %v1390 = vpop.f32.mrf.mxu0
      %v1391 = vadd.f32 0.0, %v1390
      %1392 = vmatmul.bf16.gmra.mxu0 %v1322
      %v1393 = vpop.f32.mrf.mxu0
      %v1394 = vadd.f32 0.0, %v1393
      %v1395 = vpop.f32.mrf.mxu0
      %v1396 = vadd.f32 0.0, %v1395
      %1397 = vmatmul.bf16.gmra.mxu0 %v1325
      %v1398 = vpop.f32.mrf.mxu0
      %v1399 = vadd.f32 0.0, %v1398
      %v1400 = vpop.f32.mrf.mxu0
      %v1401 = vadd.f32 0.0, %v1400
      %1402 = vmatmul.bf16.gmra.mxu0 %v1328
      %v1403 = vpop.f32.mrf.mxu0
      %v1404 = vadd.f32 0.0, %v1403
      %v1405 = vpop.f32.mrf.mxu0
      %v1406 = vadd.f32 0.0, %v1405
      %1407 = vmatmul.bf16.gmra.mxu0 %v1331
      %v1408 = vpop.f32.mrf.mxu0
      %v1409 = vadd.f32 0.0, %v1408
      %v1410 = vpop.f32.mrf.mxu0
      %v1411 = vadd.f32 0.0, %v1410
      %1412 = vmatmul.bf16.gmra.mxu0 %v1334
      %v1413 = vpop.f32.mrf.mxu0
      %v1414 = vadd.f32 0.0, %v1413
      %v1415 = vpop.f32.mrf.mxu0
      %v1416 = vadd.f32 0.0, %v1415
      %1417 = vmatmul.bf16.gmra.mxu0 %v1337
      %v1418 = vpop.f32.mrf.mxu0
      %v1419 = vadd.f32 0.0, %v1418
      %v1420 = vpop.f32.mrf.mxu0
      %v1421 = vadd.f32 0.0, %v1420
      %1422 = vmatmul.bf16.gmra.mxu0 %v1340
      %v1423 = vpop.f32.mrf.mxu0
      %v1424 = vadd.f32 0.0, %v1423
      %v1425 = vpop.f32.mrf.mxu0
      %v1426 = vadd.f32 0.0, %v1425
      %1427 = vmatmul.bf16.gmra.mxu0 %v1343
      %v1428 = vpop.f32.mrf.mxu0
      %v1429 = vadd.f32 0.0, %v1428
      %v1430 = vpop.f32.mrf.mxu0
      %v1431 = vadd.f32 0.0, %v1430
      %1432 = vmatmul.bf16.gmra.mxu0 %v1346
      %v1433 = vpop.f32.mrf.mxu0
      %v1434 = vadd.f32 0.0, %v1433
      %v1435 = vpop.f32.mrf.mxu0
      %v1436 = vadd.f32 0.0, %v1435
      %1437 = vmatmul.bf16.gmra.mxu0 %v1349
      %v1438 = vpop.f32.mrf.mxu0
      %v1439 = vadd.f32 0.0, %v1438
      %v1440 = vpop.f32.mrf.mxu0
      %v1441 = vadd.f32 0.0, %v1440
      %1442 = vdwg.mxu0
      %v1443 = vadd.f32 %v1219, %v1364
      %v1444 = vadd.f32 %v1220, %v1366
      %v1445 = vadd.f32 %v1221, %v1369
      %v1446 = vadd.f32 %v1222, %v1371
      %v1447 = vadd.f32 %v1223, %v1374
      %v1448 = vadd.f32 %v1224, %v1376
      %v1449 = vadd.f32 %v1225, %v1379
      %v1450 = vadd.f32 %v1226, %v1381
      %v1451 = vadd.f32 %v1227, %v1384
      %v1452 = vadd.f32 %v1228, %v1386
      %v1453 = vadd.f32 %v1229, %v1389
      %v1454 = vadd.f32 %v1230, %v1391
      %v1455 = vadd.f32 %v1231, %v1394
      %v1456 = vadd.f32 %v1232, %v1396
      %v1457 = vadd.f32 %v1233, %v1399
      %v1458 = vadd.f32 %v1234, %v1401
      %v1459 = vadd.f32 %v1235, %v1404
      %v1460 = vadd.f32 %v1236, %v1406
      %v1461 = vadd.f32 %v1237, %v1409
      %v1462 = vadd.f32 %v1238, %v1411
      %v1463 = vadd.f32 %v1239, %v1414
      %v1464 = vadd.f32 %v1240, %v1416
      %v1465 = vadd.f32 %v1241, %v1419
      %v1466 = vadd.f32 %v1242, %v1421
      %v1467 = vadd.f32 %v1243, %v1424
      %v1468 = vadd.f32 %v1244, %v1426
      %v1469 = vadd.f32 %v1245, %v1429
      %v1470 = vadd.f32 %v1246, %v1431
      %v1471 = vadd.f32 %v1247, %v1434
      %v1472 = vadd.f32 %v1248, %v1436
      %v1473 = vadd.f32 %v1249, %v1439
      %v1474 = vadd.f32 %v1250, %v1441
      %v1475 = vld [vmem:[%s1251 + $0x1] sm:$0xff]
      %v1476 = vld [vmem:[%s1251 + $0x9] sm:$0xff]
      %v1477 = vld [vmem:[%s1251 + $0x19] sm:$0xff]
      %v1478 = vld [vmem:[%s1251 + $0x21] sm:$0xff]
      %v1479 = vld [vmem:[%s1251 + $0x31] sm:$0xff]
      %v1480 = vld [vmem:[%s1251 + $0x39] sm:$0xff]
      %v1481 = vld [vmem:[%s1251 + $0x49] sm:$0xff]
      %v1482 = vld [vmem:[%s1251 + $0x51] sm:$0xff]
      %v1483 = vld [vmem:[%s1251 + $0x61] sm:$0xff]
      %v1484 = vld [vmem:[%s1251 + $0x69] sm:$0xff]
      %v1485 = vld [vmem:[%s1251 + $0x79] sm:$0xff]
      %v1486 = vld [vmem:[%s1251 + $0x81] sm:$0xff]
      %v1487 = vld [vmem:[%s1251 + $0x91] sm:$0xff]
      %v1488 = vld [vmem:[%s1251 + $0x99] sm:$0xff]
      %v1489 = vld [vmem:[%s1251 + $0xa9] sm:$0xff]
      %v1490 = vld [vmem:[%s1251 + $0xb1] sm:$0xff]
      %v1491 = vld [vmem:[%s1251 + $0xc1] sm:$0xff]
      %v1492 = vld [vmem:[%s1251 + $0xc9] sm:$0xff]
      %v1493 = vld [vmem:[%s1251 + $0xd9] sm:$0xff]
      %v1494 = vld [vmem:[%s1251 + $0xe1] sm:$0xff]
      %v1495 = vld [vmem:[%s1251 + $0xf1] sm:$0xff]
      %v1496 = vld [vmem:[%s1251 + $0xf9] sm:$0xff]
      %v1497 = vld [vmem:[%s1251 + $0x109] sm:$0xff]
      %v1498 = vld [vmem:[%s1251 + $0x111] sm:$0xff]
      %v1499 = vld [vmem:[%s1251 + $0x121] sm:$0xff]
      %v1500 = vld [vmem:[%s1251 + $0x129] sm:$0xff]
      %v1501 = vld [vmem:[%s1251 + $0x139] sm:$0xff]
      %v1502 = vld [vmem:[%s1251 + $0x141] sm:$0xff]
      %v1503 = vld [vmem:[%s1251 + $0x151] sm:$0xff]
      %v1504 = vld [vmem:[%s1251 + $0x159] sm:$0xff]
      %v1505 = vld [vmem:[%s1251 + $0x169] sm:$0xff]
      %v1506 = vld [vmem:[%s1251 + $0x171] sm:$0xff]
      %v1507 = vpack.c.bf16 %v1476, %v1475
      %v1508 = vpack.c.bf16 %v1478, %v1477
      %v1509 = vpack.c.bf16 %v1480, %v1479
      %v1510 = vpack.c.bf16 %v1482, %v1481
      %v1511 = vpack.c.bf16 %v1484, %v1483
      %v1512 = vpack.c.bf16 %v1486, %v1485
      %v1513 = vpack.c.bf16 %v1488, %v1487
      %v1514 = vpack.c.bf16 %v1490, %v1489
      %v1515 = vpack.c.bf16 %v1492, %v1491
      %v1516 = vpack.c.bf16 %v1494, %v1493
      %v1517 = vpack.c.bf16 %v1496, %v1495
      %v1518 = vpack.c.bf16 %v1498, %v1497
      %v1519 = vpack.c.bf16 %v1500, %v1499
      %v1520 = vpack.c.bf16 %v1502, %v1501
      %v1521 = vpack.c.bf16 %v1504, %v1503
      %v1522 = vpack.c.bf16 %v1506, %v1505
      %s1523 = scalar_lea.vmem %s1, 12
      %v1524 = vld [vmem:[%s1523] sm:$0x3]
      %v1525 = vpack.c.bf16 %v1524, %v1524
      %v1527 = vsel %vm300, %v1507, 0
      %v1530 = vsel %vm300, %v1508, 0
      %v1533 = vsel %vm300, %v1509, 0
      %v1536 = vsel %vm300, %v1510, 0
      %v1539 = vsel %vm300, %v1511, 0
      %v1542 = vsel %vm300, %v1512, 0
      %v1545 = vsel %vm300, %v1513, 0
      %v1548 = vsel %vm300, %v1514, 0
      %v1551 = vsel %vm300, %v1515, 0
      %v1554 = vsel %vm300, %v1516, 0
      %v1557 = vsel %vm300, %v1517, 0
      %v1560 = vsel %vm300, %v1518, 0
      %v1563 = vsel %vm300, %v1519, 0
      %v1566 = vsel %vm300, %v1520, 0
      %v1569 = vsel %vm300, %v1521, 0
      %v1572 = vsel %vm300, %v1522, 0
      %v1575 = vsel %vm349, %v1525, 0
      %1577 = vmatpush.bf16.msra.mxu0 0
      %1578 = vmatpush.bf16.msra.mxu0 0
      %1579 = vmatpush.bf16.msra.mxu0 0
      %1580 = vmatpush.bf16.msra.mxu0 0
      %1581 = vmatpush.bf16.msra.mxu0 0
      %1582 = vmatpush.bf16.msra.mxu0 0
      %1583 = vmatpush.bf16.msra.mxu0 0
      %1584 = vmatpush.bf16.msra.mxu0 %v1575
      %1585 = vmatmul.bf16.gmra.mxu0 %v1527
      %v1586 = vpop.f32.mrf.mxu0
      %v1587 = vadd.f32 0.0, %v1586
      %v1588 = vpop.f32.mrf.mxu0
      %v1589 = vadd.f32 0.0, %v1588
      %1590 = vmatmul.bf16.gmra.mxu0 %v1530
      %v1591 = vpop.f32.mrf.mxu0
      %v1592 = vadd.f32 0.0, %v1591
      %v1593 = vpop.f32.mrf.mxu0
      %v1594 = vadd.f32 0.0, %v1593
      %1595 = vmatmul.bf16.gmra.mxu0 %v1533
      %v1596 = vpop.f32.mrf.mxu0
      %v1597 = vadd.f32 0.0, %v1596
      %v1598 = vpop.f32.mrf.mxu0
      %v1599 = vadd.f32 0.0, %v1598
      %1600 = vmatmul.bf16.gmra.mxu0 %v1536
      %v1601 = vpop.f32.mrf.mxu0
      %v1602 = vadd.f32 0.0, %v1601
      %v1603 = vpop.f32.mrf.mxu0
      %v1604 = vadd.f32 0.0, %v1603
      %1605 = vmatmul.bf16.gmra.mxu0 %v1539
      %v1606 = vpop.f32.mrf.mxu0
      %v1607 = vadd.f32 0.0, %v1606
      %v1608 = vpop.f32.mrf.mxu0
      %v1609 = vadd.f32 0.0, %v1608
      %1610 = vmatmul.bf16.gmra.mxu0 %v1542
      %v1611 = vpop.f32.mrf.mxu0
      %v1612 = vadd.f32 0.0, %v1611
      %v1613 = vpop.f32.mrf.mxu0
      %v1614 = vadd.f32 0.0, %v1613
      %1615 = vmatmul.bf16.gmra.mxu0 %v1545
      %v1616 = vpop.f32.mrf.mxu0
      %v1617 = vadd.f32 0.0, %v1616
      %v1618 = vpop.f32.mrf.mxu0
      %v1619 = vadd.f32 0.0, %v1618
      %1620 = vmatmul.bf16.gmra.mxu0 %v1548
      %v1621 = vpop.f32.mrf.mxu0
      %v1622 = vadd.f32 0.0, %v1621
      %v1623 = vpop.f32.mrf.mxu0
      %v1624 = vadd.f32 0.0, %v1623
      %1625 = vmatmul.bf16.gmra.mxu0 %v1551
      %v1626 = vpop.f32.mrf.mxu0
      %v1627 = vadd.f32 0.0, %v1626
      %v1628 = vpop.f32.mrf.mxu0
      %v1629 = vadd.f32 0.0, %v1628
      %1630 = vmatmul.bf16.gmra.mxu0 %v1554
      %v1631 = vpop.f32.mrf.mxu0
      %v1632 = vadd.f32 0.0, %v1631
      %v1633 = vpop.f32.mrf.mxu0
      %v1634 = vadd.f32 0.0, %v1633
      %1635 = vmatmul.bf16.gmra.mxu0 %v1557
      %v1636 = vpop.f32.mrf.mxu0
      %v1637 = vadd.f32 0.0, %v1636
      %v1638 = vpop.f32.mrf.mxu0
      %v1639 = vadd.f32 0.0, %v1638
      %1640 = vmatmul.bf16.gmra.mxu0 %v1560
      %v1641 = vpop.f32.mrf.mxu0
      %v1642 = vadd.f32 0.0, %v1641
      %v1643 = vpop.f32.mrf.mxu0
      %v1644 = vadd.f32 0.0, %v1643
      %1645 = vmatmul.bf16.gmra.mxu0 %v1563
      %v1646 = vpop.f32.mrf.mxu0
      %v1647 = vadd.f32 0.0, %v1646
      %v1648 = vpop.f32.mrf.mxu0
      %v1649 = vadd.f32 0.0, %v1648
      %1650 = vmatmul.bf16.gmra.mxu0 %v1566
      %v1651 = vpop.f32.mrf.mxu0
      %v1652 = vadd.f32 0.0, %v1651
      %v1653 = vpop.f32.mrf.mxu0
      %v1654 = vadd.f32 0.0, %v1653
      %1655 = vmatmul.bf16.gmra.mxu0 %v1569
      %v1656 = vpop.f32.mrf.mxu0
      %v1657 = vadd.f32 0.0, %v1656
      %v1658 = vpop.f32.mrf.mxu0
      %v1659 = vadd.f32 0.0, %v1658
      %1660 = vmatmul.bf16.gmra.mxu0 %v1572
      %v1661 = vpop.f32.mrf.mxu0
      %v1662 = vadd.f32 0.0, %v1661
      %v1663 = vpop.f32.mrf.mxu0
      %v1664 = vadd.f32 0.0, %v1663
      %1665 = vdwg.mxu0
      %v1666 = vadd.f32 %v1443, %v1587
      %v1667 = vadd.f32 %v1444, %v1589
      %v1668 = vadd.f32 %v1445, %v1592
      %v1669 = vadd.f32 %v1446, %v1594
      %v1670 = vadd.f32 %v1447, %v1597
      %v1671 = vadd.f32 %v1448, %v1599
      %v1672 = vadd.f32 %v1449, %v1602
      %v1673 = vadd.f32 %v1450, %v1604
      %v1674 = vadd.f32 %v1451, %v1607
      %v1675 = vadd.f32 %v1452, %v1609
      %v1676 = vadd.f32 %v1453, %v1612
      %v1677 = vadd.f32 %v1454, %v1614
      %v1678 = vadd.f32 %v1455, %v1617
      %v1679 = vadd.f32 %v1456, %v1619
      %v1680 = vadd.f32 %v1457, %v1622
      %v1681 = vadd.f32 %v1458, %v1624
      %v1682 = vadd.f32 %v1459, %v1627
      %v1683 = vadd.f32 %v1460, %v1629
      %v1684 = vadd.f32 %v1461, %v1632
      %v1685 = vadd.f32 %v1462, %v1634
      %v1686 = vadd.f32 %v1463, %v1637
      %v1687 = vadd.f32 %v1464, %v1639
      %v1688 = vadd.f32 %v1465, %v1642
      %v1689 = vadd.f32 %v1466, %v1644
      %v1690 = vadd.f32 %v1467, %v1647
      %v1691 = vadd.f32 %v1468, %v1649
      %v1692 = vadd.f32 %v1469, %v1652
      %v1693 = vadd.f32 %v1470, %v1654
      %v1694 = vadd.f32 %v1471, %v1657
      %v1695 = vadd.f32 %v1472, %v1659
      %v1696 = vadd.f32 %v1473, %v1662
      %v1697 = vadd.f32 %v1474, %v1664
      %v1698 = vld [vmem:[%s1251 + $0x2] sm:$0xff]
      %v1699 = vld [vmem:[%s1251 + $0xa] sm:$0xff]
      %v1700 = vld [vmem:[%s1251 + $0x1a] sm:$0xff]
      %v1701 = vld [vmem:[%s1251 + $0x22] sm:$0xff]
      %v1702 = vld [vmem:[%s1251 + $0x32] sm:$0xff]
      %v1703 = vld [vmem:[%s1251 + $0x3a] sm:$0xff]
      %v1704 = vld [vmem:[%s1251 + $0x4a] sm:$0xff]
      %v1705 = vld [vmem:[%s1251 + $0x52] sm:$0xff]
      %v1706 = vld [vmem:[%s1251 + $0x62] sm:$0xff]
      %v1707 = vld [vmem:[%s1251 + $0x6a] sm:$0xff]
      %v1708 = vld [vmem:[%s1251 + $0x7a] sm:$0xff]
      %v1709 = vld [vmem:[%s1251 + $0x82] sm:$0xff]
      %v1710 = vld [vmem:[%s1251 + $0x92] sm:$0xff]
      %v1711 = vld [vmem:[%s1251 + $0x9a] sm:$0xff]
      %v1712 = vld [vmem:[%s1251 + $0xaa] sm:$0xff]
      %v1713 = vld [vmem:[%s1251 + $0xb2] sm:$0xff]
      %v1714 = vld [vmem:[%s1251 + $0xc2] sm:$0xff]
      %v1715 = vld [vmem:[%s1251 + $0xca] sm:$0xff]
      %v1716 = vld [vmem:[%s1251 + $0xda] sm:$0xff]
      %v1717 = vld [vmem:[%s1251 + $0xe2] sm:$0xff]
      %v1718 = vld [vmem:[%s1251 + $0xf2] sm:$0xff]
      %v1719 = vld [vmem:[%s1251 + $0xfa] sm:$0xff]
      %v1720 = vld [vmem:[%s1251 + $0x10a] sm:$0xff]
      %v1721 = vld [vmem:[%s1251 + $0x112] sm:$0xff]
      %v1722 = vld [vmem:[%s1251 + $0x122] sm:$0xff]
      %v1723 = vld [vmem:[%s1251 + $0x12a] sm:$0xff]
      %v1724 = vld [vmem:[%s1251 + $0x13a] sm:$0xff]
      %v1725 = vld [vmem:[%s1251 + $0x142] sm:$0xff]
      %v1726 = vld [vmem:[%s1251 + $0x152] sm:$0xff]
      %v1727 = vld [vmem:[%s1251 + $0x15a] sm:$0xff]
      %v1728 = vld [vmem:[%s1251 + $0x16a] sm:$0xff]
      %v1729 = vld [vmem:[%s1251 + $0x172] sm:$0xff]
      %v1730 = vpack.c.bf16 %v1699, %v1698
      %v1731 = vpack.c.bf16 %v1701, %v1700
      %v1732 = vpack.c.bf16 %v1703, %v1702
      %v1733 = vpack.c.bf16 %v1705, %v1704
      %v1734 = vpack.c.bf16 %v1707, %v1706
      %v1735 = vpack.c.bf16 %v1709, %v1708
      %v1736 = vpack.c.bf16 %v1711, %v1710
      %v1737 = vpack.c.bf16 %v1713, %v1712
      %v1738 = vpack.c.bf16 %v1715, %v1714
      %v1739 = vpack.c.bf16 %v1717, %v1716
      %v1740 = vpack.c.bf16 %v1719, %v1718
      %v1741 = vpack.c.bf16 %v1721, %v1720
      %v1742 = vpack.c.bf16 %v1723, %v1722
      %v1743 = vpack.c.bf16 %v1725, %v1724
      %v1744 = vpack.c.bf16 %v1727, %v1726
      %v1745 = vpack.c.bf16 %v1729, %v1728
      %s1746 = scalar_lea.vmem %s1, 14
      %v1747 = vld [vmem:[%s1746] sm:$0x3]
      %v1748 = vpack.c.bf16 %v1747, %v1747
      %v1750 = vsel %vm300, %v1730, 0
      %v1753 = vsel %vm300, %v1731, 0
      %v1756 = vsel %vm300, %v1732, 0
      %v1759 = vsel %vm300, %v1733, 0
      %v1762 = vsel %vm300, %v1734, 0
      %v1765 = vsel %vm300, %v1735, 0
      %v1768 = vsel %vm300, %v1736, 0
      %v1771 = vsel %vm300, %v1737, 0
      %v1774 = vsel %vm300, %v1738, 0
      %v1777 = vsel %vm300, %v1739, 0
      %v1780 = vsel %vm300, %v1740, 0
      %v1783 = vsel %vm300, %v1741, 0
      %v1786 = vsel %vm300, %v1742, 0
      %v1789 = vsel %vm300, %v1743, 0
      %v1792 = vsel %vm300, %v1744, 0
      %v1795 = vsel %vm300, %v1745, 0
      %v1798 = vsel %vm349, %v1748, 0
      %1800 = vmatpush.bf16.msra.mxu0 0
      %1801 = vmatpush.bf16.msra.mxu0 0
      %1802 = vmatpush.bf16.msra.mxu0 0
      %1803 = vmatpush.bf16.msra.mxu0 0
      %1804 = vmatpush.bf16.msra.mxu0 0
      %1805 = vmatpush.bf16.msra.mxu0 0
      %1806 = vmatpush.bf16.msra.mxu0 0
      %1807 = vmatpush.bf16.msra.mxu0 %v1798
      %1808 = vmatmul.bf16.gmra.mxu0 %v1750
      %v1809 = vpop.f32.mrf.mxu0
      %v1810 = vadd.f32 0.0, %v1809
      %v1811 = vpop.f32.mrf.mxu0
      %v1812 = vadd.f32 0.0, %v1811
      %1813 = vmatmul.bf16.gmra.mxu0 %v1753
      %v1814 = vpop.f32.mrf.mxu0
      %v1815 = vadd.f32 0.0, %v1814
      %v1816 = vpop.f32.mrf.mxu0
      %v1817 = vadd.f32 0.0, %v1816
      %1818 = vmatmul.bf16.gmra.mxu0 %v1756
      %v1819 = vpop.f32.mrf.mxu0
      %v1820 = vadd.f32 0.0, %v1819
      %v1821 = vpop.f32.mrf.mxu0
      %v1822 = vadd.f32 0.0, %v1821
      %1823 = vmatmul.bf16.gmra.mxu0 %v1759
      %v1824 = vpop.f32.mrf.mxu0
      %v1825 = vadd.f32 0.0, %v1824
      %v1826 = vpop.f32.mrf.mxu0
      %v1827 = vadd.f32 0.0, %v1826
      %1828 = vmatmul.bf16.gmra.mxu0 %v1762
      %v1829 = vpop.f32.mrf.mxu0
      %v1830 = vadd.f32 0.0, %v1829
      %v1831 = vpop.f32.mrf.mxu0
      %v1832 = vadd.f32 0.0, %v1831
      %1833 = vmatmul.bf16.gmra.mxu0 %v1765
      %v1834 = vpop.f32.mrf.mxu0
      %v1835 = vadd.f32 0.0, %v1834
      %v1836 = vpop.f32.mrf.mxu0
      %v1837 = vadd.f32 0.0, %v1836
      %1838 = vmatmul.bf16.gmra.mxu0 %v1768
      %v1839 = vpop.f32.mrf.mxu0
      %v1840 = vadd.f32 0.0, %v1839
      %v1841 = vpop.f32.mrf.mxu0
      %v1842 = vadd.f32 0.0, %v1841
      %1843 = vmatmul.bf16.gmra.mxu0 %v1771
      %v1844 = vpop.f32.mrf.mxu0
      %v1845 = vadd.f32 0.0, %v1844
      %v1846 = vpop.f32.mrf.mxu0
      %v1847 = vadd.f32 0.0, %v1846
      %1848 = vmatmul.bf16.gmra.mxu0 %v1774
      %v1849 = vpop.f32.mrf.mxu0
      %v1850 = vadd.f32 0.0, %v1849
      %v1851 = vpop.f32.mrf.mxu0
      %v1852 = vadd.f32 0.0, %v1851
      %1853 = vmatmul.bf16.gmra.mxu0 %v1777
      %v1854 = vpop.f32.mrf.mxu0
      %v1855 = vadd.f32 0.0, %v1854
      %v1856 = vpop.f32.mrf.mxu0
      %v1857 = vadd.f32 0.0, %v1856
      %1858 = vmatmul.bf16.gmra.mxu0 %v1780
      %v1859 = vpop.f32.mrf.mxu0
      %v1860 = vadd.f32 0.0, %v1859
      %v1861 = vpop.f32.mrf.mxu0
      %v1862 = vadd.f32 0.0, %v1861
      %1863 = vmatmul.bf16.gmra.mxu0 %v1783
      %v1864 = vpop.f32.mrf.mxu0
      %v1865 = vadd.f32 0.0, %v1864
      %v1866 = vpop.f32.mrf.mxu0
      %v1867 = vadd.f32 0.0, %v1866
      %1868 = vmatmul.bf16.gmra.mxu0 %v1786
      %v1869 = vpop.f32.mrf.mxu0
      %v1870 = vadd.f32 0.0, %v1869
      %v1871 = vpop.f32.mrf.mxu0
      %v1872 = vadd.f32 0.0, %v1871
      %1873 = vmatmul.bf16.gmra.mxu0 %v1789
      %v1874 = vpop.f32.mrf.mxu0
      %v1875 = vadd.f32 0.0, %v1874
      %v1876 = vpop.f32.mrf.mxu0
      %v1877 = vadd.f32 0.0, %v1876
      %1878 = vmatmul.bf16.gmra.mxu0 %v1792
      %v1879 = vpop.f32.mrf.mxu0
      %v1880 = vadd.f32 0.0, %v1879
      %v1881 = vpop.f32.mrf.mxu0
      %v1882 = vadd.f32 0.0, %v1881
      %1883 = vmatmul.bf16.gmra.mxu0 %v1795
      %v1884 = vpop.f32.mrf.mxu0
      %v1885 = vadd.f32 0.0, %v1884
      %v1886 = vpop.f32.mrf.mxu0
      %v1887 = vadd.f32 0.0, %v1886
      %1888 = vdwg.mxu0
      %v1889 = vadd.f32 %v1666, %v1810
      %v1890 = vadd.f32 %v1667, %v1812
      %v1891 = vadd.f32 %v1668, %v1815
      %v1892 = vadd.f32 %v1669, %v1817
      %v1893 = vadd.f32 %v1670, %v1820
      %v1894 = vadd.f32 %v1671, %v1822
      %v1895 = vadd.f32 %v1672, %v1825
      %v1896 = vadd.f32 %v1673, %v1827
      %v1897 = vadd.f32 %v1674, %v1830
      %v1898 = vadd.f32 %v1675, %v1832
      %v1899 = vadd.f32 %v1676, %v1835
      %v1900 = vadd.f32 %v1677, %v1837
      %v1901 = vadd.f32 %v1678, %v1840
      %v1902 = vadd.f32 %v1679, %v1842
      %v1903 = vadd.f32 %v1680, %v1845
      %v1904 = vadd.f32 %v1681, %v1847
      %v1905 = vadd.f32 %v1682, %v1850
      %v1906 = vadd.f32 %v1683, %v1852
      %v1907 = vadd.f32 %v1684, %v1855
      %v1908 = vadd.f32 %v1685, %v1857
      %v1909 = vadd.f32 %v1686, %v1860
      %v1910 = vadd.f32 %v1687, %v1862
      %v1911 = vadd.f32 %v1688, %v1865
      %v1912 = vadd.f32 %v1689, %v1867
      %v1913 = vadd.f32 %v1690, %v1870
      %v1914 = vadd.f32 %v1691, %v1872
      %v1915 = vadd.f32 %v1692, %v1875
      %v1916 = vadd.f32 %v1693, %v1877
      %v1917 = vadd.f32 %v1694, %v1880
      %v1918 = vadd.f32 %v1695, %v1882
      %v1919 = vadd.f32 %v1696, %v1885
      %v1920 = vadd.f32 %v1697, %v1887
      %v1921 = vld [vmem:[%s1251 + $0x3] sm:$0xff]
      %v1922 = vld [vmem:[%s1251 + $0xb] sm:$0xff]
      %v1923 = vld [vmem:[%s1251 + $0x1b] sm:$0xff]
      %v1924 = vld [vmem:[%s1251 + $0x23] sm:$0xff]
      %v1925 = vld [vmem:[%s1251 + $0x33] sm:$0xff]
      %v1926 = vld [vmem:[%s1251 + $0x3b] sm:$0xff]
      %v1927 = vld [vmem:[%s1251 + $0x4b] sm:$0xff]
      %v1928 = vld [vmem:[%s1251 + $0x53] sm:$0xff]
      %v1929 = vld [vmem:[%s1251 + $0x63] sm:$0xff]
      %v1930 = vld [vmem:[%s1251 + $0x6b] sm:$0xff]
      %v1931 = vld [vmem:[%s1251 + $0x7b] sm:$0xff]
      %v1932 = vld [vmem:[%s1251 + $0x83] sm:$0xff]
      %v1933 = vld [vmem:[%s1251 + $0x93] sm:$0xff]
      %v1934 = vld [vmem:[%s1251 + $0x9b] sm:$0xff]
      %v1935 = vld [vmem:[%s1251 + $0xab] sm:$0xff]
      %v1936 = vld [vmem:[%s1251 + $0xb3] sm:$0xff]
      %v1937 = vld [vmem:[%s1251 + $0xc3] sm:$0xff]
      %v1938 = vld [vmem:[%s1251 + $0xcb] sm:$0xff]
      %v1939 = vld [vmem:[%s1251 + $0xdb] sm:$0xff]
      %v1940 = vld [vmem:[%s1251 + $0xe3] sm:$0xff]
      %v1941 = vld [vmem:[%s1251 + $0xf3] sm:$0xff]
      %v1942 = vld [vmem:[%s1251 + $0xfb] sm:$0xff]
      %v1943 = vld [vmem:[%s1251 + $0x10b] sm:$0xff]
      %v1944 = vld [vmem:[%s1251 + $0x113] sm:$0xff]
      %v1945 = vld [vmem:[%s1251 + $0x123] sm:$0xff]
      %v1946 = vld [vmem:[%s1251 + $0x12b] sm:$0xff]
      %v1947 = vld [vmem:[%s1251 + $0x13b] sm:$0xff]
      %v1948 = vld [vmem:[%s1251 + $0x143] sm:$0xff]
      %v1949 = vld [vmem:[%s1251 + $0x153] sm:$0xff]
      %v1950 = vld [vmem:[%s1251 + $0x15b] sm:$0xff]
      %v1951 = vld [vmem:[%s1251 + $0x16b] sm:$0xff]
      %v1952 = vld [vmem:[%s1251 + $0x173] sm:$0xff]
      %v1953 = vpack.c.bf16 %v1922, %v1921
      %v1954 = vpack.c.bf16 %v1924, %v1923
      %v1955 = vpack.c.bf16 %v1926, %v1925
      %v1956 = vpack.c.bf16 %v1928, %v1927
      %v1957 = vpack.c.bf16 %v1930, %v1929
      %v1958 = vpack.c.bf16 %v1932, %v1931
      %v1959 = vpack.c.bf16 %v1934, %v1933
      %v1960 = vpack.c.bf16 %v1936, %v1935
      %v1961 = vpack.c.bf16 %v1938, %v1937
      %v1962 = vpack.c.bf16 %v1940, %v1939
      %v1963 = vpack.c.bf16 %v1942, %v1941
      %v1964 = vpack.c.bf16 %v1944, %v1943
      %v1965 = vpack.c.bf16 %v1946, %v1945
      %v1966 = vpack.c.bf16 %v1948, %v1947
      %v1967 = vpack.c.bf16 %v1950, %v1949
      %v1968 = vpack.c.bf16 %v1952, %v1951
      %s1969 = scalar_lea.vmem %s1, 16
      %v1970 = vld [vmem:[%s1969] sm:$0x3]
      %v1971 = vpack.c.bf16 %v1970, %v1970
      %v1973 = vsel %vm300, %v1953, 0
      %v1976 = vsel %vm300, %v1954, 0
      %v1979 = vsel %vm300, %v1955, 0
      %v1982 = vsel %vm300, %v1956, 0
      %v1985 = vsel %vm300, %v1957, 0
      %v1988 = vsel %vm300, %v1958, 0
      %v1991 = vsel %vm300, %v1959, 0
      %v1994 = vsel %vm300, %v1960, 0
      %v1997 = vsel %vm300, %v1961, 0
      %v2000 = vsel %vm300, %v1962, 0
      %v2003 = vsel %vm300, %v1963, 0
      %v2006 = vsel %vm300, %v1964, 0
      %v2009 = vsel %vm300, %v1965, 0
      %v2012 = vsel %vm300, %v1966, 0
      %v2015 = vsel %vm300, %v1967, 0
      %v2018 = vsel %vm300, %v1968, 0
      %v2021 = vsel %vm349, %v1971, 0
      %2023 = vmatpush.bf16.msra.mxu0 0
      %2024 = vmatpush.bf16.msra.mxu0 0
      %2025 = vmatpush.bf16.msra.mxu0 0
      %2026 = vmatpush.bf16.msra.mxu0 0
      %2027 = vmatpush.bf16.msra.mxu0 0
      %2028 = vmatpush.bf16.msra.mxu0 0
      %2029 = vmatpush.bf16.msra.mxu0 0
      %2030 = vmatpush.bf16.msra.mxu0 %v2021
      %2031 = vmatmul.bf16.gmra.mxu0 %v1973
      %v2032 = vpop.f32.mrf.mxu0
      %v2033 = vadd.f32 0.0, %v2032
      %v2034 = vpop.f32.mrf.mxu0
      %v2035 = vadd.f32 0.0, %v2034
      %2036 = vmatmul.bf16.gmra.mxu0 %v1976
      %v2037 = vpop.f32.mrf.mxu0
      %v2038 = vadd.f32 0.0, %v2037
      %v2039 = vpop.f32.mrf.mxu0
      %v2040 = vadd.f32 0.0, %v2039
      %2041 = vmatmul.bf16.gmra.mxu0 %v1979
      %v2042 = vpop.f32.mrf.mxu0
      %v2043 = vadd.f32 0.0, %v2042
      %v2044 = vpop.f32.mrf.mxu0
      %v2045 = vadd.f32 0.0, %v2044
      %2046 = vmatmul.bf16.gmra.mxu0 %v1982
      %v2047 = vpop.f32.mrf.mxu0
      %v2048 = vadd.f32 0.0, %v2047
      %v2049 = vpop.f32.mrf.mxu0
      %v2050 = vadd.f32 0.0, %v2049
      %2051 = vmatmul.bf16.gmra.mxu0 %v1985
      %v2052 = vpop.f32.mrf.mxu0
      %v2053 = vadd.f32 0.0, %v2052
      %v2054 = vpop.f32.mrf.mxu0
      %v2055 = vadd.f32 0.0, %v2054
      %2056 = vmatmul.bf16.gmra.mxu0 %v1988
      %v2057 = vpop.f32.mrf.mxu0
      %v2058 = vadd.f32 0.0, %v2057
      %v2059 = vpop.f32.mrf.mxu0
      %v2060 = vadd.f32 0.0, %v2059
      %2061 = vmatmul.bf16.gmra.mxu0 %v1991
      %v2062 = vpop.f32.mrf.mxu0
      %v2063 = vadd.f32 0.0, %v2062
      %v2064 = vpop.f32.mrf.mxu0
      %v2065 = vadd.f32 0.0, %v2064
      %2066 = vmatmul.bf16.gmra.mxu0 %v1994
      %v2067 = vpop.f32.mrf.mxu0
      %v2068 = vadd.f32 0.0, %v2067
      %v2069 = vpop.f32.mrf.mxu0
      %v2070 = vadd.f32 0.0, %v2069
      %2071 = vmatmul.bf16.gmra.mxu0 %v1997
      %v2072 = vpop.f32.mrf.mxu0
      %v2073 = vadd.f32 0.0, %v2072
      %v2074 = vpop.f32.mrf.mxu0
      %v2075 = vadd.f32 0.0, %v2074
      %2076 = vmatmul.bf16.gmra.mxu0 %v2000
      %v2077 = vpop.f32.mrf.mxu0
      %v2078 = vadd.f32 0.0, %v2077
      %v2079 = vpop.f32.mrf.mxu0
      %v2080 = vadd.f32 0.0, %v2079
      %2081 = vmatmul.bf16.gmra.mxu0 %v2003
      %v2082 = vpop.f32.mrf.mxu0
      %v2083 = vadd.f32 0.0, %v2082
      %v2084 = vpop.f32.mrf.mxu0
      %v2085 = vadd.f32 0.0, %v2084
      %2086 = vmatmul.bf16.gmra.mxu0 %v2006
      %v2087 = vpop.f32.mrf.mxu0
      %v2088 = vadd.f32 0.0, %v2087
      %v2089 = vpop.f32.mrf.mxu0
      %v2090 = vadd.f32 0.0, %v2089
      %2091 = vmatmul.bf16.gmra.mxu0 %v2009
      %v2092 = vpop.f32.mrf.mxu0
      %v2093 = vadd.f32 0.0, %v2092
      %v2094 = vpop.f32.mrf.mxu0
      %v2095 = vadd.f32 0.0, %v2094
      %2096 = vmatmul.bf16.gmra.mxu0 %v2012
      %v2097 = vpop.f32.mrf.mxu0
      %v2098 = vadd.f32 0.0, %v2097
      %v2099 = vpop.f32.mrf.mxu0
      %v2100 = vadd.f32 0.0, %v2099
      %2101 = vmatmul.bf16.gmra.mxu0 %v2015
      %v2102 = vpop.f32.mrf.mxu0
      %v2103 = vadd.f32 0.0, %v2102
      %v2104 = vpop.f32.mrf.mxu0
      %v2105 = vadd.f32 0.0, %v2104
      %2106 = vmatmul.bf16.gmra.mxu0 %v2018
      %v2107 = vpop.f32.mrf.mxu0
      %v2108 = vadd.f32 0.0, %v2107
      %v2109 = vpop.f32.mrf.mxu0
      %v2110 = vadd.f32 0.0, %v2109
      %2111 = vdwg.mxu0
      %v2112 = vadd.f32 %v1889, %v2033
      %v2113 = vadd.f32 %v1890, %v2035
      %v2114 = vadd.f32 %v1891, %v2038
      %v2115 = vadd.f32 %v1892, %v2040
      %v2116 = vadd.f32 %v1893, %v2043
      %v2117 = vadd.f32 %v1894, %v2045
      %v2118 = vadd.f32 %v1895, %v2048
      %v2119 = vadd.f32 %v1896, %v2050
      %v2120 = vadd.f32 %v1897, %v2053
      %v2121 = vadd.f32 %v1898, %v2055
      %v2122 = vadd.f32 %v1899, %v2058
      %v2123 = vadd.f32 %v1900, %v2060
      %v2124 = vadd.f32 %v1901, %v2063
      %v2125 = vadd.f32 %v1902, %v2065
      %v2126 = vadd.f32 %v1903, %v2068
      %v2127 = vadd.f32 %v1904, %v2070
      %v2128 = vadd.f32 %v1905, %v2073
      %v2129 = vadd.f32 %v1906, %v2075
      %v2130 = vadd.f32 %v1907, %v2078
      %v2131 = vadd.f32 %v1908, %v2080
      %v2132 = vadd.f32 %v1909, %v2083
      %v2133 = vadd.f32 %v1910, %v2085
      %v2134 = vadd.f32 %v1911, %v2088
      %v2135 = vadd.f32 %v1912, %v2090
      %v2136 = vadd.f32 %v1913, %v2093
      %v2137 = vadd.f32 %v1914, %v2095
      %v2138 = vadd.f32 %v1915, %v2098
      %v2139 = vadd.f32 %v1916, %v2100
      %v2140 = vadd.f32 %v1917, %v2103
      %v2141 = vadd.f32 %v1918, %v2105
      %v2142 = vadd.f32 %v1919, %v2108
      %v2143 = vadd.f32 %v1920, %v2110
      %v2144 = vld [vmem:[%s1251 + $0x4] sm:$0xff]
      %v2145 = vld [vmem:[%s1251 + $0xc] sm:$0xff]
      %v2146 = vld [vmem:[%s1251 + $0x1c] sm:$0xff]
      %v2147 = vld [vmem:[%s1251 + $0x24] sm:$0xff]
      %v2148 = vld [vmem:[%s1251 + $0x34] sm:$0xff]
      %v2149 = vld [vmem:[%s1251 + $0x3c] sm:$0xff]
      %v2150 = vld [vmem:[%s1251 + $0x4c] sm:$0xff]
      %v2151 = vld [vmem:[%s1251 + $0x54] sm:$0xff]
      %v2152 = vld [vmem:[%s1251 + $0x64] sm:$0xff]
      %v2153 = vld [vmem:[%s1251 + $0x6c] sm:$0xff]
      %v2154 = vld [vmem:[%s1251 + $0x7c] sm:$0xff]
      %v2155 = vld [vmem:[%s1251 + $0x84] sm:$0xff]
      %v2156 = vld [vmem:[%s1251 + $0x94] sm:$0xff]
      %v2157 = vld [vmem:[%s1251 + $0x9c] sm:$0xff]
      %v2158 = vld [vmem:[%s1251 + $0xac] sm:$0xff]
      %v2159 = vld [vmem:[%s1251 + $0xb4] sm:$0xff]
      %v2160 = vld [vmem:[%s1251 + $0xc4] sm:$0xff]
      %v2161 = vld [vmem:[%s1251 + $0xcc] sm:$0xff]
      %v2162 = vld [vmem:[%s1251 + $0xdc] sm:$0xff]
      %v2163 = vld [vmem:[%s1251 + $0xe4] sm:$0xff]
      %v2164 = vld [vmem:[%s1251 + $0xf4] sm:$0xff]
      %v2165 = vld [vmem:[%s1251 + $0xfc] sm:$0xff]
      %v2166 = vld [vmem:[%s1251 + $0x10c] sm:$0xff]
      %v2167 = vld [vmem:[%s1251 + $0x114] sm:$0xff]
      %v2168 = vld [vmem:[%s1251 + $0x124] sm:$0xff]
      %v2169 = vld [vmem:[%s1251 + $0x12c] sm:$0xff]
      %v2170 = vld [vmem:[%s1251 + $0x13c] sm:$0xff]
      %v2171 = vld [vmem:[%s1251 + $0x144] sm:$0xff]
      %v2172 = vld [vmem:[%s1251 + $0x154] sm:$0xff]
      %v2173 = vld [vmem:[%s1251 + $0x15c] sm:$0xff]
      %v2174 = vld [vmem:[%s1251 + $0x16c] sm:$0xff]
      %v2175 = vld [vmem:[%s1251 + $0x174] sm:$0xff]
      %v2176 = vpack.c.bf16 %v2145, %v2144
      %v2177 = vpack.c.bf16 %v2147, %v2146
      %v2178 = vpack.c.bf16 %v2149, %v2148
      %v2179 = vpack.c.bf16 %v2151, %v2150
      %v2180 = vpack.c.bf16 %v2153, %v2152
      %v2181 = vpack.c.bf16 %v2155, %v2154
      %v2182 = vpack.c.bf16 %v2157, %v2156
      %v2183 = vpack.c.bf16 %v2159, %v2158
      %v2184 = vpack.c.bf16 %v2161, %v2160
      %v2185 = vpack.c.bf16 %v2163, %v2162
      %v2186 = vpack.c.bf16 %v2165, %v2164
      %v2187 = vpack.c.bf16 %v2167, %v2166
      %v2188 = vpack.c.bf16 %v2169, %v2168
      %v2189 = vpack.c.bf16 %v2171, %v2170
      %v2190 = vpack.c.bf16 %v2173, %v2172
      %v2191 = vpack.c.bf16 %v2175, %v2174
      %s2192 = scalar_lea.vmem %s1, 18
      %v2193 = vld [vmem:[%s2192] sm:$0x3]
      %v2194 = vpack.c.bf16 %v2193, %v2193
      %v2196 = vsel %vm300, %v2176, 0
      %v2199 = vsel %vm300, %v2177, 0
      %v2202 = vsel %vm300, %v2178, 0
      %v2205 = vsel %vm300, %v2179, 0
      %v2208 = vsel %vm300, %v2180, 0
      %v2211 = vsel %vm300, %v2181, 0
      %v2214 = vsel %vm300, %v2182, 0
      %v2217 = vsel %vm300, %v2183, 0
      %v2220 = vsel %vm300, %v2184, 0
      %v2223 = vsel %vm300, %v2185, 0
      %v2226 = vsel %vm300, %v2186, 0
      %v2229 = vsel %vm300, %v2187, 0
      %v2232 = vsel %vm300, %v2188, 0
      %v2235 = vsel %vm300, %v2189, 0
      %v2238 = vsel %vm300, %v2190, 0
      %v2241 = vsel %vm300, %v2191, 0
      %v2244 = vsel %vm349, %v2194, 0
      %2246 = vmatpush.bf16.msra.mxu0 0
      %2247 = vmatpush.bf16.msra.mxu0 0
      %2248 = vmatpush.bf16.msra.mxu0 0
      %2249 = vmatpush.bf16.msra.mxu0 0
      %2250 = vmatpush.bf16.msra.mxu0 0
      %2251 = vmatpush.bf16.msra.mxu0 0
      %2252 = vmatpush.bf16.msra.mxu0 0
      %2253 = vmatpush.bf16.msra.mxu0 %v2244
      %2254 = vmatmul.bf16.gmra.mxu0 %v2196
      %v2255 = vpop.f32.mrf.mxu0
      %v2256 = vadd.f32 0.0, %v2255
      %v2257 = vpop.f32.mrf.mxu0
      %v2258 = vadd.f32 0.0, %v2257
      %2259 = vmatmul.bf16.gmra.mxu0 %v2199
      %v2260 = vpop.f32.mrf.mxu0
      %v2261 = vadd.f32 0.0, %v2260
      %v2262 = vpop.f32.mrf.mxu0
      %v2263 = vadd.f32 0.0, %v2262
      %2264 = vmatmul.bf16.gmra.mxu0 %v2202
      %v2265 = vpop.f32.mrf.mxu0
      %v2266 = vadd.f32 0.0, %v2265
      %v2267 = vpop.f32.mrf.mxu0
      %v2268 = vadd.f32 0.0, %v2267
      %2269 = vmatmul.bf16.gmra.mxu0 %v2205
      %v2270 = vpop.f32.mrf.mxu0
      %v2271 = vadd.f32 0.0, %v2270
      %v2272 = vpop.f32.mrf.mxu0
      %v2273 = vadd.f32 0.0, %v2272
      %2274 = vmatmul.bf16.gmra.mxu0 %v2208
      %v2275 = vpop.f32.mrf.mxu0
      %v2276 = vadd.f32 0.0, %v2275
      %v2277 = vpop.f32.mrf.mxu0
      %v2278 = vadd.f32 0.0, %v2277
      %2279 = vmatmul.bf16.gmra.mxu0 %v2211
      %v2280 = vpop.f32.mrf.mxu0
      %v2281 = vadd.f32 0.0, %v2280
      %v2282 = vpop.f32.mrf.mxu0
      %v2283 = vadd.f32 0.0, %v2282
      %2284 = vmatmul.bf16.gmra.mxu0 %v2214
      %v2285 = vpop.f32.mrf.mxu0
      %v2286 = vadd.f32 0.0, %v2285
      %v2287 = vpop.f32.mrf.mxu0
      %v2288 = vadd.f32 0.0, %v2287
      %2289 = vmatmul.bf16.gmra.mxu0 %v2217
      %v2290 = vpop.f32.mrf.mxu0
      %v2291 = vadd.f32 0.0, %v2290
      %v2292 = vpop.f32.mrf.mxu0
      %v2293 = vadd.f32 0.0, %v2292
      %2294 = vmatmul.bf16.gmra.mxu0 %v2220
      %v2295 = vpop.f32.mrf.mxu0
      %v2296 = vadd.f32 0.0, %v2295
      %v2297 = vpop.f32.mrf.mxu0
      %v2298 = vadd.f32 0.0, %v2297
      %2299 = vmatmul.bf16.gmra.mxu0 %v2223
      %v2300 = vpop.f32.mrf.mxu0
      %v2301 = vadd.f32 0.0, %v2300
      %v2302 = vpop.f32.mrf.mxu0
      %v2303 = vadd.f32 0.0, %v2302
      %2304 = vmatmul.bf16.gmra.mxu0 %v2226
      %v2305 = vpop.f32.mrf.mxu0
      %v2306 = vadd.f32 0.0, %v2305
      %v2307 = vpop.f32.mrf.mxu0
      %v2308 = vadd.f32 0.0, %v2307
      %2309 = vmatmul.bf16.gmra.mxu0 %v2229
      %v2310 = vpop.f32.mrf.mxu0
      %v2311 = vadd.f32 0.0, %v2310
      %v2312 = vpop.f32.mrf.mxu0
      %v2313 = vadd.f32 0.0, %v2312
      %2314 = vmatmul.bf16.gmra.mxu0 %v2232
      %v2315 = vpop.f32.mrf.mxu0
      %v2316 = vadd.f32 0.0, %v2315
      %v2317 = vpop.f32.mrf.mxu0
      %v2318 = vadd.f32 0.0, %v2317
      %2319 = vmatmul.bf16.gmra.mxu0 %v2235
      %v2320 = vpop.f32.mrf.mxu0
      %v2321 = vadd.f32 0.0, %v2320
      %v2322 = vpop.f32.mrf.mxu0
      %v2323 = vadd.f32 0.0, %v2322
      %2324 = vmatmul.bf16.gmra.mxu0 %v2238
      %v2325 = vpop.f32.mrf.mxu0
      %v2326 = vadd.f32 0.0, %v2325
      %v2327 = vpop.f32.mrf.mxu0
      %v2328 = vadd.f32 0.0, %v2327
      %2329 = vmatmul.bf16.gmra.mxu0 %v2241
      %v2330 = vpop.f32.mrf.mxu0
      %v2331 = vadd.f32 0.0, %v2330
      %v2332 = vpop.f32.mrf.mxu0
      %v2333 = vadd.f32 0.0, %v2332
      %2334 = vdwg.mxu0
      %v2335 = vadd.f32 %v2112, %v2256
      %v2336 = vadd.f32 %v2113, %v2258
      %v2337 = vadd.f32 %v2114, %v2261
      %v2338 = vadd.f32 %v2115, %v2263
      %v2339 = vadd.f32 %v2116, %v2266
      %v2340 = vadd.f32 %v2117, %v2268
      %v2341 = vadd.f32 %v2118, %v2271
      %v2342 = vadd.f32 %v2119, %v2273
      %v2343 = vadd.f32 %v2120, %v2276
      %v2344 = vadd.f32 %v2121, %v2278
      %v2345 = vadd.f32 %v2122, %v2281
      %v2346 = vadd.f32 %v2123, %v2283
      %v2347 = vadd.f32 %v2124, %v2286
      %v2348 = vadd.f32 %v2125, %v2288
      %v2349 = vadd.f32 %v2126, %v2291
      %v2350 = vadd.f32 %v2127, %v2293
      %v2351 = vadd.f32 %v2128, %v2296
      %v2352 = vadd.f32 %v2129, %v2298
      %v2353 = vadd.f32 %v2130, %v2301
      %v2354 = vadd.f32 %v2131, %v2303
      %v2355 = vadd.f32 %v2132, %v2306
      %v2356 = vadd.f32 %v2133, %v2308
      %v2357 = vadd.f32 %v2134, %v2311
      %v2358 = vadd.f32 %v2135, %v2313
      %v2359 = vadd.f32 %v2136, %v2316
      %v2360 = vadd.f32 %v2137, %v2318
      %v2361 = vadd.f32 %v2138, %v2321
      %v2362 = vadd.f32 %v2139, %v2323
      %v2363 = vadd.f32 %v2140, %v2326
      %v2364 = vadd.f32 %v2141, %v2328
      %v2365 = vadd.f32 %v2142, %v2331
      %v2366 = vadd.f32 %v2143, %v2333
      %s2367 = scalar_lea.vmem %s192, 48
      %v2368 = vld [vmem:[%s2367] sm:$0xff]
      %v2369 = vld [vmem:[%s2367 + $0x8] sm:$0xff]
      %v2370 = vld [vmem:[%s2367 + $0x18] sm:$0xff]
      %v2371 = vld [vmem:[%s2367 + $0x20] sm:$0xff]
      %v2372 = vld [vmem:[%s2367 + $0x30] sm:$0xff]
      %v2373 = vld [vmem:[%s2367 + $0x38] sm:$0xff]
      %v2374 = vld [vmem:[%s2367 + $0x48] sm:$0xff]
      %v2375 = vld [vmem:[%s2367 + $0x50] sm:$0xff]
      %v2376 = vld [vmem:[%s2367 + $0x60] sm:$0xff]
      %v2377 = vld [vmem:[%s2367 + $0x68] sm:$0xff]
      %v2378 = vld [vmem:[%s2367 + $0x78] sm:$0xff]
      %v2379 = vld [vmem:[%s2367 + $0x80] sm:$0xff]
      %v2380 = vld [vmem:[%s2367 + $0x90] sm:$0xff]
      %v2381 = vld [vmem:[%s2367 + $0x98] sm:$0xff]
      %v2382 = vld [vmem:[%s2367 + $0xa8] sm:$0xff]
      %v2383 = vld [vmem:[%s2367 + $0xb0] sm:$0xff]
      %v2384 = vld [vmem:[%s2367 + $0xc0] sm:$0xff]
      %v2385 = vld [vmem:[%s2367 + $0xc8] sm:$0xff]
      %v2386 = vld [vmem:[%s2367 + $0xd8] sm:$0xff]
      %v2387 = vld [vmem:[%s2367 + $0xe0] sm:$0xff]
      %v2388 = vld [vmem:[%s2367 + $0xf0] sm:$0xff]
      %v2389 = vld [vmem:[%s2367 + $0xf8] sm:$0xff]
      %v2390 = vld [vmem:[%s2367 + $0x108] sm:$0xff]
      %v2391 = vld [vmem:[%s2367 + $0x110] sm:$0xff]
      %v2392 = vld [vmem:[%s2367 + $0x120] sm:$0xff]
      %v2393 = vld [vmem:[%s2367 + $0x128] sm:$0xff]
      %v2394 = vld [vmem:[%s2367 + $0x138] sm:$0xff]
      %v2395 = vld [vmem:[%s2367 + $0x140] sm:$0xff]
      %v2396 = vld [vmem:[%s2367 + $0x150] sm:$0xff]
      %v2397 = vld [vmem:[%s2367 + $0x158] sm:$0xff]
      %v2398 = vld [vmem:[%s2367 + $0x168] sm:$0xff]
      %v2399 = vld [vmem:[%s2367 + $0x170] sm:$0xff]
      %v2400 = vpack.c.bf16 %v2369, %v2368
      %v2401 = vpack.c.bf16 %v2371, %v2370
      %v2402 = vpack.c.bf16 %v2373, %v2372
      %v2403 = vpack.c.bf16 %v2375, %v2374
      %v2404 = vpack.c.bf16 %v2377, %v2376
      %v2405 = vpack.c.bf16 %v2379, %v2378
      %v2406 = vpack.c.bf16 %v2381, %v2380
      %v2407 = vpack.c.bf16 %v2383, %v2382
      %v2408 = vpack.c.bf16 %v2385, %v2384
      %v2409 = vpack.c.bf16 %v2387, %v2386
      %v2410 = vpack.c.bf16 %v2389, %v2388
      %v2411 = vpack.c.bf16 %v2391, %v2390
      %v2412 = vpack.c.bf16 %v2393, %v2392
      %v2413 = vpack.c.bf16 %v2395, %v2394
      %v2414 = vpack.c.bf16 %v2397, %v2396
      %v2415 = vpack.c.bf16 %v2399, %v2398
      %s2416 = scalar_lea.vmem %s1, 20
      %v2417 = vld [vmem:[%s2416] sm:$0x3]
      %v2418 = vpack.c.bf16 %v2417, %v2417
      %v2420 = vsel %vm300, %v2400, 0
      %v2423 = vsel %vm300, %v2401, 0
      %v2426 = vsel %vm300, %v2402, 0
      %v2429 = vsel %vm300, %v2403, 0
      %v2432 = vsel %vm300, %v2404, 0
      %v2435 = vsel %vm300, %v2405, 0
      %v2438 = vsel %vm300, %v2406, 0
      %v2441 = vsel %vm300, %v2407, 0
      %v2444 = vsel %vm300, %v2408, 0
      %v2447 = vsel %vm300, %v2409, 0
      %v2450 = vsel %vm300, %v2410, 0
      %v2453 = vsel %vm300, %v2411, 0
      %v2456 = vsel %vm300, %v2412, 0
      %v2459 = vsel %vm300, %v2413, 0
      %v2462 = vsel %vm300, %v2414, 0
      %v2465 = vsel %vm300, %v2415, 0
      %v2468 = vsel %vm349, %v2418, 0
      %2470 = vmatpush.bf16.msra.mxu0 0
      %2471 = vmatpush.bf16.msra.mxu0 0
      %2472 = vmatpush.bf16.msra.mxu0 0
      %2473 = vmatpush.bf16.msra.mxu0 0
      %2474 = vmatpush.bf16.msra.mxu0 0
      %2475 = vmatpush.bf16.msra.mxu0 0
      %2476 = vmatpush.bf16.msra.mxu0 0
      %2477 = vmatpush.bf16.msra.mxu0 %v2468
      %2478 = vmatmul.bf16.gmra.mxu0 %v2420
      %v2479 = vpop.f32.mrf.mxu0
      %v2480 = vadd.f32 0.0, %v2479
      %v2481 = vpop.f32.mrf.mxu0
      %v2482 = vadd.f32 0.0, %v2481
      %2483 = vmatmul.bf16.gmra.mxu0 %v2423
      %v2484 = vpop.f32.mrf.mxu0
      %v2485 = vadd.f32 0.0, %v2484
      %v2486 = vpop.f32.mrf.mxu0
      %v2487 = vadd.f32 0.0, %v2486
      %2488 = vmatmul.bf16.gmra.mxu0 %v2426
      %v2489 = vpop.f32.mrf.mxu0
      %v2490 = vadd.f32 0.0, %v2489
      %v2491 = vpop.f32.mrf.mxu0
      %v2492 = vadd.f32 0.0, %v2491
      %2493 = vmatmul.bf16.gmra.mxu0 %v2429
      %v2494 = vpop.f32.mrf.mxu0
      %v2495 = vadd.f32 0.0, %v2494
      %v2496 = vpop.f32.mrf.mxu0
      %v2497 = vadd.f32 0.0, %v2496
      %2498 = vmatmul.bf16.gmra.mxu0 %v2432
      %v2499 = vpop.f32.mrf.mxu0
      %v2500 = vadd.f32 0.0, %v2499
      %v2501 = vpop.f32.mrf.mxu0
      %v2502 = vadd.f32 0.0, %v2501
      %2503 = vmatmul.bf16.gmra.mxu0 %v2435
      %v2504 = vpop.f32.mrf.mxu0
      %v2505 = vadd.f32 0.0, %v2504
      %v2506 = vpop.f32.mrf.mxu0
      %v2507 = vadd.f32 0.0, %v2506
      %2508 = vmatmul.bf16.gmra.mxu0 %v2438
      %v2509 = vpop.f32.mrf.mxu0
      %v2510 = vadd.f32 0.0, %v2509
      %v2511 = vpop.f32.mrf.mxu0
      %v2512 = vadd.f32 0.0, %v2511
      %2513 = vmatmul.bf16.gmra.mxu0 %v2441
      %v2514 = vpop.f32.mrf.mxu0
      %v2515 = vadd.f32 0.0, %v2514
      %v2516 = vpop.f32.mrf.mxu0
      %v2517 = vadd.f32 0.0, %v2516
      %2518 = vmatmul.bf16.gmra.mxu0 %v2444
      %v2519 = vpop.f32.mrf.mxu0
      %v2520 = vadd.f32 0.0, %v2519
      %v2521 = vpop.f32.mrf.mxu0
      %v2522 = vadd.f32 0.0, %v2521
      %2523 = vmatmul.bf16.gmra.mxu0 %v2447
      %v2524 = vpop.f32.mrf.mxu0
      %v2525 = vadd.f32 0.0, %v2524
      %v2526 = vpop.f32.mrf.mxu0
      %v2527 = vadd.f32 0.0, %v2526
      %2528 = vmatmul.bf16.gmra.mxu0 %v2450
      %v2529 = vpop.f32.mrf.mxu0
      %v2530 = vadd.f32 0.0, %v2529
      %v2531 = vpop.f32.mrf.mxu0
      %v2532 = vadd.f32 0.0, %v2531
      %2533 = vmatmul.bf16.gmra.mxu0 %v2453
      %v2534 = vpop.f32.mrf.mxu0
      %v2535 = vadd.f32 0.0, %v2534
      %v2536 = vpop.f32.mrf.mxu0
      %v2537 = vadd.f32 0.0, %v2536
      %2538 = vmatmul.bf16.gmra.mxu0 %v2456
      %v2539 = vpop.f32.mrf.mxu0
      %v2540 = vadd.f32 0.0, %v2539
      %v2541 = vpop.f32.mrf.mxu0
      %v2542 = vadd.f32 0.0, %v2541
      %2543 = vmatmul.bf16.gmra.mxu0 %v2459
      %v2544 = vpop.f32.mrf.mxu0
      %v2545 = vadd.f32 0.0, %v2544
      %v2546 = vpop.f32.mrf.mxu0
      %v2547 = vadd.f32 0.0, %v2546
      %2548 = vmatmul.bf16.gmra.mxu0 %v2462
      %v2549 = vpop.f32.mrf.mxu0
      %v2550 = vadd.f32 0.0, %v2549
      %v2551 = vpop.f32.mrf.mxu0
      %v2552 = vadd.f32 0.0, %v2551
      %2553 = vmatmul.bf16.gmra.mxu0 %v2465
      %v2554 = vpop.f32.mrf.mxu0
      %v2555 = vadd.f32 0.0, %v2554
      %v2556 = vpop.f32.mrf.mxu0
      %v2557 = vadd.f32 0.0, %v2556
      %2558 = vdwg.mxu0
      %v2559 = vadd.f32 %v2335, %v2480
      %v2560 = vadd.f32 %v2336, %v2482
      %v2561 = vadd.f32 %v2337, %v2485
      %v2562 = vadd.f32 %v2338, %v2487
      %v2563 = vadd.f32 %v2339, %v2490
      %v2564 = vadd.f32 %v2340, %v2492
      %v2565 = vadd.f32 %v2341, %v2495
      %v2566 = vadd.f32 %v2342, %v2497
      %v2567 = vadd.f32 %v2343, %v2500
      %v2568 = vadd.f32 %v2344, %v2502
      %v2569 = vadd.f32 %v2345, %v2505
      %v2570 = vadd.f32 %v2346, %v2507
      %v2571 = vadd.f32 %v2347, %v2510
      %v2572 = vadd.f32 %v2348, %v2512
      %v2573 = vadd.f32 %v2349, %v2515
      %v2574 = vadd.f32 %v2350, %v2517
      %v2575 = vadd.f32 %v2351, %v2520
      %v2576 = vadd.f32 %v2352, %v2522
      %v2577 = vadd.f32 %v2353, %v2525
      %v2578 = vadd.f32 %v2354, %v2527
      %v2579 = vadd.f32 %v2355, %v2530
      %v2580 = vadd.f32 %v2356, %v2532
      %v2581 = vadd.f32 %v2357, %v2535
      %v2582 = vadd.f32 %v2358, %v2537
      %v2583 = vadd.f32 %v2359, %v2540
      %v2584 = vadd.f32 %v2360, %v2542
      %v2585 = vadd.f32 %v2361, %v2545
      %v2586 = vadd.f32 %v2362, %v2547
      %v2587 = vadd.f32 %v2363, %v2550
      %v2588 = vadd.f32 %v2364, %v2552
      %v2589 = vadd.f32 %v2365, %v2555
      %v2590 = vadd.f32 %v2366, %v2557
      %v2591 = vld [vmem:[%s2367 + $0x1] sm:$0xff]
      %v2592 = vld [vmem:[%s2367 + $0x9] sm:$0xff]
      %v2593 = vld [vmem:[%s2367 + $0x19] sm:$0xff]
      %v2594 = vld [vmem:[%s2367 + $0x21] sm:$0xff]
      %v2595 = vld [vmem:[%s2367 + $0x31] sm:$0xff]
      %v2596 = vld [vmem:[%s2367 + $0x39] sm:$0xff]
      %v2597 = vld [vmem:[%s2367 + $0x49] sm:$0xff]
      %v2598 = vld [vmem:[%s2367 + $0x51] sm:$0xff]
      %v2599 = vld [vmem:[%s2367 + $0x61] sm:$0xff]
      %v2600 = vld [vmem:[%s2367 + $0x69] sm:$0xff]
      %v2601 = vld [vmem:[%s2367 + $0x79] sm:$0xff]
      %v2602 = vld [vmem:[%s2367 + $0x81] sm:$0xff]
      %v2603 = vld [vmem:[%s2367 + $0x91] sm:$0xff]
      %v2604 = vld [vmem:[%s2367 + $0x99] sm:$0xff]
      %v2605 = vld [vmem:[%s2367 + $0xa9] sm:$0xff]
      %v2606 = vld [vmem:[%s2367 + $0xb1] sm:$0xff]
      %v2607 = vld [vmem:[%s2367 + $0xc1] sm:$0xff]
      %v2608 = vld [vmem:[%s2367 + $0xc9] sm:$0xff]
      %v2609 = vld [vmem:[%s2367 + $0xd9] sm:$0xff]
      %v2610 = vld [vmem:[%s2367 + $0xe1] sm:$0xff]
      %v2611 = vld [vmem:[%s2367 + $0xf1] sm:$0xff]
      %v2612 = vld [vmem:[%s2367 + $0xf9] sm:$0xff]
      %v2613 = vld [vmem:[%s2367 + $0x109] sm:$0xff]
      %v2614 = vld [vmem:[%s2367 + $0x111] sm:$0xff]
      %v2615 = vld [vmem:[%s2367 + $0x121] sm:$0xff]
      %v2616 = vld [vmem:[%s2367 + $0x129] sm:$0xff]
      %v2617 = vld [vmem:[%s2367 + $0x139] sm:$0xff]
      %v2618 = vld [vmem:[%s2367 + $0x141] sm:$0xff]
      %v2619 = vld [vmem:[%s2367 + $0x151] sm:$0xff]
      %v2620 = vld [vmem:[%s2367 + $0x159] sm:$0xff]
      %v2621 = vld [vmem:[%s2367 + $0x169] sm:$0xff]
      %v2622 = vld [vmem:[%s2367 + $0x171] sm:$0xff]
      %v2623 = vpack.c.bf16 %v2592, %v2591
      %v2624 = vpack.c.bf16 %v2594, %v2593
      %v2625 = vpack.c.bf16 %v2596, %v2595
      %v2626 = vpack.c.bf16 %v2598, %v2597
      %v2627 = vpack.c.bf16 %v2600, %v2599
      %v2628 = vpack.c.bf16 %v2602, %v2601
      %v2629 = vpack.c.bf16 %v2604, %v2603
      %v2630 = vpack.c.bf16 %v2606, %v2605
      %v2631 = vpack.c.bf16 %v2608, %v2607
      %v2632 = vpack.c.bf16 %v2610, %v2609
      %v2633 = vpack.c.bf16 %v2612, %v2611
      %v2634 = vpack.c.bf16 %v2614, %v2613
      %v2635 = vpack.c.bf16 %v2616, %v2615
      %v2636 = vpack.c.bf16 %v2618, %v2617
      %v2637 = vpack.c.bf16 %v2620, %v2619
      %v2638 = vpack.c.bf16 %v2622, %v2621
      %s2639 = scalar_lea.vmem %s1, 22
      %v2640 = vld [vmem:[%s2639] sm:$0x3]
      %v2641 = vpack.c.bf16 %v2640, %v2640
      %v2643 = vsel %vm300, %v2623, 0
      %v2646 = vsel %vm300, %v2624, 0
      %v2649 = vsel %vm300, %v2625, 0
      %v2652 = vsel %vm300, %v2626, 0
      %v2655 = vsel %vm300, %v2627, 0
      %v2658 = vsel %vm300, %v2628, 0
      %v2661 = vsel %vm300, %v2629, 0
      %v2664 = vsel %vm300, %v2630, 0
      %v2667 = vsel %vm300, %v2631, 0
      %v2670 = vsel %vm300, %v2632, 0
      %v2673 = vsel %vm300, %v2633, 0
      %v2676 = vsel %vm300, %v2634, 0
      %v2679 = vsel %vm300, %v2635, 0
      %v2682 = vsel %vm300, %v2636, 0
      %v2685 = vsel %vm300, %v2637, 0
      %v2688 = vsel %vm300, %v2638, 0
      %v2691 = vsel %vm349, %v2641, 0
      %2693 = vmatpush.bf16.msra.mxu0 0
      %2694 = vmatpush.bf16.msra.mxu0 0
      %2695 = vmatpush.bf16.msra.mxu0 0
      %2696 = vmatpush.bf16.msra.mxu0 0
      %2697 = vmatpush.bf16.msra.mxu0 0
      %2698 = vmatpush.bf16.msra.mxu0 0
      %2699 = vmatpush.bf16.msra.mxu0 0
      %2700 = vmatpush.bf16.msra.mxu0 %v2691
      %2701 = vmatmul.bf16.gmra.mxu0 %v2643
      %v2702 = vpop.f32.mrf.mxu0
      %v2703 = vadd.f32 0.0, %v2702
      %v2704 = vpop.f32.mrf.mxu0
      %v2705 = vadd.f32 0.0, %v2704
      %2706 = vmatmul.bf16.gmra.mxu0 %v2646
      %v2707 = vpop.f32.mrf.mxu0
      %v2708 = vadd.f32 0.0, %v2707
      %v2709 = vpop.f32.mrf.mxu0
      %v2710 = vadd.f32 0.0, %v2709
      %2711 = vmatmul.bf16.gmra.mxu0 %v2649
      %v2712 = vpop.f32.mrf.mxu0
      %v2713 = vadd.f32 0.0, %v2712
      %v2714 = vpop.f32.mrf.mxu0
      %v2715 = vadd.f32 0.0, %v2714
      %2716 = vmatmul.bf16.gmra.mxu0 %v2652
      %v2717 = vpop.f32.mrf.mxu0
      %v2718 = vadd.f32 0.0, %v2717
      %v2719 = vpop.f32.mrf.mxu0
      %v2720 = vadd.f32 0.0, %v2719
      %2721 = vmatmul.bf16.gmra.mxu0 %v2655
      %v2722 = vpop.f32.mrf.mxu0
      %v2723 = vadd.f32 0.0, %v2722
      %v2724 = vpop.f32.mrf.mxu0
      %v2725 = vadd.f32 0.0, %v2724
      %2726 = vmatmul.bf16.gmra.mxu0 %v2658
      %v2727 = vpop.f32.mrf.mxu0
      %v2728 = vadd.f32 0.0, %v2727
      %v2729 = vpop.f32.mrf.mxu0
      %v2730 = vadd.f32 0.0, %v2729
      %2731 = vmatmul.bf16.gmra.mxu0 %v2661
      %v2732 = vpop.f32.mrf.mxu0
      %v2733 = vadd.f32 0.0, %v2732
      %v2734 = vpop.f32.mrf.mxu0
      %v2735 = vadd.f32 0.0, %v2734
      %2736 = vmatmul.bf16.gmra.mxu0 %v2664
      %v2737 = vpop.f32.mrf.mxu0
      %v2738 = vadd.f32 0.0, %v2737
      %v2739 = vpop.f32.mrf.mxu0
      %v2740 = vadd.f32 0.0, %v2739
      %2741 = vmatmul.bf16.gmra.mxu0 %v2667
      %v2742 = vpop.f32.mrf.mxu0
      %v2743 = vadd.f32 0.0, %v2742
      %v2744 = vpop.f32.mrf.mxu0
      %v2745 = vadd.f32 0.0, %v2744
      %2746 = vmatmul.bf16.gmra.mxu0 %v2670
      %v2747 = vpop.f32.mrf.mxu0
      %v2748 = vadd.f32 0.0, %v2747
      %v2749 = vpop.f32.mrf.mxu0
      %v2750 = vadd.f32 0.0, %v2749
      %2751 = vmatmul.bf16.gmra.mxu0 %v2673
      %v2752 = vpop.f32.mrf.mxu0
      %v2753 = vadd.f32 0.0, %v2752
      %v2754 = vpop.f32.mrf.mxu0
      %v2755 = vadd.f32 0.0, %v2754
      %2756 = vmatmul.bf16.gmra.mxu0 %v2676
      %v2757 = vpop.f32.mrf.mxu0
      %v2758 = vadd.f32 0.0, %v2757
      %v2759 = vpop.f32.mrf.mxu0
      %v2760 = vadd.f32 0.0, %v2759
      %2761 = vmatmul.bf16.gmra.mxu0 %v2679
      %v2762 = vpop.f32.mrf.mxu0
      %v2763 = vadd.f32 0.0, %v2762
      %v2764 = vpop.f32.mrf.mxu0
      %v2765 = vadd.f32 0.0, %v2764
      %2766 = vmatmul.bf16.gmra.mxu0 %v2682
      %v2767 = vpop.f32.mrf.mxu0
      %v2768 = vadd.f32 0.0, %v2767
      %v2769 = vpop.f32.mrf.mxu0
      %v2770 = vadd.f32 0.0, %v2769
      %2771 = vmatmul.bf16.gmra.mxu0 %v2685
      %v2772 = vpop.f32.mrf.mxu0
      %v2773 = vadd.f32 0.0, %v2772
      %v2774 = vpop.f32.mrf.mxu0
      %v2775 = vadd.f32 0.0, %v2774
      %2776 = vmatmul.bf16.gmra.mxu0 %v2688
      %v2777 = vpop.f32.mrf.mxu0
      %v2778 = vadd.f32 0.0, %v2777
      %v2779 = vpop.f32.mrf.mxu0
      %v2780 = vadd.f32 0.0, %v2779
      %2781 = vdwg.mxu0
      %v2782 = vadd.f32 %v2559, %v2703
      %v2783 = vadd.f32 %v2560, %v2705
      %v2784 = vadd.f32 %v2561, %v2708
      %v2785 = vadd.f32 %v2562, %v2710
      %v2786 = vadd.f32 %v2563, %v2713
      %v2787 = vadd.f32 %v2564, %v2715
      %v2788 = vadd.f32 %v2565, %v2718
      %v2789 = vadd.f32 %v2566, %v2720
      %v2790 = vadd.f32 %v2567, %v2723
      %v2791 = vadd.f32 %v2568, %v2725
      %v2792 = vadd.f32 %v2569, %v2728
      %v2793 = vadd.f32 %v2570, %v2730
      %v2794 = vadd.f32 %v2571, %v2733
      %v2795 = vadd.f32 %v2572, %v2735
      %v2796 = vadd.f32 %v2573, %v2738
      %v2797 = vadd.f32 %v2574, %v2740
      %v2798 = vadd.f32 %v2575, %v2743
      %v2799 = vadd.f32 %v2576, %v2745
      %v2800 = vadd.f32 %v2577, %v2748
      %v2801 = vadd.f32 %v2578, %v2750
      %v2802 = vadd.f32 %v2579, %v2753
      %v2803 = vadd.f32 %v2580, %v2755
      %v2804 = vadd.f32 %v2581, %v2758
      %v2805 = vadd.f32 %v2582, %v2760
      %v2806 = vadd.f32 %v2583, %v2763
      %v2807 = vadd.f32 %v2584, %v2765
      %v2808 = vadd.f32 %v2585, %v2768
      %v2809 = vadd.f32 %v2586, %v2770
      %v2810 = vadd.f32 %v2587, %v2773
      %v2811 = vadd.f32 %v2588, %v2775
      %v2812 = vadd.f32 %v2589, %v2778
      %v2813 = vadd.f32 %v2590, %v2780
      %v2814 = vld [vmem:[%s2367 + $0x2] sm:$0xff]
      %v2815 = vld [vmem:[%s2367 + $0xa] sm:$0xff]
      %v2816 = vld [vmem:[%s2367 + $0x1a] sm:$0xff]
      %v2817 = vld [vmem:[%s2367 + $0x22] sm:$0xff]
      %v2818 = vld [vmem:[%s2367 + $0x32] sm:$0xff]
      %v2819 = vld [vmem:[%s2367 + $0x3a] sm:$0xff]
      %v2820 = vld [vmem:[%s2367 + $0x4a] sm:$0xff]
      %v2821 = vld [vmem:[%s2367 + $0x52] sm:$0xff]
      %v2822 = vld [vmem:[%s2367 + $0x62] sm:$0xff]
      %v2823 = vld [vmem:[%s2367 + $0x6a] sm:$0xff]
      %v2824 = vld [vmem:[%s2367 + $0x7a] sm:$0xff]
      %v2825 = vld [vmem:[%s2367 + $0x82] sm:$0xff]
      %v2826 = vld [vmem:[%s2367 + $0x92] sm:$0xff]
      %v2827 = vld [vmem:[%s2367 + $0x9a] sm:$0xff]
      %v2828 = vld [vmem:[%s2367 + $0xaa] sm:$0xff]
      %v2829 = vld [vmem:[%s2367 + $0xb2] sm:$0xff]
      %v2830 = vld [vmem:[%s2367 + $0xc2] sm:$0xff]
      %v2831 = vld [vmem:[%s2367 + $0xca] sm:$0xff]
      %v2832 = vld [vmem:[%s2367 + $0xda] sm:$0xff]
      %v2833 = vld [vmem:[%s2367 + $0xe2] sm:$0xff]
      %v2834 = vld [vmem:[%s2367 + $0xf2] sm:$0xff]
      %v2835 = vld [vmem:[%s2367 + $0xfa] sm:$0xff]
      %v2836 = vld [vmem:[%s2367 + $0x10a] sm:$0xff]
      %v2837 = vld [vmem:[%s2367 + $0x112] sm:$0xff]
      %v2838 = vld [vmem:[%s2367 + $0x122] sm:$0xff]
      %v2839 = vld [vmem:[%s2367 + $0x12a] sm:$0xff]
      %v2840 = vld [vmem:[%s2367 + $0x13a] sm:$0xff]
      %v2841 = vld [vmem:[%s2367 + $0x142] sm:$0xff]
      %v2842 = vld [vmem:[%s2367 + $0x152] sm:$0xff]
      %v2843 = vld [vmem:[%s2367 + $0x15a] sm:$0xff]
      %v2844 = vld [vmem:[%s2367 + $0x16a] sm:$0xff]
      %v2845 = vld [vmem:[%s2367 + $0x172] sm:$0xff]
      %v2846 = vpack.c.bf16 %v2815, %v2814
      %v2847 = vpack.c.bf16 %v2817, %v2816
      %v2848 = vpack.c.bf16 %v2819, %v2818
      %v2849 = vpack.c.bf16 %v2821, %v2820
      %v2850 = vpack.c.bf16 %v2823, %v2822
      %v2851 = vpack.c.bf16 %v2825, %v2824
      %v2852 = vpack.c.bf16 %v2827, %v2826
      %v2853 = vpack.c.bf16 %v2829, %v2828
      %v2854 = vpack.c.bf16 %v2831, %v2830
      %v2855 = vpack.c.bf16 %v2833, %v2832
      %v2856 = vpack.c.bf16 %v2835, %v2834
      %v2857 = vpack.c.bf16 %v2837, %v2836
      %v2858 = vpack.c.bf16 %v2839, %v2838
      %v2859 = vpack.c.bf16 %v2841, %v2840
      %v2860 = vpack.c.bf16 %v2843, %v2842
      %v2861 = vpack.c.bf16 %v2845, %v2844
      %s2862 = scalar_lea.vmem %s1, 24
      %v2863 = vld [vmem:[%s2862] sm:$0x3]
      %v2864 = vpack.c.bf16 %v2863, %v2863
      %v2866 = vsel %vm300, %v2846, 0
      %v2869 = vsel %vm300, %v2847, 0
      %v2872 = vsel %vm300, %v2848, 0
      %v2875 = vsel %vm300, %v2849, 0
      %v2878 = vsel %vm300, %v2850, 0
      %v2881 = vsel %vm300, %v2851, 0
      %v2884 = vsel %vm300, %v2852, 0
      %v2887 = vsel %vm300, %v2853, 0
      %v2890 = vsel %vm300, %v2854, 0
      %v2893 = vsel %vm300, %v2855, 0
      %v2896 = vsel %vm300, %v2856, 0
      %v2899 = vsel %vm300, %v2857, 0
      %v2902 = vsel %vm300, %v2858, 0
      %v2905 = vsel %vm300, %v2859, 0
      %v2908 = vsel %vm300, %v2860, 0
      %v2911 = vsel %vm300, %v2861, 0
      %v2914 = vsel %vm349, %v2864, 0
      %2916 = vmatpush.bf16.msra.mxu0 0
      %2917 = vmatpush.bf16.msra.mxu0 0
      %2918 = vmatpush.bf16.msra.mxu0 0
      %2919 = vmatpush.bf16.msra.mxu0 0
      %2920 = vmatpush.bf16.msra.mxu0 0
      %2921 = vmatpush.bf16.msra.mxu0 0
      %2922 = vmatpush.bf16.msra.mxu0 0
      %2923 = vmatpush.bf16.msra.mxu0 %v2914
      %2924 = vmatmul.bf16.gmra.mxu0 %v2866
      %v2925 = vpop.f32.mrf.mxu0
      %v2926 = vadd.f32 0.0, %v2925
      %v2927 = vpop.f32.mrf.mxu0
      %v2928 = vadd.f32 0.0, %v2927
      %2929 = vmatmul.bf16.gmra.mxu0 %v2869
      %v2930 = vpop.f32.mrf.mxu0
      %v2931 = vadd.f32 0.0, %v2930
      %v2932 = vpop.f32.mrf.mxu0
      %v2933 = vadd.f32 0.0, %v2932
      %2934 = vmatmul.bf16.gmra.mxu0 %v2872
      %v2935 = vpop.f32.mrf.mxu0
      %v2936 = vadd.f32 0.0, %v2935
      %v2937 = vpop.f32.mrf.mxu0
      %v2938 = vadd.f32 0.0, %v2937
      %2939 = vmatmul.bf16.gmra.mxu0 %v2875
      %v2940 = vpop.f32.mrf.mxu0
      %v2941 = vadd.f32 0.0, %v2940
      %v2942 = vpop.f32.mrf.mxu0
      %v2943 = vadd.f32 0.0, %v2942
      %2944 = vmatmul.bf16.gmra.mxu0 %v2878
      %v2945 = vpop.f32.mrf.mxu0
      %v2946 = vadd.f32 0.0, %v2945
      %v2947 = vpop.f32.mrf.mxu0
      %v2948 = vadd.f32 0.0, %v2947
      %2949 = vmatmul.bf16.gmra.mxu0 %v2881
      %v2950 = vpop.f32.mrf.mxu0
      %v2951 = vadd.f32 0.0, %v2950
      %v2952 = vpop.f32.mrf.mxu0
      %v2953 = vadd.f32 0.0, %v2952
      %2954 = vmatmul.bf16.gmra.mxu0 %v2884
      %v2955 = vpop.f32.mrf.mxu0
      %v2956 = vadd.f32 0.0, %v2955
      %v2957 = vpop.f32.mrf.mxu0
      %v2958 = vadd.f32 0.0, %v2957
      %2959 = vmatmul.bf16.gmra.mxu0 %v2887
      %v2960 = vpop.f32.mrf.mxu0
      %v2961 = vadd.f32 0.0, %v2960
      %v2962 = vpop.f32.mrf.mxu0
      %v2963 = vadd.f32 0.0, %v2962
      %2964 = vmatmul.bf16.gmra.mxu0 %v2890
      %v2965 = vpop.f32.mrf.mxu0
      %v2966 = vadd.f32 0.0, %v2965
      %v2967 = vpop.f32.mrf.mxu0
      %v2968 = vadd.f32 0.0, %v2967
      %2969 = vmatmul.bf16.gmra.mxu0 %v2893
      %v2970 = vpop.f32.mrf.mxu0
      %v2971 = vadd.f32 0.0, %v2970
      %v2972 = vpop.f32.mrf.mxu0
      %v2973 = vadd.f32 0.0, %v2972
      %2974 = vmatmul.bf16.gmra.mxu0 %v2896
      %v2975 = vpop.f32.mrf.mxu0
      %v2976 = vadd.f32 0.0, %v2975
      %v2977 = vpop.f32.mrf.mxu0
      %v2978 = vadd.f32 0.0, %v2977
      %2979 = vmatmul.bf16.gmra.mxu0 %v2899
      %v2980 = vpop.f32.mrf.mxu0
      %v2981 = vadd.f32 0.0, %v2980
      %v2982 = vpop.f32.mrf.mxu0
      %v2983 = vadd.f32 0.0, %v2982
      %2984 = vmatmul.bf16.gmra.mxu0 %v2902
      %v2985 = vpop.f32.mrf.mxu0
      %v2986 = vadd.f32 0.0, %v2985
      %v2987 = vpop.f32.mrf.mxu0
      %v2988 = vadd.f32 0.0, %v2987
      %2989 = vmatmul.bf16.gmra.mxu0 %v2905
      %v2990 = vpop.f32.mrf.mxu0
      %v2991 = vadd.f32 0.0, %v2990
      %v2992 = vpop.f32.mrf.mxu0
      %v2993 = vadd.f32 0.0, %v2992
      %2994 = vmatmul.bf16.gmra.mxu0 %v2908
      %v2995 = vpop.f32.mrf.mxu0
      %v2996 = vadd.f32 0.0, %v2995
      %v2997 = vpop.f32.mrf.mxu0
      %v2998 = vadd.f32 0.0, %v2997
      %2999 = vmatmul.bf16.gmra.mxu0 %v2911
      %v3000 = vpop.f32.mrf.mxu0
      %v3001 = vadd.f32 0.0, %v3000
      %v3002 = vpop.f32.mrf.mxu0
      %v3003 = vadd.f32 0.0, %v3002
      %3004 = vdwg.mxu0
      %v3005 = vadd.f32 %v2782, %v2926
      %v3006 = vadd.f32 %v2783, %v2928
      %v3007 = vadd.f32 %v2784, %v2931
      %v3008 = vadd.f32 %v2785, %v2933
      %v3009 = vadd.f32 %v2786, %v2936
      %v3010 = vadd.f32 %v2787, %v2938
      %v3011 = vadd.f32 %v2788, %v2941
      %v3012 = vadd.f32 %v2789, %v2943
      %v3013 = vadd.f32 %v2790, %v2946
      %v3014 = vadd.f32 %v2791, %v2948
      %v3015 = vadd.f32 %v2792, %v2951
      %v3016 = vadd.f32 %v2793, %v2953
      %v3017 = vadd.f32 %v2794, %v2956
      %v3018 = vadd.f32 %v2795, %v2958
      %v3019 = vadd.f32 %v2796, %v2961
      %v3020 = vadd.f32 %v2797, %v2963
      %v3021 = vadd.f32 %v2798, %v2966
      %v3022 = vadd.f32 %v2799, %v2968
      %v3023 = vadd.f32 %v2800, %v2971
      %v3024 = vadd.f32 %v2801, %v2973
      %v3025 = vadd.f32 %v2802, %v2976
      %v3026 = vadd.f32 %v2803, %v2978
      %v3027 = vadd.f32 %v2804, %v2981
      %v3028 = vadd.f32 %v2805, %v2983
      %v3029 = vadd.f32 %v2806, %v2986
      %v3030 = vadd.f32 %v2807, %v2988
      %v3031 = vadd.f32 %v2808, %v2991
      %v3032 = vadd.f32 %v2809, %v2993
      %v3033 = vadd.f32 %v2810, %v2996
      %v3034 = vadd.f32 %v2811, %v2998
      %v3035 = vadd.f32 %v2812, %v3001
      %v3036 = vadd.f32 %v2813, %v3003
      %v3037 = vld [vmem:[%s2367 + $0x3] sm:$0xff]
      %v3038 = vld [vmem:[%s2367 + $0xb] sm:$0xff]
      %v3039 = vld [vmem:[%s2367 + $0x1b] sm:$0xff]
      %v3040 = vld [vmem:[%s2367 + $0x23] sm:$0xff]
      %v3041 = vld [vmem:[%s2367 + $0x33] sm:$0xff]
      %v3042 = vld [vmem:[%s2367 + $0x3b] sm:$0xff]
      %v3043 = vld [vmem:[%s2367 + $0x4b] sm:$0xff]
      %v3044 = vld [vmem:[%s2367 + $0x53] sm:$0xff]
      %v3045 = vld [vmem:[%s2367 + $0x63] sm:$0xff]
      %v3046 = vld [vmem:[%s2367 + $0x6b] sm:$0xff]
      %v3047 = vld [vmem:[%s2367 + $0x7b] sm:$0xff]
      %v3048 = vld [vmem:[%s2367 + $0x83] sm:$0xff]
      %v3049 = vld [vmem:[%s2367 + $0x93] sm:$0xff]
      %v3050 = vld [vmem:[%s2367 + $0x9b] sm:$0xff]
      %v3051 = vld [vmem:[%s2367 + $0xab] sm:$0xff]
      %v3052 = vld [vmem:[%s2367 + $0xb3] sm:$0xff]
      %v3053 = vld [vmem:[%s2367 + $0xc3] sm:$0xff]
      %v3054 = vld [vmem:[%s2367 + $0xcb] sm:$0xff]
      %v3055 = vld [vmem:[%s2367 + $0xdb] sm:$0xff]
      %v3056 = vld [vmem:[%s2367 + $0xe3] sm:$0xff]
      %v3057 = vld [vmem:[%s2367 + $0xf3] sm:$0xff]
      %v3058 = vld [vmem:[%s2367 + $0xfb] sm:$0xff]
      %v3059 = vld [vmem:[%s2367 + $0x10b] sm:$0xff]
      %v3060 = vld [vmem:[%s2367 + $0x113] sm:$0xff]
      %v3061 = vld [vmem:[%s2367 + $0x123] sm:$0xff]
      %v3062 = vld [vmem:[%s2367 + $0x12b] sm:$0xff]
      %v3063 = vld [vmem:[%s2367 + $0x13b] sm:$0xff]
      %v3064 = vld [vmem:[%s2367 + $0x143] sm:$0xff]
      %v3065 = vld [vmem:[%s2367 + $0x153] sm:$0xff]
      %v3066 = vld [vmem:[%s2367 + $0x15b] sm:$0xff]
      %v3067 = vld [vmem:[%s2367 + $0x16b] sm:$0xff]
      %v3068 = vld [vmem:[%s2367 + $0x173] sm:$0xff]
      %v3069 = vpack.c.bf16 %v3038, %v3037
      %v3070 = vpack.c.bf16 %v3040, %v3039
      %v3071 = vpack.c.bf16 %v3042, %v3041
      %v3072 = vpack.c.bf16 %v3044, %v3043
      %v3073 = vpack.c.bf16 %v3046, %v3045
      %v3074 = vpack.c.bf16 %v3048, %v3047
      %v3075 = vpack.c.bf16 %v3050, %v3049
      %v3076 = vpack.c.bf16 %v3052, %v3051
      %v3077 = vpack.c.bf16 %v3054, %v3053
      %v3078 = vpack.c.bf16 %v3056, %v3055
      %v3079 = vpack.c.bf16 %v3058, %v3057
      %v3080 = vpack.c.bf16 %v3060, %v3059
      %v3081 = vpack.c.bf16 %v3062, %v3061
      %v3082 = vpack.c.bf16 %v3064, %v3063
      %v3083 = vpack.c.bf16 %v3066, %v3065
      %v3084 = vpack.c.bf16 %v3068, %v3067
      %s3085 = scalar_lea.vmem %s1, 26
      %v3086 = vld [vmem:[%s3085] sm:$0x3]
      %v3087 = vpack.c.bf16 %v3086, %v3086
      %v3089 = vsel %vm300, %v3069, 0
      %v3092 = vsel %vm300, %v3070, 0
      %v3095 = vsel %vm300, %v3071, 0
      %v3098 = vsel %vm300, %v3072, 0
      %v3101 = vsel %vm300, %v3073, 0
      %v3104 = vsel %vm300, %v3074, 0
      %v3107 = vsel %vm300, %v3075, 0
      %v3110 = vsel %vm300, %v3076, 0
      %v3113 = vsel %vm300, %v3077, 0
      %v3116 = vsel %vm300, %v3078, 0
      %v3119 = vsel %vm300, %v3079, 0
      %v3122 = vsel %vm300, %v3080, 0
      %v3125 = vsel %vm300, %v3081, 0
      %v3128 = vsel %vm300, %v3082, 0
      %v3131 = vsel %vm300, %v3083, 0
      %v3134 = vsel %vm300, %v3084, 0
      %v3137 = vsel %vm349, %v3087, 0
      %3139 = vmatpush.bf16.msra.mxu0 0
      %3140 = vmatpush.bf16.msra.mxu0 0
      %3141 = vmatpush.bf16.msra.mxu0 0
      %3142 = vmatpush.bf16.msra.mxu0 0
      %3143 = vmatpush.bf16.msra.mxu0 0
      %3144 = vmatpush.bf16.msra.mxu0 0
      %3145 = vmatpush.bf16.msra.mxu0 0
      %3146 = vmatpush.bf16.msra.mxu0 %v3137
      %3147 = vmatmul.bf16.gmra.mxu0 %v3089
      %v3148 = vpop.f32.mrf.mxu0
      %v3149 = vadd.f32 0.0, %v3148
      %v3150 = vpop.f32.mrf.mxu0
      %v3151 = vadd.f32 0.0, %v3150
      %3152 = vmatmul.bf16.gmra.mxu0 %v3092
      %v3153 = vpop.f32.mrf.mxu0
      %v3154 = vadd.f32 0.0, %v3153
      %v3155 = vpop.f32.mrf.mxu0
      %v3156 = vadd.f32 0.0, %v3155
      %3157 = vmatmul.bf16.gmra.mxu0 %v3095
      %v3158 = vpop.f32.mrf.mxu0
      %v3159 = vadd.f32 0.0, %v3158
      %v3160 = vpop.f32.mrf.mxu0
      %v3161 = vadd.f32 0.0, %v3160
      %3162 = vmatmul.bf16.gmra.mxu0 %v3098
      %v3163 = vpop.f32.mrf.mxu0
      %v3164 = vadd.f32 0.0, %v3163
      %v3165 = vpop.f32.mrf.mxu0
      %v3166 = vadd.f32 0.0, %v3165
      %3167 = vmatmul.bf16.gmra.mxu0 %v3101
      %v3168 = vpop.f32.mrf.mxu0
      %v3169 = vadd.f32 0.0, %v3168
      %v3170 = vpop.f32.mrf.mxu0
      %v3171 = vadd.f32 0.0, %v3170
      %3172 = vmatmul.bf16.gmra.mxu0 %v3104
      %v3173 = vpop.f32.mrf.mxu0
      %v3174 = vadd.f32 0.0, %v3173
      %v3175 = vpop.f32.mrf.mxu0
      %v3176 = vadd.f32 0.0, %v3175
      %3177 = vmatmul.bf16.gmra.mxu0 %v3107
      %v3178 = vpop.f32.mrf.mxu0
      %v3179 = vadd.f32 0.0, %v3178
      %v3180 = vpop.f32.mrf.mxu0
      %v3181 = vadd.f32 0.0, %v3180
      %3182 = vmatmul.bf16.gmra.mxu0 %v3110
      %v3183 = vpop.f32.mrf.mxu0
      %v3184 = vadd.f32 0.0, %v3183
      %v3185 = vpop.f32.mrf.mxu0
      %v3186 = vadd.f32 0.0, %v3185
      %3187 = vmatmul.bf16.gmra.mxu0 %v3113
      %v3188 = vpop.f32.mrf.mxu0
      %v3189 = vadd.f32 0.0, %v3188
      %v3190 = vpop.f32.mrf.mxu0
      %v3191 = vadd.f32 0.0, %v3190
      %3192 = vmatmul.bf16.gmra.mxu0 %v3116
      %v3193 = vpop.f32.mrf.mxu0
      %v3194 = vadd.f32 0.0, %v3193
      %v3195 = vpop.f32.mrf.mxu0
      %v3196 = vadd.f32 0.0, %v3195
      %3197 = vmatmul.bf16.gmra.mxu0 %v3119
      %v3198 = vpop.f32.mrf.mxu0
      %v3199 = vadd.f32 0.0, %v3198
      %v3200 = vpop.f32.mrf.mxu0
      %v3201 = vadd.f32 0.0, %v3200
      %3202 = vmatmul.bf16.gmra.mxu0 %v3122
      %v3203 = vpop.f32.mrf.mxu0
      %v3204 = vadd.f32 0.0, %v3203
      %v3205 = vpop.f32.mrf.mxu0
      %v3206 = vadd.f32 0.0, %v3205
      %3207 = vmatmul.bf16.gmra.mxu0 %v3125
      %v3208 = vpop.f32.mrf.mxu0
      %v3209 = vadd.f32 0.0, %v3208
      %v3210 = vpop.f32.mrf.mxu0
      %v3211 = vadd.f32 0.0, %v3210
      %3212 = vmatmul.bf16.gmra.mxu0 %v3128
      %v3213 = vpop.f32.mrf.mxu0
      %v3214 = vadd.f32 0.0, %v3213
      %v3215 = vpop.f32.mrf.mxu0
      %v3216 = vadd.f32 0.0, %v3215
      %3217 = vmatmul.bf16.gmra.mxu0 %v3131
      %v3218 = vpop.f32.mrf.mxu0
      %v3219 = vadd.f32 0.0, %v3218
      %v3220 = vpop.f32.mrf.mxu0
      %v3221 = vadd.f32 0.0, %v3220
      %3222 = vmatmul.bf16.gmra.mxu0 %v3134
      %v3223 = vpop.f32.mrf.mxu0
      %v3224 = vadd.f32 0.0, %v3223
      %v3225 = vpop.f32.mrf.mxu0
      %v3226 = vadd.f32 0.0, %v3225
      %3227 = vdwg.mxu0
      %v3228 = vadd.f32 %v3005, %v3149
      %v3229 = vadd.f32 %v3006, %v3151
      %v3230 = vadd.f32 %v3007, %v3154
      %v3231 = vadd.f32 %v3008, %v3156
      %v3232 = vadd.f32 %v3009, %v3159
      %v3233 = vadd.f32 %v3010, %v3161
      %v3234 = vadd.f32 %v3011, %v3164
      %v3235 = vadd.f32 %v3012, %v3166
      %v3236 = vadd.f32 %v3013, %v3169
      %v3237 = vadd.f32 %v3014, %v3171
      %v3238 = vadd.f32 %v3015, %v3174
      %v3239 = vadd.f32 %v3016, %v3176
      %v3240 = vadd.f32 %v3017, %v3179
      %v3241 = vadd.f32 %v3018, %v3181
      %v3242 = vadd.f32 %v3019, %v3184
      %v3243 = vadd.f32 %v3020, %v3186
      %v3244 = vadd.f32 %v3021, %v3189
      %v3245 = vadd.f32 %v3022, %v3191
      %v3246 = vadd.f32 %v3023, %v3194
      %v3247 = vadd.f32 %v3024, %v3196
      %v3248 = vadd.f32 %v3025, %v3199
      %v3249 = vadd.f32 %v3026, %v3201
      %v3250 = vadd.f32 %v3027, %v3204
      %v3251 = vadd.f32 %v3028, %v3206
      %v3252 = vadd.f32 %v3029, %v3209
      %v3253 = vadd.f32 %v3030, %v3211
      %v3254 = vadd.f32 %v3031, %v3214
      %v3255 = vadd.f32 %v3032, %v3216
      %v3256 = vadd.f32 %v3033, %v3219
      %v3257 = vadd.f32 %v3034, %v3221
      %v3258 = vadd.f32 %v3035, %v3224
      %v3259 = vadd.f32 %v3036, %v3226
      %v3260 = vld [vmem:[%s2367 + $0x4] sm:$0xff]
      %v3261 = vld [vmem:[%s2367 + $0xc] sm:$0xff]
      %v3262 = vld [vmem:[%s2367 + $0x1c] sm:$0xff]
      %v3263 = vld [vmem:[%s2367 + $0x24] sm:$0xff]
      %v3264 = vld [vmem:[%s2367 + $0x34] sm:$0xff]
      %v3265 = vld [vmem:[%s2367 + $0x3c] sm:$0xff]
      %v3266 = vld [vmem:[%s2367 + $0x4c] sm:$0xff]
      %v3267 = vld [vmem:[%s2367 + $0x54] sm:$0xff]
      %v3268 = vld [vmem:[%s2367 + $0x64] sm:$0xff]
      %v3269 = vld [vmem:[%s2367 + $0x6c] sm:$0xff]
      %v3270 = vld [vmem:[%s2367 + $0x7c] sm:$0xff]
      %v3271 = vld [vmem:[%s2367 + $0x84] sm:$0xff]
      %v3272 = vld [vmem:[%s2367 + $0x94] sm:$0xff]
      %v3273 = vld [vmem:[%s2367 + $0x9c] sm:$0xff]
      %v3274 = vld [vmem:[%s2367 + $0xac] sm:$0xff]
      %v3275 = vld [vmem:[%s2367 + $0xb4] sm:$0xff]
      %v3276 = vld [vmem:[%s2367 + $0xc4] sm:$0xff]
      %v3277 = vld [vmem:[%s2367 + $0xcc] sm:$0xff]
      %v3278 = vld [vmem:[%s2367 + $0xdc] sm:$0xff]
      %v3279 = vld [vmem:[%s2367 + $0xe4] sm:$0xff]
      %v3280 = vld [vmem:[%s2367 + $0xf4] sm:$0xff]
      %v3281 = vld [vmem:[%s2367 + $0xfc] sm:$0xff]
      %v3282 = vld [vmem:[%s2367 + $0x10c] sm:$0xff]
      %v3283 = vld [vmem:[%s2367 + $0x114] sm:$0xff]
      %v3284 = vld [vmem:[%s2367 + $0x124] sm:$0xff]
      %v3285 = vld [vmem:[%s2367 + $0x12c] sm:$0xff]
      %v3286 = vld [vmem:[%s2367 + $0x13c] sm:$0xff]
      %v3287 = vld [vmem:[%s2367 + $0x144] sm:$0xff]
      %v3288 = vld [vmem:[%s2367 + $0x154] sm:$0xff]
      %v3289 = vld [vmem:[%s2367 + $0x15c] sm:$0xff]
      %v3290 = vld [vmem:[%s2367 + $0x16c] sm:$0xff]
      %v3291 = vld [vmem:[%s2367 + $0x174] sm:$0xff]
      %v3292 = vpack.c.bf16 %v3261, %v3260
      %v3293 = vpack.c.bf16 %v3263, %v3262
      %v3294 = vpack.c.bf16 %v3265, %v3264
      %v3295 = vpack.c.bf16 %v3267, %v3266
      %v3296 = vpack.c.bf16 %v3269, %v3268
      %v3297 = vpack.c.bf16 %v3271, %v3270
      %v3298 = vpack.c.bf16 %v3273, %v3272
      %v3299 = vpack.c.bf16 %v3275, %v3274
      %v3300 = vpack.c.bf16 %v3277, %v3276
      %v3301 = vpack.c.bf16 %v3279, %v3278
      %v3302 = vpack.c.bf16 %v3281, %v3280
      %v3303 = vpack.c.bf16 %v3283, %v3282
      %v3304 = vpack.c.bf16 %v3285, %v3284
      %v3305 = vpack.c.bf16 %v3287, %v3286
      %v3306 = vpack.c.bf16 %v3289, %v3288
      %v3307 = vpack.c.bf16 %v3291, %v3290
      %s3308 = scalar_lea.vmem %s1, 28
      %v3309 = vld [vmem:[%s3308] sm:$0x3]
      %v3310 = vpack.c.bf16 %v3309, %v3309
      %v3312 = vsel %vm300, %v3292, 0
      %v3315 = vsel %vm300, %v3293, 0
      %v3318 = vsel %vm300, %v3294, 0
      %v3321 = vsel %vm300, %v3295, 0
      %v3324 = vsel %vm300, %v3296, 0
      %v3327 = vsel %vm300, %v3297, 0
      %v3330 = vsel %vm300, %v3298, 0
      %v3333 = vsel %vm300, %v3299, 0
      %v3336 = vsel %vm300, %v3300, 0
      %v3339 = vsel %vm300, %v3301, 0
      %v3342 = vsel %vm300, %v3302, 0
      %v3345 = vsel %vm300, %v3303, 0
      %v3348 = vsel %vm300, %v3304, 0
      %v3351 = vsel %vm300, %v3305, 0
      %v3354 = vsel %vm300, %v3306, 0
      %v3357 = vsel %vm300, %v3307, 0
      %v3360 = vsel %vm349, %v3310, 0
      %3362 = vmatpush.bf16.msra.mxu0 0
      %3363 = vmatpush.bf16.msra.mxu0 0
      %3364 = vmatpush.bf16.msra.mxu0 0
      %3365 = vmatpush.bf16.msra.mxu0 0
      %3366 = vmatpush.bf16.msra.mxu0 0
      %3367 = vmatpush.bf16.msra.mxu0 0
      %3368 = vmatpush.bf16.msra.mxu0 0
      %3369 = vmatpush.bf16.msra.mxu0 %v3360
      %3370 = vmatmul.bf16.gmra.mxu0 %v3312
      %v3371 = vpop.f32.mrf.mxu0
      %v3372 = vadd.f32 0.0, %v3371
      %v3373 = vpop.f32.mrf.mxu0
      %v3374 = vadd.f32 0.0, %v3373
      %3375 = vmatmul.bf16.gmra.mxu0 %v3315
      %v3376 = vpop.f32.mrf.mxu0
      %v3377 = vadd.f32 0.0, %v3376
      %v3378 = vpop.f32.mrf.mxu0
      %v3379 = vadd.f32 0.0, %v3378
      %3380 = vmatmul.bf16.gmra.mxu0 %v3318
      %v3381 = vpop.f32.mrf.mxu0
      %v3382 = vadd.f32 0.0, %v3381
      %v3383 = vpop.f32.mrf.mxu0
      %v3384 = vadd.f32 0.0, %v3383
      %3385 = vmatmul.bf16.gmra.mxu0 %v3321
      %v3386 = vpop.f32.mrf.mxu0
      %v3387 = vadd.f32 0.0, %v3386
      %v3388 = vpop.f32.mrf.mxu0
      %v3389 = vadd.f32 0.0, %v3388
      %3390 = vmatmul.bf16.gmra.mxu0 %v3324
      %v3391 = vpop.f32.mrf.mxu0
      %v3392 = vadd.f32 0.0, %v3391
      %v3393 = vpop.f32.mrf.mxu0
      %v3394 = vadd.f32 0.0, %v3393
      %3395 = vmatmul.bf16.gmra.mxu0 %v3327
      %v3396 = vpop.f32.mrf.mxu0
      %v3397 = vadd.f32 0.0, %v3396
      %v3398 = vpop.f32.mrf.mxu0
      %v3399 = vadd.f32 0.0, %v3398
      %3400 = vmatmul.bf16.gmra.mxu0 %v3330
      %v3401 = vpop.f32.mrf.mxu0
      %v3402 = vadd.f32 0.0, %v3401
      %v3403 = vpop.f32.mrf.mxu0
      %v3404 = vadd.f32 0.0, %v3403
      %3405 = vmatmul.bf16.gmra.mxu0 %v3333
      %v3406 = vpop.f32.mrf.mxu0
      %v3407 = vadd.f32 0.0, %v3406
      %v3408 = vpop.f32.mrf.mxu0
      %v3409 = vadd.f32 0.0, %v3408
      %3410 = vmatmul.bf16.gmra.mxu0 %v3336
      %v3411 = vpop.f32.mrf.mxu0
      %v3412 = vadd.f32 0.0, %v3411
      %v3413 = vpop.f32.mrf.mxu0
      %v3414 = vadd.f32 0.0, %v3413
      %3415 = vmatmul.bf16.gmra.mxu0 %v3339
      %v3416 = vpop.f32.mrf.mxu0
      %v3417 = vadd.f32 0.0, %v3416
      %v3418 = vpop.f32.mrf.mxu0
      %v3419 = vadd.f32 0.0, %v3418
      %3420 = vmatmul.bf16.gmra.mxu0 %v3342
      %v3421 = vpop.f32.mrf.mxu0
      %v3422 = vadd.f32 0.0, %v3421
      %v3423 = vpop.f32.mrf.mxu0
      %v3424 = vadd.f32 0.0, %v3423
      %3425 = vmatmul.bf16.gmra.mxu0 %v3345
      %v3426 = vpop.f32.mrf.mxu0
      %v3427 = vadd.f32 0.0, %v3426
      %v3428 = vpop.f32.mrf.mxu0
      %v3429 = vadd.f32 0.0, %v3428
      %3430 = vmatmul.bf16.gmra.mxu0 %v3348
      %v3431 = vpop.f32.mrf.mxu0
      %v3432 = vadd.f32 0.0, %v3431
      %v3433 = vpop.f32.mrf.mxu0
      %v3434 = vadd.f32 0.0, %v3433
      %3435 = vmatmul.bf16.gmra.mxu0 %v3351
      %v3436 = vpop.f32.mrf.mxu0
      %v3437 = vadd.f32 0.0, %v3436
      %v3438 = vpop.f32.mrf.mxu0
      %v3439 = vadd.f32 0.0, %v3438
      %3440 = vmatmul.bf16.gmra.mxu0 %v3354
      %v3441 = vpop.f32.mrf.mxu0
      %v3442 = vadd.f32 0.0, %v3441
      %v3443 = vpop.f32.mrf.mxu0
      %v3444 = vadd.f32 0.0, %v3443
      %3445 = vmatmul.bf16.gmra.mxu0 %v3357
      %v3446 = vpop.f32.mrf.mxu0
      %v3447 = vadd.f32 0.0, %v3446
      %v3448 = vpop.f32.mrf.mxu0
      %v3449 = vadd.f32 0.0, %v3448
      %3450 = vdwg.mxu0
      %v3451 = vadd.f32 %v3228, %v3372
      %v3452 = vadd.f32 %v3229, %v3374
      %v3453 = vadd.f32 %v3230, %v3377
      %v3454 = vadd.f32 %v3231, %v3379
      %v3455 = vadd.f32 %v3232, %v3382
      %v3456 = vadd.f32 %v3233, %v3384
      %v3457 = vadd.f32 %v3234, %v3387
      %v3458 = vadd.f32 %v3235, %v3389
      %v3459 = vadd.f32 %v3236, %v3392
      %v3460 = vadd.f32 %v3237, %v3394
      %v3461 = vadd.f32 %v3238, %v3397
      %v3462 = vadd.f32 %v3239, %v3399
      %v3463 = vadd.f32 %v3240, %v3402
      %v3464 = vadd.f32 %v3241, %v3404
      %v3465 = vadd.f32 %v3242, %v3407
      %v3466 = vadd.f32 %v3243, %v3409
      %v3467 = vadd.f32 %v3244, %v3412
      %v3468 = vadd.f32 %v3245, %v3414
      %v3469 = vadd.f32 %v3246, %v3417
      %v3470 = vadd.f32 %v3247, %v3419
      %v3471 = vadd.f32 %v3248, %v3422
      %v3472 = vadd.f32 %v3249, %v3424
      %v3473 = vadd.f32 %v3250, %v3427
      %v3474 = vadd.f32 %v3251, %v3429
      %v3475 = vadd.f32 %v3252, %v3432
      %v3476 = vadd.f32 %v3253, %v3434
      %v3477 = vadd.f32 %v3254, %v3437
      %v3478 = vadd.f32 %v3255, %v3439
      %v3479 = vadd.f32 %v3256, %v3442
      %v3480 = vadd.f32 %v3257, %v3444
      %v3481 = vadd.f32 %v3258, %v3447
      %v3482 = vadd.f32 %v3259, %v3449
      %s3483 = scalar_lea.vmem %s192, 72
      %v3484 = vld [vmem:[%s3483] sm:$0xff]
      %v3485 = vld [vmem:[%s3483 + $0x8] sm:$0xff]
      %v3486 = vld [vmem:[%s3483 + $0x18] sm:$0xff]
      %v3487 = vld [vmem:[%s3483 + $0x20] sm:$0xff]
      %v3488 = vld [vmem:[%s3483 + $0x30] sm:$0xff]
      %v3489 = vld [vmem:[%s3483 + $0x38] sm:$0xff]
      %v3490 = vld [vmem:[%s3483 + $0x48] sm:$0xff]
      %v3491 = vld [vmem:[%s3483 + $0x50] sm:$0xff]
      %v3492 = vld [vmem:[%s3483 + $0x60] sm:$0xff]
      %v3493 = vld [vmem:[%s3483 + $0x68] sm:$0xff]
      %v3494 = vld [vmem:[%s3483 + $0x78] sm:$0xff]
      %v3495 = vld [vmem:[%s3483 + $0x80] sm:$0xff]
      %v3496 = vld [vmem:[%s3483 + $0x90] sm:$0xff]
      %v3497 = vld [vmem:[%s3483 + $0x98] sm:$0xff]
      %v3498 = vld [vmem:[%s3483 + $0xa8] sm:$0xff]
      %v3499 = vld [vmem:[%s3483 + $0xb0] sm:$0xff]
      %v3500 = vld [vmem:[%s3483 + $0xc0] sm:$0xff]
      %v3501 = vld [vmem:[%s3483 + $0xc8] sm:$0xff]
      %v3502 = vld [vmem:[%s3483 + $0xd8] sm:$0xff]
      %v3503 = vld [vmem:[%s3483 + $0xe0] sm:$0xff]
      %v3504 = vld [vmem:[%s3483 + $0xf0] sm:$0xff]
      %v3505 = vld [vmem:[%s3483 + $0xf8] sm:$0xff]
      %v3506 = vld [vmem:[%s3483 + $0x108] sm:$0xff]
      %v3507 = vld [vmem:[%s3483 + $0x110] sm:$0xff]
      %v3508 = vld [vmem:[%s3483 + $0x120] sm:$0xff]
      %v3509 = vld [vmem:[%s3483 + $0x128] sm:$0xff]
      %v3510 = vld [vmem:[%s3483 + $0x138] sm:$0xff]
      %v3511 = vld [vmem:[%s3483 + $0x140] sm:$0xff]
      %v3512 = vld [vmem:[%s3483 + $0x150] sm:$0xff]
      %v3513 = vld [vmem:[%s3483 + $0x158] sm:$0xff]
      %v3514 = vld [vmem:[%s3483 + $0x168] sm:$0xff]
      %v3515 = vld [vmem:[%s3483 + $0x170] sm:$0xff]
      %v3516 = vpack.c.bf16 %v3485, %v3484
      %v3517 = vpack.c.bf16 %v3487, %v3486
      %v3518 = vpack.c.bf16 %v3489, %v3488
      %v3519 = vpack.c.bf16 %v3491, %v3490
      %v3520 = vpack.c.bf16 %v3493, %v3492
      %v3521 = vpack.c.bf16 %v3495, %v3494
      %v3522 = vpack.c.bf16 %v3497, %v3496
      %v3523 = vpack.c.bf16 %v3499, %v3498
      %v3524 = vpack.c.bf16 %v3501, %v3500
      %v3525 = vpack.c.bf16 %v3503, %v3502
      %v3526 = vpack.c.bf16 %v3505, %v3504
      %v3527 = vpack.c.bf16 %v3507, %v3506
      %v3528 = vpack.c.bf16 %v3509, %v3508
      %v3529 = vpack.c.bf16 %v3511, %v3510
      %v3530 = vpack.c.bf16 %v3513, %v3512
      %v3531 = vpack.c.bf16 %v3515, %v3514
      %s3532 = scalar_lea.vmem %s1, 30
      %v3533 = vld [vmem:[%s3532] sm:$0x3]
      %v3534 = vpack.c.bf16 %v3533, %v3533
      %v3536 = vsel %vm300, %v3516, 0
      %v3539 = vsel %vm300, %v3517, 0
      %v3542 = vsel %vm300, %v3518, 0
      %v3545 = vsel %vm300, %v3519, 0
      %v3548 = vsel %vm300, %v3520, 0
      %v3551 = vsel %vm300, %v3521, 0
      %v3554 = vsel %vm300, %v3522, 0
      %v3557 = vsel %vm300, %v3523, 0
      %v3560 = vsel %vm300, %v3524, 0
      %v3563 = vsel %vm300, %v3525, 0
      %v3566 = vsel %vm300, %v3526, 0
      %v3569 = vsel %vm300, %v3527, 0
      %v3572 = vsel %vm300, %v3528, 0
      %v3575 = vsel %vm300, %v3529, 0
      %v3578 = vsel %vm300, %v3530, 0
      %v3581 = vsel %vm300, %v3531, 0
      %v3584 = vsel %vm349, %v3534, 0
      %3586 = vmatpush.bf16.msra.mxu0 0
      %3587 = vmatpush.bf16.msra.mxu0 0
      %3588 = vmatpush.bf16.msra.mxu0 0
      %3589 = vmatpush.bf16.msra.mxu0 0
      %3590 = vmatpush.bf16.msra.mxu0 0
      %3591 = vmatpush.bf16.msra.mxu0 0
      %3592 = vmatpush.bf16.msra.mxu0 0
      %3593 = vmatpush.bf16.msra.mxu0 %v3584
      %3594 = vmatmul.bf16.gmra.mxu0 %v3536
      %v3595 = vpop.f32.mrf.mxu0
      %v3596 = vadd.f32 0.0, %v3595
      %v3597 = vpop.f32.mrf.mxu0
      %v3598 = vadd.f32 0.0, %v3597
      %3599 = vmatmul.bf16.gmra.mxu0 %v3539
      %v3600 = vpop.f32.mrf.mxu0
      %v3601 = vadd.f32 0.0, %v3600
      %v3602 = vpop.f32.mrf.mxu0
      %v3603 = vadd.f32 0.0, %v3602
      %3604 = vmatmul.bf16.gmra.mxu0 %v3542
      %v3605 = vpop.f32.mrf.mxu0
      %v3606 = vadd.f32 0.0, %v3605
      %v3607 = vpop.f32.mrf.mxu0
      %v3608 = vadd.f32 0.0, %v3607
      %3609 = vmatmul.bf16.gmra.mxu0 %v3545
      %v3610 = vpop.f32.mrf.mxu0
      %v3611 = vadd.f32 0.0, %v3610
      %v3612 = vpop.f32.mrf.mxu0
      %v3613 = vadd.f32 0.0, %v3612
      %3614 = vmatmul.bf16.gmra.mxu0 %v3548
      %v3615 = vpop.f32.mrf.mxu0
      %v3616 = vadd.f32 0.0, %v3615
      %v3617 = vpop.f32.mrf.mxu0
      %v3618 = vadd.f32 0.0, %v3617
      %3619 = vmatmul.bf16.gmra.mxu0 %v3551
      %v3620 = vpop.f32.mrf.mxu0
      %v3621 = vadd.f32 0.0, %v3620
      %v3622 = vpop.f32.mrf.mxu0
      %v3623 = vadd.f32 0.0, %v3622
      %3624 = vmatmul.bf16.gmra.mxu0 %v3554
      %v3625 = vpop.f32.mrf.mxu0
      %v3626 = vadd.f32 0.0, %v3625
      %v3627 = vpop.f32.mrf.mxu0
      %v3628 = vadd.f32 0.0, %v3627
      %3629 = vmatmul.bf16.gmra.mxu0 %v3557
      %v3630 = vpop.f32.mrf.mxu0
      %v3631 = vadd.f32 0.0, %v3630
      %v3632 = vpop.f32.mrf.mxu0
      %v3633 = vadd.f32 0.0, %v3632
      %3634 = vmatmul.bf16.gmra.mxu0 %v3560
      %v3635 = vpop.f32.mrf.mxu0
      %v3636 = vadd.f32 0.0, %v3635
      %v3637 = vpop.f32.mrf.mxu0
      %v3638 = vadd.f32 0.0, %v3637
      %3639 = vmatmul.bf16.gmra.mxu0 %v3563
      %v3640 = vpop.f32.mrf.mxu0
      %v3641 = vadd.f32 0.0, %v3640
      %v3642 = vpop.f32.mrf.mxu0
      %v3643 = vadd.f32 0.0, %v3642
      %3644 = vmatmul.bf16.gmra.mxu0 %v3566
      %v3645 = vpop.f32.mrf.mxu0
      %v3646 = vadd.f32 0.0, %v3645
      %v3647 = vpop.f32.mrf.mxu0
      %v3648 = vadd.f32 0.0, %v3647
      %3649 = vmatmul.bf16.gmra.mxu0 %v3569
      %v3650 = vpop.f32.mrf.mxu0
      %v3651 = vadd.f32 0.0, %v3650
      %v3652 = vpop.f32.mrf.mxu0
      %v3653 = vadd.f32 0.0, %v3652
      %3654 = vmatmul.bf16.gmra.mxu0 %v3572
      %v3655 = vpop.f32.mrf.mxu0
      %v3656 = vadd.f32 0.0, %v3655
      %v3657 = vpop.f32.mrf.mxu0
      %v3658 = vadd.f32 0.0, %v3657
      %3659 = vmatmul.bf16.gmra.mxu0 %v3575
      %v3660 = vpop.f32.mrf.mxu0
      %v3661 = vadd.f32 0.0, %v3660
      %v3662 = vpop.f32.mrf.mxu0
      %v3663 = vadd.f32 0.0, %v3662
      %3664 = vmatmul.bf16.gmra.mxu0 %v3578
      %v3665 = vpop.f32.mrf.mxu0
      %v3666 = vadd.f32 0.0, %v3665
      %v3667 = vpop.f32.mrf.mxu0
      %v3668 = vadd.f32 0.0, %v3667
      %3669 = vmatmul.bf16.gmra.mxu0 %v3581
      %v3670 = vpop.f32.mrf.mxu0
      %v3671 = vadd.f32 0.0, %v3670
      %v3672 = vpop.f32.mrf.mxu0
      %v3673 = vadd.f32 0.0, %v3672
      %3674 = vdwg.mxu0
      %v3675 = vadd.f32 %v3451, %v3596
      %v3676 = vadd.f32 %v3452, %v3598
      %v3677 = vadd.f32 %v3453, %v3601
      %v3678 = vadd.f32 %v3454, %v3603
      %v3679 = vadd.f32 %v3455, %v3606
      %v3680 = vadd.f32 %v3456, %v3608
      %v3681 = vadd.f32 %v3457, %v3611
      %v3682 = vadd.f32 %v3458, %v3613
      %v3683 = vadd.f32 %v3459, %v3616
      %v3684 = vadd.f32 %v3460, %v3618
      %v3685 = vadd.f32 %v3461, %v3621
      %v3686 = vadd.f32 %v3462, %v3623
      %v3687 = vadd.f32 %v3463, %v3626
      %v3688 = vadd.f32 %v3464, %v3628
      %v3689 = vadd.f32 %v3465, %v3631
      %v3690 = vadd.f32 %v3466, %v3633
      %v3691 = vadd.f32 %v3467, %v3636
      %v3692 = vadd.f32 %v3468, %v3638
      %v3693 = vadd.f32 %v3469, %v3641
      %v3694 = vadd.f32 %v3470, %v3643
      %v3695 = vadd.f32 %v3471, %v3646
      %v3696 = vadd.f32 %v3472, %v3648
      %v3697 = vadd.f32 %v3473, %v3651
      %v3698 = vadd.f32 %v3474, %v3653
      %v3699 = vadd.f32 %v3475, %v3656
      %v3700 = vadd.f32 %v3476, %v3658
      %v3701 = vadd.f32 %v3477, %v3661
      %v3702 = vadd.f32 %v3478, %v3663
      %v3703 = vadd.f32 %v3479, %v3666
      %v3704 = vadd.f32 %v3480, %v3668
      %v3705 = vadd.f32 %v3481, %v3671
      %v3706 = vadd.f32 %v3482, %v3673
      %v3707 = vld [vmem:[%s3483 + $0x1] sm:$0xff]
      %v3708 = vld [vmem:[%s3483 + $0x9] sm:$0xff]
      %v3709 = vld [vmem:[%s3483 + $0x19] sm:$0xff]
      %v3710 = vld [vmem:[%s3483 + $0x21] sm:$0xff]
      %v3711 = vld [vmem:[%s3483 + $0x31] sm:$0xff]
      %v3712 = vld [vmem:[%s3483 + $0x39] sm:$0xff]
      %v3713 = vld [vmem:[%s3483 + $0x49] sm:$0xff]
      %v3714 = vld [vmem:[%s3483 + $0x51] sm:$0xff]
      %v3715 = vld [vmem:[%s3483 + $0x61] sm:$0xff]
      %v3716 = vld [vmem:[%s3483 + $0x69] sm:$0xff]
      %v3717 = vld [vmem:[%s3483 + $0x79] sm:$0xff]
      %v3718 = vld [vmem:[%s3483 + $0x81] sm:$0xff]
      %v3719 = vld [vmem:[%s3483 + $0x91] sm:$0xff]
      %v3720 = vld [vmem:[%s3483 + $0x99] sm:$0xff]
      %v3721 = vld [vmem:[%s3483 + $0xa9] sm:$0xff]
      %v3722 = vld [vmem:[%s3483 + $0xb1] sm:$0xff]
      %v3723 = vld [vmem:[%s3483 + $0xc1] sm:$0xff]
      %v3724 = vld [vmem:[%s3483 + $0xc9] sm:$0xff]
      %v3725 = vld [vmem:[%s3483 + $0xd9] sm:$0xff]
      %v3726 = vld [vmem:[%s3483 + $0xe1] sm:$0xff]
      %v3727 = vld [vmem:[%s3483 + $0xf1] sm:$0xff]
      %v3728 = vld [vmem:[%s3483 + $0xf9] sm:$0xff]
      %v3729 = vld [vmem:[%s3483 + $0x109] sm:$0xff]
      %v3730 = vld [vmem:[%s3483 + $0x111] sm:$0xff]
      %v3731 = vld [vmem:[%s3483 + $0x121] sm:$0xff]
      %v3732 = vld [vmem:[%s3483 + $0x129] sm:$0xff]
      %v3733 = vld [vmem:[%s3483 + $0x139] sm:$0xff]
      %v3734 = vld [vmem:[%s3483 + $0x141] sm:$0xff]
      %v3735 = vld [vmem:[%s3483 + $0x151] sm:$0xff]
      %v3736 = vld [vmem:[%s3483 + $0x159] sm:$0xff]
      %v3737 = vld [vmem:[%s3483 + $0x169] sm:$0xff]
      %v3738 = vld [vmem:[%s3483 + $0x171] sm:$0xff]
      %v3739 = vpack.c.bf16 %v3708, %v3707
      %v3740 = vpack.c.bf16 %v3710, %v3709
      %v3741 = vpack.c.bf16 %v3712, %v3711
      %v3742 = vpack.c.bf16 %v3714, %v3713
      %v3743 = vpack.c.bf16 %v3716, %v3715
      %v3744 = vpack.c.bf16 %v3718, %v3717
      %v3745 = vpack.c.bf16 %v3720, %v3719
      %v3746 = vpack.c.bf16 %v3722, %v3721
      %v3747 = vpack.c.bf16 %v3724, %v3723
      %v3748 = vpack.c.bf16 %v3726, %v3725
      %v3749 = vpack.c.bf16 %v3728, %v3727
      %v3750 = vpack.c.bf16 %v3730, %v3729
      %v3751 = vpack.c.bf16 %v3732, %v3731
      %v3752 = vpack.c.bf16 %v3734, %v3733
      %v3753 = vpack.c.bf16 %v3736, %v3735
      %v3754 = vpack.c.bf16 %v3738, %v3737
      %s3755 = scalar_lea.vmem %s1, 32
      %v3756 = vld [vmem:[%s3755] sm:$0x3]
      %v3757 = vpack.c.bf16 %v3756, %v3756
      %v3759 = vsel %vm300, %v3739, 0
      %v3762 = vsel %vm300, %v3740, 0
      %v3765 = vsel %vm300, %v3741, 0
      %v3768 = vsel %vm300, %v3742, 0
      %v3771 = vsel %vm300, %v3743, 0
      %v3774 = vsel %vm300, %v3744, 0
      %v3777 = vsel %vm300, %v3745, 0
      %v3780 = vsel %vm300, %v3746, 0
      %v3783 = vsel %vm300, %v3747, 0
      %v3786 = vsel %vm300, %v3748, 0
      %v3789 = vsel %vm300, %v3749, 0
      %v3792 = vsel %vm300, %v3750, 0
      %v3795 = vsel %vm300, %v3751, 0
      %v3798 = vsel %vm300, %v3752, 0
      %v3801 = vsel %vm300, %v3753, 0
      %v3804 = vsel %vm300, %v3754, 0
      %v3807 = vsel %vm349, %v3757, 0
      %3809 = vmatpush.bf16.msra.mxu0 0
      %3810 = vmatpush.bf16.msra.mxu0 0
      %3811 = vmatpush.bf16.msra.mxu0 0
      %3812 = vmatpush.bf16.msra.mxu0 0
      %3813 = vmatpush.bf16.msra.mxu0 0
      %3814 = vmatpush.bf16.msra.mxu0 0
      %3815 = vmatpush.bf16.msra.mxu0 0
      %3816 = vmatpush.bf16.msra.mxu0 %v3807
      %3817 = vmatmul.bf16.gmra.mxu0 %v3759
      %v3818 = vpop.f32.mrf.mxu0
      %v3819 = vadd.f32 0.0, %v3818
      %v3820 = vpop.f32.mrf.mxu0
      %v3821 = vadd.f32 0.0, %v3820
      %3822 = vmatmul.bf16.gmra.mxu0 %v3762
      %v3823 = vpop.f32.mrf.mxu0
      %v3824 = vadd.f32 0.0, %v3823
      %v3825 = vpop.f32.mrf.mxu0
      %v3826 = vadd.f32 0.0, %v3825
      %3827 = vmatmul.bf16.gmra.mxu0 %v3765
      %v3828 = vpop.f32.mrf.mxu0
      %v3829 = vadd.f32 0.0, %v3828
      %v3830 = vpop.f32.mrf.mxu0
      %v3831 = vadd.f32 0.0, %v3830
      %3832 = vmatmul.bf16.gmra.mxu0 %v3768
      %v3833 = vpop.f32.mrf.mxu0
      %v3834 = vadd.f32 0.0, %v3833
      %v3835 = vpop.f32.mrf.mxu0
      %v3836 = vadd.f32 0.0, %v3835
      %3837 = vmatmul.bf16.gmra.mxu0 %v3771
      %v3838 = vpop.f32.mrf.mxu0
      %v3839 = vadd.f32 0.0, %v3838
      %v3840 = vpop.f32.mrf.mxu0
      %v3841 = vadd.f32 0.0, %v3840
      %3842 = vmatmul.bf16.gmra.mxu0 %v3774
      %v3843 = vpop.f32.mrf.mxu0
      %v3844 = vadd.f32 0.0, %v3843
      %v3845 = vpop.f32.mrf.mxu0
      %v3846 = vadd.f32 0.0, %v3845
      %3847 = vmatmul.bf16.gmra.mxu0 %v3777
      %v3848 = vpop.f32.mrf.mxu0
      %v3849 = vadd.f32 0.0, %v3848
      %v3850 = vpop.f32.mrf.mxu0
      %v3851 = vadd.f32 0.0, %v3850
      %3852 = vmatmul.bf16.gmra.mxu0 %v3780
      %v3853 = vpop.f32.mrf.mxu0
      %v3854 = vadd.f32 0.0, %v3853
      %v3855 = vpop.f32.mrf.mxu0
      %v3856 = vadd.f32 0.0, %v3855
      %3857 = vmatmul.bf16.gmra.mxu0 %v3783
      %v3858 = vpop.f32.mrf.mxu0
      %v3859 = vadd.f32 0.0, %v3858
      %v3860 = vpop.f32.mrf.mxu0
      %v3861 = vadd.f32 0.0, %v3860
      %3862 = vmatmul.bf16.gmra.mxu0 %v3786
      %v3863 = vpop.f32.mrf.mxu0
      %v3864 = vadd.f32 0.0, %v3863
      %v3865 = vpop.f32.mrf.mxu0
      %v3866 = vadd.f32 0.0, %v3865
      %3867 = vmatmul.bf16.gmra.mxu0 %v3789
      %v3868 = vpop.f32.mrf.mxu0
      %v3869 = vadd.f32 0.0, %v3868
      %v3870 = vpop.f32.mrf.mxu0
      %v3871 = vadd.f32 0.0, %v3870
      %3872 = vmatmul.bf16.gmra.mxu0 %v3792
      %v3873 = vpop.f32.mrf.mxu0
      %v3874 = vadd.f32 0.0, %v3873
      %v3875 = vpop.f32.mrf.mxu0
      %v3876 = vadd.f32 0.0, %v3875
      %3877 = vmatmul.bf16.gmra.mxu0 %v3795
      %v3878 = vpop.f32.mrf.mxu0
      %v3879 = vadd.f32 0.0, %v3878
      %v3880 = vpop.f32.mrf.mxu0
      %v3881 = vadd.f32 0.0, %v3880
      %3882 = vmatmul.bf16.gmra.mxu0 %v3798
      %v3883 = vpop.f32.mrf.mxu0
      %v3884 = vadd.f32 0.0, %v3883
      %v3885 = vpop.f32.mrf.mxu0
      %v3886 = vadd.f32 0.0, %v3885
      %3887 = vmatmul.bf16.gmra.mxu0 %v3801
      %v3888 = vpop.f32.mrf.mxu0
      %v3889 = vadd.f32 0.0, %v3888
      %v3890 = vpop.f32.mrf.mxu0
      %v3891 = vadd.f32 0.0, %v3890
      %3892 = vmatmul.bf16.gmra.mxu0 %v3804
      %v3893 = vpop.f32.mrf.mxu0
      %v3894 = vadd.f32 0.0, %v3893
      %v3895 = vpop.f32.mrf.mxu0
      %v3896 = vadd.f32 0.0, %v3895
      %3897 = vdwg.mxu0
      %v3898 = vadd.f32 %v3675, %v3819
      %v3899 = vadd.f32 %v3676, %v3821
      %v3900 = vadd.f32 %v3677, %v3824
      %v3901 = vadd.f32 %v3678, %v3826
      %v3902 = vadd.f32 %v3679, %v3829
      %v3903 = vadd.f32 %v3680, %v3831
      %v3904 = vadd.f32 %v3681, %v3834
      %v3905 = vadd.f32 %v3682, %v3836
      %v3906 = vadd.f32 %v3683, %v3839
      %v3907 = vadd.f32 %v3684, %v3841
      %v3908 = vadd.f32 %v3685, %v3844
      %v3909 = vadd.f32 %v3686, %v3846
      %v3910 = vadd.f32 %v3687, %v3849
      %v3911 = vadd.f32 %v3688, %v3851
      %v3912 = vadd.f32 %v3689, %v3854
      %v3913 = vadd.f32 %v3690, %v3856
      %v3914 = vadd.f32 %v3691, %v3859
      %v3915 = vadd.f32 %v3692, %v3861
      %v3916 = vadd.f32 %v3693, %v3864
      %v3917 = vadd.f32 %v3694, %v3866
      %v3918 = vadd.f32 %v3695, %v3869
      %v3919 = vadd.f32 %v3696, %v3871
      %v3920 = vadd.f32 %v3697, %v3874
      %v3921 = vadd.f32 %v3698, %v3876
      %v3922 = vadd.f32 %v3699, %v3879
      %v3923 = vadd.f32 %v3700, %v3881
      %v3924 = vadd.f32 %v3701, %v3884
      %v3925 = vadd.f32 %v3702, %v3886
      %v3926 = vadd.f32 %v3703, %v3889
      %v3927 = vadd.f32 %v3704, %v3891
      %v3928 = vadd.f32 %v3705, %v3894
      %v3929 = vadd.f32 %v3706, %v3896
      %v3930 = vld [vmem:[%s3483 + $0x2] sm:$0xff]
      %v3931 = vld [vmem:[%s3483 + $0xa] sm:$0xff]
      %v3932 = vld [vmem:[%s3483 + $0x1a] sm:$0xff]
      %v3933 = vld [vmem:[%s3483 + $0x22] sm:$0xff]
      %v3934 = vld [vmem:[%s3483 + $0x32] sm:$0xff]
      %v3935 = vld [vmem:[%s3483 + $0x3a] sm:$0xff]
      %v3936 = vld [vmem:[%s3483 + $0x4a] sm:$0xff]
      %v3937 = vld [vmem:[%s3483 + $0x52] sm:$0xff]
      %v3938 = vld [vmem:[%s3483 + $0x62] sm:$0xff]
      %v3939 = vld [vmem:[%s3483 + $0x6a] sm:$0xff]
      %v3940 = vld [vmem:[%s3483 + $0x7a] sm:$0xff]
      %v3941 = vld [vmem:[%s3483 + $0x82] sm:$0xff]
      %v3942 = vld [vmem:[%s3483 + $0x92] sm:$0xff]
      %v3943 = vld [vmem:[%s3483 + $0x9a] sm:$0xff]
      %v3944 = vld [vmem:[%s3483 + $0xaa] sm:$0xff]
      %v3945 = vld [vmem:[%s3483 + $0xb2] sm:$0xff]
      %v3946 = vld [vmem:[%s3483 + $0xc2] sm:$0xff]
      %v3947 = vld [vmem:[%s3483 + $0xca] sm:$0xff]
      %v3948 = vld [vmem:[%s3483 + $0xda] sm:$0xff]
      %v3949 = vld [vmem:[%s3483 + $0xe2] sm:$0xff]
      %v3950 = vld [vmem:[%s3483 + $0xf2] sm:$0xff]
      %v3951 = vld [vmem:[%s3483 + $0xfa] sm:$0xff]
      %v3952 = vld [vmem:[%s3483 + $0x10a] sm:$0xff]
      %v3953 = vld [vmem:[%s3483 + $0x112] sm:$0xff]
      %v3954 = vld [vmem:[%s3483 + $0x122] sm:$0xff]
      %v3955 = vld [vmem:[%s3483 + $0x12a] sm:$0xff]
      %v3956 = vld [vmem:[%s3483 + $0x13a] sm:$0xff]
      %v3957 = vld [vmem:[%s3483 + $0x142] sm:$0xff]
      %v3958 = vld [vmem:[%s3483 + $0x152] sm:$0xff]
      %v3959 = vld [vmem:[%s3483 + $0x15a] sm:$0xff]
      %v3960 = vld [vmem:[%s3483 + $0x16a] sm:$0xff]
      %v3961 = vld [vmem:[%s3483 + $0x172] sm:$0xff]
      %v3962 = vpack.c.bf16 %v3931, %v3930
      %v3963 = vpack.c.bf16 %v3933, %v3932
      %v3964 = vpack.c.bf16 %v3935, %v3934
      %v3965 = vpack.c.bf16 %v3937, %v3936
      %v3966 = vpack.c.bf16 %v3939, %v3938
      %v3967 = vpack.c.bf16 %v3941, %v3940
      %v3968 = vpack.c.bf16 %v3943, %v3942
      %v3969 = vpack.c.bf16 %v3945, %v3944
      %v3970 = vpack.c.bf16 %v3947, %v3946
      %v3971 = vpack.c.bf16 %v3949, %v3948
      %v3972 = vpack.c.bf16 %v3951, %v3950
      %v3973 = vpack.c.bf16 %v3953, %v3952
      %v3974 = vpack.c.bf16 %v3955, %v3954
      %v3975 = vpack.c.bf16 %v3957, %v3956
      %v3976 = vpack.c.bf16 %v3959, %v3958
      %v3977 = vpack.c.bf16 %v3961, %v3960
      %s3978 = scalar_lea.vmem %s1, 34
      %v3979 = vld [vmem:[%s3978] sm:$0x3]
      %v3980 = vpack.c.bf16 %v3979, %v3979
      %v3982 = vsel %vm300, %v3962, 0
      %v3985 = vsel %vm300, %v3963, 0
      %v3988 = vsel %vm300, %v3964, 0
      %v3991 = vsel %vm300, %v3965, 0
      %v3994 = vsel %vm300, %v3966, 0
      %v3997 = vsel %vm300, %v3967, 0
      %v4000 = vsel %vm300, %v3968, 0
      %v4003 = vsel %vm300, %v3969, 0
      %v4006 = vsel %vm300, %v3970, 0
      %v4009 = vsel %vm300, %v3971, 0
      %v4012 = vsel %vm300, %v3972, 0
      %v4015 = vsel %vm300, %v3973, 0
      %v4018 = vsel %vm300, %v3974, 0
      %v4021 = vsel %vm300, %v3975, 0
      %v4024 = vsel %vm300, %v3976, 0
      %v4027 = vsel %vm300, %v3977, 0
      %v4030 = vsel %vm349, %v3980, 0
      %4032 = vmatpush.bf16.msra.mxu0 0
      %4033 = vmatpush.bf16.msra.mxu0 0
      %4034 = vmatpush.bf16.msra.mxu0 0
      %4035 = vmatpush.bf16.msra.mxu0 0
      %4036 = vmatpush.bf16.msra.mxu0 0
      %4037 = vmatpush.bf16.msra.mxu0 0
      %4038 = vmatpush.bf16.msra.mxu0 0
      %4039 = vmatpush.bf16.msra.mxu0 %v4030
      %4040 = vmatmul.bf16.gmra.mxu0 %v3982
      %v4041 = vpop.f32.mrf.mxu0
      %v4042 = vadd.f32 0.0, %v4041
      %v4043 = vpop.f32.mrf.mxu0
      %v4044 = vadd.f32 0.0, %v4043
      %4045 = vmatmul.bf16.gmra.mxu0 %v3985
      %v4046 = vpop.f32.mrf.mxu0
      %v4047 = vadd.f32 0.0, %v4046
      %v4048 = vpop.f32.mrf.mxu0
      %v4049 = vadd.f32 0.0, %v4048
      %4050 = vmatmul.bf16.gmra.mxu0 %v3988
      %v4051 = vpop.f32.mrf.mxu0
      %v4052 = vadd.f32 0.0, %v4051
      %v4053 = vpop.f32.mrf.mxu0
      %v4054 = vadd.f32 0.0, %v4053
      %4055 = vmatmul.bf16.gmra.mxu0 %v3991
      %v4056 = vpop.f32.mrf.mxu0
      %v4057 = vadd.f32 0.0, %v4056
      %v4058 = vpop.f32.mrf.mxu0
      %v4059 = vadd.f32 0.0, %v4058
      %4060 = vmatmul.bf16.gmra.mxu0 %v3994
      %v4061 = vpop.f32.mrf.mxu0
      %v4062 = vadd.f32 0.0, %v4061
      %v4063 = vpop.f32.mrf.mxu0
      %v4064 = vadd.f32 0.0, %v4063
      %4065 = vmatmul.bf16.gmra.mxu0 %v3997
      %v4066 = vpop.f32.mrf.mxu0
      %v4067 = vadd.f32 0.0, %v4066
      %v4068 = vpop.f32.mrf.mxu0
      %v4069 = vadd.f32 0.0, %v4068
      %4070 = vmatmul.bf16.gmra.mxu0 %v4000
      %v4071 = vpop.f32.mrf.mxu0
      %v4072 = vadd.f32 0.0, %v4071
      %v4073 = vpop.f32.mrf.mxu0
      %v4074 = vadd.f32 0.0, %v4073
      %4075 = vmatmul.bf16.gmra.mxu0 %v4003
      %v4076 = vpop.f32.mrf.mxu0
      %v4077 = vadd.f32 0.0, %v4076
      %v4078 = vpop.f32.mrf.mxu0
      %v4079 = vadd.f32 0.0, %v4078
      %4080 = vmatmul.bf16.gmra.mxu0 %v4006
      %v4081 = vpop.f32.mrf.mxu0
      %v4082 = vadd.f32 0.0, %v4081
      %v4083 = vpop.f32.mrf.mxu0
      %v4084 = vadd.f32 0.0, %v4083
      %4085 = vmatmul.bf16.gmra.mxu0 %v4009
      %v4086 = vpop.f32.mrf.mxu0
      %v4087 = vadd.f32 0.0, %v4086
      %v4088 = vpop.f32.mrf.mxu0
      %v4089 = vadd.f32 0.0, %v4088
      %4090 = vmatmul.bf16.gmra.mxu0 %v4012
      %v4091 = vpop.f32.mrf.mxu0
      %v4092 = vadd.f32 0.0, %v4091
      %v4093 = vpop.f32.mrf.mxu0
      %v4094 = vadd.f32 0.0, %v4093
      %4095 = vmatmul.bf16.gmra.mxu0 %v4015
      %v4096 = vpop.f32.mrf.mxu0
      %v4097 = vadd.f32 0.0, %v4096
      %v4098 = vpop.f32.mrf.mxu0
      %v4099 = vadd.f32 0.0, %v4098
      %4100 = vmatmul.bf16.gmra.mxu0 %v4018
      %v4101 = vpop.f32.mrf.mxu0
      %v4102 = vadd.f32 0.0, %v4101
      %v4103 = vpop.f32.mrf.mxu0
      %v4104 = vadd.f32 0.0, %v4103
      %4105 = vmatmul.bf16.gmra.mxu0 %v4021
      %v4106 = vpop.f32.mrf.mxu0
      %v4107 = vadd.f32 0.0, %v4106
      %v4108 = vpop.f32.mrf.mxu0
      %v4109 = vadd.f32 0.0, %v4108
      %4110 = vmatmul.bf16.gmra.mxu0 %v4024
      %v4111 = vpop.f32.mrf.mxu0
      %v4112 = vadd.f32 0.0, %v4111
      %v4113 = vpop.f32.mrf.mxu0
      %v4114 = vadd.f32 0.0, %v4113
      %4115 = vmatmul.bf16.gmra.mxu0 %v4027
      %v4116 = vpop.f32.mrf.mxu0
      %v4117 = vadd.f32 0.0, %v4116
      %v4118 = vpop.f32.mrf.mxu0
      %v4119 = vadd.f32 0.0, %v4118
      %4120 = vdwg.mxu0
      %v4121 = vadd.f32 %v3898, %v4042
      %v4122 = vadd.f32 %v3899, %v4044
      %v4123 = vadd.f32 %v3900, %v4047
      %v4124 = vadd.f32 %v3901, %v4049
      %v4125 = vadd.f32 %v3902, %v4052
      %v4126 = vadd.f32 %v3903, %v4054
      %v4127 = vadd.f32 %v3904, %v4057
      %v4128 = vadd.f32 %v3905, %v4059
      %v4129 = vadd.f32 %v3906, %v4062
      %v4130 = vadd.f32 %v3907, %v4064
      %v4131 = vadd.f32 %v3908, %v4067
      %v4132 = vadd.f32 %v3909, %v4069
      %v4133 = vadd.f32 %v3910, %v4072
      %v4134 = vadd.f32 %v3911, %v4074
      %v4135 = vadd.f32 %v3912, %v4077
      %v4136 = vadd.f32 %v3913, %v4079
      %v4137 = vadd.f32 %v3914, %v4082
      %v4138 = vadd.f32 %v3915, %v4084
      %v4139 = vadd.f32 %v3916, %v4087
      %v4140 = vadd.f32 %v3917, %v4089
      %v4141 = vadd.f32 %v3918, %v4092
      %v4142 = vadd.f32 %v3919, %v4094
      %v4143 = vadd.f32 %v3920, %v4097
      %v4144 = vadd.f32 %v3921, %v4099
      %v4145 = vadd.f32 %v3922, %v4102
      %v4146 = vadd.f32 %v3923, %v4104
      %v4147 = vadd.f32 %v3924, %v4107
      %v4148 = vadd.f32 %v3925, %v4109
      %v4149 = vadd.f32 %v3926, %v4112
      %v4150 = vadd.f32 %v3927, %v4114
      %v4151 = vadd.f32 %v3928, %v4117
      %v4152 = vadd.f32 %v3929, %v4119
      %v4153 = vld [vmem:[%s3483 + $0x3] sm:$0xff]
      %v4154 = vld [vmem:[%s3483 + $0xb] sm:$0xff]
      %v4155 = vld [vmem:[%s3483 + $0x1b] sm:$0xff]
      %v4156 = vld [vmem:[%s3483 + $0x23] sm:$0xff]
      %v4157 = vld [vmem:[%s3483 + $0x33] sm:$0xff]
      %v4158 = vld [vmem:[%s3483 + $0x3b] sm:$0xff]
      %v4159 = vld [vmem:[%s3483 + $0x4b] sm:$0xff]
      %v4160 = vld [vmem:[%s3483 + $0x53] sm:$0xff]
      %v4161 = vld [vmem:[%s3483 + $0x63] sm:$0xff]
      %v4162 = vld [vmem:[%s3483 + $0x6b] sm:$0xff]
      %v4163 = vld [vmem:[%s3483 + $0x7b] sm:$0xff]
      %v4164 = vld [vmem:[%s3483 + $0x83] sm:$0xff]
      %v4165 = vld [vmem:[%s3483 + $0x93] sm:$0xff]
      %v4166 = vld [vmem:[%s3483 + $0x9b] sm:$0xff]
      %v4167 = vld [vmem:[%s3483 + $0xab] sm:$0xff]
      %v4168 = vld [vmem:[%s3483 + $0xb3] sm:$0xff]
      %v4169 = vld [vmem:[%s3483 + $0xc3] sm:$0xff]
      %v4170 = vld [vmem:[%s3483 + $0xcb] sm:$0xff]
      %v4171 = vld [vmem:[%s3483 + $0xdb] sm:$0xff]
      %v4172 = vld [vmem:[%s3483 + $0xe3] sm:$0xff]
      %v4173 = vld [vmem:[%s3483 + $0xf3] sm:$0xff]
      %v4174 = vld [vmem:[%s3483 + $0xfb] sm:$0xff]
      %v4175 = vld [vmem:[%s3483 + $0x10b] sm:$0xff]
      %v4176 = vld [vmem:[%s3483 + $0x113] sm:$0xff]
      %v4177 = vld [vmem:[%s3483 + $0x123] sm:$0xff]
      %v4178 = vld [vmem:[%s3483 + $0x12b] sm:$0xff]
      %v4179 = vld [vmem:[%s3483 + $0x13b] sm:$0xff]
      %v4180 = vld [vmem:[%s3483 + $0x143] sm:$0xff]
      %v4181 = vld [vmem:[%s3483 + $0x153] sm:$0xff]
      %v4182 = vld [vmem:[%s3483 + $0x15b] sm:$0xff]
      %v4183 = vld [vmem:[%s3483 + $0x16b] sm:$0xff]
      %v4184 = vld [vmem:[%s3483 + $0x173] sm:$0xff]
      %v4185 = vpack.c.bf16 %v4154, %v4153
      %v4186 = vpack.c.bf16 %v4156, %v4155
      %v4187 = vpack.c.bf16 %v4158, %v4157
      %v4188 = vpack.c.bf16 %v4160, %v4159
      %v4189 = vpack.c.bf16 %v4162, %v4161
      %v4190 = vpack.c.bf16 %v4164, %v4163
      %v4191 = vpack.c.bf16 %v4166, %v4165
      %v4192 = vpack.c.bf16 %v4168, %v4167
      %v4193 = vpack.c.bf16 %v4170, %v4169
      %v4194 = vpack.c.bf16 %v4172, %v4171
      %v4195 = vpack.c.bf16 %v4174, %v4173
      %v4196 = vpack.c.bf16 %v4176, %v4175
      %v4197 = vpack.c.bf16 %v4178, %v4177
      %v4198 = vpack.c.bf16 %v4180, %v4179
      %v4199 = vpack.c.bf16 %v4182, %v4181
      %v4200 = vpack.c.bf16 %v4184, %v4183
      %s4201 = scalar_lea.vmem %s1, 36
      %v4202 = vld [vmem:[%s4201] sm:$0x3]
      %v4203 = vpack.c.bf16 %v4202, %v4202
      %v4205 = vsel %vm300, %v4185, 0
      %v4208 = vsel %vm300, %v4186, 0
      %v4211 = vsel %vm300, %v4187, 0
      %v4214 = vsel %vm300, %v4188, 0
      %v4217 = vsel %vm300, %v4189, 0
      %v4220 = vsel %vm300, %v4190, 0
      %v4223 = vsel %vm300, %v4191, 0
      %v4226 = vsel %vm300, %v4192, 0
      %v4229 = vsel %vm300, %v4193, 0
      %v4232 = vsel %vm300, %v4194, 0
      %v4235 = vsel %vm300, %v4195, 0
      %v4238 = vsel %vm300, %v4196, 0
      %v4241 = vsel %vm300, %v4197, 0
      %v4244 = vsel %vm300, %v4198, 0
      %v4247 = vsel %vm300, %v4199, 0
      %v4250 = vsel %vm300, %v4200, 0
      %v4253 = vsel %vm349, %v4203, 0
      %4255 = vmatpush.bf16.msra.mxu0 0
      %4256 = vmatpush.bf16.msra.mxu0 0
      %4257 = vmatpush.bf16.msra.mxu0 0
      %4258 = vmatpush.bf16.msra.mxu0 0
      %4259 = vmatpush.bf16.msra.mxu0 0
      %4260 = vmatpush.bf16.msra.mxu0 0
      %4261 = vmatpush.bf16.msra.mxu0 0
      %4262 = vmatpush.bf16.msra.mxu0 %v4253
      %4263 = vmatmul.bf16.gmra.mxu0 %v4205
      %v4264 = vpop.f32.mrf.mxu0
      %v4265 = vadd.f32 0.0, %v4264
      %v4266 = vpop.f32.mrf.mxu0
      %v4267 = vadd.f32 0.0, %v4266
      %4268 = vmatmul.bf16.gmra.mxu0 %v4208
      %v4269 = vpop.f32.mrf.mxu0
      %v4270 = vadd.f32 0.0, %v4269
      %v4271 = vpop.f32.mrf.mxu0
      %v4272 = vadd.f32 0.0, %v4271
      %4273 = vmatmul.bf16.gmra.mxu0 %v4211
      %v4274 = vpop.f32.mrf.mxu0
      %v4275 = vadd.f32 0.0, %v4274
      %v4276 = vpop.f32.mrf.mxu0
      %v4277 = vadd.f32 0.0, %v4276
      %4278 = vmatmul.bf16.gmra.mxu0 %v4214
      %v4279 = vpop.f32.mrf.mxu0
      %v4280 = vadd.f32 0.0, %v4279
      %v4281 = vpop.f32.mrf.mxu0
      %v4282 = vadd.f32 0.0, %v4281
      %4283 = vmatmul.bf16.gmra.mxu0 %v4217
      %v4284 = vpop.f32.mrf.mxu0
      %v4285 = vadd.f32 0.0, %v4284
      %v4286 = vpop.f32.mrf.mxu0
      %v4287 = vadd.f32 0.0, %v4286
      %4288 = vmatmul.bf16.gmra.mxu0 %v4220
      %v4289 = vpop.f32.mrf.mxu0
      %v4290 = vadd.f32 0.0, %v4289
      %v4291 = vpop.f32.mrf.mxu0
      %v4292 = vadd.f32 0.0, %v4291
      %4293 = vmatmul.bf16.gmra.mxu0 %v4223
      %v4294 = vpop.f32.mrf.mxu0
      %v4295 = vadd.f32 0.0, %v4294
      %v4296 = vpop.f32.mrf.mxu0
      %v4297 = vadd.f32 0.0, %v4296
      %4298 = vmatmul.bf16.gmra.mxu0 %v4226
      %v4299 = vpop.f32.mrf.mxu0
      %v4300 = vadd.f32 0.0, %v4299
      %v4301 = vpop.f32.mrf.mxu0
      %v4302 = vadd.f32 0.0, %v4301
      %4303 = vmatmul.bf16.gmra.mxu0 %v4229
      %v4304 = vpop.f32.mrf.mxu0
      %v4305 = vadd.f32 0.0, %v4304
      %v4306 = vpop.f32.mrf.mxu0
      %v4307 = vadd.f32 0.0, %v4306
      %4308 = vmatmul.bf16.gmra.mxu0 %v4232
      %v4309 = vpop.f32.mrf.mxu0
      %v4310 = vadd.f32 0.0, %v4309
      %v4311 = vpop.f32.mrf.mxu0
      %v4312 = vadd.f32 0.0, %v4311
      %4313 = vmatmul.bf16.gmra.mxu0 %v4235
      %v4314 = vpop.f32.mrf.mxu0
      %v4315 = vadd.f32 0.0, %v4314
      %v4316 = vpop.f32.mrf.mxu0
      %v4317 = vadd.f32 0.0, %v4316
      %4318 = vmatmul.bf16.gmra.mxu0 %v4238
      %v4319 = vpop.f32.mrf.mxu0
      %v4320 = vadd.f32 0.0, %v4319
      %v4321 = vpop.f32.mrf.mxu0
      %v4322 = vadd.f32 0.0, %v4321
      %4323 = vmatmul.bf16.gmra.mxu0 %v4241
      %v4324 = vpop.f32.mrf.mxu0
      %v4325 = vadd.f32 0.0, %v4324
      %v4326 = vpop.f32.mrf.mxu0
      %v4327 = vadd.f32 0.0, %v4326
      %4328 = vmatmul.bf16.gmra.mxu0 %v4244
      %v4329 = vpop.f32.mrf.mxu0
      %v4330 = vadd.f32 0.0, %v4329
      %v4331 = vpop.f32.mrf.mxu0
      %v4332 = vadd.f32 0.0, %v4331
      %4333 = vmatmul.bf16.gmra.mxu0 %v4247
      %v4334 = vpop.f32.mrf.mxu0
      %v4335 = vadd.f32 0.0, %v4334
      %v4336 = vpop.f32.mrf.mxu0
      %v4337 = vadd.f32 0.0, %v4336
      %4338 = vmatmul.bf16.gmra.mxu0 %v4250
      %v4339 = vpop.f32.mrf.mxu0
      %v4340 = vadd.f32 0.0, %v4339
      %v4341 = vpop.f32.mrf.mxu0
      %v4342 = vadd.f32 0.0, %v4341
      %4343 = vdwg.mxu0
      %v4344 = vadd.f32 %v4121, %v4265
      %v4345 = vadd.f32 %v4122, %v4267
      %v4346 = vadd.f32 %v4123, %v4270
      %v4347 = vadd.f32 %v4124, %v4272
      %v4348 = vadd.f32 %v4125, %v4275
      %v4349 = vadd.f32 %v4126, %v4277
      %v4350 = vadd.f32 %v4127, %v4280
      %v4351 = vadd.f32 %v4128, %v4282
      %v4352 = vadd.f32 %v4129, %v4285
      %v4353 = vadd.f32 %v4130, %v4287
      %v4354 = vadd.f32 %v4131, %v4290
      %v4355 = vadd.f32 %v4132, %v4292
      %v4356 = vadd.f32 %v4133, %v4295
      %v4357 = vadd.f32 %v4134, %v4297
      %v4358 = vadd.f32 %v4135, %v4300
      %v4359 = vadd.f32 %v4136, %v4302
      %v4360 = vadd.f32 %v4137, %v4305
      %v4361 = vadd.f32 %v4138, %v4307
      %v4362 = vadd.f32 %v4139, %v4310
      %v4363 = vadd.f32 %v4140, %v4312
      %v4364 = vadd.f32 %v4141, %v4315
      %v4365 = vadd.f32 %v4142, %v4317
      %v4366 = vadd.f32 %v4143, %v4320
      %v4367 = vadd.f32 %v4144, %v4322
      %v4368 = vadd.f32 %v4145, %v4325
      %v4369 = vadd.f32 %v4146, %v4327
      %v4370 = vadd.f32 %v4147, %v4330
      %v4371 = vadd.f32 %v4148, %v4332
      %v4372 = vadd.f32 %v4149, %v4335
      %v4373 = vadd.f32 %v4150, %v4337
      %v4374 = vadd.f32 %v4151, %v4340
      %v4375 = vadd.f32 %v4152, %v4342
      %v4376 = vld [vmem:[%s3483 + $0x4] sm:$0xff]
      %v4377 = vld [vmem:[%s3483 + $0xc] sm:$0xff]
      %v4378 = vld [vmem:[%s3483 + $0x1c] sm:$0xff]
      %v4379 = vld [vmem:[%s3483 + $0x24] sm:$0xff]
      %v4380 = vld [vmem:[%s3483 + $0x34] sm:$0xff]
      %v4381 = vld [vmem:[%s3483 + $0x3c] sm:$0xff]
      %v4382 = vld [vmem:[%s3483 + $0x4c] sm:$0xff]
      %v4383 = vld [vmem:[%s3483 + $0x54] sm:$0xff]
      %v4384 = vld [vmem:[%s3483 + $0x64] sm:$0xff]
      %v4385 = vld [vmem:[%s3483 + $0x6c] sm:$0xff]
      %v4386 = vld [vmem:[%s3483 + $0x7c] sm:$0xff]
      %v4387 = vld [vmem:[%s3483 + $0x84] sm:$0xff]
      %v4388 = vld [vmem:[%s3483 + $0x94] sm:$0xff]
      %v4389 = vld [vmem:[%s3483 + $0x9c] sm:$0xff]
      %v4390 = vld [vmem:[%s3483 + $0xac] sm:$0xff]
      %v4391 = vld [vmem:[%s3483 + $0xb4] sm:$0xff]
      %v4392 = vld [vmem:[%s3483 + $0xc4] sm:$0xff]
      %v4393 = vld [vmem:[%s3483 + $0xcc] sm:$0xff]
      %v4394 = vld [vmem:[%s3483 + $0xdc] sm:$0xff]
      %v4395 = vld [vmem:[%s3483 + $0xe4] sm:$0xff]
      %v4396 = vld [vmem:[%s3483 + $0xf4] sm:$0xff]
      %v4397 = vld [vmem:[%s3483 + $0xfc] sm:$0xff]
      %v4398 = vld [vmem:[%s3483 + $0x10c] sm:$0xff]
      %v4399 = vld [vmem:[%s3483 + $0x114] sm:$0xff]
      %v4400 = vld [vmem:[%s3483 + $0x124] sm:$0xff]
      %v4401 = vld [vmem:[%s3483 + $0x12c] sm:$0xff]
      %v4402 = vld [vmem:[%s3483 + $0x13c] sm:$0xff]
      %v4403 = vld [vmem:[%s3483 + $0x144] sm:$0xff]
      %v4404 = vld [vmem:[%s3483 + $0x154] sm:$0xff]
      %v4405 = vld [vmem:[%s3483 + $0x15c] sm:$0xff]
      %v4406 = vld [vmem:[%s3483 + $0x16c] sm:$0xff]
      %v4407 = vld [vmem:[%s3483 + $0x174] sm:$0xff]
      %v4408 = vpack.c.bf16 %v4377, %v4376
      %v4409 = vpack.c.bf16 %v4379, %v4378
      %v4410 = vpack.c.bf16 %v4381, %v4380
      %v4411 = vpack.c.bf16 %v4383, %v4382
      %v4412 = vpack.c.bf16 %v4385, %v4384
      %v4413 = vpack.c.bf16 %v4387, %v4386
      %v4414 = vpack.c.bf16 %v4389, %v4388
      %v4415 = vpack.c.bf16 %v4391, %v4390
      %v4416 = vpack.c.bf16 %v4393, %v4392
      %v4417 = vpack.c.bf16 %v4395, %v4394
      %v4418 = vpack.c.bf16 %v4397, %v4396
      %v4419 = vpack.c.bf16 %v4399, %v4398
      %v4420 = vpack.c.bf16 %v4401, %v4400
      %v4421 = vpack.c.bf16 %v4403, %v4402
      %v4422 = vpack.c.bf16 %v4405, %v4404
      %v4423 = vpack.c.bf16 %v4407, %v4406
      %s4424 = scalar_lea.vmem %s1, 38
      %v4425 = vld [vmem:[%s4424] sm:$0x3]
      %v4426 = vpack.c.bf16 %v4425, %v4425
      %v4428 = vsel %vm300, %v4408, 0
      %v4431 = vsel %vm300, %v4409, 0
      %v4434 = vsel %vm300, %v4410, 0
      %v4437 = vsel %vm300, %v4411, 0
      %v4440 = vsel %vm300, %v4412, 0
      %v4443 = vsel %vm300, %v4413, 0
      %v4446 = vsel %vm300, %v4414, 0
      %v4449 = vsel %vm300, %v4415, 0
      %v4452 = vsel %vm300, %v4416, 0
      %v4455 = vsel %vm300, %v4417, 0
      %v4458 = vsel %vm300, %v4418, 0
      %v4461 = vsel %vm300, %v4419, 0
      %v4464 = vsel %vm300, %v4420, 0
      %v4467 = vsel %vm300, %v4421, 0
      %v4470 = vsel %vm300, %v4422, 0
      %v4473 = vsel %vm300, %v4423, 0
      %v4476 = vsel %vm349, %v4426, 0
      %4478 = vmatpush.bf16.msra.mxu0 0
      %4479 = vmatpush.bf16.msra.mxu0 0
      %4480 = vmatpush.bf16.msra.mxu0 0
      %4481 = vmatpush.bf16.msra.mxu0 0
      %4482 = vmatpush.bf16.msra.mxu0 0
      %4483 = vmatpush.bf16.msra.mxu0 0
      %4484 = vmatpush.bf16.msra.mxu0 0
      %4485 = vmatpush.bf16.msra.mxu0 %v4476
      %4486 = vmatmul.bf16.gmra.mxu0 %v4428
      %v4487 = vpop.f32.mrf.mxu0
      %v4488 = vadd.f32 0.0, %v4487
      %v4489 = vpop.f32.mrf.mxu0
      %v4490 = vadd.f32 0.0, %v4489
      %4491 = vmatmul.bf16.gmra.mxu0 %v4431
      %v4492 = vpop.f32.mrf.mxu0
      %v4493 = vadd.f32 0.0, %v4492
      %v4494 = vpop.f32.mrf.mxu0
      %v4495 = vadd.f32 0.0, %v4494
      %4496 = vmatmul.bf16.gmra.mxu0 %v4434
      %v4497 = vpop.f32.mrf.mxu0
      %v4498 = vadd.f32 0.0, %v4497
      %v4499 = vpop.f32.mrf.mxu0
      %v4500 = vadd.f32 0.0, %v4499
      %4501 = vmatmul.bf16.gmra.mxu0 %v4437
      %v4502 = vpop.f32.mrf.mxu0
      %v4503 = vadd.f32 0.0, %v4502
      %v4504 = vpop.f32.mrf.mxu0
      %v4505 = vadd.f32 0.0, %v4504
      %4506 = vmatmul.bf16.gmra.mxu0 %v4440
      %v4507 = vpop.f32.mrf.mxu0
      %v4508 = vadd.f32 0.0, %v4507
      %v4509 = vpop.f32.mrf.mxu0
      %v4510 = vadd.f32 0.0, %v4509
      %4511 = vmatmul.bf16.gmra.mxu0 %v4443
      %v4512 = vpop.f32.mrf.mxu0
      %v4513 = vadd.f32 0.0, %v4512
      %v4514 = vpop.f32.mrf.mxu0
      %v4515 = vadd.f32 0.0, %v4514
      %4516 = vmatmul.bf16.gmra.mxu0 %v4446
      %v4517 = vpop.f32.mrf.mxu0
      %v4518 = vadd.f32 0.0, %v4517
      %v4519 = vpop.f32.mrf.mxu0
      %v4520 = vadd.f32 0.0, %v4519
      %4521 = vmatmul.bf16.gmra.mxu0 %v4449
      %v4522 = vpop.f32.mrf.mxu0
      %v4523 = vadd.f32 0.0, %v4522
      %v4524 = vpop.f32.mrf.mxu0
      %v4525 = vadd.f32 0.0, %v4524
      %4526 = vmatmul.bf16.gmra.mxu0 %v4452
      %v4527 = vpop.f32.mrf.mxu0
      %v4528 = vadd.f32 0.0, %v4527
      %v4529 = vpop.f32.mrf.mxu0
      %v4530 = vadd.f32 0.0, %v4529
      %4531 = vmatmul.bf16.gmra.mxu0 %v4455
      %v4532 = vpop.f32.mrf.mxu0
      %v4533 = vadd.f32 0.0, %v4532
      %v4534 = vpop.f32.mrf.mxu0
      %v4535 = vadd.f32 0.0, %v4534
      %4536 = vmatmul.bf16.gmra.mxu0 %v4458
      %v4537 = vpop.f32.mrf.mxu0
      %v4538 = vadd.f32 0.0, %v4537
      %v4539 = vpop.f32.mrf.mxu0
      %v4540 = vadd.f32 0.0, %v4539
      %4541 = vmatmul.bf16.gmra.mxu0 %v4461
      %v4542 = vpop.f32.mrf.mxu0
      %v4543 = vadd.f32 0.0, %v4542
      %v4544 = vpop.f32.mrf.mxu0
      %v4545 = vadd.f32 0.0, %v4544
      %4546 = vmatmul.bf16.gmra.mxu0 %v4464
      %v4547 = vpop.f32.mrf.mxu0
      %v4548 = vadd.f32 0.0, %v4547
      %v4549 = vpop.f32.mrf.mxu0
      %v4550 = vadd.f32 0.0, %v4549
      %4551 = vmatmul.bf16.gmra.mxu0 %v4467
      %v4552 = vpop.f32.mrf.mxu0
      %v4553 = vadd.f32 0.0, %v4552
      %v4554 = vpop.f32.mrf.mxu0
      %v4555 = vadd.f32 0.0, %v4554
      %4556 = vmatmul.bf16.gmra.mxu0 %v4470
      %v4557 = vpop.f32.mrf.mxu0
      %v4558 = vadd.f32 0.0, %v4557
      %v4559 = vpop.f32.mrf.mxu0
      %v4560 = vadd.f32 0.0, %v4559
      %4561 = vmatmul.bf16.gmra.mxu0 %v4473
      %v4562 = vpop.f32.mrf.mxu0
      %v4563 = vadd.f32 0.0, %v4562
      %v4564 = vpop.f32.mrf.mxu0
      %v4565 = vadd.f32 0.0, %v4564
      %4566 = vdwg.mxu0
      %v4567 = vadd.f32 %v4344, %v4488
      %v4568 = vadd.f32 %v4345, %v4490
      %v4569 = vadd.f32 %v4346, %v4493
      %v4570 = vadd.f32 %v4347, %v4495
      %v4571 = vadd.f32 %v4348, %v4498
      %v4572 = vadd.f32 %v4349, %v4500
      %v4573 = vadd.f32 %v4350, %v4503
      %v4574 = vadd.f32 %v4351, %v4505
      %v4575 = vadd.f32 %v4352, %v4508
      %v4576 = vadd.f32 %v4353, %v4510
      %v4577 = vadd.f32 %v4354, %v4513
      %v4578 = vadd.f32 %v4355, %v4515
      %v4579 = vadd.f32 %v4356, %v4518
      %v4580 = vadd.f32 %v4357, %v4520
      %v4581 = vadd.f32 %v4358, %v4523
      %v4582 = vadd.f32 %v4359, %v4525
      %v4583 = vadd.f32 %v4360, %v4528
      %v4584 = vadd.f32 %v4361, %v4530
      %v4585 = vadd.f32 %v4362, %v4533
      %v4586 = vadd.f32 %v4363, %v4535
      %v4587 = vadd.f32 %v4364, %v4538
      %v4588 = vadd.f32 %v4365, %v4540
      %v4589 = vadd.f32 %v4366, %v4543
      %v4590 = vadd.f32 %v4367, %v4545
      %v4591 = vadd.f32 %v4368, %v4548
      %v4592 = vadd.f32 %v4369, %v4550
      %v4593 = vadd.f32 %v4370, %v4553
      %v4594 = vadd.f32 %v4371, %v4555
      %v4595 = vadd.f32 %v4372, %v4558
      %v4596 = vadd.f32 %v4373, %v4560
      %v4597 = vadd.f32 %v4374, %v4563
      %v4598 = vadd.f32 %v4375, %v4565
      %s4599 = scalar_lea.vmem %s192, 96
      %v4600 = vld [vmem:[%s4599] sm:$0xff]
      %v4601 = vld [vmem:[%s4599 + $0x8] sm:$0xff]
      %v4602 = vld [vmem:[%s4599 + $0x18] sm:$0xff]
      %v4603 = vld [vmem:[%s4599 + $0x20] sm:$0xff]
      %v4604 = vld [vmem:[%s4599 + $0x30] sm:$0xff]
      %v4605 = vld [vmem:[%s4599 + $0x38] sm:$0xff]
      %v4606 = vld [vmem:[%s4599 + $0x48] sm:$0xff]
      %v4607 = vld [vmem:[%s4599 + $0x50] sm:$0xff]
      %v4608 = vld [vmem:[%s4599 + $0x60] sm:$0xff]
      %v4609 = vld [vmem:[%s4599 + $0x68] sm:$0xff]
      %v4610 = vld [vmem:[%s4599 + $0x78] sm:$0xff]
      %v4611 = vld [vmem:[%s4599 + $0x80] sm:$0xff]
      %v4612 = vld [vmem:[%s4599 + $0x90] sm:$0xff]
      %v4613 = vld [vmem:[%s4599 + $0x98] sm:$0xff]
      %v4614 = vld [vmem:[%s4599 + $0xa8] sm:$0xff]
      %v4615 = vld [vmem:[%s4599 + $0xb0] sm:$0xff]
      %v4616 = vld [vmem:[%s4599 + $0xc0] sm:$0xff]
      %v4617 = vld [vmem:[%s4599 + $0xc8] sm:$0xff]
      %v4618 = vld [vmem:[%s4599 + $0xd8] sm:$0xff]
      %v4619 = vld [vmem:[%s4599 + $0xe0] sm:$0xff]
      %v4620 = vld [vmem:[%s4599 + $0xf0] sm:$0xff]
      %v4621 = vld [vmem:[%s4599 + $0xf8] sm:$0xff]
      %v4622 = vld [vmem:[%s4599 + $0x108] sm:$0xff]
      %v4623 = vld [vmem:[%s4599 + $0x110] sm:$0xff]
      %v4624 = vld [vmem:[%s4599 + $0x120] sm:$0xff]
      %v4625 = vld [vmem:[%s4599 + $0x128] sm:$0xff]
      %v4626 = vld [vmem:[%s4599 + $0x138] sm:$0xff]
      %v4627 = vld [vmem:[%s4599 + $0x140] sm:$0xff]
      %v4628 = vld [vmem:[%s4599 + $0x150] sm:$0xff]
      %v4629 = vld [vmem:[%s4599 + $0x158] sm:$0xff]
      %v4630 = vld [vmem:[%s4599 + $0x168] sm:$0xff]
      %v4631 = vld [vmem:[%s4599 + $0x170] sm:$0xff]
      %v4632 = vpack.c.bf16 %v4601, %v4600
      %v4633 = vpack.c.bf16 %v4603, %v4602
      %v4634 = vpack.c.bf16 %v4605, %v4604
      %v4635 = vpack.c.bf16 %v4607, %v4606
      %v4636 = vpack.c.bf16 %v4609, %v4608
      %v4637 = vpack.c.bf16 %v4611, %v4610
      %v4638 = vpack.c.bf16 %v4613, %v4612
      %v4639 = vpack.c.bf16 %v4615, %v4614
      %v4640 = vpack.c.bf16 %v4617, %v4616
      %v4641 = vpack.c.bf16 %v4619, %v4618
      %v4642 = vpack.c.bf16 %v4621, %v4620
      %v4643 = vpack.c.bf16 %v4623, %v4622
      %v4644 = vpack.c.bf16 %v4625, %v4624
      %v4645 = vpack.c.bf16 %v4627, %v4626
      %v4646 = vpack.c.bf16 %v4629, %v4628
      %v4647 = vpack.c.bf16 %v4631, %v4630
      %s4648 = scalar_lea.vmem %s1, 40
      %v4649 = vld [vmem:[%s4648] sm:$0x3]
      %v4650 = vpack.c.bf16 %v4649, %v4649
      %v4652 = vsel %vm300, %v4632, 0
      %v4655 = vsel %vm300, %v4633, 0
      %v4658 = vsel %vm300, %v4634, 0
      %v4661 = vsel %vm300, %v4635, 0
      %v4664 = vsel %vm300, %v4636, 0
      %v4667 = vsel %vm300, %v4637, 0
      %v4670 = vsel %vm300, %v4638, 0
      %v4673 = vsel %vm300, %v4639, 0
      %v4676 = vsel %vm300, %v4640, 0
      %v4679 = vsel %vm300, %v4641, 0
      %v4682 = vsel %vm300, %v4642, 0
      %v4685 = vsel %vm300, %v4643, 0
      %v4688 = vsel %vm300, %v4644, 0
      %v4691 = vsel %vm300, %v4645, 0
      %v4694 = vsel %vm300, %v4646, 0
      %v4697 = vsel %vm300, %v4647, 0
      %v4700 = vsel %vm349, %v4650, 0
      %4702 = vmatpush.bf16.msra.mxu0 0
      %4703 = vmatpush.bf16.msra.mxu0 0
      %4704 = vmatpush.bf16.msra.mxu0 0
      %4705 = vmatpush.bf16.msra.mxu0 0
      %4706 = vmatpush.bf16.msra.mxu0 0
      %4707 = vmatpush.bf16.msra.mxu0 0
      %4708 = vmatpush.bf16.msra.mxu0 0
      %4709 = vmatpush.bf16.msra.mxu0 %v4700
      %4710 = vmatmul.bf16.gmra.mxu0 %v4652
      %v4711 = vpop.f32.mrf.mxu0
      %v4712 = vadd.f32 0.0, %v4711
      %v4713 = vpop.f32.mrf.mxu0
      %v4714 = vadd.f32 0.0, %v4713
      %4715 = vmatmul.bf16.gmra.mxu0 %v4655
      %v4716 = vpop.f32.mrf.mxu0
      %v4717 = vadd.f32 0.0, %v4716
      %v4718 = vpop.f32.mrf.mxu0
      %v4719 = vadd.f32 0.0, %v4718
      %4720 = vmatmul.bf16.gmra.mxu0 %v4658
      %v4721 = vpop.f32.mrf.mxu0
      %v4722 = vadd.f32 0.0, %v4721
      %v4723 = vpop.f32.mrf.mxu0
      %v4724 = vadd.f32 0.0, %v4723
      %4725 = vmatmul.bf16.gmra.mxu0 %v4661
      %v4726 = vpop.f32.mrf.mxu0
      %v4727 = vadd.f32 0.0, %v4726
      %v4728 = vpop.f32.mrf.mxu0
      %v4729 = vadd.f32 0.0, %v4728
      %4730 = vmatmul.bf16.gmra.mxu0 %v4664
      %v4731 = vpop.f32.mrf.mxu0
      %v4732 = vadd.f32 0.0, %v4731
      %v4733 = vpop.f32.mrf.mxu0
      %v4734 = vadd.f32 0.0, %v4733
      %4735 = vmatmul.bf16.gmra.mxu0 %v4667
      %v4736 = vpop.f32.mrf.mxu0
      %v4737 = vadd.f32 0.0, %v4736
      %v4738 = vpop.f32.mrf.mxu0
      %v4739 = vadd.f32 0.0, %v4738
      %4740 = vmatmul.bf16.gmra.mxu0 %v4670
      %v4741 = vpop.f32.mrf.mxu0
      %v4742 = vadd.f32 0.0, %v4741
      %v4743 = vpop.f32.mrf.mxu0
      %v4744 = vadd.f32 0.0, %v4743
      %4745 = vmatmul.bf16.gmra.mxu0 %v4673
      %v4746 = vpop.f32.mrf.mxu0
      %v4747 = vadd.f32 0.0, %v4746
      %v4748 = vpop.f32.mrf.mxu0
      %v4749 = vadd.f32 0.0, %v4748
      %4750 = vmatmul.bf16.gmra.mxu0 %v4676
      %v4751 = vpop.f32.mrf.mxu0
      %v4752 = vadd.f32 0.0, %v4751
      %v4753 = vpop.f32.mrf.mxu0
      %v4754 = vadd.f32 0.0, %v4753
      %4755 = vmatmul.bf16.gmra.mxu0 %v4679
      %v4756 = vpop.f32.mrf.mxu0
      %v4757 = vadd.f32 0.0, %v4756
      %v4758 = vpop.f32.mrf.mxu0
      %v4759 = vadd.f32 0.0, %v4758
      %4760 = vmatmul.bf16.gmra.mxu0 %v4682
      %v4761 = vpop.f32.mrf.mxu0
      %v4762 = vadd.f32 0.0, %v4761
      %v4763 = vpop.f32.mrf.mxu0
      %v4764 = vadd.f32 0.0, %v4763
      %4765 = vmatmul.bf16.gmra.mxu0 %v4685
      %v4766 = vpop.f32.mrf.mxu0
      %v4767 = vadd.f32 0.0, %v4766
      %v4768 = vpop.f32.mrf.mxu0
      %v4769 = vadd.f32 0.0, %v4768
      %4770 = vmatmul.bf16.gmra.mxu0 %v4688
      %v4771 = vpop.f32.mrf.mxu0
      %v4772 = vadd.f32 0.0, %v4771
      %v4773 = vpop.f32.mrf.mxu0
      %v4774 = vadd.f32 0.0, %v4773
      %4775 = vmatmul.bf16.gmra.mxu0 %v4691
      %v4776 = vpop.f32.mrf.mxu0
      %v4777 = vadd.f32 0.0, %v4776
      %v4778 = vpop.f32.mrf.mxu0
      %v4779 = vadd.f32 0.0, %v4778
      %4780 = vmatmul.bf16.gmra.mxu0 %v4694
      %v4781 = vpop.f32.mrf.mxu0
      %v4782 = vadd.f32 0.0, %v4781
      %v4783 = vpop.f32.mrf.mxu0
      %v4784 = vadd.f32 0.0, %v4783
      %4785 = vmatmul.bf16.gmra.mxu0 %v4697
      %v4786 = vpop.f32.mrf.mxu0
      %v4787 = vadd.f32 0.0, %v4786
      %v4788 = vpop.f32.mrf.mxu0
      %v4789 = vadd.f32 0.0, %v4788
      %4790 = vdwg.mxu0
      %v4791 = vadd.f32 %v4567, %v4712
      %v4792 = vadd.f32 %v4568, %v4714
      %v4793 = vadd.f32 %v4569, %v4717
      %v4794 = vadd.f32 %v4570, %v4719
      %v4795 = vadd.f32 %v4571, %v4722
      %v4796 = vadd.f32 %v4572, %v4724
      %v4797 = vadd.f32 %v4573, %v4727
      %v4798 = vadd.f32 %v4574, %v4729
      %v4799 = vadd.f32 %v4575, %v4732
      %v4800 = vadd.f32 %v4576, %v4734
      %v4801 = vadd.f32 %v4577, %v4737
      %v4802 = vadd.f32 %v4578, %v4739
      %v4803 = vadd.f32 %v4579, %v4742
      %v4804 = vadd.f32 %v4580, %v4744
      %v4805 = vadd.f32 %v4581, %v4747
      %v4806 = vadd.f32 %v4582, %v4749
      %v4807 = vadd.f32 %v4583, %v4752
      %v4808 = vadd.f32 %v4584, %v4754
      %v4809 = vadd.f32 %v4585, %v4757
      %v4810 = vadd.f32 %v4586, %v4759
      %v4811 = vadd.f32 %v4587, %v4762
      %v4812 = vadd.f32 %v4588, %v4764
      %v4813 = vadd.f32 %v4589, %v4767
      %v4814 = vadd.f32 %v4590, %v4769
      %v4815 = vadd.f32 %v4591, %v4772
      %v4816 = vadd.f32 %v4592, %v4774
      %v4817 = vadd.f32 %v4593, %v4777
      %v4818 = vadd.f32 %v4594, %v4779
      %v4819 = vadd.f32 %v4595, %v4782
      %v4820 = vadd.f32 %v4596, %v4784
      %v4821 = vadd.f32 %v4597, %v4787
      %v4822 = vadd.f32 %v4598, %v4789
      %v4823 = vld [vmem:[%s4599 + $0x1] sm:$0xff]
      %v4824 = vld [vmem:[%s4599 + $0x9] sm:$0xff]
      %v4825 = vld [vmem:[%s4599 + $0x19] sm:$0xff]
      %v4826 = vld [vmem:[%s4599 + $0x21] sm:$0xff]
      %v4827 = vld [vmem:[%s4599 + $0x31] sm:$0xff]
      %v4828 = vld [vmem:[%s4599 + $0x39] sm:$0xff]
      %v4829 = vld [vmem:[%s4599 + $0x49] sm:$0xff]
      %v4830 = vld [vmem:[%s4599 + $0x51] sm:$0xff]
      %v4831 = vld [vmem:[%s4599 + $0x61] sm:$0xff]
      %v4832 = vld [vmem:[%s4599 + $0x69] sm:$0xff]
      %v4833 = vld [vmem:[%s4599 + $0x79] sm:$0xff]
      %v4834 = vld [vmem:[%s4599 + $0x81] sm:$0xff]
      %v4835 = vld [vmem:[%s4599 + $0x91] sm:$0xff]
      %v4836 = vld [vmem:[%s4599 + $0x99] sm:$0xff]
      %v4837 = vld [vmem:[%s4599 + $0xa9] sm:$0xff]
      %v4838 = vld [vmem:[%s4599 + $0xb1] sm:$0xff]
      %v4839 = vld [vmem:[%s4599 + $0xc1] sm:$0xff]
      %v4840 = vld [vmem:[%s4599 + $0xc9] sm:$0xff]
      %v4841 = vld [vmem:[%s4599 + $0xd9] sm:$0xff]
      %v4842 = vld [vmem:[%s4599 + $0xe1] sm:$0xff]
      %v4843 = vld [vmem:[%s4599 + $0xf1] sm:$0xff]
      %v4844 = vld [vmem:[%s4599 + $0xf9] sm:$0xff]
      %v4845 = vld [vmem:[%s4599 + $0x109] sm:$0xff]
      %v4846 = vld [vmem:[%s4599 + $0x111] sm:$0xff]
      %v4847 = vld [vmem:[%s4599 + $0x121] sm:$0xff]
      %v4848 = vld [vmem:[%s4599 + $0x129] sm:$0xff]
      %v4849 = vld [vmem:[%s4599 + $0x139] sm:$0xff]
      %v4850 = vld [vmem:[%s4599 + $0x141] sm:$0xff]
      %v4851 = vld [vmem:[%s4599 + $0x151] sm:$0xff]
      %v4852 = vld [vmem:[%s4599 + $0x159] sm:$0xff]
      %v4853 = vld [vmem:[%s4599 + $0x169] sm:$0xff]
      %v4854 = vld [vmem:[%s4599 + $0x171] sm:$0xff]
      %v4855 = vpack.c.bf16 %v4824, %v4823
      %v4856 = vpack.c.bf16 %v4826, %v4825
      %v4857 = vpack.c.bf16 %v4828, %v4827
      %v4858 = vpack.c.bf16 %v4830, %v4829
      %v4859 = vpack.c.bf16 %v4832, %v4831
      %v4860 = vpack.c.bf16 %v4834, %v4833
      %v4861 = vpack.c.bf16 %v4836, %v4835
      %v4862 = vpack.c.bf16 %v4838, %v4837
      %v4863 = vpack.c.bf16 %v4840, %v4839
      %v4864 = vpack.c.bf16 %v4842, %v4841
      %v4865 = vpack.c.bf16 %v4844, %v4843
      %v4866 = vpack.c.bf16 %v4846, %v4845
      %v4867 = vpack.c.bf16 %v4848, %v4847
      %v4868 = vpack.c.bf16 %v4850, %v4849
      %v4869 = vpack.c.bf16 %v4852, %v4851
      %v4870 = vpack.c.bf16 %v4854, %v4853
      %s4871 = scalar_lea.vmem %s1, 42
      %v4872 = vld [vmem:[%s4871] sm:$0x3]
      %v4873 = vpack.c.bf16 %v4872, %v4872
      %v4875 = vsel %vm300, %v4855, 0
      %v4878 = vsel %vm300, %v4856, 0
      %v4881 = vsel %vm300, %v4857, 0
      %v4884 = vsel %vm300, %v4858, 0
      %v4887 = vsel %vm300, %v4859, 0
      %v4890 = vsel %vm300, %v4860, 0
      %v4893 = vsel %vm300, %v4861, 0
      %v4896 = vsel %vm300, %v4862, 0
      %v4899 = vsel %vm300, %v4863, 0
      %v4902 = vsel %vm300, %v4864, 0
      %v4905 = vsel %vm300, %v4865, 0
      %v4908 = vsel %vm300, %v4866, 0
      %v4911 = vsel %vm300, %v4867, 0
      %v4914 = vsel %vm300, %v4868, 0
      %v4917 = vsel %vm300, %v4869, 0
      %v4920 = vsel %vm300, %v4870, 0
      %v4923 = vsel %vm349, %v4873, 0
      %4925 = vmatpush.bf16.msra.mxu0 0
      %4926 = vmatpush.bf16.msra.mxu0 0
      %4927 = vmatpush.bf16.msra.mxu0 0
      %4928 = vmatpush.bf16.msra.mxu0 0
      %4929 = vmatpush.bf16.msra.mxu0 0
      %4930 = vmatpush.bf16.msra.mxu0 0
      %4931 = vmatpush.bf16.msra.mxu0 0
      %4932 = vmatpush.bf16.msra.mxu0 %v4923
      %4933 = vmatmul.bf16.gmra.mxu0 %v4875
      %v4934 = vpop.f32.mrf.mxu0
      %v4935 = vadd.f32 0.0, %v4934
      %v4936 = vpop.f32.mrf.mxu0
      %v4937 = vadd.f32 0.0, %v4936
      %4938 = vmatmul.bf16.gmra.mxu0 %v4878
      %v4939 = vpop.f32.mrf.mxu0
      %v4940 = vadd.f32 0.0, %v4939
      %v4941 = vpop.f32.mrf.mxu0
      %v4942 = vadd.f32 0.0, %v4941
      %4943 = vmatmul.bf16.gmra.mxu0 %v4881
      %v4944 = vpop.f32.mrf.mxu0
      %v4945 = vadd.f32 0.0, %v4944
      %v4946 = vpop.f32.mrf.mxu0
      %v4947 = vadd.f32 0.0, %v4946
      %4948 = vmatmul.bf16.gmra.mxu0 %v4884
      %v4949 = vpop.f32.mrf.mxu0
      %v4950 = vadd.f32 0.0, %v4949
      %v4951 = vpop.f32.mrf.mxu0
      %v4952 = vadd.f32 0.0, %v4951
      %4953 = vmatmul.bf16.gmra.mxu0 %v4887
      %v4954 = vpop.f32.mrf.mxu0
      %v4955 = vadd.f32 0.0, %v4954
      %v4956 = vpop.f32.mrf.mxu0
      %v4957 = vadd.f32 0.0, %v4956
      %4958 = vmatmul.bf16.gmra.mxu0 %v4890
      %v4959 = vpop.f32.mrf.mxu0
      %v4960 = vadd.f32 0.0, %v4959
      %v4961 = vpop.f32.mrf.mxu0
      %v4962 = vadd.f32 0.0, %v4961
      %4963 = vmatmul.bf16.gmra.mxu0 %v4893
      %v4964 = vpop.f32.mrf.mxu0
      %v4965 = vadd.f32 0.0, %v4964
      %v4966 = vpop.f32.mrf.mxu0
      %v4967 = vadd.f32 0.0, %v4966
      %4968 = vmatmul.bf16.gmra.mxu0 %v4896
      %v4969 = vpop.f32.mrf.mxu0
      %v4970 = vadd.f32 0.0, %v4969
      %v4971 = vpop.f32.mrf.mxu0
      %v4972 = vadd.f32 0.0, %v4971
      %4973 = vmatmul.bf16.gmra.mxu0 %v4899
      %v4974 = vpop.f32.mrf.mxu0
      %v4975 = vadd.f32 0.0, %v4974
      %v4976 = vpop.f32.mrf.mxu0
      %v4977 = vadd.f32 0.0, %v4976
      %4978 = vmatmul.bf16.gmra.mxu0 %v4902
      %v4979 = vpop.f32.mrf.mxu0
      %v4980 = vadd.f32 0.0, %v4979
      %v4981 = vpop.f32.mrf.mxu0
      %v4982 = vadd.f32 0.0, %v4981
      %4983 = vmatmul.bf16.gmra.mxu0 %v4905
      %v4984 = vpop.f32.mrf.mxu0
      %v4985 = vadd.f32 0.0, %v4984
      %v4986 = vpop.f32.mrf.mxu0
      %v4987 = vadd.f32 0.0, %v4986
      %4988 = vmatmul.bf16.gmra.mxu0 %v4908
      %v4989 = vpop.f32.mrf.mxu0
      %v4990 = vadd.f32 0.0, %v4989
      %v4991 = vpop.f32.mrf.mxu0
      %v4992 = vadd.f32 0.0, %v4991
      %4993 = vmatmul.bf16.gmra.mxu0 %v4911
      %v4994 = vpop.f32.mrf.mxu0
      %v4995 = vadd.f32 0.0, %v4994
      %v4996 = vpop.f32.mrf.mxu0
      %v4997 = vadd.f32 0.0, %v4996
      %4998 = vmatmul.bf16.gmra.mxu0 %v4914
      %v4999 = vpop.f32.mrf.mxu0
      %v5000 = vadd.f32 0.0, %v4999
      %v5001 = vpop.f32.mrf.mxu0
      %v5002 = vadd.f32 0.0, %v5001
      %5003 = vmatmul.bf16.gmra.mxu0 %v4917
      %v5004 = vpop.f32.mrf.mxu0
      %v5005 = vadd.f32 0.0, %v5004
      %v5006 = vpop.f32.mrf.mxu0
      %v5007 = vadd.f32 0.0, %v5006
      %5008 = vmatmul.bf16.gmra.mxu0 %v4920
      %v5009 = vpop.f32.mrf.mxu0
      %v5010 = vadd.f32 0.0, %v5009
      %v5011 = vpop.f32.mrf.mxu0
      %v5012 = vadd.f32 0.0, %v5011
      %5013 = vdwg.mxu0
      %v5014 = vadd.f32 %v4791, %v4935
      %v5015 = vadd.f32 %v4792, %v4937
      %v5016 = vadd.f32 %v4793, %v4940
      %v5017 = vadd.f32 %v4794, %v4942
      %v5018 = vadd.f32 %v4795, %v4945
      %v5019 = vadd.f32 %v4796, %v4947
      %v5020 = vadd.f32 %v4797, %v4950
      %v5021 = vadd.f32 %v4798, %v4952
      %v5022 = vadd.f32 %v4799, %v4955
      %v5023 = vadd.f32 %v4800, %v4957
      %v5024 = vadd.f32 %v4801, %v4960
      %v5025 = vadd.f32 %v4802, %v4962
      %v5026 = vadd.f32 %v4803, %v4965
      %v5027 = vadd.f32 %v4804, %v4967
      %v5028 = vadd.f32 %v4805, %v4970
      %v5029 = vadd.f32 %v4806, %v4972
      %v5030 = vadd.f32 %v4807, %v4975
      %v5031 = vadd.f32 %v4808, %v4977
      %v5032 = vadd.f32 %v4809, %v4980
      %v5033 = vadd.f32 %v4810, %v4982
      %v5034 = vadd.f32 %v4811, %v4985
      %v5035 = vadd.f32 %v4812, %v4987
      %v5036 = vadd.f32 %v4813, %v4990
      %v5037 = vadd.f32 %v4814, %v4992
      %v5038 = vadd.f32 %v4815, %v4995
      %v5039 = vadd.f32 %v4816, %v4997
      %v5040 = vadd.f32 %v4817, %v5000
      %v5041 = vadd.f32 %v4818, %v5002
      %v5042 = vadd.f32 %v4819, %v5005
      %v5043 = vadd.f32 %v4820, %v5007
      %v5044 = vadd.f32 %v4821, %v5010
      %v5045 = vadd.f32 %v4822, %v5012
      %v5046 = vld [vmem:[%s4599 + $0x2] sm:$0xff]
      %v5047 = vld [vmem:[%s4599 + $0xa] sm:$0xff]
      %v5048 = vld [vmem:[%s4599 + $0x1a] sm:$0xff]
      %v5049 = vld [vmem:[%s4599 + $0x22] sm:$0xff]
      %v5050 = vld [vmem:[%s4599 + $0x32] sm:$0xff]
      %v5051 = vld [vmem:[%s4599 + $0x3a] sm:$0xff]
      %v5052 = vld [vmem:[%s4599 + $0x4a] sm:$0xff]
      %v5053 = vld [vmem:[%s4599 + $0x52] sm:$0xff]
      %v5054 = vld [vmem:[%s4599 + $0x62] sm:$0xff]
      %v5055 = vld [vmem:[%s4599 + $0x6a] sm:$0xff]
      %v5056 = vld [vmem:[%s4599 + $0x7a] sm:$0xff]
      %v5057 = vld [vmem:[%s4599 + $0x82] sm:$0xff]
      %v5058 = vld [vmem:[%s4599 + $0x92] sm:$0xff]
      %v5059 = vld [vmem:[%s4599 + $0x9a] sm:$0xff]
      %v5060 = vld [vmem:[%s4599 + $0xaa] sm:$0xff]
      %v5061 = vld [vmem:[%s4599 + $0xb2] sm:$0xff]
      %v5062 = vld [vmem:[%s4599 + $0xc2] sm:$0xff]
      %v5063 = vld [vmem:[%s4599 + $0xca] sm:$0xff]
      %v5064 = vld [vmem:[%s4599 + $0xda] sm:$0xff]
      %v5065 = vld [vmem:[%s4599 + $0xe2] sm:$0xff]
      %v5066 = vld [vmem:[%s4599 + $0xf2] sm:$0xff]
      %v5067 = vld [vmem:[%s4599 + $0xfa] sm:$0xff]
      %v5068 = vld [vmem:[%s4599 + $0x10a] sm:$0xff]
      %v5069 = vld [vmem:[%s4599 + $0x112] sm:$0xff]
      %v5070 = vld [vmem:[%s4599 + $0x122] sm:$0xff]
      %v5071 = vld [vmem:[%s4599 + $0x12a] sm:$0xff]
      %v5072 = vld [vmem:[%s4599 + $0x13a] sm:$0xff]
      %v5073 = vld [vmem:[%s4599 + $0x142] sm:$0xff]
      %v5074 = vld [vmem:[%s4599 + $0x152] sm:$0xff]
      %v5075 = vld [vmem:[%s4599 + $0x15a] sm:$0xff]
      %v5076 = vld [vmem:[%s4599 + $0x16a] sm:$0xff]
      %v5077 = vld [vmem:[%s4599 + $0x172] sm:$0xff]
      %v5078 = vpack.c.bf16 %v5047, %v5046
      %v5079 = vpack.c.bf16 %v5049, %v5048
      %v5080 = vpack.c.bf16 %v5051, %v5050
      %v5081 = vpack.c.bf16 %v5053, %v5052
      %v5082 = vpack.c.bf16 %v5055, %v5054
      %v5083 = vpack.c.bf16 %v5057, %v5056
      %v5084 = vpack.c.bf16 %v5059, %v5058
      %v5085 = vpack.c.bf16 %v5061, %v5060
      %v5086 = vpack.c.bf16 %v5063, %v5062
      %v5087 = vpack.c.bf16 %v5065, %v5064
      %v5088 = vpack.c.bf16 %v5067, %v5066
      %v5089 = vpack.c.bf16 %v5069, %v5068
      %v5090 = vpack.c.bf16 %v5071, %v5070
      %v5091 = vpack.c.bf16 %v5073, %v5072
      %v5092 = vpack.c.bf16 %v5075, %v5074
      %v5093 = vpack.c.bf16 %v5077, %v5076
      %s5094 = scalar_lea.vmem %s1, 44
      %v5095 = vld [vmem:[%s5094] sm:$0x3]
      %v5096 = vpack.c.bf16 %v5095, %v5095
      %v5098 = vsel %vm300, %v5078, 0
      %v5101 = vsel %vm300, %v5079, 0
      %v5104 = vsel %vm300, %v5080, 0
      %v5107 = vsel %vm300, %v5081, 0
      %v5110 = vsel %vm300, %v5082, 0
      %v5113 = vsel %vm300, %v5083, 0
      %v5116 = vsel %vm300, %v5084, 0
      %v5119 = vsel %vm300, %v5085, 0
      %v5122 = vsel %vm300, %v5086, 0
      %v5125 = vsel %vm300, %v5087, 0
      %v5128 = vsel %vm300, %v5088, 0
      %v5131 = vsel %vm300, %v5089, 0
      %v5134 = vsel %vm300, %v5090, 0
      %v5137 = vsel %vm300, %v5091, 0
      %v5140 = vsel %vm300, %v5092, 0
      %v5143 = vsel %vm300, %v5093, 0
      %v5146 = vsel %vm349, %v5096, 0
      %5148 = vmatpush.bf16.msra.mxu0 0
      %5149 = vmatpush.bf16.msra.mxu0 0
      %5150 = vmatpush.bf16.msra.mxu0 0
      %5151 = vmatpush.bf16.msra.mxu0 0
      %5152 = vmatpush.bf16.msra.mxu0 0
      %5153 = vmatpush.bf16.msra.mxu0 0
      %5154 = vmatpush.bf16.msra.mxu0 0
      %5155 = vmatpush.bf16.msra.mxu0 %v5146
      %5156 = vmatmul.bf16.gmra.mxu0 %v5098
      %v5157 = vpop.f32.mrf.mxu0
      %v5158 = vadd.f32 0.0, %v5157
      %v5159 = vpop.f32.mrf.mxu0
      %v5160 = vadd.f32 0.0, %v5159
      %5161 = vmatmul.bf16.gmra.mxu0 %v5101
      %v5162 = vpop.f32.mrf.mxu0
      %v5163 = vadd.f32 0.0, %v5162
      %v5164 = vpop.f32.mrf.mxu0
      %v5165 = vadd.f32 0.0, %v5164
      %5166 = vmatmul.bf16.gmra.mxu0 %v5104
      %v5167 = vpop.f32.mrf.mxu0
      %v5168 = vadd.f32 0.0, %v5167
      %v5169 = vpop.f32.mrf.mxu0
      %v5170 = vadd.f32 0.0, %v5169
      %5171 = vmatmul.bf16.gmra.mxu0 %v5107
      %v5172 = vpop.f32.mrf.mxu0
      %v5173 = vadd.f32 0.0, %v5172
      %v5174 = vpop.f32.mrf.mxu0
      %v5175 = vadd.f32 0.0, %v5174
      %5176 = vmatmul.bf16.gmra.mxu0 %v5110
      %v5177 = vpop.f32.mrf.mxu0
      %v5178 = vadd.f32 0.0, %v5177
      %v5179 = vpop.f32.mrf.mxu0
      %v5180 = vadd.f32 0.0, %v5179
      %5181 = vmatmul.bf16.gmra.mxu0 %v5113
      %v5182 = vpop.f32.mrf.mxu0
      %v5183 = vadd.f32 0.0, %v5182
      %v5184 = vpop.f32.mrf.mxu0
      %v5185 = vadd.f32 0.0, %v5184
      %5186 = vmatmul.bf16.gmra.mxu0 %v5116
      %v5187 = vpop.f32.mrf.mxu0
      %v5188 = vadd.f32 0.0, %v5187
      %v5189 = vpop.f32.mrf.mxu0
      %v5190 = vadd.f32 0.0, %v5189
      %5191 = vmatmul.bf16.gmra.mxu0 %v5119
      %v5192 = vpop.f32.mrf.mxu0
      %v5193 = vadd.f32 0.0, %v5192
      %v5194 = vpop.f32.mrf.mxu0
      %v5195 = vadd.f32 0.0, %v5194
      %5196 = vmatmul.bf16.gmra.mxu0 %v5122
      %v5197 = vpop.f32.mrf.mxu0
      %v5198 = vadd.f32 0.0, %v5197
      %v5199 = vpop.f32.mrf.mxu0
      %v5200 = vadd.f32 0.0, %v5199
      %5201 = vmatmul.bf16.gmra.mxu0 %v5125
      %v5202 = vpop.f32.mrf.mxu0
      %v5203 = vadd.f32 0.0, %v5202
      %v5204 = vpop.f32.mrf.mxu0
      %v5205 = vadd.f32 0.0, %v5204
      %5206 = vmatmul.bf16.gmra.mxu0 %v5128
      %v5207 = vpop.f32.mrf.mxu0
      %v5208 = vadd.f32 0.0, %v5207
      %v5209 = vpop.f32.mrf.mxu0
      %v5210 = vadd.f32 0.0, %v5209
      %5211 = vmatmul.bf16.gmra.mxu0 %v5131
      %v5212 = vpop.f32.mrf.mxu0
      %v5213 = vadd.f32 0.0, %v5212
      %v5214 = vpop.f32.mrf.mxu0
      %v5215 = vadd.f32 0.0, %v5214
      %5216 = vmatmul.bf16.gmra.mxu0 %v5134
      %v5217 = vpop.f32.mrf.mxu0
      %v5218 = vadd.f32 0.0, %v5217
      %v5219 = vpop.f32.mrf.mxu0
      %v5220 = vadd.f32 0.0, %v5219
      %5221 = vmatmul.bf16.gmra.mxu0 %v5137
      %v5222 = vpop.f32.mrf.mxu0
      %v5223 = vadd.f32 0.0, %v5222
      %v5224 = vpop.f32.mrf.mxu0
      %v5225 = vadd.f32 0.0, %v5224
      %5226 = vmatmul.bf16.gmra.mxu0 %v5140
      %v5227 = vpop.f32.mrf.mxu0
      %v5228 = vadd.f32 0.0, %v5227
      %v5229 = vpop.f32.mrf.mxu0
      %v5230 = vadd.f32 0.0, %v5229
      %5231 = vmatmul.bf16.gmra.mxu0 %v5143
      %v5232 = vpop.f32.mrf.mxu0
      %v5233 = vadd.f32 0.0, %v5232
      %v5234 = vpop.f32.mrf.mxu0
      %v5235 = vadd.f32 0.0, %v5234
      %5236 = vdwg.mxu0
      %v5237 = vadd.f32 %v5014, %v5158
      %v5238 = vadd.f32 %v5015, %v5160
      %v5239 = vadd.f32 %v5016, %v5163
      %v5240 = vadd.f32 %v5017, %v5165
      %v5241 = vadd.f32 %v5018, %v5168
      %v5242 = vadd.f32 %v5019, %v5170
      %v5243 = vadd.f32 %v5020, %v5173
      %v5244 = vadd.f32 %v5021, %v5175
      %v5245 = vadd.f32 %v5022, %v5178
      %v5246 = vadd.f32 %v5023, %v5180
      %v5247 = vadd.f32 %v5024, %v5183
      %v5248 = vadd.f32 %v5025, %v5185
      %v5249 = vadd.f32 %v5026, %v5188
      %v5250 = vadd.f32 %v5027, %v5190
      %v5251 = vadd.f32 %v5028, %v5193
      %v5252 = vadd.f32 %v5029, %v5195
      %v5253 = vadd.f32 %v5030, %v5198
      %v5254 = vadd.f32 %v5031, %v5200
      %v5255 = vadd.f32 %v5032, %v5203
      %v5256 = vadd.f32 %v5033, %v5205
      %v5257 = vadd.f32 %v5034, %v5208
      %v5258 = vadd.f32 %v5035, %v5210
      %v5259 = vadd.f32 %v5036, %v5213
      %v5260 = vadd.f32 %v5037, %v5215
      %v5261 = vadd.f32 %v5038, %v5218
      %v5262 = vadd.f32 %v5039, %v5220
      %v5263 = vadd.f32 %v5040, %v5223
      %v5264 = vadd.f32 %v5041, %v5225
      %v5265 = vadd.f32 %v5042, %v5228
      %v5266 = vadd.f32 %v5043, %v5230
      %v5267 = vadd.f32 %v5044, %v5233
      %v5268 = vadd.f32 %v5045, %v5235
      %v5269 = vld [vmem:[%s4599 + $0x3] sm:$0xff]
      %v5270 = vld [vmem:[%s4599 + $0xb] sm:$0xff]
      %v5271 = vld [vmem:[%s4599 + $0x1b] sm:$0xff]
      %v5272 = vld [vmem:[%s4599 + $0x23] sm:$0xff]
      %v5273 = vld [vmem:[%s4599 + $0x33] sm:$0xff]
      %v5274 = vld [vmem:[%s4599 + $0x3b] sm:$0xff]
      %v5275 = vld [vmem:[%s4599 + $0x4b] sm:$0xff]
      %v5276 = vld [vmem:[%s4599 + $0x53] sm:$0xff]
      %v5277 = vld [vmem:[%s4599 + $0x63] sm:$0xff]
      %v5278 = vld [vmem:[%s4599 + $0x6b] sm:$0xff]
      %v5279 = vld [vmem:[%s4599 + $0x7b] sm:$0xff]
      %v5280 = vld [vmem:[%s4599 + $0x83] sm:$0xff]
      %v5281 = vld [vmem:[%s4599 + $0x93] sm:$0xff]
      %v5282 = vld [vmem:[%s4599 + $0x9b] sm:$0xff]
      %v5283 = vld [vmem:[%s4599 + $0xab] sm:$0xff]
      %v5284 = vld [vmem:[%s4599 + $0xb3] sm:$0xff]
      %v5285 = vld [vmem:[%s4599 + $0xc3] sm:$0xff]
      %v5286 = vld [vmem:[%s4599 + $0xcb] sm:$0xff]
      %v5287 = vld [vmem:[%s4599 + $0xdb] sm:$0xff]
      %v5288 = vld [vmem:[%s4599 + $0xe3] sm:$0xff]
      %v5289 = vld [vmem:[%s4599 + $0xf3] sm:$0xff]
      %v5290 = vld [vmem:[%s4599 + $0xfb] sm:$0xff]
      %v5291 = vld [vmem:[%s4599 + $0x10b] sm:$0xff]
      %v5292 = vld [vmem:[%s4599 + $0x113] sm:$0xff]
      %v5293 = vld [vmem:[%s4599 + $0x123] sm:$0xff]
      %v5294 = vld [vmem:[%s4599 + $0x12b] sm:$0xff]
      %v5295 = vld [vmem:[%s4599 + $0x13b] sm:$0xff]
      %v5296 = vld [vmem:[%s4599 + $0x143] sm:$0xff]
      %v5297 = vld [vmem:[%s4599 + $0x153] sm:$0xff]
      %v5298 = vld [vmem:[%s4599 + $0x15b] sm:$0xff]
      %v5299 = vld [vmem:[%s4599 + $0x16b] sm:$0xff]
      %v5300 = vld [vmem:[%s4599 + $0x173] sm:$0xff]
      %v5301 = vpack.c.bf16 %v5270, %v5269
      %v5302 = vpack.c.bf16 %v5272, %v5271
      %v5303 = vpack.c.bf16 %v5274, %v5273
      %v5304 = vpack.c.bf16 %v5276, %v5275
      %v5305 = vpack.c.bf16 %v5278, %v5277
      %v5306 = vpack.c.bf16 %v5280, %v5279
      %v5307 = vpack.c.bf16 %v5282, %v5281
      %v5308 = vpack.c.bf16 %v5284, %v5283
      %v5309 = vpack.c.bf16 %v5286, %v5285
      %v5310 = vpack.c.bf16 %v5288, %v5287
      %v5311 = vpack.c.bf16 %v5290, %v5289
      %v5312 = vpack.c.bf16 %v5292, %v5291
      %v5313 = vpack.c.bf16 %v5294, %v5293
      %v5314 = vpack.c.bf16 %v5296, %v5295
      %v5315 = vpack.c.bf16 %v5298, %v5297
      %v5316 = vpack.c.bf16 %v5300, %v5299
      %s5317 = scalar_lea.vmem %s1, 46
      %v5318 = vld [vmem:[%s5317] sm:$0x3]
      %v5319 = vpack.c.bf16 %v5318, %v5318
      %v5321 = vsel %vm300, %v5301, 0
      %v5324 = vsel %vm300, %v5302, 0
      %v5327 = vsel %vm300, %v5303, 0
      %v5330 = vsel %vm300, %v5304, 0
      %v5333 = vsel %vm300, %v5305, 0
      %v5336 = vsel %vm300, %v5306, 0
      %v5339 = vsel %vm300, %v5307, 0
      %v5342 = vsel %vm300, %v5308, 0
      %v5345 = vsel %vm300, %v5309, 0
      %v5348 = vsel %vm300, %v5310, 0
      %v5351 = vsel %vm300, %v5311, 0
      %v5354 = vsel %vm300, %v5312, 0
      %v5357 = vsel %vm300, %v5313, 0
      %v5360 = vsel %vm300, %v5314, 0
      %v5363 = vsel %vm300, %v5315, 0
      %v5366 = vsel %vm300, %v5316, 0
      %v5369 = vsel %vm349, %v5319, 0
      %5371 = vmatpush.bf16.msra.mxu0 0
      %5372 = vmatpush.bf16.msra.mxu0 0
      %5373 = vmatpush.bf16.msra.mxu0 0
      %5374 = vmatpush.bf16.msra.mxu0 0
      %5375 = vmatpush.bf16.msra.mxu0 0
      %5376 = vmatpush.bf16.msra.mxu0 0
      %5377 = vmatpush.bf16.msra.mxu0 0
      %5378 = vmatpush.bf16.msra.mxu0 %v5369
      %5379 = vmatmul.bf16.gmra.mxu0 %v5321
      %v5380 = vpop.f32.mrf.mxu0
      %v5381 = vadd.f32 0.0, %v5380
      %v5382 = vpop.f32.mrf.mxu0
      %v5383 = vadd.f32 0.0, %v5382
      %5384 = vmatmul.bf16.gmra.mxu0 %v5324
      %v5385 = vpop.f32.mrf.mxu0
      %v5386 = vadd.f32 0.0, %v5385
      %v5387 = vpop.f32.mrf.mxu0
      %v5388 = vadd.f32 0.0, %v5387
      %5389 = vmatmul.bf16.gmra.mxu0 %v5327
      %v5390 = vpop.f32.mrf.mxu0
      %v5391 = vadd.f32 0.0, %v5390
      %v5392 = vpop.f32.mrf.mxu0
      %v5393 = vadd.f32 0.0, %v5392
      %5394 = vmatmul.bf16.gmra.mxu0 %v5330
      %v5395 = vpop.f32.mrf.mxu0
      %v5396 = vadd.f32 0.0, %v5395
      %v5397 = vpop.f32.mrf.mxu0
      %v5398 = vadd.f32 0.0, %v5397
      %5399 = vmatmul.bf16.gmra.mxu0 %v5333
      %v5400 = vpop.f32.mrf.mxu0
      %v5401 = vadd.f32 0.0, %v5400
      %v5402 = vpop.f32.mrf.mxu0
      %v5403 = vadd.f32 0.0, %v5402
      %5404 = vmatmul.bf16.gmra.mxu0 %v5336
      %v5405 = vpop.f32.mrf.mxu0
      %v5406 = vadd.f32 0.0, %v5405
      %v5407 = vpop.f32.mrf.mxu0
      %v5408 = vadd.f32 0.0, %v5407
      %5409 = vmatmul.bf16.gmra.mxu0 %v5339
      %v5410 = vpop.f32.mrf.mxu0
      %v5411 = vadd.f32 0.0, %v5410
      %v5412 = vpop.f32.mrf.mxu0
      %v5413 = vadd.f32 0.0, %v5412
      %5414 = vmatmul.bf16.gmra.mxu0 %v5342
      %v5415 = vpop.f32.mrf.mxu0
      %v5416 = vadd.f32 0.0, %v5415
      %v5417 = vpop.f32.mrf.mxu0
      %v5418 = vadd.f32 0.0, %v5417
      %5419 = vmatmul.bf16.gmra.mxu0 %v5345
      %v5420 = vpop.f32.mrf.mxu0
      %v5421 = vadd.f32 0.0, %v5420
      %v5422 = vpop.f32.mrf.mxu0
      %v5423 = vadd.f32 0.0, %v5422
      %5424 = vmatmul.bf16.gmra.mxu0 %v5348
      %v5425 = vpop.f32.mrf.mxu0
      %v5426 = vadd.f32 0.0, %v5425
      %v5427 = vpop.f32.mrf.mxu0
      %v5428 = vadd.f32 0.0, %v5427
      %5429 = vmatmul.bf16.gmra.mxu0 %v5351
      %v5430 = vpop.f32.mrf.mxu0
      %v5431 = vadd.f32 0.0, %v5430
      %v5432 = vpop.f32.mrf.mxu0
      %v5433 = vadd.f32 0.0, %v5432
      %5434 = vmatmul.bf16.gmra.mxu0 %v5354
      %v5435 = vpop.f32.mrf.mxu0
      %v5436 = vadd.f32 0.0, %v5435
      %v5437 = vpop.f32.mrf.mxu0
      %v5438 = vadd.f32 0.0, %v5437
      %5439 = vmatmul.bf16.gmra.mxu0 %v5357
      %v5440 = vpop.f32.mrf.mxu0
      %v5441 = vadd.f32 0.0, %v5440
      %v5442 = vpop.f32.mrf.mxu0
      %v5443 = vadd.f32 0.0, %v5442
      %5444 = vmatmul.bf16.gmra.mxu0 %v5360
      %v5445 = vpop.f32.mrf.mxu0
      %v5446 = vadd.f32 0.0, %v5445
      %v5447 = vpop.f32.mrf.mxu0
      %v5448 = vadd.f32 0.0, %v5447
      %5449 = vmatmul.bf16.gmra.mxu0 %v5363
      %v5450 = vpop.f32.mrf.mxu0
      %v5451 = vadd.f32 0.0, %v5450
      %v5452 = vpop.f32.mrf.mxu0
      %v5453 = vadd.f32 0.0, %v5452
      %5454 = vmatmul.bf16.gmra.mxu0 %v5366
      %v5455 = vpop.f32.mrf.mxu0
      %v5456 = vadd.f32 0.0, %v5455
      %v5457 = vpop.f32.mrf.mxu0
      %v5458 = vadd.f32 0.0, %v5457
      %5459 = vdwg.mxu0
      %v5460 = vadd.f32 %v5237, %v5381
      %v5461 = vadd.f32 %v5238, %v5383
      %v5462 = vadd.f32 %v5239, %v5386
      %v5463 = vadd.f32 %v5240, %v5388
      %v5464 = vadd.f32 %v5241, %v5391
      %v5465 = vadd.f32 %v5242, %v5393
      %v5466 = vadd.f32 %v5243, %v5396
      %v5467 = vadd.f32 %v5244, %v5398
      %v5468 = vadd.f32 %v5245, %v5401
      %v5469 = vadd.f32 %v5246, %v5403
      %v5470 = vadd.f32 %v5247, %v5406
      %v5471 = vadd.f32 %v5248, %v5408
      %v5472 = vadd.f32 %v5249, %v5411
      %v5473 = vadd.f32 %v5250, %v5413
      %v5474 = vadd.f32 %v5251, %v5416
      %v5475 = vadd.f32 %v5252, %v5418
      %v5476 = vadd.f32 %v5253, %v5421
      %v5477 = vadd.f32 %v5254, %v5423
      %v5478 = vadd.f32 %v5255, %v5426
      %v5479 = vadd.f32 %v5256, %v5428
      %v5480 = vadd.f32 %v5257, %v5431
      %v5481 = vadd.f32 %v5258, %v5433
      %v5482 = vadd.f32 %v5259, %v5436
      %v5483 = vadd.f32 %v5260, %v5438
      %v5484 = vadd.f32 %v5261, %v5441
      %v5485 = vadd.f32 %v5262, %v5443
      %v5486 = vadd.f32 %v5263, %v5446
      %v5487 = vadd.f32 %v5264, %v5448
      %v5488 = vadd.f32 %v5265, %v5451
      %v5489 = vadd.f32 %v5266, %v5453
      %v5490 = vadd.f32 %v5267, %v5456
      %v5491 = vadd.f32 %v5268, %v5458
      %v5492 = vld [vmem:[%s4599 + $0x4] sm:$0xff]
      %v5493 = vld [vmem:[%s4599 + $0xc] sm:$0xff]
      %v5494 = vld [vmem:[%s4599 + $0x1c] sm:$0xff]
      %v5495 = vld [vmem:[%s4599 + $0x24] sm:$0xff]
      %v5496 = vld [vmem:[%s4599 + $0x34] sm:$0xff]
      %v5497 = vld [vmem:[%s4599 + $0x3c] sm:$0xff]
      %v5498 = vld [vmem:[%s4599 + $0x4c] sm:$0xff]
      %v5499 = vld [vmem:[%s4599 + $0x54] sm:$0xff]
      %v5500 = vld [vmem:[%s4599 + $0x64] sm:$0xff]
      %v5501 = vld [vmem:[%s4599 + $0x6c] sm:$0xff]
      %v5502 = vld [vmem:[%s4599 + $0x7c] sm:$0xff]
      %v5503 = vld [vmem:[%s4599 + $0x84] sm:$0xff]
      %v5504 = vld [vmem:[%s4599 + $0x94] sm:$0xff]
      %v5505 = vld [vmem:[%s4599 + $0x9c] sm:$0xff]
      %v5506 = vld [vmem:[%s4599 + $0xac] sm:$0xff]
      %v5507 = vld [vmem:[%s4599 + $0xb4] sm:$0xff]
      %v5508 = vld [vmem:[%s4599 + $0xc4] sm:$0xff]
      %v5509 = vld [vmem:[%s4599 + $0xcc] sm:$0xff]
      %v5510 = vld [vmem:[%s4599 + $0xdc] sm:$0xff]
      %v5511 = vld [vmem:[%s4599 + $0xe4] sm:$0xff]
      %v5512 = vld [vmem:[%s4599 + $0xf4] sm:$0xff]
      %v5513 = vld [vmem:[%s4599 + $0xfc] sm:$0xff]
      %v5514 = vld [vmem:[%s4599 + $0x10c] sm:$0xff]
      %v5515 = vld [vmem:[%s4599 + $0x114] sm:$0xff]
      %v5516 = vld [vmem:[%s4599 + $0x124] sm:$0xff]
      %v5517 = vld [vmem:[%s4599 + $0x12c] sm:$0xff]
      %v5518 = vld [vmem:[%s4599 + $0x13c] sm:$0xff]
      %v5519 = vld [vmem:[%s4599 + $0x144] sm:$0xff]
      %v5520 = vld [vmem:[%s4599 + $0x154] sm:$0xff]
      %v5521 = vld [vmem:[%s4599 + $0x15c] sm:$0xff]
      %v5522 = vld [vmem:[%s4599 + $0x16c] sm:$0xff]
      %v5523 = vld [vmem:[%s4599 + $0x174] sm:$0xff]
      %v5524 = vpack.c.bf16 %v5493, %v5492
      %v5525 = vpack.c.bf16 %v5495, %v5494
      %v5526 = vpack.c.bf16 %v5497, %v5496
      %v5527 = vpack.c.bf16 %v5499, %v5498
      %v5528 = vpack.c.bf16 %v5501, %v5500
      %v5529 = vpack.c.bf16 %v5503, %v5502
      %v5530 = vpack.c.bf16 %v5505, %v5504
      %v5531 = vpack.c.bf16 %v5507, %v5506
      %v5532 = vpack.c.bf16 %v5509, %v5508
      %v5533 = vpack.c.bf16 %v5511, %v5510
      %v5534 = vpack.c.bf16 %v5513, %v5512
      %v5535 = vpack.c.bf16 %v5515, %v5514
      %v5536 = vpack.c.bf16 %v5517, %v5516
      %v5537 = vpack.c.bf16 %v5519, %v5518
      %v5538 = vpack.c.bf16 %v5521, %v5520
      %v5539 = vpack.c.bf16 %v5523, %v5522
      %s5540 = scalar_lea.vmem %s1, 48
      %v5541 = vld [vmem:[%s5540] sm:$0x3]
      %v5542 = vpack.c.bf16 %v5541, %v5541
      %v5544 = vsel %vm300, %v5524, 0
      %v5547 = vsel %vm300, %v5525, 0
      %v5550 = vsel %vm300, %v5526, 0
      %v5553 = vsel %vm300, %v5527, 0
      %v5556 = vsel %vm300, %v5528, 0
      %v5559 = vsel %vm300, %v5529, 0
      %v5562 = vsel %vm300, %v5530, 0
      %v5565 = vsel %vm300, %v5531, 0
      %v5568 = vsel %vm300, %v5532, 0
      %v5571 = vsel %vm300, %v5533, 0
      %v5574 = vsel %vm300, %v5534, 0
      %v5577 = vsel %vm300, %v5535, 0
      %v5580 = vsel %vm300, %v5536, 0
      %v5583 = vsel %vm300, %v5537, 0
      %v5586 = vsel %vm300, %v5538, 0
      %v5589 = vsel %vm300, %v5539, 0
      %v5592 = vsel %vm349, %v5542, 0
      %5594 = vmatpush.bf16.msra.mxu0 0
      %5595 = vmatpush.bf16.msra.mxu0 0
      %5596 = vmatpush.bf16.msra.mxu0 0
      %5597 = vmatpush.bf16.msra.mxu0 0
      %5598 = vmatpush.bf16.msra.mxu0 0
      %5599 = vmatpush.bf16.msra.mxu0 0
      %5600 = vmatpush.bf16.msra.mxu0 0
      %5601 = vmatpush.bf16.msra.mxu0 %v5592
      %5602 = vmatmul.bf16.gmra.mxu0 %v5544
      %v5603 = vpop.f32.mrf.mxu0
      %v5604 = vadd.f32 0.0, %v5603
      %v5605 = vpop.f32.mrf.mxu0
      %v5606 = vadd.f32 0.0, %v5605
      %5607 = vmatmul.bf16.gmra.mxu0 %v5547
      %v5608 = vpop.f32.mrf.mxu0
      %v5609 = vadd.f32 0.0, %v5608
      %v5610 = vpop.f32.mrf.mxu0
      %v5611 = vadd.f32 0.0, %v5610
      %5612 = vmatmul.bf16.gmra.mxu0 %v5550
      %v5613 = vpop.f32.mrf.mxu0
      %v5614 = vadd.f32 0.0, %v5613
      %v5615 = vpop.f32.mrf.mxu0
      %v5616 = vadd.f32 0.0, %v5615
      %5617 = vmatmul.bf16.gmra.mxu0 %v5553
      %v5618 = vpop.f32.mrf.mxu0
      %v5619 = vadd.f32 0.0, %v5618
      %v5620 = vpop.f32.mrf.mxu0
      %v5621 = vadd.f32 0.0, %v5620
      %5622 = vmatmul.bf16.gmra.mxu0 %v5556
      %v5623 = vpop.f32.mrf.mxu0
      %v5624 = vadd.f32 0.0, %v5623
      %v5625 = vpop.f32.mrf.mxu0
      %v5626 = vadd.f32 0.0, %v5625
      %5627 = vmatmul.bf16.gmra.mxu0 %v5559
      %v5628 = vpop.f32.mrf.mxu0
      %v5629 = vadd.f32 0.0, %v5628
      %v5630 = vpop.f32.mrf.mxu0
      %v5631 = vadd.f32 0.0, %v5630
      %5632 = vmatmul.bf16.gmra.mxu0 %v5562
      %v5633 = vpop.f32.mrf.mxu0
      %v5634 = vadd.f32 0.0, %v5633
      %v5635 = vpop.f32.mrf.mxu0
      %v5636 = vadd.f32 0.0, %v5635
      %5637 = vmatmul.bf16.gmra.mxu0 %v5565
      %v5638 = vpop.f32.mrf.mxu0
      %v5639 = vadd.f32 0.0, %v5638
      %v5640 = vpop.f32.mrf.mxu0
      %v5641 = vadd.f32 0.0, %v5640
      %5642 = vmatmul.bf16.gmra.mxu0 %v5568
      %v5643 = vpop.f32.mrf.mxu0
      %v5644 = vadd.f32 0.0, %v5643
      %v5645 = vpop.f32.mrf.mxu0
      %v5646 = vadd.f32 0.0, %v5645
      %5647 = vmatmul.bf16.gmra.mxu0 %v5571
      %v5648 = vpop.f32.mrf.mxu0
      %v5649 = vadd.f32 0.0, %v5648
      %v5650 = vpop.f32.mrf.mxu0
      %v5651 = vadd.f32 0.0, %v5650
      %5652 = vmatmul.bf16.gmra.mxu0 %v5574
      %v5653 = vpop.f32.mrf.mxu0
      %v5654 = vadd.f32 0.0, %v5653
      %v5655 = vpop.f32.mrf.mxu0
      %v5656 = vadd.f32 0.0, %v5655
      %5657 = vmatmul.bf16.gmra.mxu0 %v5577
      %v5658 = vpop.f32.mrf.mxu0
      %v5659 = vadd.f32 0.0, %v5658
      %v5660 = vpop.f32.mrf.mxu0
      %v5661 = vadd.f32 0.0, %v5660
      %5662 = vmatmul.bf16.gmra.mxu0 %v5580
      %v5663 = vpop.f32.mrf.mxu0
      %v5664 = vadd.f32 0.0, %v5663
      %v5665 = vpop.f32.mrf.mxu0
      %v5666 = vadd.f32 0.0, %v5665
      %5667 = vmatmul.bf16.gmra.mxu0 %v5583
      %v5668 = vpop.f32.mrf.mxu0
      %v5669 = vadd.f32 0.0, %v5668
      %v5670 = vpop.f32.mrf.mxu0
      %v5671 = vadd.f32 0.0, %v5670
      %5672 = vmatmul.bf16.gmra.mxu0 %v5586
      %v5673 = vpop.f32.mrf.mxu0
      %v5674 = vadd.f32 0.0, %v5673
      %v5675 = vpop.f32.mrf.mxu0
      %v5676 = vadd.f32 0.0, %v5675
      %5677 = vmatmul.bf16.gmra.mxu0 %v5589
      %v5678 = vpop.f32.mrf.mxu0
      %v5679 = vadd.f32 0.0, %v5678
      %v5680 = vpop.f32.mrf.mxu0
      %v5681 = vadd.f32 0.0, %v5680
      %5682 = vdwg.mxu0
      %v5683 = vadd.f32 %v5460, %v5604
      %v5684 = vadd.f32 %v5461, %v5606
      %v5685 = vadd.f32 %v5462, %v5609
      %v5686 = vadd.f32 %v5463, %v5611
      %v5687 = vadd.f32 %v5464, %v5614
      %v5688 = vadd.f32 %v5465, %v5616
      %v5689 = vadd.f32 %v5466, %v5619
      %v5690 = vadd.f32 %v5467, %v5621
      %v5691 = vadd.f32 %v5468, %v5624
      %v5692 = vadd.f32 %v5469, %v5626
      %v5693 = vadd.f32 %v5470, %v5629
      %v5694 = vadd.f32 %v5471, %v5631
      %v5695 = vadd.f32 %v5472, %v5634
      %v5696 = vadd.f32 %v5473, %v5636
      %v5697 = vadd.f32 %v5474, %v5639
      %v5698 = vadd.f32 %v5475, %v5641
      %v5699 = vadd.f32 %v5476, %v5644
      %v5700 = vadd.f32 %v5477, %v5646
      %v5701 = vadd.f32 %v5478, %v5649
      %v5702 = vadd.f32 %v5479, %v5651
      %v5703 = vadd.f32 %v5480, %v5654
      %v5704 = vadd.f32 %v5481, %v5656
      %v5705 = vadd.f32 %v5482, %v5659
      %v5706 = vadd.f32 %v5483, %v5661
      %v5707 = vadd.f32 %v5484, %v5664
      %v5708 = vadd.f32 %v5485, %v5666
      %v5709 = vadd.f32 %v5486, %v5669
      %v5710 = vadd.f32 %v5487, %v5671
      %v5711 = vadd.f32 %v5488, %v5674
      %v5712 = vadd.f32 %v5489, %v5676
      %v5713 = vadd.f32 %v5490, %v5679
      %v5714 = vadd.f32 %v5491, %v5681
      %v5715 = vld [vmem:[%s2] sm:$0x1]
      %v5717 = vperm.slane %v5715, 0
      %v5719 = vmul.f32 %v5683, %v5717
      %v5720 = vmul.f32 %v5684, %v5717
      %v5721 = vmul.f32 %v5685, %v5717
      %v5722 = vmul.f32 %v5686, %v5717
      %v5723 = vmul.f32 %v5687, %v5717
      %v5724 = vmul.f32 %v5688, %v5717
      %v5725 = vmul.f32 %v5689, %v5717
      %v5726 = vmul.f32 %v5690, %v5717
      %v5727 = vmul.f32 %v5691, %v5717
      %v5728 = vmul.f32 %v5692, %v5717
      %v5729 = vmul.f32 %v5693, %v5717
      %v5730 = vmul.f32 %v5694, %v5717
      %v5731 = vmul.f32 %v5695, %v5717
      %v5732 = vmul.f32 %v5696, %v5717
      %v5733 = vmul.f32 %v5697, %v5717
      %v5734 = vmul.f32 %v5698, %v5717
      %v5735 = vmul.f32 %v5699, %v5717
      %v5736 = vmul.f32 %v5700, %v5717
      %v5737 = vmul.f32 %v5701, %v5717
      %v5738 = vmul.f32 %v5702, %v5717
      %v5739 = vmul.f32 %v5703, %v5717
      %v5740 = vmul.f32 %v5704, %v5717
      %v5741 = vmul.f32 %v5705, %v5717
      %v5742 = vmul.f32 %v5706, %v5717
      %v5743 = vmul.f32 %v5707, %v5717
      %v5744 = vmul.f32 %v5708, %v5717
      %v5745 = vmul.f32 %v5709, %v5717
      %v5746 = vmul.f32 %v5710, %v5717
      %v5747 = vmul.f32 %v5711, %v5717
      %v5748 = vmul.f32 %v5712, %v5717
      %v5749 = vmul.f32 %v5713, %v5717
      %v5750 = vmul.f32 %v5714, %v5717
      %v5751 = vld [vmem:[%s3] sm:$0x1]
      %v5753 = vperm.slane %v5751, 0
      %v5755 = vadd.f32 %v5719, %v5753
      %v5756 = vadd.f32 %v5720, %v5753
      %v5757 = vadd.f32 %v5721, %v5753
      %v5758 = vadd.f32 %v5722, %v5753
      %v5759 = vadd.f32 %v5723, %v5753
      %v5760 = vadd.f32 %v5724, %v5753
      %v5761 = vadd.f32 %v5725, %v5753
      %v5762 = vadd.f32 %v5726, %v5753
      %v5763 = vadd.f32 %v5727, %v5753
      %v5764 = vadd.f32 %v5728, %v5753
      %v5765 = vadd.f32 %v5729, %v5753
      %v5766 = vadd.f32 %v5730, %v5753
      %v5767 = vadd.f32 %v5731, %v5753
      %v5768 = vadd.f32 %v5732, %v5753
      %v5769 = vadd.f32 %v5733, %v5753
      %v5770 = vadd.f32 %v5734, %v5753
      %v5771 = vadd.f32 %v5735, %v5753
      %v5772 = vadd.f32 %v5736, %v5753
      %v5773 = vadd.f32 %v5737, %v5753
      %v5774 = vadd.f32 %v5738, %v5753
      %v5775 = vadd.f32 %v5739, %v5753
      %v5776 = vadd.f32 %v5740, %v5753
      %v5777 = vadd.f32 %v5741, %v5753
      %v5778 = vadd.f32 %v5742, %v5753
      %v5779 = vadd.f32 %v5743, %v5753
      %v5780 = vadd.f32 %v5744, %v5753
      %v5781 = vadd.f32 %v5745, %v5753
      %v5782 = vadd.f32 %v5746, %v5753
      %v5783 = vadd.f32 %v5747, %v5753
      %v5784 = vadd.f32 %v5748, %v5753
      %v5785 = vadd.f32 %v5749, %v5753
      %v5786 = vadd.f32 %v5750, %v5753
      %v5787 = vmax.f32 %v5755, 0.0
      %v5788 = vmax.f32 %v5756, 0.0
      %v5789 = vmax.f32 %v5757, 0.0
      %v5790 = vmax.f32 %v5758, 0.0
      %v5791 = vmax.f32 %v5759, 0.0
      %v5792 = vmax.f32 %v5760, 0.0
      %v5793 = vmax.f32 %v5761, 0.0
      %v5794 = vmax.f32 %v5762, 0.0
      %v5795 = vmax.f32 %v5763, 0.0
      %v5796 = vmax.f32 %v5764, 0.0
      %v5797 = vmax.f32 %v5765, 0.0
      %v5798 = vmax.f32 %v5766, 0.0
      %v5799 = vmax.f32 %v5767, 0.0
      %v5800 = vmax.f32 %v5768, 0.0
      %v5801 = vmax.f32 %v5769, 0.0
      %v5802 = vmax.f32 %v5770, 0.0
      %v5803 = vmax.f32 %v5771, 0.0
      %v5804 = vmax.f32 %v5772, 0.0
      %v5805 = vmax.f32 %v5773, 0.0
      %v5806 = vmax.f32 %v5774, 0.0
      %v5807 = vmax.f32 %v5775, 0.0
      %v5808 = vmax.f32 %v5776, 0.0
      %v5809 = vmax.f32 %v5777, 0.0
      %v5810 = vmax.f32 %v5778, 0.0
      %v5811 = vmax.f32 %v5779, 0.0
      %v5812 = vmax.f32 %v5780, 0.0
      %v5813 = vmax.f32 %v5781, 0.0
      %v5814 = vmax.f32 %v5782, 0.0
      %v5815 = vmax.f32 %v5783, 0.0
      %v5816 = vmax.f32 %v5784, 0.0
      %v5817 = vmax.f32 %v5785, 0.0
      %v5818 = vmax.f32 %v5786, 0.0
      %vm5819 = vcmask 31744
      %5820 = vst.msk [vmem:[%s197] sm:$0xff] %vm5819, %v5787
      %5821 = vst.msk [vmem:[%s197 + $0x8] sm:$0xff] %vm5819, %v5788
      %5822 = vst.msk [vmem:[%s197 + $0x10] sm:$0xff] %vm5819, %v5789
      %5823 = vst.msk [vmem:[%s197 + $0x18] sm:$0xff] %vm5819, %v5790
      %5824 = vst.msk [vmem:[%s197 + $0x20] sm:$0xff] %vm5819, %v5791
      %5825 = vst.msk [vmem:[%s197 + $0x28] sm:$0xff] %vm5819, %v5792
      %5826 = vst.msk [vmem:[%s197 + $0x30] sm:$0xff] %vm5819, %v5793
      %5827 = vst.msk [vmem:[%s197 + $0x38] sm:$0xff] %vm5819, %v5794
      %5828 = vst.msk [vmem:[%s197 + $0x40] sm:$0xff] %vm5819, %v5795
      %5829 = vst.msk [vmem:[%s197 + $0x48] sm:$0xff] %vm5819, %v5796
      %5830 = vst.msk [vmem:[%s197 + $0x50] sm:$0xff] %vm5819, %v5797
      %5831 = vst.msk [vmem:[%s197 + $0x58] sm:$0xff] %vm5819, %v5798
      %5832 = vst.msk [vmem:[%s197 + $0x60] sm:$0xff] %vm5819, %v5799
      %5833 = vst.msk [vmem:[%s197 + $0x68] sm:$0xff] %vm5819, %v5800
      %5834 = vst.msk [vmem:[%s197 + $0x70] sm:$0xff] %vm5819, %v5801
      %5835 = vst.msk [vmem:[%s197 + $0x78] sm:$0xff] %vm5819, %v5802
      %5836 = vst.msk [vmem:[%s197 + $0x80] sm:$0xff] %vm5819, %v5803
      %5837 = vst.msk [vmem:[%s197 + $0x88] sm:$0xff] %vm5819, %v5804
      %5838 = vst.msk [vmem:[%s197 + $0x90] sm:$0xff] %vm5819, %v5805
      %5839 = vst.msk [vmem:[%s197 + $0x98] sm:$0xff] %vm5819, %v5806
      %5840 = vst.msk [vmem:[%s197 + $0xa0] sm:$0xff] %vm5819, %v5807
      %5841 = vst.msk [vmem:[%s197 + $0xa8] sm:$0xff] %vm5819, %v5808
      %5842 = vst.msk [vmem:[%s197 + $0xb0] sm:$0xff] %vm5819, %v5809
      %5843 = vst.msk [vmem:[%s197 + $0xb8] sm:$0xff] %vm5819, %v5810
      %5844 = vst.msk [vmem:[%s197 + $0xc0] sm:$0xff] %vm5819, %v5811
      %5845 = vst.msk [vmem:[%s197 + $0xc8] sm:$0xff] %vm5819, %v5812
      %5846 = vst.msk [vmem:[%s197 + $0xd0] sm:$0xff] %vm5819, %v5813
      %5847 = vst.msk [vmem:[%s197 + $0xd8] sm:$0xff] %vm5819, %v5814
      %5848 = vst.msk [vmem:[%s197 + $0xe0] sm:$0xff] %vm5819, %v5815
      %5849 = vst.msk [vmem:[%s197 + $0xe8] sm:$0xff] %vm5819, %v5816
      %5850 = vst.msk [vmem:[%s197 + $0xf0] sm:$0xff] %vm5819, %v5817
      %5851 = vst.msk [vmem:[%s197 + $0xf8] sm:$0xff] %vm5819, %v5818
      %p5852 = scmp.lt.s32.totalorder %s15, 1
      %s5853 = scalar_select %p5852, %s15, 1
      %s5854 = smul.addr %s5853, 32
      %s5855 = smul.addr %s5854, 8
      %s5856 = scalar_lea.vmem %s4, %s5855
      // Predicated region
      $region37: #{inception_block.6} parent=35 // pred_check
        %p5857 = pneg %p122
      $region38: #{inception_block.6} parent=35 // pred_check_branch
        %5859 = sbr.rel (%p5857) target = $region40
      $region39: #{inception_block.6} parent=35 // pred_region
        _
      $region40: #{inception_block.6} parent=35 // pred_fallthru
        _
    $region36: #{inception_block.6} parent=5 // pred_fallthru
      _
    %p5860 = scmp.le.s32.totalorder 2, %s10
    // Predicated region
    $region41: #{inception_block.6} parent=5 // pred_check
      %p5861 = pneg %p5860
    $region42: #{inception_block.6} parent=5 // pred_check_branch
      %5863 = sbr.rel (%p5861) target = $region44
    $region43: #{inception_block.6} parent=5 // pred_region
      %s5864 = ssub.s32 %s10, 2
      // Predicated region
      $region45: #{inception_block.6} parent=43 // pred_check
        %p5865 = pneg %p128
      $region46: #{inception_block.6} parent=43 // pred_check_branch
        %5867 = sbr.rel (%p5865) target = $region48
      $region47: #{inception_block.6} parent=43 // pred_region
        %p5868 = scmp.lt.s32.totalorder %s16, 1
        %s5869 = scalar_select %p5868, %s16, 1
        %s5870 = smul.addr %s5869, 32
        %s5871 = smul.addr %s5870, 8
        %s5872 = scalar_lea.vmem %s4, %s5871
      $region48: #{inception_block.6} parent=43 // pred_fallthru
        _
    $region44: #{inception_block.6} parent=5 // pred_fallthru
      _
  $region6: #{inception_block.6} parent=0 // loop_footer
    %s14 = sadd.s32 1, %s10
  $region7: #{inception_block.6} parent=0 // loop_footer_branch
    %9 = sbr.rel target = $region3
  $region8: #{inception_block.6} parent=0 // loop_exit
    _

</llo_original>
